<compile_context>
chip_gen: v6e
topology: v6e:2x2x1
jax: 0.10.0
libtpu: 0.0.40
codegen_flags: <defaults>
</compile_context>

<pallas_src>
import jax
import jax.numpy as jnp
import numpy as np
from jax import lax
from jax.experimental import pallas as pl
from jax.experimental.pallas import tpu as pltpu

# hyper_params: {'in': 16, 'H': [32], 'LSTM_num_layers': 2, 'out': 8, 'drop_ps': [0.1]}
IN = 16          # input_size == seq_len == feature dim after reshape
HID = 32         # hidden size
NUM_LAYERS = 2   # LSTM_num_layers
OUT = 8          # output dim
BATCH = 2
BP = 8           # batch rows padded to one f32 sublane group
EPS = 1e-5


# ----------------------------------------------------------------------------
# Fused kernel: BN affine -> LSTM layer 0 (bidir) -> LSTM layer 1 (bidir)
# -> Linear(last timestep).  Everything VMEM-resident; only (BP, OUT) hits HBM.
#
# Packed gate-column layout (width G = 8H = 256), each group [fwd(32)|bwd(32)]:
#   [ i(64) | f(64) | o(64) | g(64) ]   (sigmoid gates contiguous, tanh last)
# ----------------------------------------------------------------------------
def _bilstm_head_kernel(x_ref, bn_s_ref, bn_b_ref,
                        wih0_ref, whh0_ref, b0_ref,
                        wih1_ref, whh1_ref, b1_ref,
                        lin_w_ref, lin_b_ref,
                        out_ref,
                        proj_sc, seq_sc):
    TBp = x_ref.shape[0]            # T * Bp = 128, rows time-major (t*Bp + b)
    Bp = out_ref.shape[0]           # 8 padded batch rows
    T = TBp // Bp                   # 16 timesteps
    H2 = seq_sc.shape[1]            # 64 = [fwd | bwd] state width
    H = H2 // 2                     # 32
    G = 4 * H2                      # 256 gate columns

    # ---- BatchNorm1d (eval): running stats pre-folded into per-row scale/shift.
    xn = x_ref[...] * bn_s_ref[...] + bn_b_ref[...]            # (T*Bp, D0) f32

    # Hoisted whole-vreg constants (computed once per forward).
    col = jax.lax.broadcasted_iota(jnp.int32, (Bp, G), 1)
    fwd_mask = (col % H2) < H                       # forward-direction columns
    act_scale = jnp.where(col < 3 * H2, 0.5, 1.0).astype(jnp.float32)

    def bidir_layer(x_bf16, wih_ref, b_ref, whh_ref):
        # Hoisted input projection: ONE single-pass bf16 MXU matmul covering all
        # T steps and both directions; kept in VMEM and sliced per step.
        proj_sc[...] = (jnp.dot(x_bf16, wih_ref[...],
                                preferred_element_type=jnp.float32)
                        + b_ref[...])                          # (T*Bp, G) f32

        def step(s, carry):
            h, c = carry                                       # (Bp, 2H) f32
            row_f = pl.multiple_of(s * Bp, Bp)                 # time s
            row_b = pl.multiple_of((T - 1 - s) * Bp, Bp)       # time T-1-s
            p_f = proj_sc[pl.ds(row_f, Bp), :]
            p_b = proj_sc[pl.ds(row_b, Bp), :]
            # TODO(synk): hold whh resident in the MXU weight registers
            # (pltpu.matmul_push_rhs / matmul_acc_lhs / matmul_pop) to avoid
            # re-feeding the loop-invariant (2H, 8H) RHS every serial step.
            rec = jnp.dot(h.astype(jnp.bfloat16), whh_ref[...],
                          preferred_element_type=jnp.float32)  # (Bp, G) f32
            gates = jnp.where(fwd_mask, p_f, p_b) + rec
            # sigmoid(x) = 0.5*(tanh(x/2)+1): one 256-lane tanh covers all gates.
            t = jnp.tanh(gates * act_scale)
            sig = t[:, :3 * H2] * 0.5 + 0.5                    # [i | f | o]
            i = sig[:, 0 * H2:1 * H2]
            f = sig[:, 1 * H2:2 * H2]
            o = sig[:, 2 * H2:3 * H2]
            g = t[:, 3 * H2:]
            c = f * c + i * g
            h = o * jnp.tanh(c)
            # Hidden sequence, both directions packed: [h_fwd(t) | h_bwd(t)].
            seq_sc[pl.ds(row_f, Bp), pl.ds(0, H)] = h[:, :H]   # fwd @ time s
            seq_sc[pl.ds(row_b, Bp), pl.ds(H, H)] = h[:, H:]   # bwd @ time T-1-s
            return h, c

        z = jnp.zeros((Bp, H2), jnp.float32)
        lax.fori_loop(0, T, step, (z, z), unroll=True)

    # Layer 0 (input D0 = 16); full hidden sequence lands in seq_sc.
    bidir_layer(xn.astype(jnp.bfloat16), wih0_ref, b0_ref, whh0_ref)
    x1 = seq_sc[...].astype(jnp.bfloat16)                      # (T*Bp, 2H)
    # TODO(synk): nn.LSTM inter-layer dropout (p=0.1) is a no-op in eval mode.

    # Layer 1 (input 2H = 64); proj/seq scratches are reused.
    bidir_layer(x1, wih1_ref, b1_ref, whh1_ref)

    # Bidirectional features at the last timestep t = T-1.
    feat = seq_sc[pl.ds((T - 1) * Bp, Bp), :]                  # (Bp, 2H) f32
    out_ref[...] = (jnp.dot(feat, lin_w_ref[...],
                            preferred_element_type=jnp.float32)
                    + lin_b_ref[...]).astype(out_ref.dtype)


# ----------------------------------------------------------------------------
# Wrapper: one pallas_call per forward.
# ----------------------------------------------------------------------------
def bilstm_forward(x, packed):
    # x: (B, C=IN, L=IN); BatchNorm1d channel dim == sequence dim after reshape.
    xr = x.reshape(-1, IN, IN).astype(jnp.float32)             # (B, T, D)
    B = xr.shape[0]
    assert B <= BP, "kernel packs the batch into a single 8-row sublane group"
    # Time-major rows (t*BP + b), batch padded to the 8-sublane granule so every
    # per-timestep slice in the kernel is a whole sublane group at offset 0.
    x_tbd = jnp.pad(jnp.transpose(xr, (1, 0, 2)), ((0, 0), (0, BP - B), (0, 0)))
    x2d = x_tbd.reshape(IN * BP, IN)                           # (T*BP, D)
    # TODO(synk): this ~8 KB transpose/pad is a separate (fusable) XLA op; fold
    # it into the kernel only if the trace shows it as a standalone dispatch.

    vmem = pl.BlockSpec(memory_space=pltpu.MemorySpace.VMEM)
    args = (x2d, packed["bn_scale"], packed["bn_shift"],
            packed["wih0"], packed["whh0"], packed["b0"],
            packed["wih1"], packed["whh1"], packed["b1"],
            packed["lin_w"], packed["lin_b"])
    out = pl.pallas_call(
        _bilstm_head_kernel,
        out_shape=jax.ShapeDtypeStruct((BP, OUT), jnp.float32),
        in_specs=[vmem] * len(args),
        out_specs=vmem,
        scratch_shapes=[pltpu.VMEM((IN * BP, 8 * HID), jnp.float32),   # gate proj
                        pltpu.VMEM((IN * BP, 2 * HID), jnp.float32)],  # hidden seq
    )(*args)
    return out[:B]


# ----------------------------------------------------------------------------
# One-time parameter packing (transposes, gate reorder [i|f|o|g], block-diag
# W_hh, bf16 weights, folded BN scale/shift) — hoisted out of the forward path.
# ----------------------------------------------------------------------------
def pack_params(params):
    gamma, beta, rmean, rvar = params["bn"]
    scale_t = gamma / jnp.sqrt(rvar + EPS)                     # (T,)
    shift_t = beta - rmean * scale_t
    # Expand per-channel (== per-timestep) BN params to per-row (t*BP + b);
    # depends only on the fixed pad width BP, not on the runtime batch.
    bn_scale = jnp.repeat(scale_t, BP)[:, None].astype(jnp.float32)    # (T*BP, 1)
    bn_shift = jnp.repeat(shift_t, BP)[:, None].astype(jnp.float32)

    def pack_layer(layer):
        w_ih_f, w_hh_f, b_f = layer["fwd"]
        w_ih_b, w_hh_b, b_b = layer["bwd"]
        H = HID
        Z = jnp.zeros((H, H), jnp.float32)
        # PyTorch gate order is (i, f, g, o); pack as [i | f | o | g] so the
        # three sigmoid gates form one contiguous 3*2H region and tanh(g) the
        # trailing 2H region.  Within each gate group: [fwd | bwd].
        ih_cols, hh_cols, b_cols = [], [], []
        for q in (0, 1, 3, 2):
            sl = slice(q * H, (q + 1) * H)
            ih_cols += [w_ih_f[sl].T, w_ih_b[sl].T]
            hh_cols += [jnp.concatenate([w_hh_f[sl].T, Z], axis=0),   # fwd cols
                        jnp.concatenate([Z, w_hh_b[sl].T], axis=0)]   # bwd cols
            b_cols += [b_f[sl], b_b[sl]]
        # bf16 weights -> single-pass MXU matmuls (accumulation stays f32).
        wih = jnp.concatenate(ih_cols, axis=1).astype(jnp.bfloat16)   # (D, 8H)
        whh = jnp.concatenate(hh_cols, axis=1).astype(jnp.bfloat16)   # (2H, 8H)
        bias = jnp.concatenate(b_cols)[None, :].astype(jnp.float32)   # (1, 8H)
        return wih, whh, bias

    wih0, whh0, b0 = pack_layer(params["lstm"][0])
    wih1, whh1, b1 = pack_layer(params["lstm"][1])
    return {
        "bn_scale": bn_scale, "bn_shift": bn_shift,
        "wih0": wih0, "whh0": whh0, "b0": b0,
        "wih1": wih1, "whh1": whh1, "b1": b1,
        # TODO(synk): the reference module declares nn.Linear(H, out), which is
        # shape-incompatible with the 2H-wide bidirectional output; a (out, 2H)
        # weight is used so the forward pass is actually runnable.
        "lin_w": jnp.asarray(params["lin_w"].T, jnp.float32),         # (2H, OUT)
        "lin_b": jnp.asarray(params["lin_b"][None, :], jnp.float32),  # (1, OUT)
    }


# ----------------------------------------------------------------------------
# Deterministic parameter init (PyTorch-like U(-1/sqrt(H), 1/sqrt(H))).
# LSTM matrices are snapped to the bf16 grid so the kernel's bf16-packed
# weights are bit-identical to the f32 reference weights.
# ----------------------------------------------------------------------------
def _bf16_grid(w):
    return w.astype(jnp.bfloat16).astype(jnp.float32)


def init_params(key):
    k = 1.0 / np.sqrt(HID)
    k_bn_g, k_bn_b, k_lstm, k_lw, k_lb = jax.random.split(key, 5)
    params = {
        "bn": (
            jax.random.uniform(k_bn_g, (IN,), minval=0.5, maxval=1.5),   # gamma
            jax.random.uniform(k_bn_b, (IN,), minval=-0.5, maxval=0.5),  # beta
            jnp.zeros((IN,), jnp.float32),                               # running_mean
            jnp.ones((IN,), jnp.float32),                                # running_var
        )
    }
    lstm_keys = jax.random.split(k_lstm, NUM_LAYERS * 2 * 4)
    idx = 0
    lstm = []
    for l in range(NUM_LAYERS):
        d_in = IN if l == 0 else 2 * HID
        layer = {}
        for dname in ("fwd", "bwd"):
            w_ih = _bf16_grid(jax.random.uniform(
                lstm_keys[idx], (4 * HID, d_in), minval=-k, maxval=k)); idx += 1
            w_hh = _bf16_grid(jax.random.uniform(
                lstm_keys[idx], (4 * HID, HID), minval=-k, maxval=k)); idx += 1
            b_ih = jax.random.uniform(lstm_keys[idx], (4 * HID,), minval=-k, maxval=k); idx += 1
            b_hh = jax.random.uniform(lstm_keys[idx], (4 * HID,), minval=-k, maxval=k); idx += 1
            layer[dname] = (w_ih, w_hh, b_ih + b_hh)   # combine the two biases
        lstm.append(layer)
    params["lstm"] = lstm
    params["lin_w"] = jax.random.uniform(k_lw, (OUT, 2 * HID), minval=-k, maxval=k)
    params["lin_b"] = jax.random.uniform(k_lb, (OUT,), minval=-k, maxval=k)
    return params


# ----------------------------------------------------------------------------
# Pure-JAX f32 reference (numerical sanity check).
# ----------------------------------------------------------------------------
def _ref_forward(x, params):
    hp = jax.lax.Precision.HIGHEST
    gamma, beta, rmean, rvar = params["bn"]
    xn = gamma[None, :, None] * (x - rmean[None, :, None]) / jnp.sqrt(
        rvar[None, :, None] + EPS) + beta[None, :, None]
    layer_in = xn.reshape(-1, IN, IN)

    def run_dir(x_tbd, w_ih, w_hh, b):
        H = HID

        def step(carry, x_t):
            h, c = carry
            gates = (jnp.dot(x_t, w_ih.T, precision=hp)
                     + jnp.dot(h, w_hh.T, precision=hp) + b)
            i = jax.nn.sigmoid(gates[:, :H])
            f = jax.nn.sigmoid(gates[:, H:2 * H])
            g = jnp.tanh(gates[:, 2 * H:3 * H])
            o = jax.nn.sigmoid(gates[:, 3 * H:])
            c = f * c + i * g
            h = o * jnp.tanh(c)
            return (h, c), h

        B = x_tbd.shape[1]
        z = jnp.zeros((B, H), jnp.float32)
        _, hs = jax.lax.scan(step, (z, z), x_tbd)
        return hs

    for l in range(NUM_LAYERS):
        p = params["lstm"][l]
        x_tbd = jnp.transpose(layer_in, (1, 0, 2))
        hf = run_dir(x_tbd, *p["fwd"])
        hb = run_dir(x_tbd[::-1], *p["bwd"])[::-1]
        layer_in = jnp.transpose(jnp.concatenate([hf, hb], -1), (1, 0, 2))
    last = layer_in[:, -1, :]
    return jnp.dot(last, params["lin_w"].T, precision=hp) + params["lin_b"]


if __name__ == "__main__":
    key = jax.random.PRNGKey(0)
    kx, kp = jax.random.split(key)
    x = jax.random.normal(kx, (BATCH, IN, IN), dtype=jnp.float32)
    params = init_params(kp)
    packed = pack_params(params)               # one-time weight packing

    fwd = jax.jit(bilstm_forward)
    y = jax.block_until_ready(fwd(x, packed))
    assert y.shape == (BATCH, OUT)

    # Kernel uses bf16 MXU operands (single-pass) vs. the f32 HIGHEST reference;
    # weights are bf16-grid so only per-step activation rounding differs.
    y_ref = _ref_forward(x, params)
    np.testing.assert_allclose(np.asarray(y), np.asarray(y_ref),
                               rtol=2e-2, atol=2e-2)
    print("KERNEL_OK")
</pallas_src>

<mosaic_0001>
module attributes {stable_mosaic.version = 11 : i64} {
  func.func @_bilstm_head_kernel(%arg0: memref<128x16xf32, #tpu.memory_space<vmem>>, %arg1: memref<128x1xf32, #tpu.memory_space<vmem>>, %arg2: memref<128x1xf32, #tpu.memory_space<vmem>>, %arg3: memref<16x256xbf16, #tpu.memory_space<vmem>>, %arg4: memref<64x256xbf16, #tpu.memory_space<vmem>>, %arg5: memref<1x256xf32, #tpu.memory_space<vmem>>, %arg6: memref<64x256xbf16, #tpu.memory_space<vmem>>, %arg7: memref<64x256xbf16, #tpu.memory_space<vmem>>, %arg8: memref<1x256xf32, #tpu.memory_space<vmem>>, %arg9: memref<64x8xf32, #tpu.memory_space<vmem>>, %arg10: memref<1x8xf32, #tpu.memory_space<vmem>>, %arg11: memref<8x8xf32, #tpu.memory_space<vmem>>, %arg12: memref<128x256xf32, #tpu.memory_space<vmem>>, %arg13: memref<128x64xf32, #tpu.memory_space<vmem>>) attributes {dimension_semantics = [], scalar_prefetch = 0 : i64, scratch_operands = 2 : i64, tpu.core_type = #tpu.core_type<tc>} {
    %c0 = arith.constant 0 : index
    %c0_0 = arith.constant 0 : index
    %0 = vector.load %arg0[%c0, %c0_0] : memref<128x16xf32, #tpu.memory_space<vmem>>, vector<128x16xf32>
    %c0_1 = arith.constant 0 : index
    %c0_2 = arith.constant 0 : index
    %1 = vector.load %arg1[%c0_1, %c0_2] : memref<128x1xf32, #tpu.memory_space<vmem>>, vector<128x1xf32>
    %2 = vector.broadcast %1 : vector<128x1xf32> to vector<128x16xf32>
    %3 = arith.mulf %0, %2 : vector<128x16xf32>
    %c0_3 = arith.constant 0 : index
    %c0_4 = arith.constant 0 : index
    %4 = vector.load %arg2[%c0_3, %c0_4] : memref<128x1xf32, #tpu.memory_space<vmem>>, vector<128x1xf32>
    %5 = vector.broadcast %4 : vector<128x1xf32> to vector<128x16xf32>
    %6 = arith.addf %3, %5 : vector<128x16xf32>
    %7 = tpu.iota {dimensions = array<i32: 1>} : vector<8x256xi32>
    %c64_i32 = arith.constant 64 : i32
    %c0_i32 = arith.constant 0 : i32
    %8 = arith.cmpi eq, %c64_i32, %c0_i32 : i32
    %c1_i32 = arith.constant 1 : i32
    %9 = arith.select %8, %c1_i32, %c64_i32 : i32
    %10 = vector.broadcast %9 : i32 to vector<8x256xi32>
    %11 = arith.remsi %7, %10 : vector<8x256xi32>
    %c0_i32_5 = arith.constant 0 : i32
    %12 = vector.broadcast %c0_i32_5 : i32 to vector<8x256xi32>
    %13 = arith.cmpi ne, %11, %12 : vector<8x256xi32>
    %c0_i32_6 = arith.constant 0 : i32
    %14 = vector.broadcast %c0_i32_6 : i32 to vector<8x256xi32>
    %15 = arith.cmpi slt, %11, %14 : vector<8x256xi32>
    %c0_i32_7 = arith.constant 0 : i32
    %16 = arith.cmpi slt, %9, %c0_i32_7 : i32
    %17 = vector.broadcast %16 : i1 to vector<8x256xi1>
    %18 = vector.broadcast %17 : vector<8x256xi1> to vector<8x256xi1>
    %19 = arith.xori %15, %18 : vector<8x256xi1>
    %20 = arith.andi %19, %13 : vector<8x256xi1>
    %21 = vector.broadcast %9 : i32 to vector<8x256xi32>
    %22 = arith.addi %11, %21 : vector<8x256xi32>
    %23 = arith.select %20, %22, %11 : vector<8x256xi1>, vector<8x256xi32>
    %c32_i32 = arith.constant 32 : i32
    %24 = vector.broadcast %c32_i32 : i32 to vector<8x256xi32>
    %25 = arith.cmpi slt, %23, %24 : vector<8x256xi32>
    %c192_i32 = arith.constant 192 : i32
    %26 = vector.broadcast %c192_i32 : i32 to vector<8x256xi32>
    %27 = arith.cmpi slt, %7, %26 : vector<8x256xi32>
    %cst = arith.constant 5.000000e-01 : f32
    %cst_8 = arith.constant 1.000000e+00 : f32
    %28 = vector.broadcast %cst : f32 to vector<8x256xf32>
    %29 = vector.broadcast %cst_8 : f32 to vector<8x256xf32>
    %30 = arith.select %27, %28, %29 : vector<8x256xi1>, vector<8x256xf32>
    %31 = arith.truncf %6 : vector<128x16xf32> to vector<128x16xbf16>
    %c0_9 = arith.constant 0 : index
    %c0_10 = arith.constant 0 : index
    %32 = vector.load %arg3[%c0_9, %c0_10] : memref<16x256xbf16, #tpu.memory_space<vmem>>, vector<16x256xbf16>
    %cst_11 = arith.constant dense<0.000000e+00> : vector<128x256xf32>
    %33 = tpu.matmul %31, %32, %cst_11 {dimension_numbers = #tpu.dot_dimension_numbers<[1], [0], [0], [1], [0, 0, 1, 1], [], []>} : vector<128x16xbf16>, vector<16x256xbf16>, vector<128x256xf32> -> vector<128x256xf32>
    %c0_12 = arith.constant 0 : index
    %c0_13 = arith.constant 0 : index
    %34 = vector.load %arg5[%c0_12, %c0_13] : memref<1x256xf32, #tpu.memory_space<vmem>>, vector<1x256xf32>
    %35 = vector.broadcast %34 : vector<1x256xf32> to vector<128x256xf32>
    %36 = arith.addf %33, %35 : vector<128x256xf32>
    %c0_14 = arith.constant 0 : index
    %c0_15 = arith.constant 0 : index
    %37 = vector.load %arg12[%c0_14, %c0_15] : memref<128x256xf32, #tpu.memory_space<vmem>>, vector<128x256xf32>
    tpu.vector_store %arg12[%c0_14, %c0_15], %36 {strides = array<i32>} : memref<128x256xf32, #tpu.memory_space<vmem>>, vector<128x256xf32>,
    %cst_16 = arith.constant 0.000000e+00 : f32
    %38 = vector.broadcast %cst_16 : f32 to vector<8x64xf32>
    %c0_i32_17 = arith.constant 0 : i32
    %c8_i32 = arith.constant 8 : i32
    %39 = arith.muli %c0_i32_17, %c8_i32 : i32
    %40 = tpu.assume_multiple %39, 8 : i32
    %c15_i32 = arith.constant 15 : i32
    %41 = arith.subi %c15_i32, %c0_i32_17 : i32
    %c8_i32_18 = arith.constant 8 : i32
    %42 = arith.muli %41, %c8_i32_18 : i32
    %43 = tpu.assume_multiple %42, 8 : i32
    %44 = arith.index_cast %40 : i32 to index
    %c0_19 = arith.constant 0 : index
    %45 = vector.load %arg12[%44, %c0_19] : memref<128x256xf32, #tpu.memory_space<vmem>>, vector<8x256xf32>
    %46 = arith.index_cast %43 : i32 to index
    %c0_20 = arith.constant 0 : index
    %47 = vector.load %arg12[%46, %c0_20] : memref<128x256xf32, #tpu.memory_space<vmem>>, vector<8x256xf32>
    %48 = arith.truncf %38 : vector<8x64xf32> to vector<8x64xbf16>
    %c0_21 = arith.constant 0 : index
    %c0_22 = arith.constant 0 : index
    %49 = vector.load %arg4[%c0_21, %c0_22] : memref<64x256xbf16, #tpu.memory_space<vmem>>, vector<64x256xbf16>
    %cst_23 = arith.constant dense<0.000000e+00> : vector<8x256xf32>
    %50 = tpu.matmul %48, %49, %cst_23 {dimension_numbers = #tpu.dot_dimension_numbers<[1], [0], [0], [1], [0, 0, 1, 1], [], []>} : vector<8x64xbf16>, vector<64x256xbf16>, vector<8x256xf32> -> vector<8x256xf32>
    %51 = arith.select %25, %45, %47 : vector<8x256xi1>, vector<8x256xf32>
    %52 = arith.addf %51, %50 : vector<8x256xf32>
    %53 = arith.mulf %52, %30 : vector<8x256xf32>
    %54 = math.tanh %53 : vector<8x256xf32>
    %55 = vector.extract_strided_slice %54 {offsets = [0, 0], sizes = [8, 192], strides = [1, 1]} : vector<8x256xf32> to vector<8x192xf32>
    %cst_24 = arith.constant 5.000000e-01 : f32
    %56 = vector.broadcast %cst_24 : f32 to vector<8x192xf32>
    %57 = arith.mulf %55, %56 : vector<8x192xf32>
    %cst_25 = arith.constant 5.000000e-01 : f32
    %58 = vector.broadcast %cst_25 : f32 to vector<8x192xf32>
    %59 = arith.addf %57, %58 : vector<8x192xf32>
    %60 = vector.extract_strided_slice %59 {offsets = [0, 0], sizes = [8, 64], strides = [1, 1]} : vector<8x192xf32> to vector<8x64xf32>
    %61 = vector.extract_strided_slice %59 {offsets = [0, 64], sizes = [8, 64], strides = [1, 1]} : vector<8x192xf32> to vector<8x64xf32>
    %62 = vector.extract_strided_slice %59 {offsets = [0, 128], sizes = [8, 64], strides = [1, 1]} : vector<8x192xf32> to vector<8x64xf32>
    %63 = vector.extract_strided_slice %54 {offsets = [0, 192], sizes = [8, 64], strides = [1, 1]} : vector<8x256xf32> to vector<8x64xf32>
    %64 = arith.mulf %61, %38 : vector<8x64xf32>
    %65 = arith.mulf %60, %63 : vector<8x64xf32>
    %66 = arith.addf %64, %65 : vector<8x64xf32>
    %67 = math.tanh %66 : vector<8x64xf32>
    %68 = arith.mulf %62, %67 : vector<8x64xf32>
    %69 = vector.extract_strided_slice %68 {offsets = [0, 0], sizes = [8, 32], strides = [1, 1]} : vector<8x64xf32> to vector<8x32xf32>
    %70 = arith.index_cast %40 : i32 to index
    %c0_26 = arith.constant 0 : index
    %71 = vector.load %arg13[%70, %c0_26] : memref<128x64xf32, #tpu.memory_space<vmem>>, vector<8x32xf32>
    tpu.vector_store %arg13[%70, %c0_26], %69 {strides = array<i32>} : memref<128x64xf32, #tpu.memory_space<vmem>>, vector<8x32xf32>,
    %72 = vector.extract_strided_slice %68 {offsets = [0, 32], sizes = [8, 32], strides = [1, 1]} : vector<8x64xf32> to vector<8x32xf32>
    %73 = arith.index_cast %43 : i32 to index
    %c32 = arith.constant 32 : index
    %74 = vector.load %arg13[%73, %c32] : memref<128x64xf32, #tpu.memory_space<vmem>>, vector<8x32xf32>
    tpu.vector_store %arg13[%73, %c32], %72 {strides = array<i32>} : memref<128x64xf32, #tpu.memory_space<vmem>>, vector<8x32xf32>,
    %c1_i32_27 = arith.constant 1 : i32
    %c8_i32_28 = arith.constant 8 : i32
    %75 = arith.muli %c1_i32_27, %c8_i32_28 : i32
    %76 = tpu.assume_multiple %75, 8 : i32
    %c15_i32_29 = arith.constant 15 : i32
    %77 = arith.subi %c15_i32_29, %c1_i32_27 : i32
    %c8_i32_30 = arith.constant 8 : i32
    %78 = arith.muli %77, %c8_i32_30 : i32
    %79 = tpu.assume_multiple %78, 8 : i32
    %80 = arith.index_cast %76 : i32 to index
    %c0_31 = arith.constant 0 : index
    %81 = vector.load %arg12[%80, %c0_31] : memref<128x256xf32, #tpu.memory_space<vmem>>, vector<8x256xf32>
    %82 = arith.index_cast %79 : i32 to index
    %c0_32 = arith.constant 0 : index
    %83 = vector.load %arg12[%82, %c0_32] : memref<128x256xf32, #tpu.memory_space<vmem>>, vector<8x256xf32>
    %84 = arith.truncf %68 : vector<8x64xf32> to vector<8x64xbf16>
    %c0_33 = arith.constant 0 : index
    %c0_34 = arith.constant 0 : index
    %85 = vector.load %arg4[%c0_33, %c0_34] : memref<64x256xbf16, #tpu.memory_space<vmem>>, vector<64x256xbf16>
    %cst_35 = arith.constant dense<0.000000e+00> : vector<8x256xf32>
    %86 = tpu.matmul %84, %85, %cst_35 {dimension_numbers = #tpu.dot_dimension_numbers<[1], [0], [0], [1], [0, 0, 1, 1], [], []>} : vector<8x64xbf16>, vector<64x256xbf16>, vector<8x256xf32> -> vector<8x256xf32>
    %87 = arith.select %25, %81, %83 : vector<8x256xi1>, vector<8x256xf32>
    %88 = arith.addf %87, %86 : vector<8x256xf32>
    %89 = arith.mulf %88, %30 : vector<8x256xf32>
    %90 = math.tanh %89 : vector<8x256xf32>
    %91 = vector.extract_strided_slice %90 {offsets = [0, 0], sizes = [8, 192], strides = [1, 1]} : vector<8x256xf32> to vector<8x192xf32>
    %cst_36 = arith.constant 5.000000e-01 : f32
    %92 = vector.broadcast %cst_36 : f32 to vector<8x192xf32>
    %93 = arith.mulf %91, %92 : vector<8x192xf32>
    %cst_37 = arith.constant 5.000000e-01 : f32
    %94 = vector.broadcast %cst_37 : f32 to vector<8x192xf32>
    %95 = arith.addf %93, %94 : vector<8x192xf32>
    %96 = vector.extract_strided_slice %95 {offsets = [0, 0], sizes = [8, 64], strides = [1, 1]} : vector<8x192xf32> to vector<8x64xf32>
    %97 = vector.extract_strided_slice %95 {offsets = [0, 64], sizes = [8, 64], strides = [1, 1]} : vector<8x192xf32> to vector<8x64xf32>
    %98 = vector.extract_strided_slice %95 {offsets = [0, 128], sizes = [8, 64], strides = [1, 1]} : vector<8x192xf32> to vector<8x64xf32>
    %99 = vector.extract_strided_slice %90 {offsets = [0, 192], sizes = [8, 64], strides = [1, 1]} : vector<8x256xf32> to vector<8x64xf32>
    %100 = arith.mulf %97, %66 : vector<8x64xf32>
    %101 = arith.mulf %96, %99 : vector<8x64xf32>
    %102 = arith.addf %100, %101 : vector<8x64xf32>
    %103 = math.tanh %102 : vector<8x64xf32>
    %104 = arith.mulf %98, %103 : vector<8x64xf32>
    %105 = vector.extract_strided_slice %104 {offsets = [0, 0], sizes = [8, 32], strides = [1, 1]} : vector<8x64xf32> to vector<8x32xf32>
    %106 = arith.index_cast %76 : i32 to index
    %c0_38 = arith.constant 0 : index
    %107 = vector.load %arg13[%106, %c0_38] : memref<128x64xf32, #tpu.memory_space<vmem>>, vector<8x32xf32>
    tpu.vector_store %arg13[%106, %c0_38], %105 {strides = array<i32>} : memref<128x64xf32, #tpu.memory_space<vmem>>, vector<8x32xf32>,
    %108 = vector.extract_strided_slice %104 {offsets = [0, 32], sizes = [8, 32], strides = [1, 1]} : vector<8x64xf32> to vector<8x32xf32>
    %109 = arith.index_cast %79 : i32 to index
    %c32_39 = arith.constant 32 : index
    %110 = vector.load %arg13[%109, %c32_39] : memref<128x64xf32, #tpu.memory_space<vmem>>, vector<8x32xf32>
    tpu.vector_store %arg13[%109, %c32_39], %108 {strides = array<i32>} : memref<128x64xf32, #tpu.memory_space<vmem>>, vector<8x32xf32>,
    %c2_i32 = arith.constant 2 : i32
    %c8_i32_40 = arith.constant 8 : i32
    %111 = arith.muli %c2_i32, %c8_i32_40 : i32
    %112 = tpu.assume_multiple %111, 8 : i32
    %c15_i32_41 = arith.constant 15 : i32
    %113 = arith.subi %c15_i32_41, %c2_i32 : i32
    %c8_i32_42 = arith.constant 8 : i32
    %114 = arith.muli %113, %c8_i32_42 : i32
    %115 = tpu.assume_multiple %114, 8 : i32
    %116 = arith.index_cast %112 : i32 to index
    %c0_43 = arith.constant 0 : index
    %117 = vector.load %arg12[%116, %c0_43] : memref<128x256xf32, #tpu.memory_space<vmem>>, vector<8x256xf32>
    %118 = arith.index_cast %115 : i32 to index
    %c0_44 = arith.constant 0 : index
    %119 = vector.load %arg12[%118, %c0_44] : memref<128x256xf32, #tpu.memory_space<vmem>>, vector<8x256xf32>
    %120 = arith.truncf %104 : vector<8x64xf32> to vector<8x64xbf16>
    %c0_45 = arith.constant 0 : index
    %c0_46 = arith.constant 0 : index
    %121 = vector.load %arg4[%c0_45, %c0_46] : memref<64x256xbf16, #tpu.memory_space<vmem>>, vector<64x256xbf16>
    %cst_47 = arith.constant dense<0.000000e+00> : vector<8x256xf32>
    %122 = tpu.matmul %120, %121, %cst_47 {dimension_numbers = #tpu.dot_dimension_numbers<[1], [0], [0], [1], [0, 0, 1, 1], [], []>} : vector<8x64xbf16>, vector<64x256xbf16>, vector<8x256xf32> -> vector<8x256xf32>
    %123 = arith.select %25, %117, %119 : vector<8x256xi1>, vector<8x256xf32>
    %124 = arith.addf %123, %122 : vector<8x256xf32>
    %125 = arith.mulf %124, %30 : vector<8x256xf32>
    %126 = math.tanh %125 : vector<8x256xf32>
    %127 = vector.extract_strided_slice %126 {offsets = [0, 0], sizes = [8, 192], strides = [1, 1]} : vector<8x256xf32> to vector<8x192xf32>
    %cst_48 = arith.constant 5.000000e-01 : f32
    %128 = vector.broadcast %cst_48 : f32 to vector<8x192xf32>
    %129 = arith.mulf %127, %128 : vector<8x192xf32>
    %cst_49 = arith.constant 5.000000e-01 : f32
    %130 = vector.broadcast %cst_49 : f32 to vector<8x192xf32>
    %131 = arith.addf %129, %130 : vector<8x192xf32>
    %132 = vector.extract_strided_slice %131 {offsets = [0, 0], sizes = [8, 64], strides = [1, 1]} : vector<8x192xf32> to vector<8x64xf32>
    %133 = vector.extract_strided_slice %131 {offsets = [0, 64], sizes = [8, 64], strides = [1, 1]} : vector<8x192xf32> to vector<8x64xf32>
    %134 = vector.extract_strided_slice %131 {offsets = [0, 128], sizes = [8, 64], strides = [1, 1]} : vector<8x192xf32> to vector<8x64xf32>
    %135 = vector.extract_strided_slice %126 {offsets = [0, 192], sizes = [8, 64], strides = [1, 1]} : vector<8x256xf32> to vector<8x64xf32>
    %136 = arith.mulf %133, %102 : vector<8x64xf32>
    %137 = arith.mulf %132, %135 : vector<8x64xf32>
    %138 = arith.addf %136, %137 : vector<8x64xf32>
    %139 = math.tanh %138 : vector<8x64xf32>
    %140 = arith.mulf %134, %139 : vector<8x64xf32>
    %141 = vector.extract_strided_slice %140 {offsets = [0, 0], sizes = [8, 32], strides = [1, 1]} : vector<8x64xf32> to vector<8x32xf32>
    %142 = arith.index_cast %112 : i32 to index
    %c0_50 = arith.constant 0 : index
    %143 = vector.load %arg13[%142, %c0_50] : memref<128x64xf32, #tpu.memory_space<vmem>>, vector<8x32xf32>
    tpu.vector_store %arg13[%142, %c0_50], %141 {strides = array<i32>} : memref<128x64xf32, #tpu.memory_space<vmem>>, vector<8x32xf32>,
    %144 = vector.extract_strided_slice %140 {offsets = [0, 32], sizes = [8, 32], strides = [1, 1]} : vector<8x64xf32> to vector<8x32xf32>
    %145 = arith.index_cast %115 : i32 to index
    %c32_51 = arith.constant 32 : index
    %146 = vector.load %arg13[%145, %c32_51] : memref<128x64xf32, #tpu.memory_space<vmem>>, vector<8x32xf32>
    tpu.vector_store %arg13[%145, %c32_51], %144 {strides = array<i32>} : memref<128x64xf32, #tpu.memory_space<vmem>>, vector<8x32xf32>,
    %c3_i32 = arith.constant 3 : i32
    %c8_i32_52 = arith.constant 8 : i32
    %147 = arith.muli %c3_i32, %c8_i32_52 : i32
    %148 = tpu.assume_multiple %147, 8 : i32
    %c15_i32_53 = arith.constant 15 : i32
    %149 = arith.subi %c15_i32_53, %c3_i32 : i32
    %c8_i32_54 = arith.constant 8 : i32
    %150 = arith.muli %149, %c8_i32_54 : i32
    %151 = tpu.assume_multiple %150, 8 : i32
    %152 = arith.index_cast %148 : i32 to index
    %c0_55 = arith.constant 0 : index
    %153 = vector.load %arg12[%152, %c0_55] : memref<128x256xf32, #tpu.memory_space<vmem>>, vector<8x256xf32>
    %154 = arith.index_cast %151 : i32 to index
    %c0_56 = arith.constant 0 : index
    %155 = vector.load %arg12[%154, %c0_56] : memref<128x256xf32, #tpu.memory_space<vmem>>, vector<8x256xf32>
    %156 = arith.truncf %140 : vector<8x64xf32> to vector<8x64xbf16>
    %c0_57 = arith.constant 0 : index
    %c0_58 = arith.constant 0 : index
    %157 = vector.load %arg4[%c0_57, %c0_58] : memref<64x256xbf16, #tpu.memory_space<vmem>>, vector<64x256xbf16>
    %cst_59 = arith.constant dense<0.000000e+00> : vector<8x256xf32>
    %158 = tpu.matmul %156, %157, %cst_59 {dimension_numbers = #tpu.dot_dimension_numbers<[1], [0], [0], [1], [0, 0, 1, 1], [], []>} : vector<8x64xbf16>, vector<64x256xbf16>, vector<8x256xf32> -> vector<8x256xf32>
    %159 = arith.select %25, %153, %155 : vector<8x256xi1>, vector<8x256xf32>
    %160 = arith.addf %159, %158 : vector<8x256xf32>
    %161 = arith.mulf %160, %30 : vector<8x256xf32>
    %162 = math.tanh %161 : vector<8x256xf32>
    %163 = vector.extract_strided_slice %162 {offsets = [0, 0], sizes = [8, 192], strides = [1, 1]} : vector<8x256xf32> to vector<8x192xf32>
    %cst_60 = arith.constant 5.000000e-01 : f32
    %164 = vector.broadcast %cst_60 : f32 to vector<8x192xf32>
    %165 = arith.mulf %163, %164 : vector<8x192xf32>
    %cst_61 = arith.constant 5.000000e-01 : f32
    %166 = vector.broadcast %cst_61 : f32 to vector<8x192xf32>
    %167 = arith.addf %165, %166 : vector<8x192xf32>
    %168 = vector.extract_strided_slice %167 {offsets = [0, 0], sizes = [8, 64], strides = [1, 1]} : vector<8x192xf32> to vector<8x64xf32>
    %169 = vector.extract_strided_slice %167 {offsets = [0, 64], sizes = [8, 64], strides = [1, 1]} : vector<8x192xf32> to vector<8x64xf32>
    %170 = vector.extract_strided_slice %167 {offsets = [0, 128], sizes = [8, 64], strides = [1, 1]} : vector<8x192xf32> to vector<8x64xf32>
    %171 = vector.extract_strided_slice %162 {offsets = [0, 192], sizes = [8, 64], strides = [1, 1]} : vector<8x256xf32> to vector<8x64xf32>
    %172 = arith.mulf %169, %138 : vector<8x64xf32>
    %173 = arith.mulf %168, %171 : vector<8x64xf32>
    %174 = arith.addf %172, %173 : vector<8x64xf32>
    %175 = math.tanh %174 : vector<8x64xf32>
    %176 = arith.mulf %170, %175 : vector<8x64xf32>
    %177 = vector.extract_strided_slice %176 {offsets = [0, 0], sizes = [8, 32], strides = [1, 1]} : vector<8x64xf32> to vector<8x32xf32>
    %178 = arith.index_cast %148 : i32 to index
    %c0_62 = arith.constant 0 : index
    %179 = vector.load %arg13[%178, %c0_62] : memref<128x64xf32, #tpu.memory_space<vmem>>, vector<8x32xf32>
    tpu.vector_store %arg13[%178, %c0_62], %177 {strides = array<i32>} : memref<128x64xf32, #tpu.memory_space<vmem>>, vector<8x32xf32>,
    %180 = vector.extract_strided_slice %176 {offsets = [0, 32], sizes = [8, 32], strides = [1, 1]} : vector<8x64xf32> to vector<8x32xf32>
    %181 = arith.index_cast %151 : i32 to index
    %c32_63 = arith.constant 32 : index
    %182 = vector.load %arg13[%181, %c32_63] : memref<128x64xf32, #tpu.memory_space<vmem>>, vector<8x32xf32>
    tpu.vector_store %arg13[%181, %c32_63], %180 {strides = array<i32>} : memref<128x64xf32, #tpu.memory_space<vmem>>, vector<8x32xf32>,
    %c4_i32 = arith.constant 4 : i32
    %c8_i32_64 = arith.constant 8 : i32
    %183 = arith.muli %c4_i32, %c8_i32_64 : i32
    %184 = tpu.assume_multiple %183, 8 : i32
    %c15_i32_65 = arith.constant 15 : i32
    %185 = arith.subi %c15_i32_65, %c4_i32 : i32
    %c8_i32_66 = arith.constant 8 : i32
    %186 = arith.muli %185, %c8_i32_66 : i32
    %187 = tpu.assume_multiple %186, 8 : i32
    %188 = arith.index_cast %184 : i32 to index
    %c0_67 = arith.constant 0 : index
    %189 = vector.load %arg12[%188, %c0_67] : memref<128x256xf32, #tpu.memory_space<vmem>>, vector<8x256xf32>
    %190 = arith.index_cast %187 : i32 to index
    %c0_68 = arith.constant 0 : index
    %191 = vector.load %arg12[%190, %c0_68] : memref<128x256xf32, #tpu.memory_space<vmem>>, vector<8x256xf32>
    %192 = arith.truncf %176 : vector<8x64xf32> to vector<8x64xbf16>
    %c0_69 = arith.constant 0 : index
    %c0_70 = arith.constant 0 : index
    %193 = vector.load %arg4[%c0_69, %c0_70] : memref<64x256xbf16, #tpu.memory_space<vmem>>, vector<64x256xbf16>
    %cst_71 = arith.constant dense<0.000000e+00> : vector<8x256xf32>
    %194 = tpu.matmul %192, %193, %cst_71 {dimension_numbers = #tpu.dot_dimension_numbers<[1], [0], [0], [1], [0, 0, 1, 1], [], []>} : vector<8x64xbf16>, vector<64x256xbf16>, vector<8x256xf32> -> vector<8x256xf32>
    %195 = arith.select %25, %189, %191 : vector<8x256xi1>, vector<8x256xf32>
    %196 = arith.addf %195, %194 : vector<8x256xf32>
    %197 = arith.mulf %196, %30 : vector<8x256xf32>
    %198 = math.tanh %197 : vector<8x256xf32>
    %199 = vector.extract_strided_slice %198 {offsets = [0, 0], sizes = [8, 192], strides = [1, 1]} : vector<8x256xf32> to vector<8x192xf32>
    %cst_72 = arith.constant 5.000000e-01 : f32
    %200 = vector.broadcast %cst_72 : f32 to vector<8x192xf32>
    %201 = arith.mulf %199, %200 : vector<8x192xf32>
    %cst_73 = arith.constant 5.000000e-01 : f32
    %202 = vector.broadcast %cst_73 : f32 to vector<8x192xf32>
    %203 = arith.addf %201, %202 : vector<8x192xf32>
    %204 = vector.extract_strided_slice %203 {offsets = [0, 0], sizes = [8, 64], strides = [1, 1]} : vector<8x192xf32> to vector<8x64xf32>
    %205 = vector.extract_strided_slice %203 {offsets = [0, 64], sizes = [8, 64], strides = [1, 1]} : vector<8x192xf32> to vector<8x64xf32>
    %206 = vector.extract_strided_slice %203 {offsets = [0, 128], sizes = [8, 64], strides = [1, 1]} : vector<8x192xf32> to vector<8x64xf32>
    %207 = vector.extract_strided_slice %198 {offsets = [0, 192], sizes = [8, 64], strides = [1, 1]} : vector<8x256xf32> to vector<8x64xf32>
    %208 = arith.mulf %205, %174 : vector<8x64xf32>
    %209 = arith.mulf %204, %207 : vector<8x64xf32>
    %210 = arith.addf %208, %209 : vector<8x64xf32>
    %211 = math.tanh %210 : vector<8x64xf32>
    %212 = arith.mulf %206, %211 : vector<8x64xf32>
    %213 = vector.extract_strided_slice %212 {offsets = [0, 0], sizes = [8, 32], strides = [1, 1]} : vector<8x64xf32> to vector<8x32xf32>
    %214 = arith.index_cast %184 : i32 to index
    %c0_74 = arith.constant 0 : index
    %215 = vector.load %arg13[%214, %c0_74] : memref<128x64xf32, #tpu.memory_space<vmem>>, vector<8x32xf32>
    tpu.vector_store %arg13[%214, %c0_74], %213 {strides = array<i32>} : memref<128x64xf32, #tpu.memory_space<vmem>>, vector<8x32xf32>,
    %216 = vector.extract_strided_slice %212 {offsets = [0, 32], sizes = [8, 32], strides = [1, 1]} : vector<8x64xf32> to vector<8x32xf32>
    %217 = arith.index_cast %187 : i32 to index
    %c32_75 = arith.constant 32 : index
    %218 = vector.load %arg13[%217, %c32_75] : memref<128x64xf32, #tpu.memory_space<vmem>>, vector<8x32xf32>
    tpu.vector_store %arg13[%217, %c32_75], %216 {strides = array<i32>} : memref<128x64xf32, #tpu.memory_space<vmem>>, vector<8x32xf32>,
    %c5_i32 = arith.constant 5 : i32
    %c8_i32_76 = arith.constant 8 : i32
    %219 = arith.muli %c5_i32, %c8_i32_76 : i32
    %220 = tpu.assume_multiple %219, 8 : i32
    %c15_i32_77 = arith.constant 15 : i32
    %221 = arith.subi %c15_i32_77, %c5_i32 : i32
    %c8_i32_78 = arith.constant 8 : i32
    %222 = arith.muli %221, %c8_i32_78 : i32
    %223 = tpu.assume_multiple %222, 8 : i32
    %224 = arith.index_cast %220 : i32 to index
    %c0_79 = arith.constant 0 : index
    %225 = vector.load %arg12[%224, %c0_79] : memref<128x256xf32, #tpu.memory_space<vmem>>, vector<8x256xf32>
    %226 = arith.index_cast %223 : i32 to index
    %c0_80 = arith.constant 0 : index
    %227 = vector.load %arg12[%226, %c0_80] : memref<128x256xf32, #tpu.memory_space<vmem>>, vector<8x256xf32>
    %228 = arith.truncf %212 : vector<8x64xf32> to vector<8x64xbf16>
    %c0_81 = arith.constant 0 : index
    %c0_82 = arith.constant 0 : index
    %229 = vector.load %arg4[%c0_81, %c0_82] : memref<64x256xbf16, #tpu.memory_space<vmem>>, vector<64x256xbf16>
    %cst_83 = arith.constant dense<0.000000e+00> : vector<8x256xf32>
    %230 = tpu.matmul %228, %229, %cst_83 {dimension_numbers = #tpu.dot_dimension_numbers<[1], [0], [0], [1], [0, 0, 1, 1], [], []>} : vector<8x64xbf16>, vector<64x256xbf16>, vector<8x256xf32> -> vector<8x256xf32>
    %231 = arith.select %25, %225, %227 : vector<8x256xi1>, vector<8x256xf32>
    %232 = arith.addf %231, %230 : vector<8x256xf32>
    %233 = arith.mulf %232, %30 : vector<8x256xf32>
    %234 = math.tanh %233 : vector<8x256xf32>
    %235 = vector.extract_strided_slice %234 {offsets = [0, 0], sizes = [8, 192], strides = [1, 1]} : vector<8x256xf32> to vector<8x192xf32>
    %cst_84 = arith.constant 5.000000e-01 : f32
    %236 = vector.broadcast %cst_84 : f32 to vector<8x192xf32>
    %237 = arith.mulf %235, %236 : vector<8x192xf32>
    %cst_85 = arith.constant 5.000000e-01 : f32
    %238 = vector.broadcast %cst_85 : f32 to vector<8x192xf32>
    %239 = arith.addf %237, %238 : vector<8x192xf32>
    %240 = vector.extract_strided_slice %239 {offsets = [0, 0], sizes = [8, 64], strides = [1, 1]} : vector<8x192xf32> to vector<8x64xf32>
    %241 = vector.extract_strided_slice %239 {offsets = [0, 64], sizes = [8, 64], strides = [1, 1]} : vector<8x192xf32> to vector<8x64xf32>
    %242 = vector.extract_strided_slice %239 {offsets = [0, 128], sizes = [8, 64], strides = [1, 1]} : vector<8x192xf32> to vector<8x64xf32>
    %243 = vector.extract_strided_slice %234 {offsets = [0, 192], sizes = [8, 64], strides = [1, 1]} : vector<8x256xf32> to vector<8x64xf32>
    %244 = arith.mulf %241, %210 : vector<8x64xf32>
    %245 = arith.mulf %240, %243 : vector<8x64xf32>
    %246 = arith.addf %244, %245 : vector<8x64xf32>
    %247 = math.tanh %246 : vector<8x64xf32>
    %248 = arith.mulf %242, %247 : vector<8x64xf32>
    %249 = vector.extract_strided_slice %248 {offsets = [0, 0], sizes = [8, 32], strides = [1, 1]} : vector<8x64xf32> to vector<8x32xf32>
    %250 = arith.index_cast %220 : i32 to index
    %c0_86 = arith.constant 0 : index
    %251 = vector.load %arg13[%250, %c0_86] : memref<128x64xf32, #tpu.memory_space<vmem>>, vector<8x32xf32>
    tpu.vector_store %arg13[%250, %c0_86], %249 {strides = array<i32>} : memref<128x64xf32, #tpu.memory_space<vmem>>, vector<8x32xf32>,
    %252 = vector.extract_strided_slice %248 {offsets = [0, 32], sizes = [8, 32], strides = [1, 1]} : vector<8x64xf32> to vector<8x32xf32>
    %253 = arith.index_cast %223 : i32 to index
    %c32_87 = arith.constant 32 : index
    %254 = vector.load %arg13[%253, %c32_87] : memref<128x64xf32, #tpu.memory_space<vmem>>, vector<8x32xf32>
    tpu.vector_store %arg13[%253, %c32_87], %252 {strides = array<i32>} : memref<128x64xf32, #tpu.memory_space<vmem>>, vector<8x32xf32>,
    %c6_i32 = arith.constant 6 : i32
    %c8_i32_88 = arith.constant 8 : i32
    %255 = arith.muli %c6_i32, %c8_i32_88 : i32
    %256 = tpu.assume_multiple %255, 8 : i32
    %c15_i32_89 = arith.constant 15 : i32
    %257 = arith.subi %c15_i32_89, %c6_i32 : i32
    %c8_i32_90 = arith.constant 8 : i32
    %258 = arith.muli %257, %c8_i32_90 : i32
    %259 = tpu.assume_multiple %258, 8 : i32
    %260 = arith.index_cast %256 : i32 to index
    %c0_91 = arith.constant 0 : index
    %261 = vector.load %arg12[%260, %c0_91] : memref<128x256xf32, #tpu.memory_space<vmem>>, vector<8x256xf32>
    %262 = arith.index_cast %259 : i32 to index
    %c0_92 = arith.constant 0 : index
    %263 = vector.load %arg12[%262, %c0_92] : memref<128x256xf32, #tpu.memory_space<vmem>>, vector<8x256xf32>
    %264 = arith.truncf %248 : vector<8x64xf32> to vector<8x64xbf16>
    %c0_93 = arith.constant 0 : index
    %c0_94 = arith.constant 0 : index
    %265 = vector.load %arg4[%c0_93, %c0_94] : memref<64x256xbf16, #tpu.memory_space<vmem>>, vector<64x256xbf16>
    %cst_95 = arith.constant dense<0.000000e+00> : vector<8x256xf32>
    %266 = tpu.matmul %264, %265, %cst_95 {dimension_numbers = #tpu.dot_dimension_numbers<[1], [0], [0], [1], [0, 0, 1, 1], [], []>} : vector<8x64xbf16>, vector<64x256xbf16>, vector<8x256xf32> -> vector<8x256xf32>
    %267 = arith.select %25, %261, %263 : vector<8x256xi1>, vector<8x256xf32>
    %268 = arith.addf %267, %266 : vector<8x256xf32>
    %269 = arith.mulf %268, %30 : vector<8x256xf32>
    %270 = math.tanh %269 : vector<8x256xf32>
    %271 = vector.extract_strided_slice %270 {offsets = [0, 0], sizes = [8, 192], strides = [1, 1]} : vector<8x256xf32> to vector<8x192xf32>
    %cst_96 = arith.constant 5.000000e-01 : f32
    %272 = vector.broadcast %cst_96 : f32 to vector<8x192xf32>
    %273 = arith.mulf %271, %272 : vector<8x192xf32>
    %cst_97 = arith.constant 5.000000e-01 : f32
    %274 = vector.broadcast %cst_97 : f32 to vector<8x192xf32>
    %275 = arith.addf %273, %274 : vector<8x192xf32>
    %276 = vector.extract_strided_slice %275 {offsets = [0, 0], sizes = [8, 64], strides = [1, 1]} : vector<8x192xf32> to vector<8x64xf32>
    %277 = vector.extract_strided_slice %275 {offsets = [0, 64], sizes = [8, 64], strides = [1, 1]} : vector<8x192xf32> to vector<8x64xf32>
    %278 = vector.extract_strided_slice %275 {offsets = [0, 128], sizes = [8, 64], strides = [1, 1]} : vector<8x192xf32> to vector<8x64xf32>
    %279 = vector.extract_strided_slice %270 {offsets = [0, 192], sizes = [8, 64], strides = [1, 1]} : vector<8x256xf32> to vector<8x64xf32>
    %280 = arith.mulf %277, %246 : vector<8x64xf32>
    %281 = arith.mulf %276, %279 : vector<8x64xf32>
    %282 = arith.addf %280, %281 : vector<8x64xf32>
    %283 = math.tanh %282 : vector<8x64xf32>
    %284 = arith.mulf %278, %283 : vector<8x64xf32>
    %285 = vector.extract_strided_slice %284 {offsets = [0, 0], sizes = [8, 32], strides = [1, 1]} : vector<8x64xf32> to vector<8x32xf32>
    %286 = arith.index_cast %256 : i32 to index
    %c0_98 = arith.constant 0 : index
    %287 = vector.load %arg13[%286, %c0_98] : memref<128x64xf32, #tpu.memory_space<vmem>>, vector<8x32xf32>
    tpu.vector_store %arg13[%286, %c0_98], %285 {strides = array<i32>} : memref<128x64xf32, #tpu.memory_space<vmem>>, vector<8x32xf32>,
    %288 = vector.extract_strided_slice %284 {offsets = [0, 32], sizes = [8, 32], strides = [1, 1]} : vector<8x64xf32> to vector<8x32xf32>
    %289 = arith.index_cast %259 : i32 to index
    %c32_99 = arith.constant 32 : index
    %290 = vector.load %arg13[%289, %c32_99] : memref<128x64xf32, #tpu.memory_space<vmem>>, vector<8x32xf32>
    tpu.vector_store %arg13[%289, %c32_99], %288 {strides = array<i32>} : memref<128x64xf32, #tpu.memory_space<vmem>>, vector<8x32xf32>,
    %c7_i32 = arith.constant 7 : i32
    %c8_i32_100 = arith.constant 8 : i32
    %291 = arith.muli %c7_i32, %c8_i32_100 : i32
    %292 = tpu.assume_multiple %291, 8 : i32
    %c15_i32_101 = arith.constant 15 : i32
    %293 = arith.subi %c15_i32_101, %c7_i32 : i32
    %c8_i32_102 = arith.constant 8 : i32
    %294 = arith.muli %293, %c8_i32_102 : i32
    %295 = tpu.assume_multiple %294, 8 : i32
    %296 = arith.index_cast %292 : i32 to index
    %c0_103 = arith.constant 0 : index
    %297 = vector.load %arg12[%296, %c0_103] : memref<128x256xf32, #tpu.memory_space<vmem>>, vector<8x256xf32>
    %298 = arith.index_cast %295 : i32 to index
    %c0_104 = arith.constant 0 : index
    %299 = vector.load %arg12[%298, %c0_104] : memref<128x256xf32, #tpu.memory_space<vmem>>, vector<8x256xf32>
    %300 = arith.truncf %284 : vector<8x64xf32> to vector<8x64xbf16>
    %c0_105 = arith.constant 0 : index
    %c0_106 = arith.constant 0 : index
    %301 = vector.load %arg4[%c0_105, %c0_106] : memref<64x256xbf16, #tpu.memory_space<vmem>>, vector<64x256xbf16>
    %cst_107 = arith.constant dense<0.000000e+00> : vector<8x256xf32>
    %302 = tpu.matmul %300, %301, %cst_107 {dimension_numbers = #tpu.dot_dimension_numbers<[1], [0], [0], [1], [0, 0, 1, 1], [], []>} : vector<8x64xbf16>, vector<64x256xbf16>, vector<8x256xf32> -> vector<8x256xf32>
    %303 = arith.select %25, %297, %299 : vector<8x256xi1>, vector<8x256xf32>
    %304 = arith.addf %303, %302 : vector<8x256xf32>
    %305 = arith.mulf %304, %30 : vector<8x256xf32>
    %306 = math.tanh %305 : vector<8x256xf32>
    %307 = vector.extract_strided_slice %306 {offsets = [0, 0], sizes = [8, 192], strides = [1, 1]} : vector<8x256xf32> to vector<8x192xf32>
    %cst_108 = arith.constant 5.000000e-01 : f32
    %308 = vector.broadcast %cst_108 : f32 to vector<8x192xf32>
    %309 = arith.mulf %307, %308 : vector<8x192xf32>
    %cst_109 = arith.constant 5.000000e-01 : f32
    %310 = vector.broadcast %cst_109 : f32 to vector<8x192xf32>
    %311 = arith.addf %309, %310 : vector<8x192xf32>
    %312 = vector.extract_strided_slice %311 {offsets = [0, 0], sizes = [8, 64], strides = [1, 1]} : vector<8x192xf32> to vector<8x64xf32>
    %313 = vector.extract_strided_slice %311 {offsets = [0, 64], sizes = [8, 64], strides = [1, 1]} : vector<8x192xf32> to vector<8x64xf32>
    %314 = vector.extract_strided_slice %311 {offsets = [0, 128], sizes = [8, 64], strides = [1, 1]} : vector<8x192xf32> to vector<8x64xf32>
    %315 = vector.extract_strided_slice %306 {offsets = [0, 192], sizes = [8, 64], strides = [1, 1]} : vector<8x256xf32> to vector<8x64xf32>
    %316 = arith.mulf %313, %282 : vector<8x64xf32>
    %317 = arith.mulf %312, %315 : vector<8x64xf32>
    %318 = arith.addf %316, %317 : vector<8x64xf32>
    %319 = math.tanh %318 : vector<8x64xf32>
    %320 = arith.mulf %314, %319 : vector<8x64xf32>
    %321 = vector.extract_strided_slice %320 {offsets = [0, 0], sizes = [8, 32], strides = [1, 1]} : vector<8x64xf32> to vector<8x32xf32>
    %322 = arith.index_cast %292 : i32 to index
    %c0_110 = arith.constant 0 : index
    %323 = vector.load %arg13[%322, %c0_110] : memref<128x64xf32, #tpu.memory_space<vmem>>, vector<8x32xf32>
    tpu.vector_store %arg13[%322, %c0_110], %321 {strides = array<i32>} : memref<128x64xf32, #tpu.memory_space<vmem>>, vector<8x32xf32>,
    %324 = vector.extract_strided_slice %320 {offsets = [0, 32], sizes = [8, 32], strides = [1, 1]} : vector<8x64xf32> to vector<8x32xf32>
    %325 = arith.index_cast %295 : i32 to index
    %c32_111 = arith.constant 32 : index
    %326 = vector.load %arg13[%325, %c32_111] : memref<128x64xf32, #tpu.memory_space<vmem>>, vector<8x32xf32>
    tpu.vector_store %arg13[%325, %c32_111], %324 {strides = array<i32>} : memref<128x64xf32, #tpu.memory_space<vmem>>, vector<8x32xf32>,
    %c8_i32_112 = arith.constant 8 : i32
    %c8_i32_113 = arith.constant 8 : i32
    %327 = arith.muli %c8_i32_112, %c8_i32_113 : i32
    %328 = tpu.assume_multiple %327, 8 : i32
    %c15_i32_114 = arith.constant 15 : i32
    %329 = arith.subi %c15_i32_114, %c8_i32_112 : i32
    %c8_i32_115 = arith.constant 8 : i32
    %330 = arith.muli %329, %c8_i32_115 : i32
    %331 = tpu.assume_multiple %330, 8 : i32
    %332 = arith.index_cast %328 : i32 to index
    %c0_116 = arith.constant 0 : index
    %333 = vector.load %arg12[%332, %c0_116] : memref<128x256xf32, #tpu.memory_space<vmem>>, vector<8x256xf32>
    %334 = arith.index_cast %331 : i32 to index
    %c0_117 = arith.constant 0 : index
    %335 = vector.load %arg12[%334, %c0_117] : memref<128x256xf32, #tpu.memory_space<vmem>>, vector<8x256xf32>
    %336 = arith.truncf %320 : vector<8x64xf32> to vector<8x64xbf16>
    %c0_118 = arith.constant 0 : index
    %c0_119 = arith.constant 0 : index
    %337 = vector.load %arg4[%c0_118, %c0_119] : memref<64x256xbf16, #tpu.memory_space<vmem>>, vector<64x256xbf16>
    %cst_120 = arith.constant dense<0.000000e+00> : vector<8x256xf32>
    %338 = tpu.matmul %336, %337, %cst_120 {dimension_numbers = #tpu.dot_dimension_numbers<[1], [0], [0], [1], [0, 0, 1, 1], [], []>} : vector<8x64xbf16>, vector<64x256xbf16>, vector<8x256xf32> -> vector<8x256xf32>
    %339 = arith.select %25, %333, %335 : vector<8x256xi1>, vector<8x256xf32>
    %340 = arith.addf %339, %338 : vector<8x256xf32>
    %341 = arith.mulf %340, %30 : vector<8x256xf32>
    %342 = math.tanh %341 : vector<8x256xf32>
    %343 = vector.extract_strided_slice %342 {offsets = [0, 0], sizes = [8, 192], strides = [1, 1]} : vector<8x256xf32> to vector<8x192xf32>
    %cst_121 = arith.constant 5.000000e-01 : f32
    %344 = vector.broadcast %cst_121 : f32 to vector<8x192xf32>
    %345 = arith.mulf %343, %344 : vector<8x192xf32>
    %cst_122 = arith.constant 5.000000e-01 : f32
    %346 = vector.broadcast %cst_122 : f32 to vector<8x192xf32>
    %347 = arith.addf %345, %346 : vector<8x192xf32>
    %348 = vector.extract_strided_slice %347 {offsets = [0, 0], sizes = [8, 64], strides = [1, 1]} : vector<8x192xf32> to vector<8x64xf32>
    %349 = vector.extract_strided_slice %347 {offsets = [0, 64], sizes = [8, 64], strides = [1, 1]} : vector<8x192xf32> to vector<8x64xf32>
    %350 = vector.extract_strided_slice %347 {offsets = [0, 128], sizes = [8, 64], strides = [1, 1]} : vector<8x192xf32> to vector<8x64xf32>
    %351 = vector.extract_strided_slice %342 {offsets = [0, 192], sizes = [8, 64], strides = [1, 1]} : vector<8x256xf32> to vector<8x64xf32>
    %352 = arith.mulf %349, %318 : vector<8x64xf32>
    %353 = arith.mulf %348, %351 : vector<8x64xf32>
    %354 = arith.addf %352, %353 : vector<8x64xf32>
    %355 = math.tanh %354 : vector<8x64xf32>
    %356 = arith.mulf %350, %355 : vector<8x64xf32>
    %357 = vector.extract_strided_slice %356 {offsets = [0, 0], sizes = [8, 32], strides = [1, 1]} : vector<8x64xf32> to vector<8x32xf32>
    %358 = arith.index_cast %328 : i32 to index
    %c0_123 = arith.constant 0 : index
    %359 = vector.load %arg13[%358, %c0_123] : memref<128x64xf32, #tpu.memory_space<vmem>>, vector<8x32xf32>
    tpu.vector_store %arg13[%358, %c0_123], %357 {strides = array<i32>} : memref<128x64xf32, #tpu.memory_space<vmem>>, vector<8x32xf32>,
    %360 = vector.extract_strided_slice %356 {offsets = [0, 32], sizes = [8, 32], strides = [1, 1]} : vector<8x64xf32> to vector<8x32xf32>
    %361 = arith.index_cast %331 : i32 to index
    %c32_124 = arith.constant 32 : index
    %362 = vector.load %arg13[%361, %c32_124] : memref<128x64xf32, #tpu.memory_space<vmem>>, vector<8x32xf32>
    tpu.vector_store %arg13[%361, %c32_124], %360 {strides = array<i32>} : memref<128x64xf32, #tpu.memory_space<vmem>>, vector<8x32xf32>,
    %c9_i32 = arith.constant 9 : i32
    %c8_i32_125 = arith.constant 8 : i32
    %363 = arith.muli %c9_i32, %c8_i32_125 : i32
    %364 = tpu.assume_multiple %363, 8 : i32
    %c15_i32_126 = arith.constant 15 : i32
    %365 = arith.subi %c15_i32_126, %c9_i32 : i32
    %c8_i32_127 = arith.constant 8 : i32
    %366 = arith.muli %365, %c8_i32_127 : i32
    %367 = tpu.assume_multiple %366, 8 : i32
    %368 = arith.index_cast %364 : i32 to index
    %c0_128 = arith.constant 0 : index
    %369 = vector.load %arg12[%368, %c0_128] : memref<128x256xf32, #tpu.memory_space<vmem>>, vector<8x256xf32>
    %370 = arith.index_cast %367 : i32 to index
    %c0_129 = arith.constant 0 : index
    %371 = vector.load %arg12[%370, %c0_129] : memref<128x256xf32, #tpu.memory_space<vmem>>, vector<8x256xf32>
    %372 = arith.truncf %356 : vector<8x64xf32> to vector<8x64xbf16>
    %c0_130 = arith.constant 0 : index
    %c0_131 = arith.constant 0 : index
    %373 = vector.load %arg4[%c0_130, %c0_131] : memref<64x256xbf16, #tpu.memory_space<vmem>>, vector<64x256xbf16>
    %cst_132 = arith.constant dense<0.000000e+00> : vector<8x256xf32>
    %374 = tpu.matmul %372, %373, %cst_132 {dimension_numbers = #tpu.dot_dimension_numbers<[1], [0], [0], [1], [0, 0, 1, 1], [], []>} : vector<8x64xbf16>, vector<64x256xbf16>, vector<8x256xf32> -> vector<8x256xf32>
    %375 = arith.select %25, %369, %371 : vector<8x256xi1>, vector<8x256xf32>
    %376 = arith.addf %375, %374 : vector<8x256xf32>
    %377 = arith.mulf %376, %30 : vector<8x256xf32>
    %378 = math.tanh %377 : vector<8x256xf32>
    %379 = vector.extract_strided_slice %378 {offsets = [0, 0], sizes = [8, 192], strides = [1, 1]} : vector<8x256xf32> to vector<8x192xf32>
    %cst_133 = arith.constant 5.000000e-01 : f32
    %380 = vector.broadcast %cst_133 : f32 to vector<8x192xf32>
    %381 = arith.mulf %379, %380 : vector<8x192xf32>
    %cst_134 = arith.constant 5.000000e-01 : f32
    %382 = vector.broadcast %cst_134 : f32 to vector<8x192xf32>
    %383 = arith.addf %381, %382 : vector<8x192xf32>
    %384 = vector.extract_strided_slice %383 {offsets = [0, 0], sizes = [8, 64], strides = [1, 1]} : vector<8x192xf32> to vector<8x64xf32>
    %385 = vector.extract_strided_slice %383 {offsets = [0, 64], sizes = [8, 64], strides = [1, 1]} : vector<8x192xf32> to vector<8x64xf32>
    %386 = vector.extract_strided_slice %383 {offsets = [0, 128], sizes = [8, 64], strides = [1, 1]} : vector<8x192xf32> to vector<8x64xf32>
    %387 = vector.extract_strided_slice %378 {offsets = [0, 192], sizes = [8, 64], strides = [1, 1]} : vector<8x256xf32> to vector<8x64xf32>
    %388 = arith.mulf %385, %354 : vector<8x64xf32>
    %389 = arith.mulf %384, %387 : vector<8x64xf32>
    %390 = arith.addf %388, %389 : vector<8x64xf32>
    %391 = math.tanh %390 : vector<8x64xf32>
    %392 = arith.mulf %386, %391 : vector<8x64xf32>
    %393 = vector.extract_strided_slice %392 {offsets = [0, 0], sizes = [8, 32], strides = [1, 1]} : vector<8x64xf32> to vector<8x32xf32>
    %394 = arith.index_cast %364 : i32 to index
    %c0_135 = arith.constant 0 : index
    %395 = vector.load %arg13[%394, %c0_135] : memref<128x64xf32, #tpu.memory_space<vmem>>, vector<8x32xf32>
    tpu.vector_store %arg13[%394, %c0_135], %393 {strides = array<i32>} : memref<128x64xf32, #tpu.memory_space<vmem>>, vector<8x32xf32>,
    %396 = vector.extract_strided_slice %392 {offsets = [0, 32], sizes = [8, 32], strides = [1, 1]} : vector<8x64xf32> to vector<8x32xf32>
    %397 = arith.index_cast %367 : i32 to index
    %c32_136 = arith.constant 32 : index
    %398 = vector.load %arg13[%397, %c32_136] : memref<128x64xf32, #tpu.memory_space<vmem>>, vector<8x32xf32>
    tpu.vector_store %arg13[%397, %c32_136], %396 {strides = array<i32>} : memref<128x64xf32, #tpu.memory_space<vmem>>, vector<8x32xf32>,
    %c10_i32 = arith.constant 10 : i32
    %c8_i32_137 = arith.constant 8 : i32
    %399 = arith.muli %c10_i32, %c8_i32_137 : i32
    %400 = tpu.assume_multiple %399, 8 : i32
    %c15_i32_138 = arith.constant 15 : i32
    %401 = arith.subi %c15_i32_138, %c10_i32 : i32
    %c8_i32_139 = arith.constant 8 : i32
    %402 = arith.muli %401, %c8_i32_139 : i32
    %403 = tpu.assume_multiple %402, 8 : i32
    %404 = arith.index_cast %400 : i32 to index
    %c0_140 = arith.constant 0 : index
    %405 = vector.load %arg12[%404, %c0_140] : memref<128x256xf32, #tpu.memory_space<vmem>>, vector<8x256xf32>
    %406 = arith.index_cast %403 : i32 to index
    %c0_141 = arith.constant 0 : index
    %407 = vector.load %arg12[%406, %c0_141] : memref<128x256xf32, #tpu.memory_space<vmem>>, vector<8x256xf32>
    %408 = arith.truncf %392 : vector<8x64xf32> to vector<8x64xbf16>
    %c0_142 = arith.constant 0 : index
    %c0_143 = arith.constant 0 : index
    %409 = vector.load %arg4[%c0_142, %c0_143] : memref<64x256xbf16, #tpu.memory_space<vmem>>, vector<64x256xbf16>
    %cst_144 = arith.constant dense<0.000000e+00> : vector<8x256xf32>
    %410 = tpu.matmul %408, %409, %cst_144 {dimension_numbers = #tpu.dot_dimension_numbers<[1], [0], [0], [1], [0, 0, 1, 1], [], []>} : vector<8x64xbf16>, vector<64x256xbf16>, vector<8x256xf32> -> vector<8x256xf32>
    %411 = arith.select %25, %405, %407 : vector<8x256xi1>, vector<8x256xf32>
    %412 = arith.addf %411, %410 : vector<8x256xf32>
    %413 = arith.mulf %412, %30 : vector<8x256xf32>
    %414 = math.tanh %413 : vector<8x256xf32>
    %415 = vector.extract_strided_slice %414 {offsets = [0, 0], sizes = [8, 192], strides = [1, 1]} : vector<8x256xf32> to vector<8x192xf32>
    %cst_145 = arith.constant 5.000000e-01 : f32
    %416 = vector.broadcast %cst_145 : f32 to vector<8x192xf32>
    %417 = arith.mulf %415, %416 : vector<8x192xf32>
    %cst_146 = arith.constant 5.000000e-01 : f32
    %418 = vector.broadcast %cst_146 : f32 to vector<8x192xf32>
    %419 = arith.addf %417, %418 : vector<8x192xf32>
    %420 = vector.extract_strided_slice %419 {offsets = [0, 0], sizes = [8, 64], strides = [1, 1]} : vector<8x192xf32> to vector<8x64xf32>
    %421 = vector.extract_strided_slice %419 {offsets = [0, 64], sizes = [8, 64], strides = [1, 1]} : vector<8x192xf32> to vector<8x64xf32>
    %422 = vector.extract_strided_slice %419 {offsets = [0, 128], sizes = [8, 64], strides = [1, 1]} : vector<8x192xf32> to vector<8x64xf32>
    %423 = vector.extract_strided_slice %414 {offsets = [0, 192], sizes = [8, 64], strides = [1, 1]} : vector<8x256xf32> to vector<8x64xf32>
    %424 = arith.mulf %421, %390 : vector<8x64xf32>
    %425 = arith.mulf %420, %423 : vector<8x64xf32>
    %426 = arith.addf %424, %425 : vector<8x64xf32>
    %427 = math.tanh %426 : vector<8x64xf32>
    %428 = arith.mulf %422, %427 : vector<8x64xf32>
    %429 = vector.extract_strided_slice %428 {offsets = [0, 0], sizes = [8, 32], strides = [1, 1]} : vector<8x64xf32> to vector<8x32xf32>
    %430 = arith.index_cast %400 : i32 to index
    %c0_147 = arith.constant 0 : index
    %431 = vector.load %arg13[%430, %c0_147] : memref<128x64xf32, #tpu.memory_space<vmem>>, vector<8x32xf32>
    tpu.vector_store %arg13[%430, %c0_147], %429 {strides = array<i32>} : memref<128x64xf32, #tpu.memory_space<vmem>>, vector<8x32xf32>,
    %432 = vector.extract_strided_slice %428 {offsets = [0, 32], sizes = [8, 32], strides = [1, 1]} : vector<8x64xf32> to vector<8x32xf32>
    %433 = arith.index_cast %403 : i32 to index
    %c32_148 = arith.constant 32 : index
    %434 = vector.load %arg13[%433, %c32_148] : memref<128x64xf32, #tpu.memory_space<vmem>>, vector<8x32xf32>
    tpu.vector_store %arg13[%433, %c32_148], %432 {strides = array<i32>} : memref<128x64xf32, #tpu.memory_space<vmem>>, vector<8x32xf32>,
    %c11_i32 = arith.constant 11 : i32
    %c8_i32_149 = arith.constant 8 : i32
    %435 = arith.muli %c11_i32, %c8_i32_149 : i32
    %436 = tpu.assume_multiple %435, 8 : i32
    %c15_i32_150 = arith.constant 15 : i32
    %437 = arith.subi %c15_i32_150, %c11_i32 : i32
    %c8_i32_151 = arith.constant 8 : i32
    %438 = arith.muli %437, %c8_i32_151 : i32
    %439 = tpu.assume_multiple %438, 8 : i32
    %440 = arith.index_cast %436 : i32 to index
    %c0_152 = arith.constant 0 : index
    %441 = vector.load %arg12[%440, %c0_152] : memref<128x256xf32, #tpu.memory_space<vmem>>, vector<8x256xf32>
    %442 = arith.index_cast %439 : i32 to index
    %c0_153 = arith.constant 0 : index
    %443 = vector.load %arg12[%442, %c0_153] : memref<128x256xf32, #tpu.memory_space<vmem>>, vector<8x256xf32>
    %444 = arith.truncf %428 : vector<8x64xf32> to vector<8x64xbf16>
    %c0_154 = arith.constant 0 : index
    %c0_155 = arith.constant 0 : index
    %445 = vector.load %arg4[%c0_154, %c0_155] : memref<64x256xbf16, #tpu.memory_space<vmem>>, vector<64x256xbf16>
    %cst_156 = arith.constant dense<0.000000e+00> : vector<8x256xf32>
    %446 = tpu.matmul %444, %445, %cst_156 {dimension_numbers = #tpu.dot_dimension_numbers<[1], [0], [0], [1], [0, 0, 1, 1], [], []>} : vector<8x64xbf16>, vector<64x256xbf16>, vector<8x256xf32> -> vector<8x256xf32>
    %447 = arith.select %25, %441, %443 : vector<8x256xi1>, vector<8x256xf32>
    %448 = arith.addf %447, %446 : vector<8x256xf32>
    %449 = arith.mulf %448, %30 : vector<8x256xf32>
    %450 = math.tanh %449 : vector<8x256xf32>
    %451 = vector.extract_strided_slice %450 {offsets = [0, 0], sizes = [8, 192], strides = [1, 1]} : vector<8x256xf32> to vector<8x192xf32>
    %cst_157 = arith.constant 5.000000e-01 : f32
    %452 = vector.broadcast %cst_157 : f32 to vector<8x192xf32>
    %453 = arith.mulf %451, %452 : vector<8x192xf32>
    %cst_158 = arith.constant 5.000000e-01 : f32
    %454 = vector.broadcast %cst_158 : f32 to vector<8x192xf32>
    %455 = arith.addf %453, %454 : vector<8x192xf32>
    %456 = vector.extract_strided_slice %455 {offsets = [0, 0], sizes = [8, 64], strides = [1, 1]} : vector<8x192xf32> to vector<8x64xf32>
    %457 = vector.extract_strided_slice %455 {offsets = [0, 64], sizes = [8, 64], strides = [1, 1]} : vector<8x192xf32> to vector<8x64xf32>
    %458 = vector.extract_strided_slice %455 {offsets = [0, 128], sizes = [8, 64], strides = [1, 1]} : vector<8x192xf32> to vector<8x64xf32>
    %459 = vector.extract_strided_slice %450 {offsets = [0, 192], sizes = [8, 64], strides = [1, 1]} : vector<8x256xf32> to vector<8x64xf32>
    %460 = arith.mulf %457, %426 : vector<8x64xf32>
    %461 = arith.mulf %456, %459 : vector<8x64xf32>
    %462 = arith.addf %460, %461 : vector<8x64xf32>
    %463 = math.tanh %462 : vector<8x64xf32>
    %464 = arith.mulf %458, %463 : vector<8x64xf32>
    %465 = vector.extract_strided_slice %464 {offsets = [0, 0], sizes = [8, 32], strides = [1, 1]} : vector<8x64xf32> to vector<8x32xf32>
    %466 = arith.index_cast %436 : i32 to index
    %c0_159 = arith.constant 0 : index
    %467 = vector.load %arg13[%466, %c0_159] : memref<128x64xf32, #tpu.memory_space<vmem>>, vector<8x32xf32>
    tpu.vector_store %arg13[%466, %c0_159], %465 {strides = array<i32>} : memref<128x64xf32, #tpu.memory_space<vmem>>, vector<8x32xf32>,
    %468 = vector.extract_strided_slice %464 {offsets = [0, 32], sizes = [8, 32], strides = [1, 1]} : vector<8x64xf32> to vector<8x32xf32>
    %469 = arith.index_cast %439 : i32 to index
    %c32_160 = arith.constant 32 : index
    %470 = vector.load %arg13[%469, %c32_160] : memref<128x64xf32, #tpu.memory_space<vmem>>, vector<8x32xf32>
    tpu.vector_store %arg13[%469, %c32_160], %468 {strides = array<i32>} : memref<128x64xf32, #tpu.memory_space<vmem>>, vector<8x32xf32>,
    %c12_i32 = arith.constant 12 : i32
    %c8_i32_161 = arith.constant 8 : i32
    %471 = arith.muli %c12_i32, %c8_i32_161 : i32
    %472 = tpu.assume_multiple %471, 8 : i32
    %c15_i32_162 = arith.constant 15 : i32
    %473 = arith.subi %c15_i32_162, %c12_i32 : i32
    %c8_i32_163 = arith.constant 8 : i32
    %474 = arith.muli %473, %c8_i32_163 : i32
    %475 = tpu.assume_multiple %474, 8 : i32
    %476 = arith.index_cast %472 : i32 to index
    %c0_164 = arith.constant 0 : index
    %477 = vector.load %arg12[%476, %c0_164] : memref<128x256xf32, #tpu.memory_space<vmem>>, vector<8x256xf32>
    %478 = arith.index_cast %475 : i32 to index
    %c0_165 = arith.constant 0 : index
    %479 = vector.load %arg12[%478, %c0_165] : memref<128x256xf32, #tpu.memory_space<vmem>>, vector<8x256xf32>
    %480 = arith.truncf %464 : vector<8x64xf32> to vector<8x64xbf16>
    %c0_166 = arith.constant 0 : index
    %c0_167 = arith.constant 0 : index
    %481 = vector.load %arg4[%c0_166, %c0_167] : memref<64x256xbf16, #tpu.memory_space<vmem>>, vector<64x256xbf16>
    %cst_168 = arith.constant dense<0.000000e+00> : vector<8x256xf32>
    %482 = tpu.matmul %480, %481, %cst_168 {dimension_numbers = #tpu.dot_dimension_numbers<[1], [0], [0], [1], [0, 0, 1, 1], [], []>} : vector<8x64xbf16>, vector<64x256xbf16>, vector<8x256xf32> -> vector<8x256xf32>
    %483 = arith.select %25, %477, %479 : vector<8x256xi1>, vector<8x256xf32>
    %484 = arith.addf %483, %482 : vector<8x256xf32>
    %485 = arith.mulf %484, %30 : vector<8x256xf32>
    %486 = math.tanh %485 : vector<8x256xf32>
    %487 = vector.extract_strided_slice %486 {offsets = [0, 0], sizes = [8, 192], strides = [1, 1]} : vector<8x256xf32> to vector<8x192xf32>
    %cst_169 = arith.constant 5.000000e-01 : f32
    %488 = vector.broadcast %cst_169 : f32 to vector<8x192xf32>
    %489 = arith.mulf %487, %488 : vector<8x192xf32>
    %cst_170 = arith.constant 5.000000e-01 : f32
    %490 = vector.broadcast %cst_170 : f32 to vector<8x192xf32>
    %491 = arith.addf %489, %490 : vector<8x192xf32>
    %492 = vector.extract_strided_slice %491 {offsets = [0, 0], sizes = [8, 64], strides = [1, 1]} : vector<8x192xf32> to vector<8x64xf32>
    %493 = vector.extract_strided_slice %491 {offsets = [0, 64], sizes = [8, 64], strides = [1, 1]} : vector<8x192xf32> to vector<8x64xf32>
    %494 = vector.extract_strided_slice %491 {offsets = [0, 128], sizes = [8, 64], strides = [1, 1]} : vector<8x192xf32> to vector<8x64xf32>
    %495 = vector.extract_strided_slice %486 {offsets = [0, 192], sizes = [8, 64], strides = [1, 1]} : vector<8x256xf32> to vector<8x64xf32>
    %496 = arith.mulf %493, %462 : vector<8x64xf32>
    %497 = arith.mulf %492, %495 : vector<8x64xf32>
    %498 = arith.addf %496, %497 : vector<8x64xf32>
    %499 = math.tanh %498 : vector<8x64xf32>
    %500 = arith.mulf %494, %499 : vector<8x64xf32>
    %501 = vector.extract_strided_slice %500 {offsets = [0, 0], sizes = [8, 32], strides = [1, 1]} : vector<8x64xf32> to vector<8x32xf32>
    %502 = arith.index_cast %472 : i32 to index
    %c0_171 = arith.constant 0 : index
    %503 = vector.load %arg13[%502, %c0_171] : memref<128x64xf32, #tpu.memory_space<vmem>>, vector<8x32xf32>
    tpu.vector_store %arg13[%502, %c0_171], %501 {strides = array<i32>} : memref<128x64xf32, #tpu.memory_space<vmem>>, vector<8x32xf32>,
    %504 = vector.extract_strided_slice %500 {offsets = [0, 32], sizes = [8, 32], strides = [1, 1]} : vector<8x64xf32> to vector<8x32xf32>
    %505 = arith.index_cast %475 : i32 to index
    %c32_172 = arith.constant 32 : index
    %506 = vector.load %arg13[%505, %c32_172] : memref<128x64xf32, #tpu.memory_space<vmem>>, vector<8x32xf32>
    tpu.vector_store %arg13[%505, %c32_172], %504 {strides = array<i32>} : memref<128x64xf32, #tpu.memory_space<vmem>>, vector<8x32xf32>,
    %c13_i32 = arith.constant 13 : i32
    %c8_i32_173 = arith.constant 8 : i32
    %507 = arith.muli %c13_i32, %c8_i32_173 : i32
    %508 = tpu.assume_multiple %507, 8 : i32
    %c15_i32_174 = arith.constant 15 : i32
    %509 = arith.subi %c15_i32_174, %c13_i32 : i32
    %c8_i32_175 = arith.constant 8 : i32
    %510 = arith.muli %509, %c8_i32_175 : i32
    %511 = tpu.assume_multiple %510, 8 : i32
    %512 = arith.index_cast %508 : i32 to index
    %c0_176 = arith.constant 0 : index
    %513 = vector.load %arg12[%512, %c0_176] : memref<128x256xf32, #tpu.memory_space<vmem>>, vector<8x256xf32>
    %514 = arith.index_cast %511 : i32 to index
    %c0_177 = arith.constant 0 : index
    %515 = vector.load %arg12[%514, %c0_177] : memref<128x256xf32, #tpu.memory_space<vmem>>, vector<8x256xf32>
    %516 = arith.truncf %500 : vector<8x64xf32> to vector<8x64xbf16>
    %c0_178 = arith.constant 0 : index
    %c0_179 = arith.constant 0 : index
    %517 = vector.load %arg4[%c0_178, %c0_179] : memref<64x256xbf16, #tpu.memory_space<vmem>>, vector<64x256xbf16>
    %cst_180 = arith.constant dense<0.000000e+00> : vector<8x256xf32>
    %518 = tpu.matmul %516, %517, %cst_180 {dimension_numbers = #tpu.dot_dimension_numbers<[1], [0], [0], [1], [0, 0, 1, 1], [], []>} : vector<8x64xbf16>, vector<64x256xbf16>, vector<8x256xf32> -> vector<8x256xf32>
    %519 = arith.select %25, %513, %515 : vector<8x256xi1>, vector<8x256xf32>
    %520 = arith.addf %519, %518 : vector<8x256xf32>
    %521 = arith.mulf %520, %30 : vector<8x256xf32>
    %522 = math.tanh %521 : vector<8x256xf32>
    %523 = vector.extract_strided_slice %522 {offsets = [0, 0], sizes = [8, 192], strides = [1, 1]} : vector<8x256xf32> to vector<8x192xf32>
    %cst_181 = arith.constant 5.000000e-01 : f32
    %524 = vector.broadcast %cst_181 : f32 to vector<8x192xf32>
    %525 = arith.mulf %523, %524 : vector<8x192xf32>
    %cst_182 = arith.constant 5.000000e-01 : f32
    %526 = vector.broadcast %cst_182 : f32 to vector<8x192xf32>
    %527 = arith.addf %525, %526 : vector<8x192xf32>
    %528 = vector.extract_strided_slice %527 {offsets = [0, 0], sizes = [8, 64], strides = [1, 1]} : vector<8x192xf32> to vector<8x64xf32>
    %529 = vector.extract_strided_slice %527 {offsets = [0, 64], sizes = [8, 64], strides = [1, 1]} : vector<8x192xf32> to vector<8x64xf32>
    %530 = vector.extract_strided_slice %527 {offsets = [0, 128], sizes = [8, 64], strides = [1, 1]} : vector<8x192xf32> to vector<8x64xf32>
    %531 = vector.extract_strided_slice %522 {offsets = [0, 192], sizes = [8, 64], strides = [1, 1]} : vector<8x256xf32> to vector<8x64xf32>
    %532 = arith.mulf %529, %498 : vector<8x64xf32>
    %533 = arith.mulf %528, %531 : vector<8x64xf32>
    %534 = arith.addf %532, %533 : vector<8x64xf32>
    %535 = math.tanh %534 : vector<8x64xf32>
    %536 = arith.mulf %530, %535 : vector<8x64xf32>
    %537 = vector.extract_strided_slice %536 {offsets = [0, 0], sizes = [8, 32], strides = [1, 1]} : vector<8x64xf32> to vector<8x32xf32>
    %538 = arith.index_cast %508 : i32 to index
    %c0_183 = arith.constant 0 : index
    %539 = vector.load %arg13[%538, %c0_183] : memref<128x64xf32, #tpu.memory_space<vmem>>, vector<8x32xf32>
    tpu.vector_store %arg13[%538, %c0_183], %537 {strides = array<i32>} : memref<128x64xf32, #tpu.memory_space<vmem>>, vector<8x32xf32>,
    %540 = vector.extract_strided_slice %536 {offsets = [0, 32], sizes = [8, 32], strides = [1, 1]} : vector<8x64xf32> to vector<8x32xf32>
    %541 = arith.index_cast %511 : i32 to index
    %c32_184 = arith.constant 32 : index
    %542 = vector.load %arg13[%541, %c32_184] : memref<128x64xf32, #tpu.memory_space<vmem>>, vector<8x32xf32>
    tpu.vector_store %arg13[%541, %c32_184], %540 {strides = array<i32>} : memref<128x64xf32, #tpu.memory_space<vmem>>, vector<8x32xf32>,
    %c14_i32 = arith.constant 14 : i32
    %c8_i32_185 = arith.constant 8 : i32
    %543 = arith.muli %c14_i32, %c8_i32_185 : i32
    %544 = tpu.assume_multiple %543, 8 : i32
    %c15_i32_186 = arith.constant 15 : i32
    %545 = arith.subi %c15_i32_186, %c14_i32 : i32
    %c8_i32_187 = arith.constant 8 : i32
    %546 = arith.muli %545, %c8_i32_187 : i32
    %547 = tpu.assume_multiple %546, 8 : i32
    %548 = arith.index_cast %544 : i32 to index
    %c0_188 = arith.constant 0 : index
    %549 = vector.load %arg12[%548, %c0_188] : memref<128x256xf32, #tpu.memory_space<vmem>>, vector<8x256xf32>
    %550 = arith.index_cast %547 : i32 to index
    %c0_189 = arith.constant 0 : index
    %551 = vector.load %arg12[%550, %c0_189] : memref<128x256xf32, #tpu.memory_space<vmem>>, vector<8x256xf32>
    %552 = arith.truncf %536 : vector<8x64xf32> to vector<8x64xbf16>
    %c0_190 = arith.constant 0 : index
    %c0_191 = arith.constant 0 : index
    %553 = vector.load %arg4[%c0_190, %c0_191] : memref<64x256xbf16, #tpu.memory_space<vmem>>, vector<64x256xbf16>
    %cst_192 = arith.constant dense<0.000000e+00> : vector<8x256xf32>
    %554 = tpu.matmul %552, %553, %cst_192 {dimension_numbers = #tpu.dot_dimension_numbers<[1], [0], [0], [1], [0, 0, 1, 1], [], []>} : vector<8x64xbf16>, vector<64x256xbf16>, vector<8x256xf32> -> vector<8x256xf32>
    %555 = arith.select %25, %549, %551 : vector<8x256xi1>, vector<8x256xf32>
    %556 = arith.addf %555, %554 : vector<8x256xf32>
    %557 = arith.mulf %556, %30 : vector<8x256xf32>
    %558 = math.tanh %557 : vector<8x256xf32>
    %559 = vector.extract_strided_slice %558 {offsets = [0, 0], sizes = [8, 192], strides = [1, 1]} : vector<8x256xf32> to vector<8x192xf32>
    %cst_193 = arith.constant 5.000000e-01 : f32
    %560 = vector.broadcast %cst_193 : f32 to vector<8x192xf32>
    %561 = arith.mulf %559, %560 : vector<8x192xf32>
    %cst_194 = arith.constant 5.000000e-01 : f32
    %562 = vector.broadcast %cst_194 : f32 to vector<8x192xf32>
    %563 = arith.addf %561, %562 : vector<8x192xf32>
    %564 = vector.extract_strided_slice %563 {offsets = [0, 0], sizes = [8, 64], strides = [1, 1]} : vector<8x192xf32> to vector<8x64xf32>
    %565 = vector.extract_strided_slice %563 {offsets = [0, 64], sizes = [8, 64], strides = [1, 1]} : vector<8x192xf32> to vector<8x64xf32>
    %566 = vector.extract_strided_slice %563 {offsets = [0, 128], sizes = [8, 64], strides = [1, 1]} : vector<8x192xf32> to vector<8x64xf32>
    %567 = vector.extract_strided_slice %558 {offsets = [0, 192], sizes = [8, 64], strides = [1, 1]} : vector<8x256xf32> to vector<8x64xf32>
    %568 = arith.mulf %565, %534 : vector<8x64xf32>
    %569 = arith.mulf %564, %567 : vector<8x64xf32>
    %570 = arith.addf %568, %569 : vector<8x64xf32>
    %571 = math.tanh %570 : vector<8x64xf32>
    %572 = arith.mulf %566, %571 : vector<8x64xf32>
    %573 = vector.extract_strided_slice %572 {offsets = [0, 0], sizes = [8, 32], strides = [1, 1]} : vector<8x64xf32> to vector<8x32xf32>
    %574 = arith.index_cast %544 : i32 to index
    %c0_195 = arith.constant 0 : index
    %575 = vector.load %arg13[%574, %c0_195] : memref<128x64xf32, #tpu.memory_space<vmem>>, vector<8x32xf32>
    tpu.vector_store %arg13[%574, %c0_195], %573 {strides = array<i32>} : memref<128x64xf32, #tpu.memory_space<vmem>>, vector<8x32xf32>,
    %576 = vector.extract_strided_slice %572 {offsets = [0, 32], sizes = [8, 32], strides = [1, 1]} : vector<8x64xf32> to vector<8x32xf32>
    %577 = arith.index_cast %547 : i32 to index
    %c32_196 = arith.constant 32 : index
    %578 = vector.load %arg13[%577, %c32_196] : memref<128x64xf32, #tpu.memory_space<vmem>>, vector<8x32xf32>
    tpu.vector_store %arg13[%577, %c32_196], %576 {strides = array<i32>} : memref<128x64xf32, #tpu.memory_space<vmem>>, vector<8x32xf32>,
    %c15_i32_197 = arith.constant 15 : i32
    %c8_i32_198 = arith.constant 8 : i32
    %579 = arith.muli %c15_i32_197, %c8_i32_198 : i32
    %580 = tpu.assume_multiple %579, 8 : i32
    %c15_i32_199 = arith.constant 15 : i32
    %581 = arith.subi %c15_i32_199, %c15_i32_197 : i32
    %c8_i32_200 = arith.constant 8 : i32
    %582 = arith.muli %581, %c8_i32_200 : i32
    %583 = tpu.assume_multiple %582, 8 : i32
    %584 = arith.index_cast %580 : i32 to index
    %c0_201 = arith.constant 0 : index
    %585 = vector.load %arg12[%584, %c0_201] : memref<128x256xf32, #tpu.memory_space<vmem>>, vector<8x256xf32>
    %586 = arith.index_cast %583 : i32 to index
    %c0_202 = arith.constant 0 : index
    %587 = vector.load %arg12[%586, %c0_202] : memref<128x256xf32, #tpu.memory_space<vmem>>, vector<8x256xf32>
    %588 = arith.truncf %572 : vector<8x64xf32> to vector<8x64xbf16>
    %c0_203 = arith.constant 0 : index
    %c0_204 = arith.constant 0 : index
    %589 = vector.load %arg4[%c0_203, %c0_204] : memref<64x256xbf16, #tpu.memory_space<vmem>>, vector<64x256xbf16>
    %cst_205 = arith.constant dense<0.000000e+00> : vector<8x256xf32>
    %590 = tpu.matmul %588, %589, %cst_205 {dimension_numbers = #tpu.dot_dimension_numbers<[1], [0], [0], [1], [0, 0, 1, 1], [], []>} : vector<8x64xbf16>, vector<64x256xbf16>, vector<8x256xf32> -> vector<8x256xf32>
    %591 = arith.select %25, %585, %587 : vector<8x256xi1>, vector<8x256xf32>
    %592 = arith.addf %591, %590 : vector<8x256xf32>
    %593 = arith.mulf %592, %30 : vector<8x256xf32>
    %594 = math.tanh %593 : vector<8x256xf32>
    %595 = vector.extract_strided_slice %594 {offsets = [0, 0], sizes = [8, 192], strides = [1, 1]} : vector<8x256xf32> to vector<8x192xf32>
    %cst_206 = arith.constant 5.000000e-01 : f32
    %596 = vector.broadcast %cst_206 : f32 to vector<8x192xf32>
    %597 = arith.mulf %595, %596 : vector<8x192xf32>
    %cst_207 = arith.constant 5.000000e-01 : f32
    %598 = vector.broadcast %cst_207 : f32 to vector<8x192xf32>
    %599 = arith.addf %597, %598 : vector<8x192xf32>
    %600 = vector.extract_strided_slice %599 {offsets = [0, 0], sizes = [8, 64], strides = [1, 1]} : vector<8x192xf32> to vector<8x64xf32>
    %601 = vector.extract_strided_slice %599 {offsets = [0, 64], sizes = [8, 64], strides = [1, 1]} : vector<8x192xf32> to vector<8x64xf32>
    %602 = vector.extract_strided_slice %599 {offsets = [0, 128], sizes = [8, 64], strides = [1, 1]} : vector<8x192xf32> to vector<8x64xf32>
    %603 = vector.extract_strided_slice %594 {offsets = [0, 192], sizes = [8, 64], strides = [1, 1]} : vector<8x256xf32> to vector<8x64xf32>
    %604 = arith.mulf %601, %570 : vector<8x64xf32>
    %605 = arith.mulf %600, %603 : vector<8x64xf32>
    %606 = arith.addf %604, %605 : vector<8x64xf32>
    %607 = math.tanh %606 : vector<8x64xf32>
    %608 = arith.mulf %602, %607 : vector<8x64xf32>
    %609 = vector.extract_strided_slice %608 {offsets = [0, 0], sizes = [8, 32], strides = [1, 1]} : vector<8x64xf32> to vector<8x32xf32>
    %610 = arith.index_cast %580 : i32 to index
    %c0_208 = arith.constant 0 : index
    %611 = vector.load %arg13[%610, %c0_208] : memref<128x64xf32, #tpu.memory_space<vmem>>, vector<8x32xf32>
    tpu.vector_store %arg13[%610, %c0_208], %609 {strides = array<i32>} : memref<128x64xf32, #tpu.memory_space<vmem>>, vector<8x32xf32>,
    %612 = vector.extract_strided_slice %608 {offsets = [0, 32], sizes = [8, 32], strides = [1, 1]} : vector<8x64xf32> to vector<8x32xf32>
    %613 = arith.index_cast %583 : i32 to index
    %c32_209 = arith.constant 32 : index
    %614 = vector.load %arg13[%613, %c32_209] : memref<128x64xf32, #tpu.memory_space<vmem>>, vector<8x32xf32>
    tpu.vector_store %arg13[%613, %c32_209], %612 {strides = array<i32>} : memref<128x64xf32, #tpu.memory_space<vmem>>, vector<8x32xf32>,
    %c16_i32 = arith.constant 16 : i32
    %c0_210 = arith.constant 0 : index
    %c0_211 = arith.constant 0 : index
    %615 = vector.load %arg13[%c0_210, %c0_211] : memref<128x64xf32, #tpu.memory_space<vmem>>, vector<128x64xf32>
    %616 = arith.truncf %615 : vector<128x64xf32> to vector<128x64xbf16>
    %c0_212 = arith.constant 0 : index
    %c0_213 = arith.constant 0 : index
    %617 = vector.load %arg6[%c0_212, %c0_213] : memref<64x256xbf16, #tpu.memory_space<vmem>>, vector<64x256xbf16>
    %cst_214 = arith.constant dense<0.000000e+00> : vector<128x256xf32>
    %618 = tpu.matmul %616, %617, %cst_214 {dimension_numbers = #tpu.dot_dimension_numbers<[1], [0], [0], [1], [0, 0, 1, 1], [], []>} : vector<128x64xbf16>, vector<64x256xbf16>, vector<128x256xf32> -> vector<128x256xf32>
    %c0_215 = arith.constant 0 : index
    %c0_216 = arith.constant 0 : index
    %619 = vector.load %arg8[%c0_215, %c0_216] : memref<1x256xf32, #tpu.memory_space<vmem>>, vector<1x256xf32>
    %620 = vector.broadcast %619 : vector<1x256xf32> to vector<128x256xf32>
    %621 = arith.addf %618, %620 : vector<128x256xf32>
    %c0_217 = arith.constant 0 : index
    %c0_218 = arith.constant 0 : index
    %622 = vector.load %arg12[%c0_217, %c0_218] : memref<128x256xf32, #tpu.memory_space<vmem>>, vector<128x256xf32>
    tpu.vector_store %arg12[%c0_217, %c0_218], %621 {strides = array<i32>} : memref<128x256xf32, #tpu.memory_space<vmem>>, vector<128x256xf32>,
    %cst_219 = arith.constant 0.000000e+00 : f32
    %623 = vector.broadcast %cst_219 : f32 to vector<8x64xf32>
    %c0_i32_220 = arith.constant 0 : i32
    %c8_i32_221 = arith.constant 8 : i32
    %624 = arith.muli %c0_i32_220, %c8_i32_221 : i32
    %625 = tpu.assume_multiple %624, 8 : i32
    %c15_i32_222 = arith.constant 15 : i32
    %626 = arith.subi %c15_i32_222, %c0_i32_220 : i32
    %c8_i32_223 = arith.constant 8 : i32
    %627 = arith.muli %626, %c8_i32_223 : i32
    %628 = tpu.assume_multiple %627, 8 : i32
    %629 = arith.index_cast %625 : i32 to index
    %c0_224 = arith.constant 0 : index
    %630 = vector.load %arg12[%629, %c0_224] : memref<128x256xf32, #tpu.memory_space<vmem>>, vector<8x256xf32>
    %631 = arith.index_cast %628 : i32 to index
    %c0_225 = arith.constant 0 : index
    %632 = vector.load %arg12[%631, %c0_225] : memref<128x256xf32, #tpu.memory_space<vmem>>, vector<8x256xf32>
    %633 = arith.truncf %623 : vector<8x64xf32> to vector<8x64xbf16>
    %c0_226 = arith.constant 0 : index
    %c0_227 = arith.constant 0 : index
    %634 = vector.load %arg7[%c0_226, %c0_227] : memref<64x256xbf16, #tpu.memory_space<vmem>>, vector<64x256xbf16>
    %cst_228 = arith.constant dense<0.000000e+00> : vector<8x256xf32>
    %635 = tpu.matmul %633, %634, %cst_228 {dimension_numbers = #tpu.dot_dimension_numbers<[1], [0], [0], [1], [0, 0, 1, 1], [], []>} : vector<8x64xbf16>, vector<64x256xbf16>, vector<8x256xf32> -> vector<8x256xf32>
    %636 = arith.select %25, %630, %632 : vector<8x256xi1>, vector<8x256xf32>
    %637 = arith.addf %636, %635 : vector<8x256xf32>
    %638 = arith.mulf %637, %30 : vector<8x256xf32>
    %639 = math.tanh %638 : vector<8x256xf32>
    %640 = vector.extract_strided_slice %639 {offsets = [0, 0], sizes = [8, 192], strides = [1, 1]} : vector<8x256xf32> to vector<8x192xf32>
    %cst_229 = arith.constant 5.000000e-01 : f32
    %641 = vector.broadcast %cst_229 : f32 to vector<8x192xf32>
    %642 = arith.mulf %640, %641 : vector<8x192xf32>
    %cst_230 = arith.constant 5.000000e-01 : f32
    %643 = vector.broadcast %cst_230 : f32 to vector<8x192xf32>
    %644 = arith.addf %642, %643 : vector<8x192xf32>
    %645 = vector.extract_strided_slice %644 {offsets = [0, 0], sizes = [8, 64], strides = [1, 1]} : vector<8x192xf32> to vector<8x64xf32>
    %646 = vector.extract_strided_slice %644 {offsets = [0, 64], sizes = [8, 64], strides = [1, 1]} : vector<8x192xf32> to vector<8x64xf32>
    %647 = vector.extract_strided_slice %644 {offsets = [0, 128], sizes = [8, 64], strides = [1, 1]} : vector<8x192xf32> to vector<8x64xf32>
    %648 = vector.extract_strided_slice %639 {offsets = [0, 192], sizes = [8, 64], strides = [1, 1]} : vector<8x256xf32> to vector<8x64xf32>
    %649 = arith.mulf %646, %623 : vector<8x64xf32>
    %650 = arith.mulf %645, %648 : vector<8x64xf32>
    %651 = arith.addf %649, %650 : vector<8x64xf32>
    %652 = math.tanh %651 : vector<8x64xf32>
    %653 = arith.mulf %647, %652 : vector<8x64xf32>
    %654 = vector.extract_strided_slice %653 {offsets = [0, 0], sizes = [8, 32], strides = [1, 1]} : vector<8x64xf32> to vector<8x32xf32>
    %655 = arith.index_cast %625 : i32 to index
    %c0_231 = arith.constant 0 : index
    %656 = vector.load %arg13[%655, %c0_231] : memref<128x64xf32, #tpu.memory_space<vmem>>, vector<8x32xf32>
    tpu.vector_store %arg13[%655, %c0_231], %654 {strides = array<i32>} : memref<128x64xf32, #tpu.memory_space<vmem>>, vector<8x32xf32>,
    %657 = vector.extract_strided_slice %653 {offsets = [0, 32], sizes = [8, 32], strides = [1, 1]} : vector<8x64xf32> to vector<8x32xf32>
    %658 = arith.index_cast %628 : i32 to index
    %c32_232 = arith.constant 32 : index
    %659 = vector.load %arg13[%658, %c32_232] : memref<128x64xf32, #tpu.memory_space<vmem>>, vector<8x32xf32>
    tpu.vector_store %arg13[%658, %c32_232], %657 {strides = array<i32>} : memref<128x64xf32, #tpu.memory_space<vmem>>, vector<8x32xf32>,
    %c1_i32_233 = arith.constant 1 : i32
    %c8_i32_234 = arith.constant 8 : i32
    %660 = arith.muli %c1_i32_233, %c8_i32_234 : i32
    %661 = tpu.assume_multiple %660, 8 : i32
    %c15_i32_235 = arith.constant 15 : i32
    %662 = arith.subi %c15_i32_235, %c1_i32_233 : i32
    %c8_i32_236 = arith.constant 8 : i32
    %663 = arith.muli %662, %c8_i32_236 : i32
    %664 = tpu.assume_multiple %663, 8 : i32
    %665 = arith.index_cast %661 : i32 to index
    %c0_237 = arith.constant 0 : index
    %666 = vector.load %arg12[%665, %c0_237] : memref<128x256xf32, #tpu.memory_space<vmem>>, vector<8x256xf32>
    %667 = arith.index_cast %664 : i32 to index
    %c0_238 = arith.constant 0 : index
    %668 = vector.load %arg12[%667, %c0_238] : memref<128x256xf32, #tpu.memory_space<vmem>>, vector<8x256xf32>
    %669 = arith.truncf %653 : vector<8x64xf32> to vector<8x64xbf16>
    %c0_239 = arith.constant 0 : index
    %c0_240 = arith.constant 0 : index
    %670 = vector.load %arg7[%c0_239, %c0_240] : memref<64x256xbf16, #tpu.memory_space<vmem>>, vector<64x256xbf16>
    %cst_241 = arith.constant dense<0.000000e+00> : vector<8x256xf32>
    %671 = tpu.matmul %669, %670, %cst_241 {dimension_numbers = #tpu.dot_dimension_numbers<[1], [0], [0], [1], [0, 0, 1, 1], [], []>} : vector<8x64xbf16>, vector<64x256xbf16>, vector<8x256xf32> -> vector<8x256xf32>
    %672 = arith.select %25, %666, %668 : vector<8x256xi1>, vector<8x256xf32>
    %673 = arith.addf %672, %671 : vector<8x256xf32>
    %674 = arith.mulf %673, %30 : vector<8x256xf32>
    %675 = math.tanh %674 : vector<8x256xf32>
    %676 = vector.extract_strided_slice %675 {offsets = [0, 0], sizes = [8, 192], strides = [1, 1]} : vector<8x256xf32> to vector<8x192xf32>
    %cst_242 = arith.constant 5.000000e-01 : f32
    %677 = vector.broadcast %cst_242 : f32 to vector<8x192xf32>
    %678 = arith.mulf %676, %677 : vector<8x192xf32>
    %cst_243 = arith.constant 5.000000e-01 : f32
    %679 = vector.broadcast %cst_243 : f32 to vector<8x192xf32>
    %680 = arith.addf %678, %679 : vector<8x192xf32>
    %681 = vector.extract_strided_slice %680 {offsets = [0, 0], sizes = [8, 64], strides = [1, 1]} : vector<8x192xf32> to vector<8x64xf32>
    %682 = vector.extract_strided_slice %680 {offsets = [0, 64], sizes = [8, 64], strides = [1, 1]} : vector<8x192xf32> to vector<8x64xf32>
    %683 = vector.extract_strided_slice %680 {offsets = [0, 128], sizes = [8, 64], strides = [1, 1]} : vector<8x192xf32> to vector<8x64xf32>
    %684 = vector.extract_strided_slice %675 {offsets = [0, 192], sizes = [8, 64], strides = [1, 1]} : vector<8x256xf32> to vector<8x64xf32>
    %685 = arith.mulf %682, %651 : vector<8x64xf32>
    %686 = arith.mulf %681, %684 : vector<8x64xf32>
    %687 = arith.addf %685, %686 : vector<8x64xf32>
    %688 = math.tanh %687 : vector<8x64xf32>
    %689 = arith.mulf %683, %688 : vector<8x64xf32>
    %690 = vector.extract_strided_slice %689 {offsets = [0, 0], sizes = [8, 32], strides = [1, 1]} : vector<8x64xf32> to vector<8x32xf32>
    %691 = arith.index_cast %661 : i32 to index
    %c0_244 = arith.constant 0 : index
    %692 = vector.load %arg13[%691, %c0_244] : memref<128x64xf32, #tpu.memory_space<vmem>>, vector<8x32xf32>
    tpu.vector_store %arg13[%691, %c0_244], %690 {strides = array<i32>} : memref<128x64xf32, #tpu.memory_space<vmem>>, vector<8x32xf32>,
    %693 = vector.extract_strided_slice %689 {offsets = [0, 32], sizes = [8, 32], strides = [1, 1]} : vector<8x64xf32> to vector<8x32xf32>
    %694 = arith.index_cast %664 : i32 to index
    %c32_245 = arith.constant 32 : index
    %695 = vector.load %arg13[%694, %c32_245] : memref<128x64xf32, #tpu.memory_space<vmem>>, vector<8x32xf32>
    tpu.vector_store %arg13[%694, %c32_245], %693 {strides = array<i32>} : memref<128x64xf32, #tpu.memory_space<vmem>>, vector<8x32xf32>,
    %c2_i32_246 = arith.constant 2 : i32
    %c8_i32_247 = arith.constant 8 : i32
    %696 = arith.muli %c2_i32_246, %c8_i32_247 : i32
    %697 = tpu.assume_multiple %696, 8 : i32
    %c15_i32_248 = arith.constant 15 : i32
    %698 = arith.subi %c15_i32_248, %c2_i32_246 : i32
    %c8_i32_249 = arith.constant 8 : i32
    %699 = arith.muli %698, %c8_i32_249 : i32
    %700 = tpu.assume_multiple %699, 8 : i32
    %701 = arith.index_cast %697 : i32 to index
    %c0_250 = arith.constant 0 : index
    %702 = vector.load %arg12[%701, %c0_250] : memref<128x256xf32, #tpu.memory_space<vmem>>, vector<8x256xf32>
    %703 = arith.index_cast %700 : i32 to index
    %c0_251 = arith.constant 0 : index
    %704 = vector.load %arg12[%703, %c0_251] : memref<128x256xf32, #tpu.memory_space<vmem>>, vector<8x256xf32>
    %705 = arith.truncf %689 : vector<8x64xf32> to vector<8x64xbf16>
    %c0_252 = arith.constant 0 : index
    %c0_253 = arith.constant 0 : index
    %706 = vector.load %arg7[%c0_252, %c0_253] : memref<64x256xbf16, #tpu.memory_space<vmem>>, vector<64x256xbf16>
    %cst_254 = arith.constant dense<0.000000e+00> : vector<8x256xf32>
    %707 = tpu.matmul %705, %706, %cst_254 {dimension_numbers = #tpu.dot_dimension_numbers<[1], [0], [0], [1], [0, 0, 1, 1], [], []>} : vector<8x64xbf16>, vector<64x256xbf16>, vector<8x256xf32> -> vector<8x256xf32>
    %708 = arith.select %25, %702, %704 : vector<8x256xi1>, vector<8x256xf32>
    %709 = arith.addf %708, %707 : vector<8x256xf32>
    %710 = arith.mulf %709, %30 : vector<8x256xf32>
    %711 = math.tanh %710 : vector<8x256xf32>
    %712 = vector.extract_strided_slice %711 {offsets = [0, 0], sizes = [8, 192], strides = [1, 1]} : vector<8x256xf32> to vector<8x192xf32>
    %cst_255 = arith.constant 5.000000e-01 : f32
    %713 = vector.broadcast %cst_255 : f32 to vector<8x192xf32>
    %714 = arith.mulf %712, %713 : vector<8x192xf32>
    %cst_256 = arith.constant 5.000000e-01 : f32
    %715 = vector.broadcast %cst_256 : f32 to vector<8x192xf32>
    %716 = arith.addf %714, %715 : vector<8x192xf32>
    %717 = vector.extract_strided_slice %716 {offsets = [0, 0], sizes = [8, 64], strides = [1, 1]} : vector<8x192xf32> to vector<8x64xf32>
    %718 = vector.extract_strided_slice %716 {offsets = [0, 64], sizes = [8, 64], strides = [1, 1]} : vector<8x192xf32> to vector<8x64xf32>
    %719 = vector.extract_strided_slice %716 {offsets = [0, 128], sizes = [8, 64], strides = [1, 1]} : vector<8x192xf32> to vector<8x64xf32>
    %720 = vector.extract_strided_slice %711 {offsets = [0, 192], sizes = [8, 64], strides = [1, 1]} : vector<8x256xf32> to vector<8x64xf32>
    %721 = arith.mulf %718, %687 : vector<8x64xf32>
    %722 = arith.mulf %717, %720 : vector<8x64xf32>
    %723 = arith.addf %721, %722 : vector<8x64xf32>
    %724 = math.tanh %723 : vector<8x64xf32>
    %725 = arith.mulf %719, %724 : vector<8x64xf32>
    %726 = vector.extract_strided_slice %725 {offsets = [0, 0], sizes = [8, 32], strides = [1, 1]} : vector<8x64xf32> to vector<8x32xf32>
    %727 = arith.index_cast %697 : i32 to index
    %c0_257 = arith.constant 0 : index
    %728 = vector.load %arg13[%727, %c0_257] : memref<128x64xf32, #tpu.memory_space<vmem>>, vector<8x32xf32>
    tpu.vector_store %arg13[%727, %c0_257], %726 {strides = array<i32>} : memref<128x64xf32, #tpu.memory_space<vmem>>, vector<8x32xf32>,
    %729 = vector.extract_strided_slice %725 {offsets = [0, 32], sizes = [8, 32], strides = [1, 1]} : vector<8x64xf32> to vector<8x32xf32>
    %730 = arith.index_cast %700 : i32 to index
    %c32_258 = arith.constant 32 : index
    %731 = vector.load %arg13[%730, %c32_258] : memref<128x64xf32, #tpu.memory_space<vmem>>, vector<8x32xf32>
    tpu.vector_store %arg13[%730, %c32_258], %729 {strides = array<i32>} : memref<128x64xf32, #tpu.memory_space<vmem>>, vector<8x32xf32>,
    %c3_i32_259 = arith.constant 3 : i32
    %c8_i32_260 = arith.constant 8 : i32
    %732 = arith.muli %c3_i32_259, %c8_i32_260 : i32
    %733 = tpu.assume_multiple %732, 8 : i32
    %c15_i32_261 = arith.constant 15 : i32
    %734 = arith.subi %c15_i32_261, %c3_i32_259 : i32
    %c8_i32_262 = arith.constant 8 : i32
    %735 = arith.muli %734, %c8_i32_262 : i32
    %736 = tpu.assume_multiple %735, 8 : i32
    %737 = arith.index_cast %733 : i32 to index
    %c0_263 = arith.constant 0 : index
    %738 = vector.load %arg12[%737, %c0_263] : memref<128x256xf32, #tpu.memory_space<vmem>>, vector<8x256xf32>
    %739 = arith.index_cast %736 : i32 to index
    %c0_264 = arith.constant 0 : index
    %740 = vector.load %arg12[%739, %c0_264] : memref<128x256xf32, #tpu.memory_space<vmem>>, vector<8x256xf32>
    %741 = arith.truncf %725 : vector<8x64xf32> to vector<8x64xbf16>
    %c0_265 = arith.constant 0 : index
    %c0_266 = arith.constant 0 : index
    %742 = vector.load %arg7[%c0_265, %c0_266] : memref<64x256xbf16, #tpu.memory_space<vmem>>, vector<64x256xbf16>
    %cst_267 = arith.constant dense<0.000000e+00> : vector<8x256xf32>
    %743 = tpu.matmul %741, %742, %cst_267 {dimension_numbers = #tpu.dot_dimension_numbers<[1], [0], [0], [1], [0, 0, 1, 1], [], []>} : vector<8x64xbf16>, vector<64x256xbf16>, vector<8x256xf32> -> vector<8x256xf32>
    %744 = arith.select %25, %738, %740 : vector<8x256xi1>, vector<8x256xf32>
    %745 = arith.addf %744, %743 : vector<8x256xf32>
    %746 = arith.mulf %745, %30 : vector<8x256xf32>
    %747 = math.tanh %746 : vector<8x256xf32>
    %748 = vector.extract_strided_slice %747 {offsets = [0, 0], sizes = [8, 192], strides = [1, 1]} : vector<8x256xf32> to vector<8x192xf32>
    %cst_268 = arith.constant 5.000000e-01 : f32
    %749 = vector.broadcast %cst_268 : f32 to vector<8x192xf32>
    %750 = arith.mulf %748, %749 : vector<8x192xf32>
    %cst_269 = arith.constant 5.000000e-01 : f32
    %751 = vector.broadcast %cst_269 : f32 to vector<8x192xf32>
    %752 = arith.addf %750, %751 : vector<8x192xf32>
    %753 = vector.extract_strided_slice %752 {offsets = [0, 0], sizes = [8, 64], strides = [1, 1]} : vector<8x192xf32> to vector<8x64xf32>
    %754 = vector.extract_strided_slice %752 {offsets = [0, 64], sizes = [8, 64], strides = [1, 1]} : vector<8x192xf32> to vector<8x64xf32>
    %755 = vector.extract_strided_slice %752 {offsets = [0, 128], sizes = [8, 64], strides = [1, 1]} : vector<8x192xf32> to vector<8x64xf32>
    %756 = vector.extract_strided_slice %747 {offsets = [0, 192], sizes = [8, 64], strides = [1, 1]} : vector<8x256xf32> to vector<8x64xf32>
    %757 = arith.mulf %754, %723 : vector<8x64xf32>
    %758 = arith.mulf %753, %756 : vector<8x64xf32>
    %759 = arith.addf %757, %758 : vector<8x64xf32>
    %760 = math.tanh %759 : vector<8x64xf32>
    %761 = arith.mulf %755, %760 : vector<8x64xf32>
    %762 = vector.extract_strided_slice %761 {offsets = [0, 0], sizes = [8, 32], strides = [1, 1]} : vector<8x64xf32> to vector<8x32xf32>
    %763 = arith.index_cast %733 : i32 to index
    %c0_270 = arith.constant 0 : index
    %764 = vector.load %arg13[%763, %c0_270] : memref<128x64xf32, #tpu.memory_space<vmem>>, vector<8x32xf32>
    tpu.vector_store %arg13[%763, %c0_270], %762 {strides = array<i32>} : memref<128x64xf32, #tpu.memory_space<vmem>>, vector<8x32xf32>,
    %765 = vector.extract_strided_slice %761 {offsets = [0, 32], sizes = [8, 32], strides = [1, 1]} : vector<8x64xf32> to vector<8x32xf32>
    %766 = arith.index_cast %736 : i32 to index
    %c32_271 = arith.constant 32 : index
    %767 = vector.load %arg13[%766, %c32_271] : memref<128x64xf32, #tpu.memory_space<vmem>>, vector<8x32xf32>
    tpu.vector_store %arg13[%766, %c32_271], %765 {strides = array<i32>} : memref<128x64xf32, #tpu.memory_space<vmem>>, vector<8x32xf32>,
    %c4_i32_272 = arith.constant 4 : i32
    %c8_i32_273 = arith.constant 8 : i32
    %768 = arith.muli %c4_i32_272, %c8_i32_273 : i32
    %769 = tpu.assume_multiple %768, 8 : i32
    %c15_i32_274 = arith.constant 15 : i32
    %770 = arith.subi %c15_i32_274, %c4_i32_272 : i32
    %c8_i32_275 = arith.constant 8 : i32
    %771 = arith.muli %770, %c8_i32_275 : i32
    %772 = tpu.assume_multiple %771, 8 : i32
    %773 = arith.index_cast %769 : i32 to index
    %c0_276 = arith.constant 0 : index
    %774 = vector.load %arg12[%773, %c0_276] : memref<128x256xf32, #tpu.memory_space<vmem>>, vector<8x256xf32>
    %775 = arith.index_cast %772 : i32 to index
    %c0_277 = arith.constant 0 : index
    %776 = vector.load %arg12[%775, %c0_277] : memref<128x256xf32, #tpu.memory_space<vmem>>, vector<8x256xf32>
    %777 = arith.truncf %761 : vector<8x64xf32> to vector<8x64xbf16>
    %c0_278 = arith.constant 0 : index
    %c0_279 = arith.constant 0 : index
    %778 = vector.load %arg7[%c0_278, %c0_279] : memref<64x256xbf16, #tpu.memory_space<vmem>>, vector<64x256xbf16>
    %cst_280 = arith.constant dense<0.000000e+00> : vector<8x256xf32>
    %779 = tpu.matmul %777, %778, %cst_280 {dimension_numbers = #tpu.dot_dimension_numbers<[1], [0], [0], [1], [0, 0, 1, 1], [], []>} : vector<8x64xbf16>, vector<64x256xbf16>, vector<8x256xf32> -> vector<8x256xf32>
    %780 = arith.select %25, %774, %776 : vector<8x256xi1>, vector<8x256xf32>
    %781 = arith.addf %780, %779 : vector<8x256xf32>
    %782 = arith.mulf %781, %30 : vector<8x256xf32>
    %783 = math.tanh %782 : vector<8x256xf32>
    %784 = vector.extract_strided_slice %783 {offsets = [0, 0], sizes = [8, 192], strides = [1, 1]} : vector<8x256xf32> to vector<8x192xf32>
    %cst_281 = arith.constant 5.000000e-01 : f32
    %785 = vector.broadcast %cst_281 : f32 to vector<8x192xf32>
    %786 = arith.mulf %784, %785 : vector<8x192xf32>
    %cst_282 = arith.constant 5.000000e-01 : f32
    %787 = vector.broadcast %cst_282 : f32 to vector<8x192xf32>
    %788 = arith.addf %786, %787 : vector<8x192xf32>
    %789 = vector.extract_strided_slice %788 {offsets = [0, 0], sizes = [8, 64], strides = [1, 1]} : vector<8x192xf32> to vector<8x64xf32>
    %790 = vector.extract_strided_slice %788 {offsets = [0, 64], sizes = [8, 64], strides = [1, 1]} : vector<8x192xf32> to vector<8x64xf32>
    %791 = vector.extract_strided_slice %788 {offsets = [0, 128], sizes = [8, 64], strides = [1, 1]} : vector<8x192xf32> to vector<8x64xf32>
    %792 = vector.extract_strided_slice %783 {offsets = [0, 192], sizes = [8, 64], strides = [1, 1]} : vector<8x256xf32> to vector<8x64xf32>
    %793 = arith.mulf %790, %759 : vector<8x64xf32>
    %794 = arith.mulf %789, %792 : vector<8x64xf32>
    %795 = arith.addf %793, %794 : vector<8x64xf32>
    %796 = math.tanh %795 : vector<8x64xf32>
    %797 = arith.mulf %791, %796 : vector<8x64xf32>
    %798 = vector.extract_strided_slice %797 {offsets = [0, 0], sizes = [8, 32], strides = [1, 1]} : vector<8x64xf32> to vector<8x32xf32>
    %799 = arith.index_cast %769 : i32 to index
    %c0_283 = arith.constant 0 : index
    %800 = vector.load %arg13[%799, %c0_283] : memref<128x64xf32, #tpu.memory_space<vmem>>, vector<8x32xf32>
    tpu.vector_store %arg13[%799, %c0_283], %798 {strides = array<i32>} : memref<128x64xf32, #tpu.memory_space<vmem>>, vector<8x32xf32>,
    %801 = vector.extract_strided_slice %797 {offsets = [0, 32], sizes = [8, 32], strides = [1, 1]} : vector<8x64xf32> to vector<8x32xf32>
    %802 = arith.index_cast %772 : i32 to index
    %c32_284 = arith.constant 32 : index
    %803 = vector.load %arg13[%802, %c32_284] : memref<128x64xf32, #tpu.memory_space<vmem>>, vector<8x32xf32>
    tpu.vector_store %arg13[%802, %c32_284], %801 {strides = array<i32>} : memref<128x64xf32, #tpu.memory_space<vmem>>, vector<8x32xf32>,
    %c5_i32_285 = arith.constant 5 : i32
    %c8_i32_286 = arith.constant 8 : i32
    %804 = arith.muli %c5_i32_285, %c8_i32_286 : i32
    %805 = tpu.assume_multiple %804, 8 : i32
    %c15_i32_287 = arith.constant 15 : i32
    %806 = arith.subi %c15_i32_287, %c5_i32_285 : i32
    %c8_i32_288 = arith.constant 8 : i32
    %807 = arith.muli %806, %c8_i32_288 : i32
    %808 = tpu.assume_multiple %807, 8 : i32
    %809 = arith.index_cast %805 : i32 to index
    %c0_289 = arith.constant 0 : index
    %810 = vector.load %arg12[%809, %c0_289] : memref<128x256xf32, #tpu.memory_space<vmem>>, vector<8x256xf32>
    %811 = arith.index_cast %808 : i32 to index
    %c0_290 = arith.constant 0 : index
    %812 = vector.load %arg12[%811, %c0_290] : memref<128x256xf32, #tpu.memory_space<vmem>>, vector<8x256xf32>
    %813 = arith.truncf %797 : vector<8x64xf32> to vector<8x64xbf16>
    %c0_291 = arith.constant 0 : index
    %c0_292 = arith.constant 0 : index
    %814 = vector.load %arg7[%c0_291, %c0_292] : memref<64x256xbf16, #tpu.memory_space<vmem>>, vector<64x256xbf16>
    %cst_293 = arith.constant dense<0.000000e+00> : vector<8x256xf32>
    %815 = tpu.matmul %813, %814, %cst_293 {dimension_numbers = #tpu.dot_dimension_numbers<[1], [0], [0], [1], [0, 0, 1, 1], [], []>} : vector<8x64xbf16>, vector<64x256xbf16>, vector<8x256xf32> -> vector<8x256xf32>
    %816 = arith.select %25, %810, %812 : vector<8x256xi1>, vector<8x256xf32>
    %817 = arith.addf %816, %815 : vector<8x256xf32>
    %818 = arith.mulf %817, %30 : vector<8x256xf32>
    %819 = math.tanh %818 : vector<8x256xf32>
    %820 = vector.extract_strided_slice %819 {offsets = [0, 0], sizes = [8, 192], strides = [1, 1]} : vector<8x256xf32> to vector<8x192xf32>
    %cst_294 = arith.constant 5.000000e-01 : f32
    %821 = vector.broadcast %cst_294 : f32 to vector<8x192xf32>
    %822 = arith.mulf %820, %821 : vector<8x192xf32>
    %cst_295 = arith.constant 5.000000e-01 : f32
    %823 = vector.broadcast %cst_295 : f32 to vector<8x192xf32>
    %824 = arith.addf %822, %823 : vector<8x192xf32>
    %825 = vector.extract_strided_slice %824 {offsets = [0, 0], sizes = [8, 64], strides = [1, 1]} : vector<8x192xf32> to vector<8x64xf32>
    %826 = vector.extract_strided_slice %824 {offsets = [0, 64], sizes = [8, 64], strides = [1, 1]} : vector<8x192xf32> to vector<8x64xf32>
    %827 = vector.extract_strided_slice %824 {offsets = [0, 128], sizes = [8, 64], strides = [1, 1]} : vector<8x192xf32> to vector<8x64xf32>
    %828 = vector.extract_strided_slice %819 {offsets = [0, 192], sizes = [8, 64], strides = [1, 1]} : vector<8x256xf32> to vector<8x64xf32>
    %829 = arith.mulf %826, %795 : vector<8x64xf32>
    %830 = arith.mulf %825, %828 : vector<8x64xf32>
    %831 = arith.addf %829, %830 : vector<8x64xf32>
    %832 = math.tanh %831 : vector<8x64xf32>
    %833 = arith.mulf %827, %832 : vector<8x64xf32>
    %834 = vector.extract_strided_slice %833 {offsets = [0, 0], sizes = [8, 32], strides = [1, 1]} : vector<8x64xf32> to vector<8x32xf32>
    %835 = arith.index_cast %805 : i32 to index
    %c0_296 = arith.constant 0 : index
    %836 = vector.load %arg13[%835, %c0_296] : memref<128x64xf32, #tpu.memory_space<vmem>>, vector<8x32xf32>
    tpu.vector_store %arg13[%835, %c0_296], %834 {strides = array<i32>} : memref<128x64xf32, #tpu.memory_space<vmem>>, vector<8x32xf32>,
    %837 = vector.extract_strided_slice %833 {offsets = [0, 32], sizes = [8, 32], strides = [1, 1]} : vector<8x64xf32> to vector<8x32xf32>
    %838 = arith.index_cast %808 : i32 to index
    %c32_297 = arith.constant 32 : index
    %839 = vector.load %arg13[%838, %c32_297] : memref<128x64xf32, #tpu.memory_space<vmem>>, vector<8x32xf32>
    tpu.vector_store %arg13[%838, %c32_297], %837 {strides = array<i32>} : memref<128x64xf32, #tpu.memory_space<vmem>>, vector<8x32xf32>,
    %c6_i32_298 = arith.constant 6 : i32
    %c8_i32_299 = arith.constant 8 : i32
    %840 = arith.muli %c6_i32_298, %c8_i32_299 : i32
    %841 = tpu.assume_multiple %840, 8 : i32
    %c15_i32_300 = arith.constant 15 : i32
    %842 = arith.subi %c15_i32_300, %c6_i32_298 : i32
    %c8_i32_301 = arith.constant 8 : i32
    %843 = arith.muli %842, %c8_i32_301 : i32
    %844 = tpu.assume_multiple %843, 8 : i32
    %845 = arith.index_cast %841 : i32 to index
    %c0_302 = arith.constant 0 : index
    %846 = vector.load %arg12[%845, %c0_302] : memref<128x256xf32, #tpu.memory_space<vmem>>, vector<8x256xf32>
    %847 = arith.index_cast %844 : i32 to index
    %c0_303 = arith.constant 0 : index
    %848 = vector.load %arg12[%847, %c0_303] : memref<128x256xf32, #tpu.memory_space<vmem>>, vector<8x256xf32>
    %849 = arith.truncf %833 : vector<8x64xf32> to vector<8x64xbf16>
    %c0_304 = arith.constant 0 : index
    %c0_305 = arith.constant 0 : index
    %850 = vector.load %arg7[%c0_304, %c0_305] : memref<64x256xbf16, #tpu.memory_space<vmem>>, vector<64x256xbf16>
    %cst_306 = arith.constant dense<0.000000e+00> : vector<8x256xf32>
    %851 = tpu.matmul %849, %850, %cst_306 {dimension_numbers = #tpu.dot_dimension_numbers<[1], [0], [0], [1], [0, 0, 1, 1], [], []>} : vector<8x64xbf16>, vector<64x256xbf16>, vector<8x256xf32> -> vector<8x256xf32>
    %852 = arith.select %25, %846, %848 : vector<8x256xi1>, vector<8x256xf32>
    %853 = arith.addf %852, %851 : vector<8x256xf32>
    %854 = arith.mulf %853, %30 : vector<8x256xf32>
    %855 = math.tanh %854 : vector<8x256xf32>
    %856 = vector.extract_strided_slice %855 {offsets = [0, 0], sizes = [8, 192], strides = [1, 1]} : vector<8x256xf32> to vector<8x192xf32>
    %cst_307 = arith.constant 5.000000e-01 : f32
    %857 = vector.broadcast %cst_307 : f32 to vector<8x192xf32>
    %858 = arith.mulf %856, %857 : vector<8x192xf32>
    %cst_308 = arith.constant 5.000000e-01 : f32
    %859 = vector.broadcast %cst_308 : f32 to vector<8x192xf32>
    %860 = arith.addf %858, %859 : vector<8x192xf32>
    %861 = vector.extract_strided_slice %860 {offsets = [0, 0], sizes = [8, 64], strides = [1, 1]} : vector<8x192xf32> to vector<8x64xf32>
    %862 = vector.extract_strided_slice %860 {offsets = [0, 64], sizes = [8, 64], strides = [1, 1]} : vector<8x192xf32> to vector<8x64xf32>
    %863 = vector.extract_strided_slice %860 {offsets = [0, 128], sizes = [8, 64], strides = [1, 1]} : vector<8x192xf32> to vector<8x64xf32>
    %864 = vector.extract_strided_slice %855 {offsets = [0, 192], sizes = [8, 64], strides = [1, 1]} : vector<8x256xf32> to vector<8x64xf32>
    %865 = arith.mulf %862, %831 : vector<8x64xf32>
    %866 = arith.mulf %861, %864 : vector<8x64xf32>
    %867 = arith.addf %865, %866 : vector<8x64xf32>
    %868 = math.tanh %867 : vector<8x64xf32>
    %869 = arith.mulf %863, %868 : vector<8x64xf32>
    %870 = vector.extract_strided_slice %869 {offsets = [0, 0], sizes = [8, 32], strides = [1, 1]} : vector<8x64xf32> to vector<8x32xf32>
    %871 = arith.index_cast %841 : i32 to index
    %c0_309 = arith.constant 0 : index
    %872 = vector.load %arg13[%871, %c0_309] : memref<128x64xf32, #tpu.memory_space<vmem>>, vector<8x32xf32>
    tpu.vector_store %arg13[%871, %c0_309], %870 {strides = array<i32>} : memref<128x64xf32, #tpu.memory_space<vmem>>, vector<8x32xf32>,
    %873 = vector.extract_strided_slice %869 {offsets = [0, 32], sizes = [8, 32], strides = [1, 1]} : vector<8x64xf32> to vector<8x32xf32>
    %874 = arith.index_cast %844 : i32 to index
    %c32_310 = arith.constant 32 : index
    %875 = vector.load %arg13[%874, %c32_310] : memref<128x64xf32, #tpu.memory_space<vmem>>, vector<8x32xf32>
    tpu.vector_store %arg13[%874, %c32_310], %873 {strides = array<i32>} : memref<128x64xf32, #tpu.memory_space<vmem>>, vector<8x32xf32>,
    %c7_i32_311 = arith.constant 7 : i32
    %c8_i32_312 = arith.constant 8 : i32
    %876 = arith.muli %c7_i32_311, %c8_i32_312 : i32
    %877 = tpu.assume_multiple %876, 8 : i32
    %c15_i32_313 = arith.constant 15 : i32
    %878 = arith.subi %c15_i32_313, %c7_i32_311 : i32
    %c8_i32_314 = arith.constant 8 : i32
    %879 = arith.muli %878, %c8_i32_314 : i32
    %880 = tpu.assume_multiple %879, 8 : i32
    %881 = arith.index_cast %877 : i32 to index
    %c0_315 = arith.constant 0 : index
    %882 = vector.load %arg12[%881, %c0_315] : memref<128x256xf32, #tpu.memory_space<vmem>>, vector<8x256xf32>
    %883 = arith.index_cast %880 : i32 to index
    %c0_316 = arith.constant 0 : index
    %884 = vector.load %arg12[%883, %c0_316] : memref<128x256xf32, #tpu.memory_space<vmem>>, vector<8x256xf32>
    %885 = arith.truncf %869 : vector<8x64xf32> to vector<8x64xbf16>
    %c0_317 = arith.constant 0 : index
    %c0_318 = arith.constant 0 : index
    %886 = vector.load %arg7[%c0_317, %c0_318] : memref<64x256xbf16, #tpu.memory_space<vmem>>, vector<64x256xbf16>
    %cst_319 = arith.constant dense<0.000000e+00> : vector<8x256xf32>
    %887 = tpu.matmul %885, %886, %cst_319 {dimension_numbers = #tpu.dot_dimension_numbers<[1], [0], [0], [1], [0, 0, 1, 1], [], []>} : vector<8x64xbf16>, vector<64x256xbf16>, vector<8x256xf32> -> vector<8x256xf32>
    %888 = arith.select %25, %882, %884 : vector<8x256xi1>, vector<8x256xf32>
    %889 = arith.addf %888, %887 : vector<8x256xf32>
    %890 = arith.mulf %889, %30 : vector<8x256xf32>
    %891 = math.tanh %890 : vector<8x256xf32>
    %892 = vector.extract_strided_slice %891 {offsets = [0, 0], sizes = [8, 192], strides = [1, 1]} : vector<8x256xf32> to vector<8x192xf32>
    %cst_320 = arith.constant 5.000000e-01 : f32
    %893 = vector.broadcast %cst_320 : f32 to vector<8x192xf32>
    %894 = arith.mulf %892, %893 : vector<8x192xf32>
    %cst_321 = arith.constant 5.000000e-01 : f32
    %895 = vector.broadcast %cst_321 : f32 to vector<8x192xf32>
    %896 = arith.addf %894, %895 : vector<8x192xf32>
    %897 = vector.extract_strided_slice %896 {offsets = [0, 0], sizes = [8, 64], strides = [1, 1]} : vector<8x192xf32> to vector<8x64xf32>
    %898 = vector.extract_strided_slice %896 {offsets = [0, 64], sizes = [8, 64], strides = [1, 1]} : vector<8x192xf32> to vector<8x64xf32>
    %899 = vector.extract_strided_slice %896 {offsets = [0, 128], sizes = [8, 64], strides = [1, 1]} : vector<8x192xf32> to vector<8x64xf32>
    %900 = vector.extract_strided_slice %891 {offsets = [0, 192], sizes = [8, 64], strides = [1, 1]} : vector<8x256xf32> to vector<8x64xf32>
    %901 = arith.mulf %898, %867 : vector<8x64xf32>
    %902 = arith.mulf %897, %900 : vector<8x64xf32>
    %903 = arith.addf %901, %902 : vector<8x64xf32>
    %904 = math.tanh %903 : vector<8x64xf32>
    %905 = arith.mulf %899, %904 : vector<8x64xf32>
    %906 = vector.extract_strided_slice %905 {offsets = [0, 0], sizes = [8, 32], strides = [1, 1]} : vector<8x64xf32> to vector<8x32xf32>
    %907 = arith.index_cast %877 : i32 to index
    %c0_322 = arith.constant 0 : index
    %908 = vector.load %arg13[%907, %c0_322] : memref<128x64xf32, #tpu.memory_space<vmem>>, vector<8x32xf32>
    tpu.vector_store %arg13[%907, %c0_322], %906 {strides = array<i32>} : memref<128x64xf32, #tpu.memory_space<vmem>>, vector<8x32xf32>,
    %909 = vector.extract_strided_slice %905 {offsets = [0, 32], sizes = [8, 32], strides = [1, 1]} : vector<8x64xf32> to vector<8x32xf32>
    %910 = arith.index_cast %880 : i32 to index
    %c32_323 = arith.constant 32 : index
    %911 = vector.load %arg13[%910, %c32_323] : memref<128x64xf32, #tpu.memory_space<vmem>>, vector<8x32xf32>
    tpu.vector_store %arg13[%910, %c32_323], %909 {strides = array<i32>} : memref<128x64xf32, #tpu.memory_space<vmem>>, vector<8x32xf32>,
    %c8_i32_324 = arith.constant 8 : i32
    %c8_i32_325 = arith.constant 8 : i32
    %912 = arith.muli %c8_i32_324, %c8_i32_325 : i32
    %913 = tpu.assume_multiple %912, 8 : i32
    %c15_i32_326 = arith.constant 15 : i32
    %914 = arith.subi %c15_i32_326, %c8_i32_324 : i32
    %c8_i32_327 = arith.constant 8 : i32
    %915 = arith.muli %914, %c8_i32_327 : i32
    %916 = tpu.assume_multiple %915, 8 : i32
    %917 = arith.index_cast %913 : i32 to index
    %c0_328 = arith.constant 0 : index
    %918 = vector.load %arg12[%917, %c0_328] : memref<128x256xf32, #tpu.memory_space<vmem>>, vector<8x256xf32>
    %919 = arith.index_cast %916 : i32 to index
    %c0_329 = arith.constant 0 : index
    %920 = vector.load %arg12[%919, %c0_329] : memref<128x256xf32, #tpu.memory_space<vmem>>, vector<8x256xf32>
    %921 = arith.truncf %905 : vector<8x64xf32> to vector<8x64xbf16>
    %c0_330 = arith.constant 0 : index
    %c0_331 = arith.constant 0 : index
    %922 = vector.load %arg7[%c0_330, %c0_331] : memref<64x256xbf16, #tpu.memory_space<vmem>>, vector<64x256xbf16>
    %cst_332 = arith.constant dense<0.000000e+00> : vector<8x256xf32>
    %923 = tpu.matmul %921, %922, %cst_332 {dimension_numbers = #tpu.dot_dimension_numbers<[1], [0], [0], [1], [0, 0, 1, 1], [], []>} : vector<8x64xbf16>, vector<64x256xbf16>, vector<8x256xf32> -> vector<8x256xf32>
    %924 = arith.select %25, %918, %920 : vector<8x256xi1>, vector<8x256xf32>
    %925 = arith.addf %924, %923 : vector<8x256xf32>
    %926 = arith.mulf %925, %30 : vector<8x256xf32>
    %927 = math.tanh %926 : vector<8x256xf32>
    %928 = vector.extract_strided_slice %927 {offsets = [0, 0], sizes = [8, 192], strides = [1, 1]} : vector<8x256xf32> to vector<8x192xf32>
    %cst_333 = arith.constant 5.000000e-01 : f32
    %929 = vector.broadcast %cst_333 : f32 to vector<8x192xf32>
    %930 = arith.mulf %928, %929 : vector<8x192xf32>
    %cst_334 = arith.constant 5.000000e-01 : f32
    %931 = vector.broadcast %cst_334 : f32 to vector<8x192xf32>
    %932 = arith.addf %930, %931 : vector<8x192xf32>
    %933 = vector.extract_strided_slice %932 {offsets = [0, 0], sizes = [8, 64], strides = [1, 1]} : vector<8x192xf32> to vector<8x64xf32>
    %934 = vector.extract_strided_slice %932 {offsets = [0, 64], sizes = [8, 64], strides = [1, 1]} : vector<8x192xf32> to vector<8x64xf32>
    %935 = vector.extract_strided_slice %932 {offsets = [0, 128], sizes = [8, 64], strides = [1, 1]} : vector<8x192xf32> to vector<8x64xf32>
    %936 = vector.extract_strided_slice %927 {offsets = [0, 192], sizes = [8, 64], strides = [1, 1]} : vector<8x256xf32> to vector<8x64xf32>
    %937 = arith.mulf %934, %903 : vector<8x64xf32>
    %938 = arith.mulf %933, %936 : vector<8x64xf32>
    %939 = arith.addf %937, %938 : vector<8x64xf32>
    %940 = math.tanh %939 : vector<8x64xf32>
    %941 = arith.mulf %935, %940 : vector<8x64xf32>
    %942 = vector.extract_strided_slice %941 {offsets = [0, 0], sizes = [8, 32], strides = [1, 1]} : vector<8x64xf32> to vector<8x32xf32>
    %943 = arith.index_cast %913 : i32 to index
    %c0_335 = arith.constant 0 : index
    %944 = vector.load %arg13[%943, %c0_335] : memref<128x64xf32, #tpu.memory_space<vmem>>, vector<8x32xf32>
    tpu.vector_store %arg13[%943, %c0_335], %942 {strides = array<i32>} : memref<128x64xf32, #tpu.memory_space<vmem>>, vector<8x32xf32>,
    %945 = vector.extract_strided_slice %941 {offsets = [0, 32], sizes = [8, 32], strides = [1, 1]} : vector<8x64xf32> to vector<8x32xf32>
    %946 = arith.index_cast %916 : i32 to index
    %c32_336 = arith.constant 32 : index
    %947 = vector.load %arg13[%946, %c32_336] : memref<128x64xf32, #tpu.memory_space<vmem>>, vector<8x32xf32>
    tpu.vector_store %arg13[%946, %c32_336], %945 {strides = array<i32>} : memref<128x64xf32, #tpu.memory_space<vmem>>, vector<8x32xf32>,
    %c9_i32_337 = arith.constant 9 : i32
    %c8_i32_338 = arith.constant 8 : i32
    %948 = arith.muli %c9_i32_337, %c8_i32_338 : i32
    %949 = tpu.assume_multiple %948, 8 : i32
    %c15_i32_339 = arith.constant 15 : i32
    %950 = arith.subi %c15_i32_339, %c9_i32_337 : i32
    %c8_i32_340 = arith.constant 8 : i32
    %951 = arith.muli %950, %c8_i32_340 : i32
    %952 = tpu.assume_multiple %951, 8 : i32
    %953 = arith.index_cast %949 : i32 to index
    %c0_341 = arith.constant 0 : index
    %954 = vector.load %arg12[%953, %c0_341] : memref<128x256xf32, #tpu.memory_space<vmem>>, vector<8x256xf32>
    %955 = arith.index_cast %952 : i32 to index
    %c0_342 = arith.constant 0 : index
    %956 = vector.load %arg12[%955, %c0_342] : memref<128x256xf32, #tpu.memory_space<vmem>>, vector<8x256xf32>
    %957 = arith.truncf %941 : vector<8x64xf32> to vector<8x64xbf16>
    %c0_343 = arith.constant 0 : index
    %c0_344 = arith.constant 0 : index
    %958 = vector.load %arg7[%c0_343, %c0_344] : memref<64x256xbf16, #tpu.memory_space<vmem>>, vector<64x256xbf16>
    %cst_345 = arith.constant dense<0.000000e+00> : vector<8x256xf32>
    %959 = tpu.matmul %957, %958, %cst_345 {dimension_numbers = #tpu.dot_dimension_numbers<[1], [0], [0], [1], [0, 0, 1, 1], [], []>} : vector<8x64xbf16>, vector<64x256xbf16>, vector<8x256xf32> -> vector<8x256xf32>
    %960 = arith.select %25, %954, %956 : vector<8x256xi1>, vector<8x256xf32>
    %961 = arith.addf %960, %959 : vector<8x256xf32>
    %962 = arith.mulf %961, %30 : vector<8x256xf32>
    %963 = math.tanh %962 : vector<8x256xf32>
    %964 = vector.extract_strided_slice %963 {offsets = [0, 0], sizes = [8, 192], strides = [1, 1]} : vector<8x256xf32> to vector<8x192xf32>
    %cst_346 = arith.constant 5.000000e-01 : f32
    %965 = vector.broadcast %cst_346 : f32 to vector<8x192xf32>
    %966 = arith.mulf %964, %965 : vector<8x192xf32>
    %cst_347 = arith.constant 5.000000e-01 : f32
    %967 = vector.broadcast %cst_347 : f32 to vector<8x192xf32>
    %968 = arith.addf %966, %967 : vector<8x192xf32>
    %969 = vector.extract_strided_slice %968 {offsets = [0, 0], sizes = [8, 64], strides = [1, 1]} : vector<8x192xf32> to vector<8x64xf32>
    %970 = vector.extract_strided_slice %968 {offsets = [0, 64], sizes = [8, 64], strides = [1, 1]} : vector<8x192xf32> to vector<8x64xf32>
    %971 = vector.extract_strided_slice %968 {offsets = [0, 128], sizes = [8, 64], strides = [1, 1]} : vector<8x192xf32> to vector<8x64xf32>
    %972 = vector.extract_strided_slice %963 {offsets = [0, 192], sizes = [8, 64], strides = [1, 1]} : vector<8x256xf32> to vector<8x64xf32>
    %973 = arith.mulf %970, %939 : vector<8x64xf32>
    %974 = arith.mulf %969, %972 : vector<8x64xf32>
    %975 = arith.addf %973, %974 : vector<8x64xf32>
    %976 = math.tanh %975 : vector<8x64xf32>
    %977 = arith.mulf %971, %976 : vector<8x64xf32>
    %978 = vector.extract_strided_slice %977 {offsets = [0, 0], sizes = [8, 32], strides = [1, 1]} : vector<8x64xf32> to vector<8x32xf32>
    %979 = arith.index_cast %949 : i32 to index
    %c0_348 = arith.constant 0 : index
    %980 = vector.load %arg13[%979, %c0_348] : memref<128x64xf32, #tpu.memory_space<vmem>>, vector<8x32xf32>
    tpu.vector_store %arg13[%979, %c0_348], %978 {strides = array<i32>} : memref<128x64xf32, #tpu.memory_space<vmem>>, vector<8x32xf32>,
    %981 = vector.extract_strided_slice %977 {offsets = [0, 32], sizes = [8, 32], strides = [1, 1]} : vector<8x64xf32> to vector<8x32xf32>
    %982 = arith.index_cast %952 : i32 to index
    %c32_349 = arith.constant 32 : index
    %983 = vector.load %arg13[%982, %c32_349] : memref<128x64xf32, #tpu.memory_space<vmem>>, vector<8x32xf32>
    tpu.vector_store %arg13[%982, %c32_349], %981 {strides = array<i32>} : memref<128x64xf32, #tpu.memory_space<vmem>>, vector<8x32xf32>,
    %c10_i32_350 = arith.constant 10 : i32
    %c8_i32_351 = arith.constant 8 : i32
    %984 = arith.muli %c10_i32_350, %c8_i32_351 : i32
    %985 = tpu.assume_multiple %984, 8 : i32
    %c15_i32_352 = arith.constant 15 : i32
    %986 = arith.subi %c15_i32_352, %c10_i32_350 : i32
    %c8_i32_353 = arith.constant 8 : i32
    %987 = arith.muli %986, %c8_i32_353 : i32
    %988 = tpu.assume_multiple %987, 8 : i32
    %989 = arith.index_cast %985 : i32 to index
    %c0_354 = arith.constant 0 : index
    %990 = vector.load %arg12[%989, %c0_354] : memref<128x256xf32, #tpu.memory_space<vmem>>, vector<8x256xf32>
    %991 = arith.index_cast %988 : i32 to index
    %c0_355 = arith.constant 0 : index
    %992 = vector.load %arg12[%991, %c0_355] : memref<128x256xf32, #tpu.memory_space<vmem>>, vector<8x256xf32>
    %993 = arith.truncf %977 : vector<8x64xf32> to vector<8x64xbf16>
    %c0_356 = arith.constant 0 : index
    %c0_357 = arith.constant 0 : index
    %994 = vector.load %arg7[%c0_356, %c0_357] : memref<64x256xbf16, #tpu.memory_space<vmem>>, vector<64x256xbf16>
    %cst_358 = arith.constant dense<0.000000e+00> : vector<8x256xf32>
    %995 = tpu.matmul %993, %994, %cst_358 {dimension_numbers = #tpu.dot_dimension_numbers<[1], [0], [0], [1], [0, 0, 1, 1], [], []>} : vector<8x64xbf16>, vector<64x256xbf16>, vector<8x256xf32> -> vector<8x256xf32>
    %996 = arith.select %25, %990, %992 : vector<8x256xi1>, vector<8x256xf32>
    %997 = arith.addf %996, %995 : vector<8x256xf32>
    %998 = arith.mulf %997, %30 : vector<8x256xf32>
    %999 = math.tanh %998 : vector<8x256xf32>
    %1000 = vector.extract_strided_slice %999 {offsets = [0, 0], sizes = [8, 192], strides = [1, 1]} : vector<8x256xf32> to vector<8x192xf32>
    %cst_359 = arith.constant 5.000000e-01 : f32
    %1001 = vector.broadcast %cst_359 : f32 to vector<8x192xf32>
    %1002 = arith.mulf %1000, %1001 : vector<8x192xf32>
    %cst_360 = arith.constant 5.000000e-01 : f32
    %1003 = vector.broadcast %cst_360 : f32 to vector<8x192xf32>
    %1004 = arith.addf %1002, %1003 : vector<8x192xf32>
    %1005 = vector.extract_strided_slice %1004 {offsets = [0, 0], sizes = [8, 64], strides = [1, 1]} : vector<8x192xf32> to vector<8x64xf32>
    %1006 = vector.extract_strided_slice %1004 {offsets = [0, 64], sizes = [8, 64], strides = [1, 1]} : vector<8x192xf32> to vector<8x64xf32>
    %1007 = vector.extract_strided_slice %1004 {offsets = [0, 128], sizes = [8, 64], strides = [1, 1]} : vector<8x192xf32> to vector<8x64xf32>
    %1008 = vector.extract_strided_slice %999 {offsets = [0, 192], sizes = [8, 64], strides = [1, 1]} : vector<8x256xf32> to vector<8x64xf32>
    %1009 = arith.mulf %1006, %975 : vector<8x64xf32>
    %1010 = arith.mulf %1005, %1008 : vector<8x64xf32>
    %1011 = arith.addf %1009, %1010 : vector<8x64xf32>
    %1012 = math.tanh %1011 : vector<8x64xf32>
    %1013 = arith.mulf %1007, %1012 : vector<8x64xf32>
    %1014 = vector.extract_strided_slice %1013 {offsets = [0, 0], sizes = [8, 32], strides = [1, 1]} : vector<8x64xf32> to vector<8x32xf32>
    %1015 = arith.index_cast %985 : i32 to index
    %c0_361 = arith.constant 0 : index
    %1016 = vector.load %arg13[%1015, %c0_361] : memref<128x64xf32, #tpu.memory_space<vmem>>, vector<8x32xf32>
    tpu.vector_store %arg13[%1015, %c0_361], %1014 {strides = array<i32>} : memref<128x64xf32, #tpu.memory_space<vmem>>, vector<8x32xf32>,
    %1017 = vector.extract_strided_slice %1013 {offsets = [0, 32], sizes = [8, 32], strides = [1, 1]} : vector<8x64xf32> to vector<8x32xf32>
    %1018 = arith.index_cast %988 : i32 to index
    %c32_362 = arith.constant 32 : index
    %1019 = vector.load %arg13[%1018, %c32_362] : memref<128x64xf32, #tpu.memory_space<vmem>>, vector<8x32xf32>
    tpu.vector_store %arg13[%1018, %c32_362], %1017 {strides = array<i32>} : memref<128x64xf32, #tpu.memory_space<vmem>>, vector<8x32xf32>,
    %c11_i32_363 = arith.constant 11 : i32
    %c8_i32_364 = arith.constant 8 : i32
    %1020 = arith.muli %c11_i32_363, %c8_i32_364 : i32
    %1021 = tpu.assume_multiple %1020, 8 : i32
    %c15_i32_365 = arith.constant 15 : i32
    %1022 = arith.subi %c15_i32_365, %c11_i32_363 : i32
    %c8_i32_366 = arith.constant 8 : i32
    %1023 = arith.muli %1022, %c8_i32_366 : i32
    %1024 = tpu.assume_multiple %1023, 8 : i32
    %1025 = arith.index_cast %1021 : i32 to index
    %c0_367 = arith.constant 0 : index
    %1026 = vector.load %arg12[%1025, %c0_367] : memref<128x256xf32, #tpu.memory_space<vmem>>, vector<8x256xf32>
    %1027 = arith.index_cast %1024 : i32 to index
    %c0_368 = arith.constant 0 : index
    %1028 = vector.load %arg12[%1027, %c0_368] : memref<128x256xf32, #tpu.memory_space<vmem>>, vector<8x256xf32>
    %1029 = arith.truncf %1013 : vector<8x64xf32> to vector<8x64xbf16>
    %c0_369 = arith.constant 0 : index
    %c0_370 = arith.constant 0 : index
    %1030 = vector.load %arg7[%c0_369, %c0_370] : memref<64x256xbf16, #tpu.memory_space<vmem>>, vector<64x256xbf16>
    %cst_371 = arith.constant dense<0.000000e+00> : vector<8x256xf32>
    %1031 = tpu.matmul %1029, %1030, %cst_371 {dimension_numbers = #tpu.dot_dimension_numbers<[1], [0], [0], [1], [0, 0, 1, 1], [], []>} : vector<8x64xbf16>, vector<64x256xbf16>, vector<8x256xf32> -> vector<8x256xf32>
    %1032 = arith.select %25, %1026, %1028 : vector<8x256xi1>, vector<8x256xf32>
    %1033 = arith.addf %1032, %1031 : vector<8x256xf32>
    %1034 = arith.mulf %1033, %30 : vector<8x256xf32>
    %1035 = math.tanh %1034 : vector<8x256xf32>
    %1036 = vector.extract_strided_slice %1035 {offsets = [0, 0], sizes = [8, 192], strides = [1, 1]} : vector<8x256xf32> to vector<8x192xf32>
    %cst_372 = arith.constant 5.000000e-01 : f32
    %1037 = vector.broadcast %cst_372 : f32 to vector<8x192xf32>
    %1038 = arith.mulf %1036, %1037 : vector<8x192xf32>
    %cst_373 = arith.constant 5.000000e-01 : f32
    %1039 = vector.broadcast %cst_373 : f32 to vector<8x192xf32>
    %1040 = arith.addf %1038, %1039 : vector<8x192xf32>
    %1041 = vector.extract_strided_slice %1040 {offsets = [0, 0], sizes = [8, 64], strides = [1, 1]} : vector<8x192xf32> to vector<8x64xf32>
    %1042 = vector.extract_strided_slice %1040 {offsets = [0, 64], sizes = [8, 64], strides = [1, 1]} : vector<8x192xf32> to vector<8x64xf32>
    %1043 = vector.extract_strided_slice %1040 {offsets = [0, 128], sizes = [8, 64], strides = [1, 1]} : vector<8x192xf32> to vector<8x64xf32>
    %1044 = vector.extract_strided_slice %1035 {offsets = [0, 192], sizes = [8, 64], strides = [1, 1]} : vector<8x256xf32> to vector<8x64xf32>
    %1045 = arith.mulf %1042, %1011 : vector<8x64xf32>
    %1046 = arith.mulf %1041, %1044 : vector<8x64xf32>
    %1047 = arith.addf %1045, %1046 : vector<8x64xf32>
    %1048 = math.tanh %1047 : vector<8x64xf32>
    %1049 = arith.mulf %1043, %1048 : vector<8x64xf32>
    %1050 = vector.extract_strided_slice %1049 {offsets = [0, 0], sizes = [8, 32], strides = [1, 1]} : vector<8x64xf32> to vector<8x32xf32>
    %1051 = arith.index_cast %1021 : i32 to index
    %c0_374 = arith.constant 0 : index
    %1052 = vector.load %arg13[%1051, %c0_374] : memref<128x64xf32, #tpu.memory_space<vmem>>, vector<8x32xf32>
    tpu.vector_store %arg13[%1051, %c0_374], %1050 {strides = array<i32>} : memref<128x64xf32, #tpu.memory_space<vmem>>, vector<8x32xf32>,
    %1053 = vector.extract_strided_slice %1049 {offsets = [0, 32], sizes = [8, 32], strides = [1, 1]} : vector<8x64xf32> to vector<8x32xf32>
    %1054 = arith.index_cast %1024 : i32 to index
    %c32_375 = arith.constant 32 : index
    %1055 = vector.load %arg13[%1054, %c32_375] : memref<128x64xf32, #tpu.memory_space<vmem>>, vector<8x32xf32>
    tpu.vector_store %arg13[%1054, %c32_375], %1053 {strides = array<i32>} : memref<128x64xf32, #tpu.memory_space<vmem>>, vector<8x32xf32>,
    %c12_i32_376 = arith.constant 12 : i32
    %c8_i32_377 = arith.constant 8 : i32
    %1056 = arith.muli %c12_i32_376, %c8_i32_377 : i32
    %1057 = tpu.assume_multiple %1056, 8 : i32
    %c15_i32_378 = arith.constant 15 : i32
    %1058 = arith.subi %c15_i32_378, %c12_i32_376 : i32
    %c8_i32_379 = arith.constant 8 : i32
    %1059 = arith.muli %1058, %c8_i32_379 : i32
    %1060 = tpu.assume_multiple %1059, 8 : i32
    %1061 = arith.index_cast %1057 : i32 to index
    %c0_380 = arith.constant 0 : index
    %1062 = vector.load %arg12[%1061, %c0_380] : memref<128x256xf32, #tpu.memory_space<vmem>>, vector<8x256xf32>
    %1063 = arith.index_cast %1060 : i32 to index
    %c0_381 = arith.constant 0 : index
    %1064 = vector.load %arg12[%1063, %c0_381] : memref<128x256xf32, #tpu.memory_space<vmem>>, vector<8x256xf32>
    %1065 = arith.truncf %1049 : vector<8x64xf32> to vector<8x64xbf16>
    %c0_382 = arith.constant 0 : index
    %c0_383 = arith.constant 0 : index
    %1066 = vector.load %arg7[%c0_382, %c0_383] : memref<64x256xbf16, #tpu.memory_space<vmem>>, vector<64x256xbf16>
    %cst_384 = arith.constant dense<0.000000e+00> : vector<8x256xf32>
    %1067 = tpu.matmul %1065, %1066, %cst_384 {dimension_numbers = #tpu.dot_dimension_numbers<[1], [0], [0], [1], [0, 0, 1, 1], [], []>} : vector<8x64xbf16>, vector<64x256xbf16>, vector<8x256xf32> -> vector<8x256xf32>
    %1068 = arith.select %25, %1062, %1064 : vector<8x256xi1>, vector<8x256xf32>
    %1069 = arith.addf %1068, %1067 : vector<8x256xf32>
    %1070 = arith.mulf %1069, %30 : vector<8x256xf32>
    %1071 = math.tanh %1070 : vector<8x256xf32>
    %1072 = vector.extract_strided_slice %1071 {offsets = [0, 0], sizes = [8, 192], strides = [1, 1]} : vector<8x256xf32> to vector<8x192xf32>
    %cst_385 = arith.constant 5.000000e-01 : f32
    %1073 = vector.broadcast %cst_385 : f32 to vector<8x192xf32>
    %1074 = arith.mulf %1072, %1073 : vector<8x192xf32>
    %cst_386 = arith.constant 5.000000e-01 : f32
    %1075 = vector.broadcast %cst_386 : f32 to vector<8x192xf32>
    %1076 = arith.addf %1074, %1075 : vector<8x192xf32>
    %1077 = vector.extract_strided_slice %1076 {offsets = [0, 0], sizes = [8, 64], strides = [1, 1]} : vector<8x192xf32> to vector<8x64xf32>
    %1078 = vector.extract_strided_slice %1076 {offsets = [0, 64], sizes = [8, 64], strides = [1, 1]} : vector<8x192xf32> to vector<8x64xf32>
    %1079 = vector.extract_strided_slice %1076 {offsets = [0, 128], sizes = [8, 64], strides = [1, 1]} : vector<8x192xf32> to vector<8x64xf32>
    %1080 = vector.extract_strided_slice %1071 {offsets = [0, 192], sizes = [8, 64], strides = [1, 1]} : vector<8x256xf32> to vector<8x64xf32>
    %1081 = arith.mulf %1078, %1047 : vector<8x64xf32>
    %1082 = arith.mulf %1077, %1080 : vector<8x64xf32>
    %1083 = arith.addf %1081, %1082 : vector<8x64xf32>
    %1084 = math.tanh %1083 : vector<8x64xf32>
    %1085 = arith.mulf %1079, %1084 : vector<8x64xf32>
    %1086 = vector.extract_strided_slice %1085 {offsets = [0, 0], sizes = [8, 32], strides = [1, 1]} : vector<8x64xf32> to vector<8x32xf32>
    %1087 = arith.index_cast %1057 : i32 to index
    %c0_387 = arith.constant 0 : index
    %1088 = vector.load %arg13[%1087, %c0_387] : memref<128x64xf32, #tpu.memory_space<vmem>>, vector<8x32xf32>
    tpu.vector_store %arg13[%1087, %c0_387], %1086 {strides = array<i32>} : memref<128x64xf32, #tpu.memory_space<vmem>>, vector<8x32xf32>,
    %1089 = vector.extract_strided_slice %1085 {offsets = [0, 32], sizes = [8, 32], strides = [1, 1]} : vector<8x64xf32> to vector<8x32xf32>
    %1090 = arith.index_cast %1060 : i32 to index
    %c32_388 = arith.constant 32 : index
    %1091 = vector.load %arg13[%1090, %c32_388] : memref<128x64xf32, #tpu.memory_space<vmem>>, vector<8x32xf32>
    tpu.vector_store %arg13[%1090, %c32_388], %1089 {strides = array<i32>} : memref<128x64xf32, #tpu.memory_space<vmem>>, vector<8x32xf32>,
    %c13_i32_389 = arith.constant 13 : i32
    %c8_i32_390 = arith.constant 8 : i32
    %1092 = arith.muli %c13_i32_389, %c8_i32_390 : i32
    %1093 = tpu.assume_multiple %1092, 8 : i32
    %c15_i32_391 = arith.constant 15 : i32
    %1094 = arith.subi %c15_i32_391, %c13_i32_389 : i32
    %c8_i32_392 = arith.constant 8 : i32
    %1095 = arith.muli %1094, %c8_i32_392 : i32
    %1096 = tpu.assume_multiple %1095, 8 : i32
    %1097 = arith.index_cast %1093 : i32 to index
    %c0_393 = arith.constant 0 : index
    %1098 = vector.load %arg12[%1097, %c0_393] : memref<128x256xf32, #tpu.memory_space<vmem>>, vector<8x256xf32>
    %1099 = arith.index_cast %1096 : i32 to index
    %c0_394 = arith.constant 0 : index
    %1100 = vector.load %arg12[%1099, %c0_394] : memref<128x256xf32, #tpu.memory_space<vmem>>, vector<8x256xf32>
    %1101 = arith.truncf %1085 : vector<8x64xf32> to vector<8x64xbf16>
    %c0_395 = arith.constant 0 : index
    %c0_396 = arith.constant 0 : index
    %1102 = vector.load %arg7[%c0_395, %c0_396] : memref<64x256xbf16, #tpu.memory_space<vmem>>, vector<64x256xbf16>
    %cst_397 = arith.constant dense<0.000000e+00> : vector<8x256xf32>
    %1103 = tpu.matmul %1101, %1102, %cst_397 {dimension_numbers = #tpu.dot_dimension_numbers<[1], [0], [0], [1], [0, 0, 1, 1], [], []>} : vector<8x64xbf16>, vector<64x256xbf16>, vector<8x256xf32> -> vector<8x256xf32>
    %1104 = arith.select %25, %1098, %1100 : vector<8x256xi1>, vector<8x256xf32>
    %1105 = arith.addf %1104, %1103 : vector<8x256xf32>
    %1106 = arith.mulf %1105, %30 : vector<8x256xf32>
    %1107 = math.tanh %1106 : vector<8x256xf32>
    %1108 = vector.extract_strided_slice %1107 {offsets = [0, 0], sizes = [8, 192], strides = [1, 1]} : vector<8x256xf32> to vector<8x192xf32>
    %cst_398 = arith.constant 5.000000e-01 : f32
    %1109 = vector.broadcast %cst_398 : f32 to vector<8x192xf32>
    %1110 = arith.mulf %1108, %1109 : vector<8x192xf32>
    %cst_399 = arith.constant 5.000000e-01 : f32
    %1111 = vector.broadcast %cst_399 : f32 to vector<8x192xf32>
    %1112 = arith.addf %1110, %1111 : vector<8x192xf32>
    %1113 = vector.extract_strided_slice %1112 {offsets = [0, 0], sizes = [8, 64], strides = [1, 1]} : vector<8x192xf32> to vector<8x64xf32>
    %1114 = vector.extract_strided_slice %1112 {offsets = [0, 64], sizes = [8, 64], strides = [1, 1]} : vector<8x192xf32> to vector<8x64xf32>
    %1115 = vector.extract_strided_slice %1112 {offsets = [0, 128], sizes = [8, 64], strides = [1, 1]} : vector<8x192xf32> to vector<8x64xf32>
    %1116 = vector.extract_strided_slice %1107 {offsets = [0, 192], sizes = [8, 64], strides = [1, 1]} : vector<8x256xf32> to vector<8x64xf32>
    %1117 = arith.mulf %1114, %1083 : vector<8x64xf32>
    %1118 = arith.mulf %1113, %1116 : vector<8x64xf32>
    %1119 = arith.addf %1117, %1118 : vector<8x64xf32>
    %1120 = math.tanh %1119 : vector<8x64xf32>
    %1121 = arith.mulf %1115, %1120 : vector<8x64xf32>
    %1122 = vector.extract_strided_slice %1121 {offsets = [0, 0], sizes = [8, 32], strides = [1, 1]} : vector<8x64xf32> to vector<8x32xf32>
    %1123 = arith.index_cast %1093 : i32 to index
    %c0_400 = arith.constant 0 : index
    %1124 = vector.load %arg13[%1123, %c0_400] : memref<128x64xf32, #tpu.memory_space<vmem>>, vector<8x32xf32>
    tpu.vector_store %arg13[%1123, %c0_400], %1122 {strides = array<i32>} : memref<128x64xf32, #tpu.memory_space<vmem>>, vector<8x32xf32>,
    %1125 = vector.extract_strided_slice %1121 {offsets = [0, 32], sizes = [8, 32], strides = [1, 1]} : vector<8x64xf32> to vector<8x32xf32>
    %1126 = arith.index_cast %1096 : i32 to index
    %c32_401 = arith.constant 32 : index
    %1127 = vector.load %arg13[%1126, %c32_401] : memref<128x64xf32, #tpu.memory_space<vmem>>, vector<8x32xf32>
    tpu.vector_store %arg13[%1126, %c32_401], %1125 {strides = array<i32>} : memref<128x64xf32, #tpu.memory_space<vmem>>, vector<8x32xf32>,
    %c14_i32_402 = arith.constant 14 : i32
    %c8_i32_403 = arith.constant 8 : i32
    %1128 = arith.muli %c14_i32_402, %c8_i32_403 : i32
    %1129 = tpu.assume_multiple %1128, 8 : i32
    %c15_i32_404 = arith.constant 15 : i32
    %1130 = arith.subi %c15_i32_404, %c14_i32_402 : i32
    %c8_i32_405 = arith.constant 8 : i32
    %1131 = arith.muli %1130, %c8_i32_405 : i32
    %1132 = tpu.assume_multiple %1131, 8 : i32
    %1133 = arith.index_cast %1129 : i32 to index
    %c0_406 = arith.constant 0 : index
    %1134 = vector.load %arg12[%1133, %c0_406] : memref<128x256xf32, #tpu.memory_space<vmem>>, vector<8x256xf32>
    %1135 = arith.index_cast %1132 : i32 to index
    %c0_407 = arith.constant 0 : index
    %1136 = vector.load %arg12[%1135, %c0_407] : memref<128x256xf32, #tpu.memory_space<vmem>>, vector<8x256xf32>
    %1137 = arith.truncf %1121 : vector<8x64xf32> to vector<8x64xbf16>
    %c0_408 = arith.constant 0 : index
    %c0_409 = arith.constant 0 : index
    %1138 = vector.load %arg7[%c0_408, %c0_409] : memref<64x256xbf16, #tpu.memory_space<vmem>>, vector<64x256xbf16>
    %cst_410 = arith.constant dense<0.000000e+00> : vector<8x256xf32>
    %1139 = tpu.matmul %1137, %1138, %cst_410 {dimension_numbers = #tpu.dot_dimension_numbers<[1], [0], [0], [1], [0, 0, 1, 1], [], []>} : vector<8x64xbf16>, vector<64x256xbf16>, vector<8x256xf32> -> vector<8x256xf32>
    %1140 = arith.select %25, %1134, %1136 : vector<8x256xi1>, vector<8x256xf32>
    %1141 = arith.addf %1140, %1139 : vector<8x256xf32>
    %1142 = arith.mulf %1141, %30 : vector<8x256xf32>
    %1143 = math.tanh %1142 : vector<8x256xf32>
    %1144 = vector.extract_strided_slice %1143 {offsets = [0, 0], sizes = [8, 192], strides = [1, 1]} : vector<8x256xf32> to vector<8x192xf32>
    %cst_411 = arith.constant 5.000000e-01 : f32
    %1145 = vector.broadcast %cst_411 : f32 to vector<8x192xf32>
    %1146 = arith.mulf %1144, %1145 : vector<8x192xf32>
    %cst_412 = arith.constant 5.000000e-01 : f32
    %1147 = vector.broadcast %cst_412 : f32 to vector<8x192xf32>
    %1148 = arith.addf %1146, %1147 : vector<8x192xf32>
    %1149 = vector.extract_strided_slice %1148 {offsets = [0, 0], sizes = [8, 64], strides = [1, 1]} : vector<8x192xf32> to vector<8x64xf32>
    %1150 = vector.extract_strided_slice %1148 {offsets = [0, 64], sizes = [8, 64], strides = [1, 1]} : vector<8x192xf32> to vector<8x64xf32>
    %1151 = vector.extract_strided_slice %1148 {offsets = [0, 128], sizes = [8, 64], strides = [1, 1]} : vector<8x192xf32> to vector<8x64xf32>
    %1152 = vector.extract_strided_slice %1143 {offsets = [0, 192], sizes = [8, 64], strides = [1, 1]} : vector<8x256xf32> to vector<8x64xf32>
    %1153 = arith.mulf %1150, %1119 : vector<8x64xf32>
    %1154 = arith.mulf %1149, %1152 : vector<8x64xf32>
    %1155 = arith.addf %1153, %1154 : vector<8x64xf32>
    %1156 = math.tanh %1155 : vector<8x64xf32>
    %1157 = arith.mulf %1151, %1156 : vector<8x64xf32>
    %1158 = vector.extract_strided_slice %1157 {offsets = [0, 0], sizes = [8, 32], strides = [1, 1]} : vector<8x64xf32> to vector<8x32xf32>
    %1159 = arith.index_cast %1129 : i32 to index
    %c0_413 = arith.constant 0 : index
    %1160 = vector.load %arg13[%1159, %c0_413] : memref<128x64xf32, #tpu.memory_space<vmem>>, vector<8x32xf32>
    tpu.vector_store %arg13[%1159, %c0_413], %1158 {strides = array<i32>} : memref<128x64xf32, #tpu.memory_space<vmem>>, vector<8x32xf32>,
    %1161 = vector.extract_strided_slice %1157 {offsets = [0, 32], sizes = [8, 32], strides = [1, 1]} : vector<8x64xf32> to vector<8x32xf32>
    %1162 = arith.index_cast %1132 : i32 to index
    %c32_414 = arith.constant 32 : index
    %1163 = vector.load %arg13[%1162, %c32_414] : memref<128x64xf32, #tpu.memory_space<vmem>>, vector<8x32xf32>
    tpu.vector_store %arg13[%1162, %c32_414], %1161 {strides = array<i32>} : memref<128x64xf32, #tpu.memory_space<vmem>>, vector<8x32xf32>,
    %c15_i32_415 = arith.constant 15 : i32
    %c8_i32_416 = arith.constant 8 : i32
    %1164 = arith.muli %c15_i32_415, %c8_i32_416 : i32
    %1165 = tpu.assume_multiple %1164, 8 : i32
    %c15_i32_417 = arith.constant 15 : i32
    %1166 = arith.subi %c15_i32_417, %c15_i32_415 : i32
    %c8_i32_418 = arith.constant 8 : i32
    %1167 = arith.muli %1166, %c8_i32_418 : i32
    %1168 = tpu.assume_multiple %1167, 8 : i32
    %1169 = arith.index_cast %1165 : i32 to index
    %c0_419 = arith.constant 0 : index
    %1170 = vector.load %arg12[%1169, %c0_419] : memref<128x256xf32, #tpu.memory_space<vmem>>, vector<8x256xf32>
    %1171 = arith.index_cast %1168 : i32 to index
    %c0_420 = arith.constant 0 : index
    %1172 = vector.load %arg12[%1171, %c0_420] : memref<128x256xf32, #tpu.memory_space<vmem>>, vector<8x256xf32>
    %1173 = arith.truncf %1157 : vector<8x64xf32> to vector<8x64xbf16>
    %c0_421 = arith.constant 0 : index
    %c0_422 = arith.constant 0 : index
    %1174 = vector.load %arg7[%c0_421, %c0_422] : memref<64x256xbf16, #tpu.memory_space<vmem>>, vector<64x256xbf16>
    %cst_423 = arith.constant dense<0.000000e+00> : vector<8x256xf32>
    %1175 = tpu.matmul %1173, %1174, %cst_423 {dimension_numbers = #tpu.dot_dimension_numbers<[1], [0], [0], [1], [0, 0, 1, 1], [], []>} : vector<8x64xbf16>, vector<64x256xbf16>, vector<8x256xf32> -> vector<8x256xf32>
    %1176 = arith.select %25, %1170, %1172 : vector<8x256xi1>, vector<8x256xf32>
    %1177 = arith.addf %1176, %1175 : vector<8x256xf32>
    %1178 = arith.mulf %1177, %30 : vector<8x256xf32>
    %1179 = math.tanh %1178 : vector<8x256xf32>
    %1180 = vector.extract_strided_slice %1179 {offsets = [0, 0], sizes = [8, 192], strides = [1, 1]} : vector<8x256xf32> to vector<8x192xf32>
    %cst_424 = arith.constant 5.000000e-01 : f32
    %1181 = vector.broadcast %cst_424 : f32 to vector<8x192xf32>
    %1182 = arith.mulf %1180, %1181 : vector<8x192xf32>
    %cst_425 = arith.constant 5.000000e-01 : f32
    %1183 = vector.broadcast %cst_425 : f32 to vector<8x192xf32>
    %1184 = arith.addf %1182, %1183 : vector<8x192xf32>
    %1185 = vector.extract_strided_slice %1184 {offsets = [0, 0], sizes = [8, 64], strides = [1, 1]} : vector<8x192xf32> to vector<8x64xf32>
    %1186 = vector.extract_strided_slice %1184 {offsets = [0, 64], sizes = [8, 64], strides = [1, 1]} : vector<8x192xf32> to vector<8x64xf32>
    %1187 = vector.extract_strided_slice %1184 {offsets = [0, 128], sizes = [8, 64], strides = [1, 1]} : vector<8x192xf32> to vector<8x64xf32>
    %1188 = vector.extract_strided_slice %1179 {offsets = [0, 192], sizes = [8, 64], strides = [1, 1]} : vector<8x256xf32> to vector<8x64xf32>
    %1189 = arith.mulf %1186, %1155 : vector<8x64xf32>
    %1190 = arith.mulf %1185, %1188 : vector<8x64xf32>
    %1191 = arith.addf %1189, %1190 : vector<8x64xf32>
    %1192 = math.tanh %1191 : vector<8x64xf32>
    %1193 = arith.mulf %1187, %1192 : vector<8x64xf32>
    %1194 = vector.extract_strided_slice %1193 {offsets = [0, 0], sizes = [8, 32], strides = [1, 1]} : vector<8x64xf32> to vector<8x32xf32>
    %1195 = arith.index_cast %1165 : i32 to index
    %c0_426 = arith.constant 0 : index
    %1196 = vector.load %arg13[%1195, %c0_426] : memref<128x64xf32, #tpu.memory_space<vmem>>, vector<8x32xf32>
    tpu.vector_store %arg13[%1195, %c0_426], %1194 {strides = array<i32>} : memref<128x64xf32, #tpu.memory_space<vmem>>, vector<8x32xf32>,
    %1197 = vector.extract_strided_slice %1193 {offsets = [0, 32], sizes = [8, 32], strides = [1, 1]} : vector<8x64xf32> to vector<8x32xf32>
    %1198 = arith.index_cast %1168 : i32 to index
    %c32_427 = arith.constant 32 : index
    %1199 = vector.load %arg13[%1198, %c32_427] : memref<128x64xf32, #tpu.memory_space<vmem>>, vector<8x32xf32>
    tpu.vector_store %arg13[%1198, %c32_427], %1197 {strides = array<i32>} : memref<128x64xf32, #tpu.memory_space<vmem>>, vector<8x32xf32>,
    %c16_i32_428 = arith.constant 16 : i32
    %c120 = arith.constant 120 : index
    %c0_429 = arith.constant 0 : index
    %1200 = vector.load %arg13[%c120, %c0_429] : memref<128x64xf32, #tpu.memory_space<vmem>>, vector<8x64xf32>
    %c0_430 = arith.constant 0 : index
    %c0_431 = arith.constant 0 : index
    %1201 = vector.load %arg9[%c0_430, %c0_431] : memref<64x8xf32, #tpu.memory_space<vmem>>, vector<64x8xf32>
    %cst_432 = arith.constant dense<0.000000e+00> : vector<8x8xf32>
    %1202 = tpu.matmul %1200, %1201, %cst_432 {dimension_numbers = #tpu.dot_dimension_numbers<[1], [0], [0], [1], [0, 0, 1, 1], [], []>} : vector<8x64xf32>, vector<64x8xf32>, vector<8x8xf32> -> vector<8x8xf32>
    %c0_433 = arith.constant 0 : index
    %c0_434 = arith.constant 0 : index
    %1203 = vector.load %arg10[%c0_433, %c0_434] : memref<1x8xf32, #tpu.memory_space<vmem>>, vector<1x8xf32>
    %1204 = vector.broadcast %1203 : vector<1x8xf32> to vector<8x8xf32>
    %1205 = arith.addf %1202, %1204 : vector<8x8xf32>
    %c0_435 = arith.constant 0 : index
    %c0_436 = arith.constant 0 : index
    %1206 = vector.load %arg11[%c0_435, %c0_436] : memref<8x8xf32, #tpu.memory_space<vmem>>, vector<8x8xf32>
    tpu.vector_store %arg11[%c0_435, %c0_436], %1205 {strides = array<i32>} : memref<8x8xf32, #tpu.memory_space<vmem>>, vector<8x8xf32>,
    return
  }
}

</mosaic_0001>

<llo_original>
// kernel: bilstm_forward.1
$region0: #{bilstm_forward.1}
  #allocation0 [shape = 'u32[]', space=smem, size = 0x4, offset = 0x4, fixed_abs, tag = 'smem constant byte address 0x4 - core index']
  #allocation1 [shape = 'u32[144,128]{1,0:T(1,128)}', space=vmem, size = 0x12000, scoped, tag = 'internal scratch']
  #allocation2 [shape = 'f32[128,256]{1,0:T(8,128)}', space=vmem, size = 0x20000, scoped, tag = 'scratch operand']
  #allocation3 [shape = 'f32[128,64]{1,0:T(8,128)}', space=vmem, size = 0x10000, scoped, tag = 'scratch operand']
  %s0 = inlined_call_operand.vmem [shape: f32[128,16], index: 0, kind: input, shape index: {}]
  %s1 = inlined_call_operand.vmem [shape: f32[128,1], index: 1, kind: input, shape index: {}]
  %s2 = inlined_call_operand.vmem [shape: f32[128,1], index: 2, kind: input, shape index: {}]
  %s3 = inlined_call_operand.vmem [shape: bf16[16,256], index: 3, kind: input, shape index: {}]
  %s4 = inlined_call_operand.vmem [shape: bf16[64,256], index: 4, kind: input, shape index: {}]
  %s5 = inlined_call_operand.vmem [shape: f32[1,256], index: 5, kind: input, shape index: {}]
  %s6 = inlined_call_operand.vmem [shape: bf16[64,256], index: 6, kind: input, shape index: {}]
  %s7 = inlined_call_operand.vmem [shape: bf16[64,256], index: 7, kind: input, shape index: {}]
  %s8 = inlined_call_operand.vmem [shape: f32[1,256], index: 8, kind: input, shape index: {}]
  %s9 = inlined_call_operand.vmem [shape: f32[64,8], index: 9, kind: input, shape index: {}]
  %s10 = inlined_call_operand.vmem [shape: f32[1,8], index: 10, kind: input, shape index: {}]
  %s11 = inlined_call_operand.vmem [shape: f32[8,8], index: 11, kind: output, shape index: {}]
  %s12 = sld [smem:[#allocation0]]
  $region54: #{bilstm_forward.1} parent=0
    _
  %s14 = ssub.s32 1, %s12
  %s15 = scalar_select 0, %s14, %s12
  // Predicated region
  $region2: #{bilstm_forward.1} parent=0 // pred_check
    _
  $region3: #{bilstm_forward.1} parent=0 // pred_check_branch
    %17 = sbr.rel (0) target = $region5
  $region4: #{bilstm_forward.1} parent=0 // pred_region
    _
  $region5: #{bilstm_forward.1} parent=0 // pred_fallthru
    _
  // Predicated region
  $region6: #{bilstm_forward.1} parent=0 // pred_check
    _
  $region7: #{bilstm_forward.1} parent=0 // pred_check_branch
    %19 = sbr.rel (0) target = $region9
  $region8: #{bilstm_forward.1} parent=0 // pred_region
    _
  $region9: #{bilstm_forward.1} parent=0 // pred_fallthru
    _
  // Predicated region
  $region10: #{bilstm_forward.1} parent=0 // pred_check
    _
  $region11: #{bilstm_forward.1} parent=0 // pred_check_branch
    %21 = sbr.rel (0) target = $region13
  $region12: #{bilstm_forward.1} parent=0 // pred_region
    _
  $region13: #{bilstm_forward.1} parent=0 // pred_fallthru
    _
  // Predicated region
  $region14: #{bilstm_forward.1} parent=0 // pred_check
    _
  $region15: #{bilstm_forward.1} parent=0 // pred_check_branch
    %23 = sbr.rel (0) target = $region17
  $region16: #{bilstm_forward.1} parent=0 // pred_region
    _
  $region17: #{bilstm_forward.1} parent=0 // pred_fallthru
    _
  // Predicated region
  $region18: #{bilstm_forward.1} parent=0 // pred_check
    _
  $region19: #{bilstm_forward.1} parent=0 // pred_check_branch
    %25 = sbr.rel (0) target = $region21
  $region20: #{bilstm_forward.1} parent=0 // pred_region
    _
  $region21: #{bilstm_forward.1} parent=0 // pred_fallthru
    _
  // Predicated region
  $region22: #{bilstm_forward.1} parent=0 // pred_check
    _
  $region23: #{bilstm_forward.1} parent=0 // pred_check_branch
    %27 = sbr.rel (0) target = $region25
  $region24: #{bilstm_forward.1} parent=0 // pred_region
    _
  $region25: #{bilstm_forward.1} parent=0 // pred_fallthru
    _
  // Predicated region
  $region26: #{bilstm_forward.1} parent=0 // pred_check
    _
  $region27: #{bilstm_forward.1} parent=0 // pred_check_branch
    %29 = sbr.rel (0) target = $region29
  $region28: #{bilstm_forward.1} parent=0 // pred_region
    _
  $region29: #{bilstm_forward.1} parent=0 // pred_fallthru
    _
  // Predicated region
  $region30: #{bilstm_forward.1} parent=0 // pred_check
    _
  $region31: #{bilstm_forward.1} parent=0 // pred_check_branch
    %31 = sbr.rel (0) target = $region33
  $region32: #{bilstm_forward.1} parent=0 // pred_region
    _
  $region33: #{bilstm_forward.1} parent=0 // pred_fallthru
    _
  // Predicated region
  $region34: #{bilstm_forward.1} parent=0 // pred_check
    _
  $region35: #{bilstm_forward.1} parent=0 // pred_check_branch
    %33 = sbr.rel (0) target = $region37
  $region36: #{bilstm_forward.1} parent=0 // pred_region
    _
  $region37: #{bilstm_forward.1} parent=0 // pred_fallthru
    _
  // Predicated region
  $region38: #{bilstm_forward.1} parent=0 // pred_check
    _
  $region39: #{bilstm_forward.1} parent=0 // pred_check_branch
    %35 = sbr.rel (0) target = $region41
  $region40: #{bilstm_forward.1} parent=0 // pred_region
    _
  $region41: #{bilstm_forward.1} parent=0 // pred_fallthru
    _
  // Predicated region
  $region42: #{bilstm_forward.1} parent=0 // pred_check
    _
  $region43: #{bilstm_forward.1} parent=0 // pred_check_branch
    %37 = sbr.rel (0) target = $region45
  $region44: #{bilstm_forward.1} parent=0 // pred_region
    _
  $region45: #{bilstm_forward.1} parent=0 // pred_fallthru
    _
  %v39 = vld [vmem:[%s0] sm:$0xff]
  %v40 = vld [vmem:[%s0 + $0x8] sm:$0xff]
  %v41 = vld [vmem:[%s0 + $0x10] sm:$0xff]
  %v42 = vld [vmem:[%s0 + $0x18] sm:$0xff]
  %v43 = vld [vmem:[%s0 + $0x20] sm:$0xff]
  %v44 = vld [vmem:[%s0 + $0x28] sm:$0xff]
  %v45 = vld [vmem:[%s0 + $0x30] sm:$0xff]
  %v46 = vld [vmem:[%s0 + $0x38] sm:$0xff]
  %v47 = vld [vmem:[%s0 + $0x40] sm:$0xff]
  %v48 = vld [vmem:[%s0 + $0x48] sm:$0xff]
  %v49 = vld [vmem:[%s0 + $0x50] sm:$0xff]
  %v50 = vld [vmem:[%s0 + $0x58] sm:$0xff]
  %v51 = vld [vmem:[%s0 + $0x60] sm:$0xff]
  %v52 = vld [vmem:[%s0 + $0x68] sm:$0xff]
  %v53 = vld [vmem:[%s0 + $0x70] sm:$0xff]
  %v54 = vld [vmem:[%s0 + $0x78] sm:$0xff]
  %v55 = vld [vmem:[%s1] sm:$0xff]
  %v56 = vld [vmem:[%s1 + $0x8] sm:$0xff]
  %v57 = vld [vmem:[%s1 + $0x10] sm:$0xff]
  %v58 = vld [vmem:[%s1 + $0x18] sm:$0xff]
  %v59 = vld [vmem:[%s1 + $0x20] sm:$0xff]
  %v60 = vld [vmem:[%s1 + $0x28] sm:$0xff]
  %v61 = vld [vmem:[%s1 + $0x30] sm:$0xff]
  %v62 = vld [vmem:[%s1 + $0x38] sm:$0xff]
  %v63 = vld [vmem:[%s1 + $0x40] sm:$0xff]
  %v64 = vld [vmem:[%s1 + $0x48] sm:$0xff]
  %v65 = vld [vmem:[%s1 + $0x50] sm:$0xff]
  %v66 = vld [vmem:[%s1 + $0x58] sm:$0xff]
  %v67 = vld [vmem:[%s1 + $0x60] sm:$0xff]
  %v68 = vld [vmem:[%s1 + $0x68] sm:$0xff]
  %v69 = vld [vmem:[%s1 + $0x70] sm:$0xff]
  %v70 = vld [vmem:[%s1 + $0x78] sm:$0xff]
  %72 = vset.pattern.permute.xlu0 0
  %73 = vperm.xlu0 %72, %v55
  %v74 = vpop.permute.xlu0 %73
  %77 = vset.pattern.permute.xlu0 0
  %78 = vperm.xlu0 %77, %v56
  %v79 = vpop.permute.xlu0 %78
  %82 = vset.pattern.permute.xlu0 0
  %83 = vperm.xlu0 %82, %v57
  %v84 = vpop.permute.xlu0 %83
  %87 = vset.pattern.permute.xlu0 0
  %88 = vperm.xlu0 %87, %v58
  %v89 = vpop.permute.xlu0 %88
  %92 = vset.pattern.permute.xlu0 0
  %93 = vperm.xlu0 %92, %v59
  %v94 = vpop.permute.xlu0 %93
  %97 = vset.pattern.permute.xlu0 0
  %98 = vperm.xlu0 %97, %v60
  %v99 = vpop.permute.xlu0 %98
  %102 = vset.pattern.permute.xlu0 0
  %103 = vperm.xlu0 %102, %v61
  %v104 = vpop.permute.xlu0 %103
  %107 = vset.pattern.permute.xlu0 0
  %108 = vperm.xlu0 %107, %v62
  %v109 = vpop.permute.xlu0 %108
  %112 = vset.pattern.permute.xlu0 0
  %113 = vperm.xlu0 %112, %v63
  %v114 = vpop.permute.xlu0 %113
  %117 = vset.pattern.permute.xlu0 0
  %118 = vperm.xlu0 %117, %v64
  %v119 = vpop.permute.xlu0 %118
  %122 = vset.pattern.permute.xlu0 0
  %123 = vperm.xlu0 %122, %v65
  %v124 = vpop.permute.xlu0 %123
  %127 = vset.pattern.permute.xlu0 0
  %128 = vperm.xlu0 %127, %v66
  %v129 = vpop.permute.xlu0 %128
  %132 = vset.pattern.permute.xlu0 0
  %133 = vperm.xlu0 %132, %v67
  %v134 = vpop.permute.xlu0 %133
  %137 = vset.pattern.permute.xlu0 0
  %138 = vperm.xlu0 %137, %v68
  %v139 = vpop.permute.xlu0 %138
  %142 = vset.pattern.permute.xlu0 0
  %143 = vperm.xlu0 %142, %v69
  %v144 = vpop.permute.xlu0 %143
  %147 = vset.pattern.permute.xlu0 0
  %148 = vperm.xlu0 %147, %v70
  %v149 = vpop.permute.xlu0 %148
  %v151 = vmul.f32 %v39, %v74
  %v152 = vmul.f32 %v40, %v79
  %v153 = vmul.f32 %v41, %v84
  %v154 = vmul.f32 %v42, %v89
  %v155 = vmul.f32 %v43, %v94
  %v156 = vmul.f32 %v44, %v99
  %v157 = vmul.f32 %v45, %v104
  %v158 = vmul.f32 %v46, %v109
  %v159 = vmul.f32 %v47, %v114
  %v160 = vmul.f32 %v48, %v119
  %v161 = vmul.f32 %v49, %v124
  %v162 = vmul.f32 %v50, %v129
  %v163 = vmul.f32 %v51, %v134
  %v164 = vmul.f32 %v52, %v139
  %v165 = vmul.f32 %v53, %v144
  %v166 = vmul.f32 %v54, %v149
  %v167 = vld [vmem:[%s2] sm:$0xff]
  %v168 = vld [vmem:[%s2 + $0x8] sm:$0xff]
  %v169 = vld [vmem:[%s2 + $0x10] sm:$0xff]
  %v170 = vld [vmem:[%s2 + $0x18] sm:$0xff]
  %v171 = vld [vmem:[%s2 + $0x20] sm:$0xff]
  %v172 = vld [vmem:[%s2 + $0x28] sm:$0xff]
  %v173 = vld [vmem:[%s2 + $0x30] sm:$0xff]
  %v174 = vld [vmem:[%s2 + $0x38] sm:$0xff]
  %v175 = vld [vmem:[%s2 + $0x40] sm:$0xff]
  %v176 = vld [vmem:[%s2 + $0x48] sm:$0xff]
  %v177 = vld [vmem:[%s2 + $0x50] sm:$0xff]
  %v178 = vld [vmem:[%s2 + $0x58] sm:$0xff]
  %v179 = vld [vmem:[%s2 + $0x60] sm:$0xff]
  %v180 = vld [vmem:[%s2 + $0x68] sm:$0xff]
  %v181 = vld [vmem:[%s2 + $0x70] sm:$0xff]
  %v182 = vld [vmem:[%s2 + $0x78] sm:$0xff]
  %184 = vset.pattern.permute.xlu0 0
  %185 = vperm.xlu0 %184, %v167
  %v186 = vpop.permute.xlu0 %185
  %189 = vset.pattern.permute.xlu0 0
  %190 = vperm.xlu0 %189, %v168
  %v191 = vpop.permute.xlu0 %190
  %194 = vset.pattern.permute.xlu0 0
  %195 = vperm.xlu0 %194, %v169
  %v196 = vpop.permute.xlu0 %195
  %199 = vset.pattern.permute.xlu0 0
  %200 = vperm.xlu0 %199, %v170
  %v201 = vpop.permute.xlu0 %200
  %204 = vset.pattern.permute.xlu0 0
  %205 = vperm.xlu0 %204, %v171
  %v206 = vpop.permute.xlu0 %205
  %209 = vset.pattern.permute.xlu0 0
  %210 = vperm.xlu0 %209, %v172
  %v211 = vpop.permute.xlu0 %210
  %214 = vset.pattern.permute.xlu0 0
  %215 = vperm.xlu0 %214, %v173
  %v216 = vpop.permute.xlu0 %215
  %219 = vset.pattern.permute.xlu0 0
  %220 = vperm.xlu0 %219, %v174
  %v221 = vpop.permute.xlu0 %220
  %224 = vset.pattern.permute.xlu0 0
  %225 = vperm.xlu0 %224, %v175
  %v226 = vpop.permute.xlu0 %225
  %229 = vset.pattern.permute.xlu0 0
  %230 = vperm.xlu0 %229, %v176
  %v231 = vpop.permute.xlu0 %230
  %234 = vset.pattern.permute.xlu0 0
  %235 = vperm.xlu0 %234, %v177
  %v236 = vpop.permute.xlu0 %235
  %239 = vset.pattern.permute.xlu0 0
  %240 = vperm.xlu0 %239, %v178
  %v241 = vpop.permute.xlu0 %240
  %244 = vset.pattern.permute.xlu0 0
  %245 = vperm.xlu0 %244, %v179
  %v246 = vpop.permute.xlu0 %245
  %249 = vset.pattern.permute.xlu0 0
  %250 = vperm.xlu0 %249, %v180
  %v251 = vpop.permute.xlu0 %250
  %254 = vset.pattern.permute.xlu0 0
  %255 = vperm.xlu0 %254, %v181
  %v256 = vpop.permute.xlu0 %255
  %259 = vset.pattern.permute.xlu0 0
  %260 = vperm.xlu0 %259, %v182
  %v261 = vpop.permute.xlu0 %260
  %v263 = vadd.f32 %v151, %v186
  %v264 = vadd.f32 %v152, %v191
  %v265 = vadd.f32 %v153, %v196
  %v266 = vadd.f32 %v154, %v201
  %v267 = vadd.f32 %v155, %v206
  %v268 = vadd.f32 %v156, %v211
  %v269 = vadd.f32 %v157, %v216
  %v270 = vadd.f32 %v158, %v221
  %v271 = vadd.f32 %v159, %v226
  %v272 = vadd.f32 %v160, %v231
  %v273 = vadd.f32 %v161, %v236
  %v274 = vadd.f32 %v162, %v241
  %v275 = vadd.f32 %v163, %v246
  %v276 = vadd.f32 %v164, %v251
  %v277 = vadd.f32 %v165, %v256
  %v278 = vadd.f32 %v166, %v261
  %v279 = vlaneseq
  %v280 = vand.u32 %v279, 127
  %v281 = vadd.s32 %v280, 128
  %vm282 = vcmp.lt.s32.totalorder %v280, 0
  %v283 = vsub.s32 0, %v280
  %v284 = vsel %vm282, %v283, %v280
  %v285 = vshrl.u32 %v284, 6
  %v286 = vand.u32 %v284, 63
  %v287 = vsub.s32 0, %v286
  %v288 = vsel %vm282, %v287, %v286
  %vm289 = vcmp.lt.s32.totalorder %v281, 0
  %v290 = vsub.s32 0, %v281
  %v291 = vsel %vm289, %v290, %v281
  %v292 = vshrl.u32 %v291, 6
  %v293 = vand.u32 %v291, 63
  %v294 = vsub.s32 0, %v293
  %v295 = vsel %vm289, %v294, %v293
  %vm296 = vcmp.ne.s32.totalorder %v288, 0
  %vm297 = vcmp.ne.s32.totalorder %v295, 0
  %vm298 = vcmp.lt.s32.totalorder %v288, 0
  %vm299 = vcmp.lt.s32.totalorder %v295, 0
  %vm300 = vmand %vm298, %vm296
  %vm301 = vmand %vm299, %vm297
  %v302 = vadd.s32 %v288, 64
  %v303 = vadd.s32 %v295, 64
  %v304 = vsel %vm300, %v302, %v288
  %v305 = vsel %vm301, %v303, %v295
  %vm306 = vcmp.lt.s32.totalorder %v304, 32
  %vm307 = vcmp.lt.s32.totalorder %v305, 32
  %vm308 = vcmp.lt.s32.totalorder %v280, 192
  %vm309 = vcmp.lt.s32.totalorder %v281, 192
  %v310 = vsel %vm308, 0.5, 1.0
  %v311 = vsel %vm309, 0.5, 1.0
  %v312 = vpack.c.bf16 %v264, %v263
  %v313 = vpack.c.bf16 %v266, %v265
  %v314 = vpack.c.bf16 %v268, %v267
  %v315 = vpack.c.bf16 %v270, %v269
  %v316 = vpack.c.bf16 %v272, %v271
  %v317 = vpack.c.bf16 %v274, %v273
  %v318 = vpack.c.bf16 %v276, %v275
  %v319 = vpack.c.bf16 %v278, %v277
  %v320 = vld [vmem:[%s3] sm:$0xff]
  %v321 = vld [vmem:[%s3 + $0x8] sm:$0xff]
  %v322 = vld [vmem:[%s5] sm:$0x3]
  %v324 = vlaneseq
  %v325 = vshrl.u32 %v324, 7
  %v326 = vsub.s32 0, %v325
  %v327 = vrot.slane %v322, %v326
  %v328 = vlaneseq
  %v329 = vshrl.u32 %v328, 7
  %v330 = vsub.s32 1, %v329
  %v331 = vrot.slane %v322, %v330
  %v336 = vunpack.c.l.b16 %v320
  %v337 = vunpack.c.h.b16 %v320
  %v338 = vunpack.c.l.b16 %v321
  %v339 = vunpack.c.h.b16 %v321
  %v340 = vpack.c.b16 %v338, %v336
  %v341 = vpack.c.b16 %v339, %v337
  %vm344 = vcmask 130048
  %v346 = vsel %vm344, %v312, 0
  %v349 = vsel %vm344, %v313, 0
  %v352 = vsel %vm344, %v314, 0
  %v355 = vsel %vm344, %v315, 0
  %v358 = vsel %vm344, %v316, 0
  %v361 = vsel %vm344, %v317, 0
  %v364 = vsel %vm344, %v318, 0
  %v367 = vsel %vm344, %v319, 0
  %369 = vmatprep.subr.bf16.mxu0 0
  %370 = vmatpush1.bf16.msra.mxu0 0
  %371 = vmatprep.subr.bf16.mxu0 0
  %372 = vmatpush1.bf16.msra.mxu0 0
  %373 = vmatprep.subr.bf16.mxu0 0
  %374 = vmatpush1.bf16.msra.mxu0 0
  %375 = vmatprep.subr.bf16.mxu0 0
  %376 = vmatpush1.bf16.msra.mxu0 0
  %377 = vmatprep.subr.bf16.mxu0 0
  %378 = vmatpush1.bf16.msra.mxu0 0
  %379 = vmatprep.subr.bf16.mxu0 0
  %380 = vmatpush1.bf16.msra.mxu0 0
  %381 = vmatprep.subr.bf16.mxu0 0
  %382 = vmatpush1.bf16.msra.mxu0 0
  %383 = vmatprep.subr.bf16.mxu0 %v341
  %384 = vmatpush1.bf16.msra.mxu0 %v340
  %385 = vmatprep.subr.bf16.mxu0 0
  %386 = vmatpush2.bf16.msra.mxu0 0
  %387 = vmatprep.subr.bf16.mxu0 0
  %388 = vmatpush2.bf16.msra.mxu0 0
  %389 = vmatprep.subr.bf16.mxu0 0
  %390 = vmatpush2.bf16.msra.mxu0 0
  %391 = vmatprep.subr.bf16.mxu0 0
  %392 = vmatpush2.bf16.msra.mxu0 0
  %393 = vmatprep.subr.bf16.mxu0 0
  %394 = vmatpush2.bf16.msra.mxu0 0
  %395 = vmatprep.subr.bf16.mxu0 0
  %396 = vmatpush2.bf16.msra.mxu0 0
  %397 = vmatprep.subr.bf16.mxu0 0
  %398 = vmatpush2.bf16.msra.mxu0 0
  %399 = vmatprep.subr.bf16.mxu0 0
  %400 = vmatpush2.bf16.msra.mxu0 0
  %401 = vmatprep.mubr.bf16.mxu0 0
  %402 = vmatmul.mubr.bf16.gmra.mxu0 %v346
  %v403 = vpop.f32.mrf.mxu0
  %v404 = vadd.f32 %v327, %v403
  %v405 = vpop.f32.mrf.mxu0
  %v406 = vadd.f32 %v331, %v405
  %v407 = vpop.f32.mrf.mxu0
  %v408 = vadd.f32 %v327, %v407
  %v409 = vpop.f32.mrf.mxu0
  %v410 = vadd.f32 %v331, %v409
  %411 = vmatprep.mubr.bf16.mxu0 0
  %412 = vmatmul.mubr.bf16.gmra.mxu0 %v349
  %v413 = vpop.f32.mrf.mxu0
  %v414 = vadd.f32 %v327, %v413
  %v415 = vpop.f32.mrf.mxu0
  %v416 = vadd.f32 %v331, %v415
  %v417 = vpop.f32.mrf.mxu0
  %v418 = vadd.f32 %v327, %v417
  %v419 = vpop.f32.mrf.mxu0
  %v420 = vadd.f32 %v331, %v419
  %421 = vmatprep.mubr.bf16.mxu0 0
  %422 = vmatmul.mubr.bf16.gmra.mxu0 %v352
  %v423 = vpop.f32.mrf.mxu0
  %v424 = vadd.f32 %v327, %v423
  %v425 = vpop.f32.mrf.mxu0
  %v426 = vadd.f32 %v331, %v425
  %v427 = vpop.f32.mrf.mxu0
  %v428 = vadd.f32 %v327, %v427
  %v429 = vpop.f32.mrf.mxu0
  %v430 = vadd.f32 %v331, %v429
  %431 = vmatprep.mubr.bf16.mxu0 0
  %432 = vmatmul.mubr.bf16.gmra.mxu0 %v355
  %v433 = vpop.f32.mrf.mxu0
  %v434 = vadd.f32 %v327, %v433
  %v435 = vpop.f32.mrf.mxu0
  %v436 = vadd.f32 %v331, %v435
  %v437 = vpop.f32.mrf.mxu0
  %v438 = vadd.f32 %v327, %v437
  %v439 = vpop.f32.mrf.mxu0
  %v440 = vadd.f32 %v331, %v439
  %441 = vmatprep.mubr.bf16.mxu0 0
  %442 = vmatmul.mubr.bf16.gmra.mxu0 %v358
  %v443 = vpop.f32.mrf.mxu0
  %v444 = vadd.f32 %v327, %v443
  %v445 = vpop.f32.mrf.mxu0
  %v446 = vadd.f32 %v331, %v445
  %v447 = vpop.f32.mrf.mxu0
  %v448 = vadd.f32 %v327, %v447
  %v449 = vpop.f32.mrf.mxu0
  %v450 = vadd.f32 %v331, %v449
  %451 = vmatprep.mubr.bf16.mxu0 0
  %452 = vmatmul.mubr.bf16.gmra.mxu0 %v361
  %v453 = vpop.f32.mrf.mxu0
  %v454 = vadd.f32 %v327, %v453
  %v455 = vpop.f32.mrf.mxu0
  %v456 = vadd.f32 %v331, %v455
  %v457 = vpop.f32.mrf.mxu0
  %v458 = vadd.f32 %v327, %v457
  %v459 = vpop.f32.mrf.mxu0
  %v460 = vadd.f32 %v331, %v459
  %461 = vmatprep.mubr.bf16.mxu0 0
  %462 = vmatmul.mubr.bf16.gmra.mxu0 %v364
  %v463 = vpop.f32.mrf.mxu0
  %v464 = vadd.f32 %v327, %v463
  %v465 = vpop.f32.mrf.mxu0
  %v466 = vadd.f32 %v331, %v465
  %v467 = vpop.f32.mrf.mxu0
  %v468 = vadd.f32 %v327, %v467
  %v469 = vpop.f32.mrf.mxu0
  %v470 = vadd.f32 %v331, %v469
  %471 = vmatprep.mubr.bf16.mxu0 0
  %472 = vmatmul.mubr.bf16.gmra.mxu0 %v367
  %v473 = vpop.f32.mrf.mxu0
  %v474 = vadd.f32 %v327, %v473
  %v475 = vpop.f32.mrf.mxu0
  %v476 = vadd.f32 %v331, %v475
  %v477 = vpop.f32.mrf.mxu0
  %v478 = vadd.f32 %v327, %v477
  %v479 = vpop.f32.mrf.mxu0
  %v480 = vadd.f32 %v331, %v479
  %481 = vdwg.mxu0
  %482 = vst [vmem:[#allocation2] sm:$0xff] %v404
  %483 = vst [vmem:[#allocation2 + $0x8] sm:$0xff] %v406
  %484 = vst [vmem:[#allocation2 + $0x10] sm:$0xff] %v408
  %485 = vst [vmem:[#allocation2 + $0x18] sm:$0xff] %v410
  %486 = vst [vmem:[#allocation2 + $0x20] sm:$0xff] %v414
  %487 = vst [vmem:[#allocation2 + $0x28] sm:$0xff] %v416
  %488 = vst [vmem:[#allocation2 + $0x30] sm:$0xff] %v418
  %489 = vst [vmem:[#allocation2 + $0x38] sm:$0xff] %v420
  %490 = vst [vmem:[#allocation2 + $0x40] sm:$0xff] %v424
  %491 = vst [vmem:[#allocation2 + $0x48] sm:$0xff] %v426
  %492 = vst [vmem:[#allocation2 + $0x50] sm:$0xff] %v428
  %493 = vst [vmem:[#allocation2 + $0x58] sm:$0xff] %v430
  %494 = vst [vmem:[#allocation2 + $0x60] sm:$0xff] %v434
  %495 = vst [vmem:[#allocation2 + $0x68] sm:$0xff] %v436
  %496 = vst [vmem:[#allocation2 + $0x70] sm:$0xff] %v438
  %497 = vst [vmem:[#allocation2 + $0x78] sm:$0xff] %v440
  %498 = vst [vmem:[#allocation2 + $0x80] sm:$0xff] %v444
  %499 = vst [vmem:[#allocation2 + $0x88] sm:$0xff] %v446
  %500 = vst [vmem:[#allocation2 + $0x90] sm:$0xff] %v448
  %501 = vst [vmem:[#allocation2 + $0x98] sm:$0xff] %v450
  %502 = vst [vmem:[#allocation2 + $0xa0] sm:$0xff] %v454
  %503 = vst [vmem:[#allocation2 + $0xa8] sm:$0xff] %v456
  %504 = vst [vmem:[#allocation2 + $0xb0] sm:$0xff] %v458
  %505 = vst [vmem:[#allocation2 + $0xb8] sm:$0xff] %v460
  %506 = vst [vmem:[#allocation2 + $0xc0] sm:$0xff] %v464
  %507 = vst [vmem:[#allocation2 + $0xc8] sm:$0xff] %v466
  %508 = vst [vmem:[#allocation2 + $0xd0] sm:$0xff] %v468
  %509 = vst [vmem:[#allocation2 + $0xd8] sm:$0xff] %v470
  %510 = vst [vmem:[#allocation2 + $0xe0] sm:$0xff] %v474
  %511 = vst [vmem:[#allocation2 + $0xe8] sm:$0xff] %v476
  %512 = vst [vmem:[#allocation2 + $0xf0] sm:$0xff] %v478
  %513 = vst [vmem:[#allocation2 + $0xf8] sm:$0xff] %v480
  %s514 = smul.u32 0, 2
  %s515 = smul.addr %s514, 8
  %s516 = scalar_lea.vmem [#allocation2], %s515
  %v517 = vld [vmem:[%s516] sm:$0xff]
  %v518 = vld [vmem:[%s516 + $0x8] sm:$0xff]
  %s519 = smul.u32 15, 2
  %s520 = smul.addr %s519, 8
  %s521 = scalar_lea.vmem [#allocation2], %s520
  %v522 = vld [vmem:[%s521] sm:$0xff]
  %v523 = vld [vmem:[%s521 + $0x8] sm:$0xff]
  %v524 = vld [vmem:[%s4] sm:$0xff]
  %v525 = vld [vmem:[%s4 + $0x8] sm:$0xff]
  %v526 = vld [vmem:[%s4 + $0x10] sm:$0xff]
  %v527 = vld [vmem:[%s4 + $0x18] sm:$0xff]
  %v528 = vld [vmem:[%s4 + $0x20] sm:$0xff]
  %v529 = vld [vmem:[%s4 + $0x28] sm:$0xff]
  %v530 = vld [vmem:[%s4 + $0x30] sm:$0xff]
  %v531 = vld [vmem:[%s4 + $0x38] sm:$0xff]
  %v540 = vunpack.c.l.b16 %v524
  %v541 = vunpack.c.h.b16 %v524
  %v542 = vunpack.c.l.b16 %v525
  %v543 = vunpack.c.h.b16 %v525
  %v544 = vunpack.c.l.b16 %v526
  %v545 = vunpack.c.h.b16 %v526
  %v546 = vunpack.c.l.b16 %v527
  %v547 = vunpack.c.h.b16 %v527
  %v548 = vunpack.c.l.b16 %v528
  %v549 = vunpack.c.h.b16 %v528
  %v550 = vunpack.c.l.b16 %v529
  %v551 = vunpack.c.h.b16 %v529
  %v552 = vunpack.c.l.b16 %v530
  %v553 = vunpack.c.h.b16 %v530
  %v554 = vunpack.c.l.b16 %v531
  %v555 = vunpack.c.h.b16 %v531
  %v556 = vpack.c.b16 %v542, %v540
  %v557 = vpack.c.b16 %v543, %v541
  %v558 = vpack.c.b16 %v546, %v544
  %v559 = vpack.c.b16 %v547, %v545
  %v560 = vpack.c.b16 %v550, %v548
  %v561 = vpack.c.b16 %v551, %v549
  %v562 = vpack.c.b16 %v554, %v552
  %v563 = vpack.c.b16 %v555, %v553
  %vm572 = vcmask 523264
  %v574 = vsel %vm572, 0, 0
  %576 = vmatprep.subr.bf16.mxu0 0
  %577 = vmatpush1.bf16.msra.mxu0 0
  %578 = vmatprep.subr.bf16.mxu0 0
  %579 = vmatpush1.bf16.msra.mxu0 0
  %580 = vmatprep.subr.bf16.mxu0 0
  %581 = vmatpush1.bf16.msra.mxu0 0
  %582 = vmatprep.subr.bf16.mxu0 0
  %583 = vmatpush1.bf16.msra.mxu0 0
  %584 = vmatprep.subr.bf16.mxu0 %v563
  %585 = vmatpush1.bf16.msra.mxu0 %v562
  %586 = vmatprep.subr.bf16.mxu0 %v561
  %587 = vmatpush1.bf16.msra.mxu0 %v560
  %588 = vmatprep.subr.bf16.mxu0 %v559
  %589 = vmatpush1.bf16.msra.mxu0 %v558
  %590 = vmatprep.subr.bf16.mxu0 %v557
  %591 = vmatpush1.bf16.msra.mxu0 %v556
  %592 = vmatprep.subr.bf16.mxu0 0
  %593 = vmatpush2.bf16.msra.mxu0 0
  %594 = vmatprep.subr.bf16.mxu0 0
  %595 = vmatpush2.bf16.msra.mxu0 0
  %596 = vmatprep.subr.bf16.mxu0 0
  %597 = vmatpush2.bf16.msra.mxu0 0
  %598 = vmatprep.subr.bf16.mxu0 0
  %599 = vmatpush2.bf16.msra.mxu0 0
  %600 = vmatprep.subr.bf16.mxu0 0
  %601 = vmatpush2.bf16.msra.mxu0 0
  %602 = vmatprep.subr.bf16.mxu0 0
  %603 = vmatpush2.bf16.msra.mxu0 0
  %604 = vmatprep.subr.bf16.mxu0 0
  %605 = vmatpush2.bf16.msra.mxu0 0
  %606 = vmatprep.subr.bf16.mxu0 0
  %607 = vmatpush2.bf16.msra.mxu0 0
  %608 = vmatprep.mubr.bf16.mxu0 0
  %609 = vmatmul.mubr.bf16.gmra.mxu0 %v574
  %v610 = vpop.f32.mrf.mxu0
  %v611 = vadd.f32 0.0, %v610
  %v612 = vpop.f32.mrf.mxu0
  %v613 = vadd.f32 0.0, %v612
  %v614 = vpop.f32.mrf.mxu0
  %v615 = vpop.f32.mrf.mxu0
  %616 = vdwg.mxu0
  %v617 = vsel %vm306, %v517, %v522
  %v618 = vsel %vm307, %v518, %v523
  %v619 = vadd.f32 %v617, %v611
  %v620 = vadd.f32 %v618, %v613
  %v621 = vmul.f32 %v619, %v310
  %v622 = vmul.f32 %v620, %v311
  %v623 = vtanh.pop %v621
  %v624 = vtanh.pop %v622
  %v625 = vmul.f32 %v623, 0.5
  %v626 = vmul.f32 %v624, 0.5
  %v627 = vadd.f32 %v625, 0.5
  %v628 = vadd.f32 %v626, 0.5
  %v629 = vmul.f32 %v627, 0.0
  %631 = vrot.lane.b32.xlu0 %v624, 64
  %v632 = vpop.permute.xlu0 %631
  %v634 = vmul.f32 %v627, %v632
  %636 = vrot.lane.b32.xlu0 %v634, 64
  %v637 = vpop.permute.xlu0 %636
  %v639 = vadd.f32 %v629, %v637
  %v640 = vtanh.pop %v639
  %642 = vrot.lane.b32.xlu0 %v640, 64
  %v643 = vpop.permute.xlu0 %642
  %v645 = vmul.f32 %v628, %v643
  %vm646 = vcmask 261120
  %647 = vst.msk [vmem:[#allocation3] sm:$0xff] %vm646, %v645
  %s648 = scalar_lea.vmem [#allocation3], 120
  %vm649 = vcmask 523520
  %650 = vst.msk [vmem:[%s648] sm:$0xff] %vm649, %v645
  %s651 = smul.u32 1, 2
  %s652 = smul.addr %s651, 8
  %s653 = scalar_lea.vmem [#allocation2], %s652
  %v654 = vld [vmem:[%s653] sm:$0xff]
  %v655 = vld [vmem:[%s653 + $0x8] sm:$0xff]
  %s656 = smul.u32 14, 2
  %s657 = smul.addr %s656, 8
  %s658 = scalar_lea.vmem [#allocation2], %s657
  %v659 = vld [vmem:[%s658] sm:$0xff]
  %v660 = vld [vmem:[%s658 + $0x8] sm:$0xff]
  %v661 = vpack.c.bf16 %v645, %v645
  %v662 = vld [vmem:[%s4] sm:$0xff]
  %v663 = vld [vmem:[%s4 + $0x8] sm:$0xff]
  %v664 = vld [vmem:[%s4 + $0x10] sm:$0xff]
  %v665 = vld [vmem:[%s4 + $0x18] sm:$0xff]
  %v666 = vld [vmem:[%s4 + $0x20] sm:$0xff]
  %v667 = vld [vmem:[%s4 + $0x28] sm:$0xff]
  %v668 = vld [vmem:[%s4 + $0x30] sm:$0xff]
  %v669 = vld [vmem:[%s4 + $0x38] sm:$0xff]
  %v678 = vunpack.c.l.b16 %v662
  %v679 = vunpack.c.h.b16 %v662
  %v680 = vunpack.c.l.b16 %v663
  %v681 = vunpack.c.h.b16 %v663
  %v682 = vunpack.c.l.b16 %v664
  %v683 = vunpack.c.h.b16 %v664
  %v684 = vunpack.c.l.b16 %v665
  %v685 = vunpack.c.h.b16 %v665
  %v686 = vunpack.c.l.b16 %v666
  %v687 = vunpack.c.h.b16 %v666
  %v688 = vunpack.c.l.b16 %v667
  %v689 = vunpack.c.h.b16 %v667
  %v690 = vunpack.c.l.b16 %v668
  %v691 = vunpack.c.h.b16 %v668
  %v692 = vunpack.c.l.b16 %v669
  %v693 = vunpack.c.h.b16 %v669
  %v694 = vpack.c.b16 %v680, %v678
  %v695 = vpack.c.b16 %v681, %v679
  %v696 = vpack.c.b16 %v684, %v682
  %v697 = vpack.c.b16 %v685, %v683
  %v698 = vpack.c.b16 %v688, %v686
  %v699 = vpack.c.b16 %v689, %v687
  %v700 = vpack.c.b16 %v692, %v690
  %v701 = vpack.c.b16 %v693, %v691
  %v711 = vsel %vm572, %v661, 0
  %713 = vmatprep.subr.bf16.mxu0 0
  %714 = vmatpush1.bf16.msra.mxu0 0
  %715 = vmatprep.subr.bf16.mxu0 0
  %716 = vmatpush1.bf16.msra.mxu0 0
  %717 = vmatprep.subr.bf16.mxu0 0
  %718 = vmatpush1.bf16.msra.mxu0 0
  %719 = vmatprep.subr.bf16.mxu0 0
  %720 = vmatpush1.bf16.msra.mxu0 0
  %721 = vmatprep.subr.bf16.mxu0 %v701
  %722 = vmatpush1.bf16.msra.mxu0 %v700
  %723 = vmatprep.subr.bf16.mxu0 %v699
  %724 = vmatpush1.bf16.msra.mxu0 %v698
  %725 = vmatprep.subr.bf16.mxu0 %v697
  %726 = vmatpush1.bf16.msra.mxu0 %v696
  %727 = vmatprep.subr.bf16.mxu0 %v695
  %728 = vmatpush1.bf16.msra.mxu0 %v694
  %729 = vmatprep.subr.bf16.mxu0 0
  %730 = vmatpush2.bf16.msra.mxu0 0
  %731 = vmatprep.subr.bf16.mxu0 0
  %732 = vmatpush2.bf16.msra.mxu0 0
  %733 = vmatprep.subr.bf16.mxu0 0
  %734 = vmatpush2.bf16.msra.mxu0 0
  %735 = vmatprep.subr.bf16.mxu0 0
  %736 = vmatpush2.bf16.msra.mxu0 0
  %737 = vmatprep.subr.bf16.mxu0 0
  %738 = vmatpush2.bf16.msra.mxu0 0
  %739 = vmatprep.subr.bf16.mxu0 0
  %740 = vmatpush2.bf16.msra.mxu0 0
  %741 = vmatprep.subr.bf16.mxu0 0
  %742 = vmatpush2.bf16.msra.mxu0 0
  %743 = vmatprep.subr.bf16.mxu0 0
  %744 = vmatpush2.bf16.msra.mxu0 0
  %745 = vmatprep.mubr.bf16.mxu0 0
  %746 = vmatmul.mubr.bf16.gmra.mxu0 %v711
  %v747 = vpop.f32.mrf.mxu0
  %v748 = vadd.f32 0.0, %v747
  %v749 = vpop.f32.mrf.mxu0
  %v750 = vadd.f32 0.0, %v749
  %v751 = vpop.f32.mrf.mxu0
  %v752 = vpop.f32.mrf.mxu0
  %753 = vdwg.mxu0
  %v754 = vsel %vm306, %v654, %v659
  %v755 = vsel %vm307, %v655, %v660
  %v756 = vadd.f32 %v754, %v748
  %v757 = vadd.f32 %v755, %v750
  %v758 = vmul.f32 %v756, %v310
  %v759 = vmul.f32 %v757, %v311
  %v760 = vtanh.pop %v758
  %v761 = vtanh.pop %v759
  %v762 = vmul.f32 %v760, 0.5
  %v763 = vmul.f32 %v761, 0.5
  %v764 = vadd.f32 %v762, 0.5
  %v765 = vadd.f32 %v763, 0.5
  %v766 = vmul.f32 %v764, %v639
  %768 = vrot.lane.b32.xlu0 %v761, 64
  %v769 = vpop.permute.xlu0 %768
  %v771 = vmul.f32 %v764, %v769
  %773 = vrot.lane.b32.xlu0 %v771, 64
  %v774 = vpop.permute.xlu0 %773
  %v776 = vadd.f32 %v766, %v774
  %v777 = vtanh.pop %v776
  %779 = vrot.lane.b32.xlu0 %v777, 64
  %v780 = vpop.permute.xlu0 %779
  %v782 = vmul.f32 %v765, %v780
  %s783 = scalar_lea.vmem [#allocation3], 8
  %784 = vst.msk [vmem:[%s783] sm:$0xff] %vm646, %v782
  %s785 = scalar_lea.vmem [#allocation3], 112
  %786 = vst.msk [vmem:[%s785] sm:$0xff] %vm649, %v782
  %s787 = smul.u32 2, 2
  %s788 = smul.addr %s787, 8
  %s789 = scalar_lea.vmem [#allocation2], %s788
  %v790 = vld [vmem:[%s789] sm:$0xff]
  %v791 = vld [vmem:[%s789 + $0x8] sm:$0xff]
  %s792 = smul.u32 13, 2
  %s793 = smul.addr %s792, 8
  %s794 = scalar_lea.vmem [#allocation2], %s793
  %v795 = vld [vmem:[%s794] sm:$0xff]
  %v796 = vld [vmem:[%s794 + $0x8] sm:$0xff]
  %v797 = vpack.c.bf16 %v782, %v782
  %v798 = vld [vmem:[%s4] sm:$0xff]
  %v799 = vld [vmem:[%s4 + $0x8] sm:$0xff]
  %v800 = vld [vmem:[%s4 + $0x10] sm:$0xff]
  %v801 = vld [vmem:[%s4 + $0x18] sm:$0xff]
  %v802 = vld [vmem:[%s4 + $0x20] sm:$0xff]
  %v803 = vld [vmem:[%s4 + $0x28] sm:$0xff]
  %v804 = vld [vmem:[%s4 + $0x30] sm:$0xff]
  %v805 = vld [vmem:[%s4 + $0x38] sm:$0xff]
  %v814 = vunpack.c.l.b16 %v798
  %v815 = vunpack.c.h.b16 %v798
  %v816 = vunpack.c.l.b16 %v799
  %v817 = vunpack.c.h.b16 %v799
  %v818 = vunpack.c.l.b16 %v800
  %v819 = vunpack.c.h.b16 %v800
  %v820 = vunpack.c.l.b16 %v801
  %v821 = vunpack.c.h.b16 %v801
  %v822 = vunpack.c.l.b16 %v802
  %v823 = vunpack.c.h.b16 %v802
  %v824 = vunpack.c.l.b16 %v803
  %v825 = vunpack.c.h.b16 %v803
  %v826 = vunpack.c.l.b16 %v804
  %v827 = vunpack.c.h.b16 %v804
  %v828 = vunpack.c.l.b16 %v805
  %v829 = vunpack.c.h.b16 %v805
  %v830 = vpack.c.b16 %v816, %v814
  %v831 = vpack.c.b16 %v817, %v815
  %v832 = vpack.c.b16 %v820, %v818
  %v833 = vpack.c.b16 %v821, %v819
  %v834 = vpack.c.b16 %v824, %v822
  %v835 = vpack.c.b16 %v825, %v823
  %v836 = vpack.c.b16 %v828, %v826
  %v837 = vpack.c.b16 %v829, %v827
  %v847 = vsel %vm572, %v797, 0
  %849 = vmatprep.subr.bf16.mxu0 0
  %850 = vmatpush1.bf16.msra.mxu0 0
  %851 = vmatprep.subr.bf16.mxu0 0
  %852 = vmatpush1.bf16.msra.mxu0 0
  %853 = vmatprep.subr.bf16.mxu0 0
  %854 = vmatpush1.bf16.msra.mxu0 0
  %855 = vmatprep.subr.bf16.mxu0 0
  %856 = vmatpush1.bf16.msra.mxu0 0
  %857 = vmatprep.subr.bf16.mxu0 %v837
  %858 = vmatpush1.bf16.msra.mxu0 %v836
  %859 = vmatprep.subr.bf16.mxu0 %v835
  %860 = vmatpush1.bf16.msra.mxu0 %v834
  %861 = vmatprep.subr.bf16.mxu0 %v833
  %862 = vmatpush1.bf16.msra.mxu0 %v832
  %863 = vmatprep.subr.bf16.mxu0 %v831
  %864 = vmatpush1.bf16.msra.mxu0 %v830
  %865 = vmatprep.subr.bf16.mxu0 0
  %866 = vmatpush2.bf16.msra.mxu0 0
  %867 = vmatprep.subr.bf16.mxu0 0
  %868 = vmatpush2.bf16.msra.mxu0 0
  %869 = vmatprep.subr.bf16.mxu0 0
  %870 = vmatpush2.bf16.msra.mxu0 0
  %871 = vmatprep.subr.bf16.mxu0 0
  %872 = vmatpush2.bf16.msra.mxu0 0
  %873 = vmatprep.subr.bf16.mxu0 0
  %874 = vmatpush2.bf16.msra.mxu0 0
  %875 = vmatprep.subr.bf16.mxu0 0
  %876 = vmatpush2.bf16.msra.mxu0 0
  %877 = vmatprep.subr.bf16.mxu0 0
  %878 = vmatpush2.bf16.msra.mxu0 0
  %879 = vmatprep.subr.bf16.mxu0 0
  %880 = vmatpush2.bf16.msra.mxu0 0
  %881 = vmatprep.mubr.bf16.mxu0 0
  %882 = vmatmul.mubr.bf16.gmra.mxu0 %v847
  %v883 = vpop.f32.mrf.mxu0
  %v884 = vadd.f32 0.0, %v883
  %v885 = vpop.f32.mrf.mxu0
  %v886 = vadd.f32 0.0, %v885
  %v887 = vpop.f32.mrf.mxu0
  %v888 = vpop.f32.mrf.mxu0
  %889 = vdwg.mxu0
  %v890 = vsel %vm306, %v790, %v795
  %v891 = vsel %vm307, %v791, %v796
  %v892 = vadd.f32 %v890, %v884
  %v893 = vadd.f32 %v891, %v886
  %v894 = vmul.f32 %v892, %v310
  %v895 = vmul.f32 %v893, %v311
  %v896 = vtanh.pop %v894
  %v897 = vtanh.pop %v895
  %v898 = vmul.f32 %v896, 0.5
  %v899 = vmul.f32 %v897, 0.5
  %v900 = vadd.f32 %v898, 0.5
  %v901 = vadd.f32 %v899, 0.5
  %v902 = vmul.f32 %v900, %v776
  %904 = vrot.lane.b32.xlu0 %v897, 64
  %v905 = vpop.permute.xlu0 %904
  %v907 = vmul.f32 %v900, %v905
  %909 = vrot.lane.b32.xlu0 %v907, 64
  %v910 = vpop.permute.xlu0 %909
  %v912 = vadd.f32 %v902, %v910
  %v913 = vtanh.pop %v912
  %915 = vrot.lane.b32.xlu0 %v913, 64
  %v916 = vpop.permute.xlu0 %915
  %v918 = vmul.f32 %v901, %v916
  %s919 = scalar_lea.vmem [#allocation3], 16
  %920 = vst.msk [vmem:[%s919] sm:$0xff] %vm646, %v918
  %s921 = scalar_lea.vmem [#allocation3], 104
  %922 = vst.msk [vmem:[%s921] sm:$0xff] %vm649, %v918
  %s923 = smul.u32 3, 2
  %s924 = smul.addr %s923, 8
  %s925 = scalar_lea.vmem [#allocation2], %s924
  %v926 = vld [vmem:[%s925] sm:$0xff]
  %v927 = vld [vmem:[%s925 + $0x8] sm:$0xff]
  %s928 = smul.u32 12, 2
  %s929 = smul.addr %s928, 8
  %s930 = scalar_lea.vmem [#allocation2], %s929
  %v931 = vld [vmem:[%s930] sm:$0xff]
  %v932 = vld [vmem:[%s930 + $0x8] sm:$0xff]
  %v933 = vpack.c.bf16 %v918, %v918
  %v934 = vld [vmem:[%s4] sm:$0xff]
  %v935 = vld [vmem:[%s4 + $0x8] sm:$0xff]
  %v936 = vld [vmem:[%s4 + $0x10] sm:$0xff]
  %v937 = vld [vmem:[%s4 + $0x18] sm:$0xff]
  %v938 = vld [vmem:[%s4 + $0x20] sm:$0xff]
  %v939 = vld [vmem:[%s4 + $0x28] sm:$0xff]
  %v940 = vld [vmem:[%s4 + $0x30] sm:$0xff]
  %v941 = vld [vmem:[%s4 + $0x38] sm:$0xff]
  %v950 = vunpack.c.l.b16 %v934
  %v951 = vunpack.c.h.b16 %v934
  %v952 = vunpack.c.l.b16 %v935
  %v953 = vunpack.c.h.b16 %v935
  %v954 = vunpack.c.l.b16 %v936
  %v955 = vunpack.c.h.b16 %v936
  %v956 = vunpack.c.l.b16 %v937
  %v957 = vunpack.c.h.b16 %v937
  %v958 = vunpack.c.l.b16 %v938
  %v959 = vunpack.c.h.b16 %v938
  %v960 = vunpack.c.l.b16 %v939
  %v961 = vunpack.c.h.b16 %v939
  %v962 = vunpack.c.l.b16 %v940
  %v963 = vunpack.c.h.b16 %v940
  %v964 = vunpack.c.l.b16 %v941
  %v965 = vunpack.c.h.b16 %v941
  %v966 = vpack.c.b16 %v952, %v950
  %v967 = vpack.c.b16 %v953, %v951
  %v968 = vpack.c.b16 %v956, %v954
  %v969 = vpack.c.b16 %v957, %v955
  %v970 = vpack.c.b16 %v960, %v958
  %v971 = vpack.c.b16 %v961, %v959
  %v972 = vpack.c.b16 %v964, %v962
  %v973 = vpack.c.b16 %v965, %v963
  %v983 = vsel %vm572, %v933, 0
  %985 = vmatprep.subr.bf16.mxu0 0
  %986 = vmatpush1.bf16.msra.mxu0 0
  %987 = vmatprep.subr.bf16.mxu0 0
  %988 = vmatpush1.bf16.msra.mxu0 0
  %989 = vmatprep.subr.bf16.mxu0 0
  %990 = vmatpush1.bf16.msra.mxu0 0
  %991 = vmatprep.subr.bf16.mxu0 0
  %992 = vmatpush1.bf16.msra.mxu0 0
  %993 = vmatprep.subr.bf16.mxu0 %v973
  %994 = vmatpush1.bf16.msra.mxu0 %v972
  %995 = vmatprep.subr.bf16.mxu0 %v971
  %996 = vmatpush1.bf16.msra.mxu0 %v970
  %997 = vmatprep.subr.bf16.mxu0 %v969
  %998 = vmatpush1.bf16.msra.mxu0 %v968
  %999 = vmatprep.subr.bf16.mxu0 %v967
  %1000 = vmatpush1.bf16.msra.mxu0 %v966
  %1001 = vmatprep.subr.bf16.mxu0 0
  %1002 = vmatpush2.bf16.msra.mxu0 0
  %1003 = vmatprep.subr.bf16.mxu0 0
  %1004 = vmatpush2.bf16.msra.mxu0 0
  %1005 = vmatprep.subr.bf16.mxu0 0
  %1006 = vmatpush2.bf16.msra.mxu0 0
  %1007 = vmatprep.subr.bf16.mxu0 0
  %1008 = vmatpush2.bf16.msra.mxu0 0
  %1009 = vmatprep.subr.bf16.mxu0 0
  %1010 = vmatpush2.bf16.msra.mxu0 0
  %1011 = vmatprep.subr.bf16.mxu0 0
  %1012 = vmatpush2.bf16.msra.mxu0 0
  %1013 = vmatprep.subr.bf16.mxu0 0
  %1014 = vmatpush2.bf16.msra.mxu0 0
  %1015 = vmatprep.subr.bf16.mxu0 0
  %1016 = vmatpush2.bf16.msra.mxu0 0
  %1017 = vmatprep.mubr.bf16.mxu0 0
  %1018 = vmatmul.mubr.bf16.gmra.mxu0 %v983
  %v1019 = vpop.f32.mrf.mxu0
  %v1020 = vadd.f32 0.0, %v1019
  %v1021 = vpop.f32.mrf.mxu0
  %v1022 = vadd.f32 0.0, %v1021
  %v1023 = vpop.f32.mrf.mxu0
  %v1024 = vpop.f32.mrf.mxu0
  %1025 = vdwg.mxu0
  %v1026 = vsel %vm306, %v926, %v931
  %v1027 = vsel %vm307, %v927, %v932
  %v1028 = vadd.f32 %v1026, %v1020
  %v1029 = vadd.f32 %v1027, %v1022
  %v1030 = vmul.f32 %v1028, %v310
  %v1031 = vmul.f32 %v1029, %v311
  %v1032 = vtanh.pop %v1030
  %v1033 = vtanh.pop %v1031
  %v1034 = vmul.f32 %v1032, 0.5
  %v1035 = vmul.f32 %v1033, 0.5
  %v1036 = vadd.f32 %v1034, 0.5
  %v1037 = vadd.f32 %v1035, 0.5
  %v1038 = vmul.f32 %v1036, %v912
  %1040 = vrot.lane.b32.xlu0 %v1033, 64
  %v1041 = vpop.permute.xlu0 %1040
  %v1043 = vmul.f32 %v1036, %v1041
  %1045 = vrot.lane.b32.xlu0 %v1043, 64
  %v1046 = vpop.permute.xlu0 %1045
  %v1048 = vadd.f32 %v1038, %v1046
  %v1049 = vtanh.pop %v1048
  %1051 = vrot.lane.b32.xlu0 %v1049, 64
  %v1052 = vpop.permute.xlu0 %1051
  %v1054 = vmul.f32 %v1037, %v1052
  %s1055 = scalar_lea.vmem [#allocation3], 24
  %1056 = vst.msk [vmem:[%s1055] sm:$0xff] %vm646, %v1054
  %s1057 = scalar_lea.vmem [#allocation3], 96
  %1058 = vst.msk [vmem:[%s1057] sm:$0xff] %vm649, %v1054
  %s1059 = smul.u32 4, 2
  %s1060 = smul.addr %s1059, 8
  %s1061 = scalar_lea.vmem [#allocation2], %s1060
  %v1062 = vld [vmem:[%s1061] sm:$0xff]
  %v1063 = vld [vmem:[%s1061 + $0x8] sm:$0xff]
  %s1064 = smul.u32 11, 2
  %s1065 = smul.addr %s1064, 8
  %s1066 = scalar_lea.vmem [#allocation2], %s1065
  %v1067 = vld [vmem:[%s1066] sm:$0xff]
  %v1068 = vld [vmem:[%s1066 + $0x8] sm:$0xff]
  %v1069 = vpack.c.bf16 %v1054, %v1054
  %v1070 = vld [vmem:[%s4] sm:$0xff]
  %v1071 = vld [vmem:[%s4 + $0x8] sm:$0xff]
  %v1072 = vld [vmem:[%s4 + $0x10] sm:$0xff]
  %v1073 = vld [vmem:[%s4 + $0x18] sm:$0xff]
  %v1074 = vld [vmem:[%s4 + $0x20] sm:$0xff]
  %v1075 = vld [vmem:[%s4 + $0x28] sm:$0xff]
  %v1076 = vld [vmem:[%s4 + $0x30] sm:$0xff]
  %v1077 = vld [vmem:[%s4 + $0x38] sm:$0xff]
  %v1086 = vunpack.c.l.b16 %v1070
  %v1087 = vunpack.c.h.b16 %v1070
  %v1088 = vunpack.c.l.b16 %v1071
  %v1089 = vunpack.c.h.b16 %v1071
  %v1090 = vunpack.c.l.b16 %v1072
  %v1091 = vunpack.c.h.b16 %v1072
  %v1092 = vunpack.c.l.b16 %v1073
  %v1093 = vunpack.c.h.b16 %v1073
  %v1094 = vunpack.c.l.b16 %v1074
  %v1095 = vunpack.c.h.b16 %v1074
  %v1096 = vunpack.c.l.b16 %v1075
  %v1097 = vunpack.c.h.b16 %v1075
  %v1098 = vunpack.c.l.b16 %v1076
  %v1099 = vunpack.c.h.b16 %v1076
  %v1100 = vunpack.c.l.b16 %v1077
  %v1101 = vunpack.c.h.b16 %v1077
  %v1102 = vpack.c.b16 %v1088, %v1086
  %v1103 = vpack.c.b16 %v1089, %v1087
  %v1104 = vpack.c.b16 %v1092, %v1090
  %v1105 = vpack.c.b16 %v1093, %v1091
  %v1106 = vpack.c.b16 %v1096, %v1094
  %v1107 = vpack.c.b16 %v1097, %v1095
  %v1108 = vpack.c.b16 %v1100, %v1098
  %v1109 = vpack.c.b16 %v1101, %v1099
  %v1119 = vsel %vm572, %v1069, 0
  %1121 = vmatprep.subr.bf16.mxu0 0
  %1122 = vmatpush1.bf16.msra.mxu0 0
  %1123 = vmatprep.subr.bf16.mxu0 0
  %1124 = vmatpush1.bf16.msra.mxu0 0
  %1125 = vmatprep.subr.bf16.mxu0 0
  %1126 = vmatpush1.bf16.msra.mxu0 0
  %1127 = vmatprep.subr.bf16.mxu0 0
  %1128 = vmatpush1.bf16.msra.mxu0 0
  %1129 = vmatprep.subr.bf16.mxu0 %v1109
  %1130 = vmatpush1.bf16.msra.mxu0 %v1108
  %1131 = vmatprep.subr.bf16.mxu0 %v1107
  %1132 = vmatpush1.bf16.msra.mxu0 %v1106
  %1133 = vmatprep.subr.bf16.mxu0 %v1105
  %1134 = vmatpush1.bf16.msra.mxu0 %v1104
  %1135 = vmatprep.subr.bf16.mxu0 %v1103
  %1136 = vmatpush1.bf16.msra.mxu0 %v1102
  %1137 = vmatprep.subr.bf16.mxu0 0
  %1138 = vmatpush2.bf16.msra.mxu0 0
  %1139 = vmatprep.subr.bf16.mxu0 0
  %1140 = vmatpush2.bf16.msra.mxu0 0
  %1141 = vmatprep.subr.bf16.mxu0 0
  %1142 = vmatpush2.bf16.msra.mxu0 0
  %1143 = vmatprep.subr.bf16.mxu0 0
  %1144 = vmatpush2.bf16.msra.mxu0 0
  %1145 = vmatprep.subr.bf16.mxu0 0
  %1146 = vmatpush2.bf16.msra.mxu0 0
  %1147 = vmatprep.subr.bf16.mxu0 0
  %1148 = vmatpush2.bf16.msra.mxu0 0
  %1149 = vmatprep.subr.bf16.mxu0 0
  %1150 = vmatpush2.bf16.msra.mxu0 0
  %1151 = vmatprep.subr.bf16.mxu0 0
  %1152 = vmatpush2.bf16.msra.mxu0 0
  %1153 = vmatprep.mubr.bf16.mxu0 0
  %1154 = vmatmul.mubr.bf16.gmra.mxu0 %v1119
  %v1155 = vpop.f32.mrf.mxu0
  %v1156 = vadd.f32 0.0, %v1155
  %v1157 = vpop.f32.mrf.mxu0
  %v1158 = vadd.f32 0.0, %v1157
  %v1159 = vpop.f32.mrf.mxu0
  %v1160 = vpop.f32.mrf.mxu0
  %1161 = vdwg.mxu0
  %v1162 = vsel %vm306, %v1062, %v1067
  %v1163 = vsel %vm307, %v1063, %v1068
  %v1164 = vadd.f32 %v1162, %v1156
  %v1165 = vadd.f32 %v1163, %v1158
  %v1166 = vmul.f32 %v1164, %v310
  %v1167 = vmul.f32 %v1165, %v311
  %v1168 = vtanh.pop %v1166
  %v1169 = vtanh.pop %v1167
  %v1170 = vmul.f32 %v1168, 0.5
  %v1171 = vmul.f32 %v1169, 0.5
  %v1172 = vadd.f32 %v1170, 0.5
  %v1173 = vadd.f32 %v1171, 0.5
  %v1174 = vmul.f32 %v1172, %v1048
  %1176 = vrot.lane.b32.xlu0 %v1169, 64
  %v1177 = vpop.permute.xlu0 %1176
  %v1179 = vmul.f32 %v1172, %v1177
  %1181 = vrot.lane.b32.xlu0 %v1179, 64
  %v1182 = vpop.permute.xlu0 %1181
  %v1184 = vadd.f32 %v1174, %v1182
  %v1185 = vtanh.pop %v1184
  %1187 = vrot.lane.b32.xlu0 %v1185, 64
  %v1188 = vpop.permute.xlu0 %1187
  %v1190 = vmul.f32 %v1173, %v1188
  %s1191 = scalar_lea.vmem [#allocation3], 32
  %1192 = vst.msk [vmem:[%s1191] sm:$0xff] %vm646, %v1190
  %s1193 = scalar_lea.vmem [#allocation3], 88
  %1194 = vst.msk [vmem:[%s1193] sm:$0xff] %vm649, %v1190
  %s1195 = smul.u32 5, 2
  %s1196 = smul.addr %s1195, 8
  %s1197 = scalar_lea.vmem [#allocation2], %s1196
  %v1198 = vld [vmem:[%s1197] sm:$0xff]
  %v1199 = vld [vmem:[%s1197 + $0x8] sm:$0xff]
  %s1200 = smul.u32 10, 2
  %s1201 = smul.addr %s1200, 8
  %s1202 = scalar_lea.vmem [#allocation2], %s1201
  %v1203 = vld [vmem:[%s1202] sm:$0xff]
  %v1204 = vld [vmem:[%s1202 + $0x8] sm:$0xff]
  %v1205 = vpack.c.bf16 %v1190, %v1190
  %v1206 = vld [vmem:[%s4] sm:$0xff]
  %v1207 = vld [vmem:[%s4 + $0x8] sm:$0xff]
  %v1208 = vld [vmem:[%s4 + $0x10] sm:$0xff]
  %v1209 = vld [vmem:[%s4 + $0x18] sm:$0xff]
  %v1210 = vld [vmem:[%s4 + $0x20] sm:$0xff]
  %v1211 = vld [vmem:[%s4 + $0x28] sm:$0xff]
  %v1212 = vld [vmem:[%s4 + $0x30] sm:$0xff]
  %v1213 = vld [vmem:[%s4 + $0x38] sm:$0xff]
  %v1222 = vunpack.c.l.b16 %v1206
  %v1223 = vunpack.c.h.b16 %v1206
  %v1224 = vunpack.c.l.b16 %v1207
  %v1225 = vunpack.c.h.b16 %v1207
  %v1226 = vunpack.c.l.b16 %v1208
  %v1227 = vunpack.c.h.b16 %v1208
  %v1228 = vunpack.c.l.b16 %v1209
  %v1229 = vunpack.c.h.b16 %v1209
  %v1230 = vunpack.c.l.b16 %v1210
  %v1231 = vunpack.c.h.b16 %v1210
  %v1232 = vunpack.c.l.b16 %v1211
  %v1233 = vunpack.c.h.b16 %v1211
  %v1234 = vunpack.c.l.b16 %v1212
  %v1235 = vunpack.c.h.b16 %v1212
  %v1236 = vunpack.c.l.b16 %v1213
  %v1237 = vunpack.c.h.b16 %v1213
  %v1238 = vpack.c.b16 %v1224, %v1222
  %v1239 = vpack.c.b16 %v1225, %v1223
  %v1240 = vpack.c.b16 %v1228, %v1226
  %v1241 = vpack.c.b16 %v1229, %v1227
  %v1242 = vpack.c.b16 %v1232, %v1230
  %v1243 = vpack.c.b16 %v1233, %v1231
  %v1244 = vpack.c.b16 %v1236, %v1234
  %v1245 = vpack.c.b16 %v1237, %v1235
  %v1255 = vsel %vm572, %v1205, 0
  %1257 = vmatprep.subr.bf16.mxu0 0
  %1258 = vmatpush1.bf16.msra.mxu0 0
  %1259 = vmatprep.subr.bf16.mxu0 0
  %1260 = vmatpush1.bf16.msra.mxu0 0
  %1261 = vmatprep.subr.bf16.mxu0 0
  %1262 = vmatpush1.bf16.msra.mxu0 0
  %1263 = vmatprep.subr.bf16.mxu0 0
  %1264 = vmatpush1.bf16.msra.mxu0 0
  %1265 = vmatprep.subr.bf16.mxu0 %v1245
  %1266 = vmatpush1.bf16.msra.mxu0 %v1244
  %1267 = vmatprep.subr.bf16.mxu0 %v1243
  %1268 = vmatpush1.bf16.msra.mxu0 %v1242
  %1269 = vmatprep.subr.bf16.mxu0 %v1241
  %1270 = vmatpush1.bf16.msra.mxu0 %v1240
  %1271 = vmatprep.subr.bf16.mxu0 %v1239
  %1272 = vmatpush1.bf16.msra.mxu0 %v1238
  %1273 = vmatprep.subr.bf16.mxu0 0
  %1274 = vmatpush2.bf16.msra.mxu0 0
  %1275 = vmatprep.subr.bf16.mxu0 0
  %1276 = vmatpush2.bf16.msra.mxu0 0
  %1277 = vmatprep.subr.bf16.mxu0 0
  %1278 = vmatpush2.bf16.msra.mxu0 0
  %1279 = vmatprep.subr.bf16.mxu0 0
  %1280 = vmatpush2.bf16.msra.mxu0 0
  %1281 = vmatprep.subr.bf16.mxu0 0
  %1282 = vmatpush2.bf16.msra.mxu0 0
  %1283 = vmatprep.subr.bf16.mxu0 0
  %1284 = vmatpush2.bf16.msra.mxu0 0
  %1285 = vmatprep.subr.bf16.mxu0 0
  %1286 = vmatpush2.bf16.msra.mxu0 0
  %1287 = vmatprep.subr.bf16.mxu0 0
  %1288 = vmatpush2.bf16.msra.mxu0 0
  %1289 = vmatprep.mubr.bf16.mxu0 0
  %1290 = vmatmul.mubr.bf16.gmra.mxu0 %v1255
  %v1291 = vpop.f32.mrf.mxu0
  %v1292 = vadd.f32 0.0, %v1291
  %v1293 = vpop.f32.mrf.mxu0
  %v1294 = vadd.f32 0.0, %v1293
  %v1295 = vpop.f32.mrf.mxu0
  %v1296 = vpop.f32.mrf.mxu0
  %1297 = vdwg.mxu0
  %v1298 = vsel %vm306, %v1198, %v1203
  %v1299 = vsel %vm307, %v1199, %v1204
  %v1300 = vadd.f32 %v1298, %v1292
  %v1301 = vadd.f32 %v1299, %v1294
  %v1302 = vmul.f32 %v1300, %v310
  %v1303 = vmul.f32 %v1301, %v311
  %v1304 = vtanh.pop %v1302
  %v1305 = vtanh.pop %v1303
  %v1306 = vmul.f32 %v1304, 0.5
  %v1307 = vmul.f32 %v1305, 0.5
  %v1308 = vadd.f32 %v1306, 0.5
  %v1309 = vadd.f32 %v1307, 0.5
  %v1310 = vmul.f32 %v1308, %v1184
  %1312 = vrot.lane.b32.xlu0 %v1305, 64
  %v1313 = vpop.permute.xlu0 %1312
  %v1315 = vmul.f32 %v1308, %v1313
  %1317 = vrot.lane.b32.xlu0 %v1315, 64
  %v1318 = vpop.permute.xlu0 %1317
  %v1320 = vadd.f32 %v1310, %v1318
  %v1321 = vtanh.pop %v1320
  %1323 = vrot.lane.b32.xlu0 %v1321, 64
  %v1324 = vpop.permute.xlu0 %1323
  %v1326 = vmul.f32 %v1309, %v1324
  %s1327 = scalar_lea.vmem [#allocation3], 40
  %1328 = vst.msk [vmem:[%s1327] sm:$0xff] %vm646, %v1326
  %s1329 = scalar_lea.vmem [#allocation3], 80
  %1330 = vst.msk [vmem:[%s1329] sm:$0xff] %vm649, %v1326
  %s1331 = smul.u32 6, 2
  %s1332 = smul.addr %s1331, 8
  %s1333 = scalar_lea.vmem [#allocation2], %s1332
  %v1334 = vld [vmem:[%s1333] sm:$0xff]
  %v1335 = vld [vmem:[%s1333 + $0x8] sm:$0xff]
  %s1336 = smul.u32 9, 2
  %s1337 = smul.addr %s1336, 8
  %s1338 = scalar_lea.vmem [#allocation2], %s1337
  %v1339 = vld [vmem:[%s1338] sm:$0xff]
  %v1340 = vld [vmem:[%s1338 + $0x8] sm:$0xff]
  %v1341 = vpack.c.bf16 %v1326, %v1326
  %v1342 = vld [vmem:[%s4] sm:$0xff]
  %v1343 = vld [vmem:[%s4 + $0x8] sm:$0xff]
  %v1344 = vld [vmem:[%s4 + $0x10] sm:$0xff]
  %v1345 = vld [vmem:[%s4 + $0x18] sm:$0xff]
  %v1346 = vld [vmem:[%s4 + $0x20] sm:$0xff]
  %v1347 = vld [vmem:[%s4 + $0x28] sm:$0xff]
  %v1348 = vld [vmem:[%s4 + $0x30] sm:$0xff]
  %v1349 = vld [vmem:[%s4 + $0x38] sm:$0xff]
  %v1358 = vunpack.c.l.b16 %v1342
  %v1359 = vunpack.c.h.b16 %v1342
  %v1360 = vunpack.c.l.b16 %v1343
  %v1361 = vunpack.c.h.b16 %v1343
  %v1362 = vunpack.c.l.b16 %v1344
  %v1363 = vunpack.c.h.b16 %v1344
  %v1364 = vunpack.c.l.b16 %v1345
  %v1365 = vunpack.c.h.b16 %v1345
  %v1366 = vunpack.c.l.b16 %v1346
  %v1367 = vunpack.c.h.b16 %v1346
  %v1368 = vunpack.c.l.b16 %v1347
  %v1369 = vunpack.c.h.b16 %v1347
  %v1370 = vunpack.c.l.b16 %v1348
  %v1371 = vunpack.c.h.b16 %v1348
  %v1372 = vunpack.c.l.b16 %v1349
  %v1373 = vunpack.c.h.b16 %v1349
  %v1374 = vpack.c.b16 %v1360, %v1358
  %v1375 = vpack.c.b16 %v1361, %v1359
  %v1376 = vpack.c.b16 %v1364, %v1362
  %v1377 = vpack.c.b16 %v1365, %v1363
  %v1378 = vpack.c.b16 %v1368, %v1366
  %v1379 = vpack.c.b16 %v1369, %v1367
  %v1380 = vpack.c.b16 %v1372, %v1370
  %v1381 = vpack.c.b16 %v1373, %v1371
  %v1391 = vsel %vm572, %v1341, 0
  %1393 = vmatprep.subr.bf16.mxu0 0
  %1394 = vmatpush1.bf16.msra.mxu0 0
  %1395 = vmatprep.subr.bf16.mxu0 0
  %1396 = vmatpush1.bf16.msra.mxu0 0
  %1397 = vmatprep.subr.bf16.mxu0 0
  %1398 = vmatpush1.bf16.msra.mxu0 0
  %1399 = vmatprep.subr.bf16.mxu0 0
  %1400 = vmatpush1.bf16.msra.mxu0 0
  %1401 = vmatprep.subr.bf16.mxu0 %v1381
  %1402 = vmatpush1.bf16.msra.mxu0 %v1380
  %1403 = vmatprep.subr.bf16.mxu0 %v1379
  %1404 = vmatpush1.bf16.msra.mxu0 %v1378
  %1405 = vmatprep.subr.bf16.mxu0 %v1377
  %1406 = vmatpush1.bf16.msra.mxu0 %v1376
  %1407 = vmatprep.subr.bf16.mxu0 %v1375
  %1408 = vmatpush1.bf16.msra.mxu0 %v1374
  %1409 = vmatprep.subr.bf16.mxu0 0
  %1410 = vmatpush2.bf16.msra.mxu0 0
  %1411 = vmatprep.subr.bf16.mxu0 0
  %1412 = vmatpush2.bf16.msra.mxu0 0
  %1413 = vmatprep.subr.bf16.mxu0 0
  %1414 = vmatpush2.bf16.msra.mxu0 0
  %1415 = vmatprep.subr.bf16.mxu0 0
  %1416 = vmatpush2.bf16.msra.mxu0 0
  %1417 = vmatprep.subr.bf16.mxu0 0
  %1418 = vmatpush2.bf16.msra.mxu0 0
  %1419 = vmatprep.subr.bf16.mxu0 0
  %1420 = vmatpush2.bf16.msra.mxu0 0
  %1421 = vmatprep.subr.bf16.mxu0 0
  %1422 = vmatpush2.bf16.msra.mxu0 0
  %1423 = vmatprep.subr.bf16.mxu0 0
  %1424 = vmatpush2.bf16.msra.mxu0 0
  %1425 = vmatprep.mubr.bf16.mxu0 0
  %1426 = vmatmul.mubr.bf16.gmra.mxu0 %v1391
  %v1427 = vpop.f32.mrf.mxu0
  %v1428 = vadd.f32 0.0, %v1427
  %v1429 = vpop.f32.mrf.mxu0
  %v1430 = vadd.f32 0.0, %v1429
  %v1431 = vpop.f32.mrf.mxu0
  %v1432 = vpop.f32.mrf.mxu0
  %1433 = vdwg.mxu0
  %v1434 = vsel %vm306, %v1334, %v1339
  %v1435 = vsel %vm307, %v1335, %v1340
  %v1436 = vadd.f32 %v1434, %v1428
  %v1437 = vadd.f32 %v1435, %v1430
  %v1438 = vmul.f32 %v1436, %v310
  %v1439 = vmul.f32 %v1437, %v311
  %v1440 = vtanh.pop %v1438
  %v1441 = vtanh.pop %v1439
  %v1442 = vmul.f32 %v1440, 0.5
  %v1443 = vmul.f32 %v1441, 0.5
  %v1444 = vadd.f32 %v1442, 0.5
  %v1445 = vadd.f32 %v1443, 0.5
  %v1446 = vmul.f32 %v1444, %v1320
  %1448 = vrot.lane.b32.xlu0 %v1441, 64
  %v1449 = vpop.permute.xlu0 %1448
  %v1451 = vmul.f32 %v1444, %v1449
  %1453 = vrot.lane.b32.xlu0 %v1451, 64
  %v1454 = vpop.permute.xlu0 %1453
  %v1456 = vadd.f32 %v1446, %v1454
  %v1457 = vtanh.pop %v1456
  %1459 = vrot.lane.b32.xlu0 %v1457, 64
  %v1460 = vpop.permute.xlu0 %1459
  %v1462 = vmul.f32 %v1445, %v1460
  %s1463 = scalar_lea.vmem [#allocation3], 48
  %1464 = vst.msk [vmem:[%s1463] sm:$0xff] %vm646, %v1462
  %s1465 = scalar_lea.vmem [#allocation3], 72
  %1466 = vst.msk [vmem:[%s1465] sm:$0xff] %vm649, %v1462
  %s1467 = smul.u32 7, 2
  %s1468 = smul.addr %s1467, 8
  %s1469 = scalar_lea.vmem [#allocation2], %s1468
  %v1470 = vld [vmem:[%s1469] sm:$0xff]
  %v1471 = vld [vmem:[%s1469 + $0x8] sm:$0xff]
  %s1472 = smul.u32 8, 2
  %s1473 = smul.addr %s1472, 8
  %s1474 = scalar_lea.vmem [#allocation2], %s1473
  %v1475 = vld [vmem:[%s1474] sm:$0xff]
  %v1476 = vld [vmem:[%s1474 + $0x8] sm:$0xff]
  %v1477 = vpack.c.bf16 %v1462, %v1462
  %v1478 = vld [vmem:[%s4] sm:$0xff]
  %v1479 = vld [vmem:[%s4 + $0x8] sm:$0xff]
  %v1480 = vld [vmem:[%s4 + $0x10] sm:$0xff]
  %v1481 = vld [vmem:[%s4 + $0x18] sm:$0xff]
  %v1482 = vld [vmem:[%s4 + $0x20] sm:$0xff]
  %v1483 = vld [vmem:[%s4 + $0x28] sm:$0xff]
  %v1484 = vld [vmem:[%s4 + $0x30] sm:$0xff]
  %v1485 = vld [vmem:[%s4 + $0x38] sm:$0xff]
  %v1494 = vunpack.c.l.b16 %v1478
  %v1495 = vunpack.c.h.b16 %v1478
  %v1496 = vunpack.c.l.b16 %v1479
  %v1497 = vunpack.c.h.b16 %v1479
  %v1498 = vunpack.c.l.b16 %v1480
  %v1499 = vunpack.c.h.b16 %v1480
  %v1500 = vunpack.c.l.b16 %v1481
  %v1501 = vunpack.c.h.b16 %v1481
  %v1502 = vunpack.c.l.b16 %v1482
  %v1503 = vunpack.c.h.b16 %v1482
  %v1504 = vunpack.c.l.b16 %v1483
  %v1505 = vunpack.c.h.b16 %v1483
  %v1506 = vunpack.c.l.b16 %v1484
  %v1507 = vunpack.c.h.b16 %v1484
  %v1508 = vunpack.c.l.b16 %v1485
  %v1509 = vunpack.c.h.b16 %v1485
  %v1510 = vpack.c.b16 %v1496, %v1494
  %v1511 = vpack.c.b16 %v1497, %v1495
  %v1512 = vpack.c.b16 %v1500, %v1498
  %v1513 = vpack.c.b16 %v1501, %v1499
  %v1514 = vpack.c.b16 %v1504, %v1502
  %v1515 = vpack.c.b16 %v1505, %v1503
  %v1516 = vpack.c.b16 %v1508, %v1506
  %v1517 = vpack.c.b16 %v1509, %v1507
  %v1527 = vsel %vm572, %v1477, 0
  %1529 = vmatprep.subr.bf16.mxu0 0
  %1530 = vmatpush1.bf16.msra.mxu0 0
  %1531 = vmatprep.subr.bf16.mxu0 0
  %1532 = vmatpush1.bf16.msra.mxu0 0
  %1533 = vmatprep.subr.bf16.mxu0 0
  %1534 = vmatpush1.bf16.msra.mxu0 0
  %1535 = vmatprep.subr.bf16.mxu0 0
  %1536 = vmatpush1.bf16.msra.mxu0 0
  %1537 = vmatprep.subr.bf16.mxu0 %v1517
  %1538 = vmatpush1.bf16.msra.mxu0 %v1516
  %1539 = vmatprep.subr.bf16.mxu0 %v1515
  %1540 = vmatpush1.bf16.msra.mxu0 %v1514
  %1541 = vmatprep.subr.bf16.mxu0 %v1513
  %1542 = vmatpush1.bf16.msra.mxu0 %v1512
  %1543 = vmatprep.subr.bf16.mxu0 %v1511
  %1544 = vmatpush1.bf16.msra.mxu0 %v1510
  %1545 = vmatprep.subr.bf16.mxu0 0
  %1546 = vmatpush2.bf16.msra.mxu0 0
  %1547 = vmatprep.subr.bf16.mxu0 0
  %1548 = vmatpush2.bf16.msra.mxu0 0
  %1549 = vmatprep.subr.bf16.mxu0 0
  %1550 = vmatpush2.bf16.msra.mxu0 0
  %1551 = vmatprep.subr.bf16.mxu0 0
  %1552 = vmatpush2.bf16.msra.mxu0 0
  %1553 = vmatprep.subr.bf16.mxu0 0
  %1554 = vmatpush2.bf16.msra.mxu0 0
  %1555 = vmatprep.subr.bf16.mxu0 0
  %1556 = vmatpush2.bf16.msra.mxu0 0
  %1557 = vmatprep.subr.bf16.mxu0 0
  %1558 = vmatpush2.bf16.msra.mxu0 0
  %1559 = vmatprep.subr.bf16.mxu0 0
  %1560 = vmatpush2.bf16.msra.mxu0 0
  %1561 = vmatprep.mubr.bf16.mxu0 0
  %1562 = vmatmul.mubr.bf16.gmra.mxu0 %v1527
  %v1563 = vpop.f32.mrf.mxu0
  %v1564 = vadd.f32 0.0, %v1563
  %v1565 = vpop.f32.mrf.mxu0
  %v1566 = vadd.f32 0.0, %v1565
  %v1567 = vpop.f32.mrf.mxu0
  %v1568 = vpop.f32.mrf.mxu0
  %1569 = vdwg.mxu0
  %v1570 = vsel %vm306, %v1470, %v1475
  %v1571 = vsel %vm307, %v1471, %v1476
  %v1572 = vadd.f32 %v1570, %v1564
  %v1573 = vadd.f32 %v1571, %v1566
  %v1574 = vmul.f32 %v1572, %v310
  %v1575 = vmul.f32 %v1573, %v311
  %v1576 = vtanh.pop %v1574
  %v1577 = vtanh.pop %v1575
  %v1578 = vmul.f32 %v1576, 0.5
  %v1579 = vmul.f32 %v1577, 0.5
  %v1580 = vadd.f32 %v1578, 0.5
  %v1581 = vadd.f32 %v1579, 0.5
  %v1582 = vmul.f32 %v1580, %v1456
  %1584 = vrot.lane.b32.xlu0 %v1577, 64
  %v1585 = vpop.permute.xlu0 %1584
  %v1587 = vmul.f32 %v1580, %v1585
  %1589 = vrot.lane.b32.xlu0 %v1587, 64
  %v1590 = vpop.permute.xlu0 %1589
  %v1592 = vadd.f32 %v1582, %v1590
  %v1593 = vtanh.pop %v1592
  %1595 = vrot.lane.b32.xlu0 %v1593, 64
  %v1596 = vpop.permute.xlu0 %1595
  %v1598 = vmul.f32 %v1581, %v1596
  %s1599 = scalar_lea.vmem [#allocation3], 56
  %1600 = vst.msk [vmem:[%s1599] sm:$0xff] %vm646, %v1598
  %s1601 = scalar_lea.vmem [#allocation3], 64
  %1602 = vst.msk [vmem:[%s1601] sm:$0xff] %vm649, %v1598
  %v1603 = vld [vmem:[%s1474] sm:$0xff]
  %v1604 = vld [vmem:[%s1474 + $0x8] sm:$0xff]
  %v1605 = vld [vmem:[%s1469] sm:$0xff]
  %v1606 = vld [vmem:[%s1469 + $0x8] sm:$0xff]
  %v1607 = vpack.c.bf16 %v1598, %v1598
  %v1608 = vld [vmem:[%s4] sm:$0xff]
  %v1609 = vld [vmem:[%s4 + $0x8] sm:$0xff]
  %v1610 = vld [vmem:[%s4 + $0x10] sm:$0xff]
  %v1611 = vld [vmem:[%s4 + $0x18] sm:$0xff]
  %v1612 = vld [vmem:[%s4 + $0x20] sm:$0xff]
  %v1613 = vld [vmem:[%s4 + $0x28] sm:$0xff]
  %v1614 = vld [vmem:[%s4 + $0x30] sm:$0xff]
  %v1615 = vld [vmem:[%s4 + $0x38] sm:$0xff]
  %v1624 = vunpack.c.l.b16 %v1608
  %v1625 = vunpack.c.h.b16 %v1608
  %v1626 = vunpack.c.l.b16 %v1609
  %v1627 = vunpack.c.h.b16 %v1609
  %v1628 = vunpack.c.l.b16 %v1610
  %v1629 = vunpack.c.h.b16 %v1610
  %v1630 = vunpack.c.l.b16 %v1611
  %v1631 = vunpack.c.h.b16 %v1611
  %v1632 = vunpack.c.l.b16 %v1612
  %v1633 = vunpack.c.h.b16 %v1612
  %v1634 = vunpack.c.l.b16 %v1613
  %v1635 = vunpack.c.h.b16 %v1613
  %v1636 = vunpack.c.l.b16 %v1614
  %v1637 = vunpack.c.h.b16 %v1614
  %v1638 = vunpack.c.l.b16 %v1615
  %v1639 = vunpack.c.h.b16 %v1615
  %v1640 = vpack.c.b16 %v1626, %v1624
  %v1641 = vpack.c.b16 %v1627, %v1625
  %v1642 = vpack.c.b16 %v1630, %v1628
  %v1643 = vpack.c.b16 %v1631, %v1629
  %v1644 = vpack.c.b16 %v1634, %v1632
  %v1645 = vpack.c.b16 %v1635, %v1633
  %v1646 = vpack.c.b16 %v1638, %v1636
  %v1647 = vpack.c.b16 %v1639, %v1637
  %v1657 = vsel %vm572, %v1607, 0
  %1659 = vmatprep.subr.bf16.mxu0 0
  %1660 = vmatpush1.bf16.msra.mxu0 0
  %1661 = vmatprep.subr.bf16.mxu0 0
  %1662 = vmatpush1.bf16.msra.mxu0 0
  %1663 = vmatprep.subr.bf16.mxu0 0
  %1664 = vmatpush1.bf16.msra.mxu0 0
  %1665 = vmatprep.subr.bf16.mxu0 0
  %1666 = vmatpush1.bf16.msra.mxu0 0
  %1667 = vmatprep.subr.bf16.mxu0 %v1647
  %1668 = vmatpush1.bf16.msra.mxu0 %v1646
  %1669 = vmatprep.subr.bf16.mxu0 %v1645
  %1670 = vmatpush1.bf16.msra.mxu0 %v1644
  %1671 = vmatprep.subr.bf16.mxu0 %v1643
  %1672 = vmatpush1.bf16.msra.mxu0 %v1642
  %1673 = vmatprep.subr.bf16.mxu0 %v1641
  %1674 = vmatpush1.bf16.msra.mxu0 %v1640
  %1675 = vmatprep.subr.bf16.mxu0 0
  %1676 = vmatpush2.bf16.msra.mxu0 0
  %1677 = vmatprep.subr.bf16.mxu0 0
  %1678 = vmatpush2.bf16.msra.mxu0 0
  %1679 = vmatprep.subr.bf16.mxu0 0
  %1680 = vmatpush2.bf16.msra.mxu0 0
  %1681 = vmatprep.subr.bf16.mxu0 0
  %1682 = vmatpush2.bf16.msra.mxu0 0
  %1683 = vmatprep.subr.bf16.mxu0 0
  %1684 = vmatpush2.bf16.msra.mxu0 0
  %1685 = vmatprep.subr.bf16.mxu0 0
  %1686 = vmatpush2.bf16.msra.mxu0 0
  %1687 = vmatprep.subr.bf16.mxu0 0
  %1688 = vmatpush2.bf16.msra.mxu0 0
  %1689 = vmatprep.subr.bf16.mxu0 0
  %1690 = vmatpush2.bf16.msra.mxu0 0
  %1691 = vmatprep.mubr.bf16.mxu0 0
  %1692 = vmatmul.mubr.bf16.gmra.mxu0 %v1657
  %v1693 = vpop.f32.mrf.mxu0
  %v1694 = vadd.f32 0.0, %v1693
  %v1695 = vpop.f32.mrf.mxu0
  %v1696 = vadd.f32 0.0, %v1695
  %v1697 = vpop.f32.mrf.mxu0
  %v1698 = vpop.f32.mrf.mxu0
  %1699 = vdwg.mxu0
  %v1700 = vsel %vm306, %v1603, %v1605
  %v1701 = vsel %vm307, %v1604, %v1606
  %v1702 = vadd.f32 %v1700, %v1694
  %v1703 = vadd.f32 %v1701, %v1696
  %v1704 = vmul.f32 %v1702, %v310
  %v1705 = vmul.f32 %v1703, %v311
  %v1706 = vtanh.pop %v1704
  %v1707 = vtanh.pop %v1705
  %v1708 = vmul.f32 %v1706, 0.5
  %v1709 = vmul.f32 %v1707, 0.5
  %v1710 = vadd.f32 %v1708, 0.5
  %v1711 = vadd.f32 %v1709, 0.5
  %v1712 = vmul.f32 %v1710, %v1592
  %1714 = vrot.lane.b32.xlu0 %v1707, 64
  %v1715 = vpop.permute.xlu0 %1714
  %v1717 = vmul.f32 %v1710, %v1715
  %1719 = vrot.lane.b32.xlu0 %v1717, 64
  %v1720 = vpop.permute.xlu0 %1719
  %v1722 = vadd.f32 %v1712, %v1720
  %v1723 = vtanh.pop %v1722
  %1725 = vrot.lane.b32.xlu0 %v1723, 64
  %v1726 = vpop.permute.xlu0 %1725
  %v1728 = vmul.f32 %v1711, %v1726
  %1729 = vst.msk [vmem:[%s1601] sm:$0xff] %vm646, %v1728
  %1730 = vst.msk [vmem:[%s1599] sm:$0xff] %vm649, %v1728
  %v1731 = vld [vmem:[%s1338] sm:$0xff]
  %v1732 = vld [vmem:[%s1338 + $0x8] sm:$0xff]
  %v1733 = vld [vmem:[%s1333] sm:$0xff]
  %v1734 = vld [vmem:[%s1333 + $0x8] sm:$0xff]
  %v1735 = vpack.c.bf16 %v1728, %v1728
  %v1736 = vld [vmem:[%s4] sm:$0xff]
  %v1737 = vld [vmem:[%s4 + $0x8] sm:$0xff]
  %v1738 = vld [vmem:[%s4 + $0x10] sm:$0xff]
  %v1739 = vld [vmem:[%s4 + $0x18] sm:$0xff]
  %v1740 = vld [vmem:[%s4 + $0x20] sm:$0xff]
  %v1741 = vld [vmem:[%s4 + $0x28] sm:$0xff]
  %v1742 = vld [vmem:[%s4 + $0x30] sm:$0xff]
  %v1743 = vld [vmem:[%s4 + $0x38] sm:$0xff]
  %v1752 = vunpack.c.l.b16 %v1736
  %v1753 = vunpack.c.h.b16 %v1736
  %v1754 = vunpack.c.l.b16 %v1737
  %v1755 = vunpack.c.h.b16 %v1737
  %v1756 = vunpack.c.l.b16 %v1738
  %v1757 = vunpack.c.h.b16 %v1738
  %v1758 = vunpack.c.l.b16 %v1739
  %v1759 = vunpack.c.h.b16 %v1739
  %v1760 = vunpack.c.l.b16 %v1740
  %v1761 = vunpack.c.h.b16 %v1740
  %v1762 = vunpack.c.l.b16 %v1741
  %v1763 = vunpack.c.h.b16 %v1741
  %v1764 = vunpack.c.l.b16 %v1742
  %v1765 = vunpack.c.h.b16 %v1742
  %v1766 = vunpack.c.l.b16 %v1743
  %v1767 = vunpack.c.h.b16 %v1743
  %v1768 = vpack.c.b16 %v1754, %v1752
  %v1769 = vpack.c.b16 %v1755, %v1753
  %v1770 = vpack.c.b16 %v1758, %v1756
  %v1771 = vpack.c.b16 %v1759, %v1757
  %v1772 = vpack.c.b16 %v1762, %v1760
  %v1773 = vpack.c.b16 %v1763, %v1761
  %v1774 = vpack.c.b16 %v1766, %v1764
  %v1775 = vpack.c.b16 %v1767, %v1765
  %v1785 = vsel %vm572, %v1735, 0
  %1787 = vmatprep.subr.bf16.mxu0 0
  %1788 = vmatpush1.bf16.msra.mxu0 0
  %1789 = vmatprep.subr.bf16.mxu0 0
  %1790 = vmatpush1.bf16.msra.mxu0 0
  %1791 = vmatprep.subr.bf16.mxu0 0
  %1792 = vmatpush1.bf16.msra.mxu0 0
  %1793 = vmatprep.subr.bf16.mxu0 0
  %1794 = vmatpush1.bf16.msra.mxu0 0
  %1795 = vmatprep.subr.bf16.mxu0 %v1775
  %1796 = vmatpush1.bf16.msra.mxu0 %v1774
  %1797 = vmatprep.subr.bf16.mxu0 %v1773
  %1798 = vmatpush1.bf16.msra.mxu0 %v1772
  %1799 = vmatprep.subr.bf16.mxu0 %v1771
  %1800 = vmatpush1.bf16.msra.mxu0 %v1770
  %1801 = vmatprep.subr.bf16.mxu0 %v1769
  %1802 = vmatpush1.bf16.msra.mxu0 %v1768
  %1803 = vmatprep.subr.bf16.mxu0 0
  %1804 = vmatpush2.bf16.msra.mxu0 0
  %1805 = vmatprep.subr.bf16.mxu0 0
  %1806 = vmatpush2.bf16.msra.mxu0 0
  %1807 = vmatprep.subr.bf16.mxu0 0
  %1808 = vmatpush2.bf16.msra.mxu0 0
  %1809 = vmatprep.subr.bf16.mxu0 0
  %1810 = vmatpush2.bf16.msra.mxu0 0
  %1811 = vmatprep.subr.bf16.mxu0 0
  %1812 = vmatpush2.bf16.msra.mxu0 0
  %1813 = vmatprep.subr.bf16.mxu0 0
  %1814 = vmatpush2.bf16.msra.mxu0 0
  %1815 = vmatprep.subr.bf16.mxu0 0
  %1816 = vmatpush2.bf16.msra.mxu0 0
  %1817 = vmatprep.subr.bf16.mxu0 0
  %1818 = vmatpush2.bf16.msra.mxu0 0
  %1819 = vmatprep.mubr.bf16.mxu0 0
  %1820 = vmatmul.mubr.bf16.gmra.mxu0 %v1785
  %v1821 = vpop.f32.mrf.mxu0
  %v1822 = vadd.f32 0.0, %v1821
  %v1823 = vpop.f32.mrf.mxu0
  %v1824 = vadd.f32 0.0, %v1823
  %v1825 = vpop.f32.mrf.mxu0
  %v1826 = vpop.f32.mrf.mxu0
  %1827 = vdwg.mxu0
  %v1828 = vsel %vm306, %v1731, %v1733
  %v1829 = vsel %vm307, %v1732, %v1734
  %v1830 = vadd.f32 %v1828, %v1822
  %v1831 = vadd.f32 %v1829, %v1824
  %v1832 = vmul.f32 %v1830, %v310
  %v1833 = vmul.f32 %v1831, %v311
  %v1834 = vtanh.pop %v1832
  %v1835 = vtanh.pop %v1833
  %v1836 = vmul.f32 %v1834, 0.5
  %v1837 = vmul.f32 %v1835, 0.5
  %v1838 = vadd.f32 %v1836, 0.5
  %v1839 = vadd.f32 %v1837, 0.5
  %v1840 = vmul.f32 %v1838, %v1722
  %1842 = vrot.lane.b32.xlu0 %v1835, 64
  %v1843 = vpop.permute.xlu0 %1842
  %v1845 = vmul.f32 %v1838, %v1843
  %1847 = vrot.lane.b32.xlu0 %v1845, 64
  %v1848 = vpop.permute.xlu0 %1847
  %v1850 = vadd.f32 %v1840, %v1848
  %v1851 = vtanh.pop %v1850
  %1853 = vrot.lane.b32.xlu0 %v1851, 64
  %v1854 = vpop.permute.xlu0 %1853
  %v1856 = vmul.f32 %v1839, %v1854
  %1857 = vst.msk [vmem:[%s1465] sm:$0xff] %vm646, %v1856
  %1858 = vst.msk [vmem:[%s1463] sm:$0xff] %vm649, %v1856
  %v1859 = vld [vmem:[%s1202] sm:$0xff]
  %v1860 = vld [vmem:[%s1202 + $0x8] sm:$0xff]
  %v1861 = vld [vmem:[%s1197] sm:$0xff]
  %v1862 = vld [vmem:[%s1197 + $0x8] sm:$0xff]
  %v1863 = vpack.c.bf16 %v1856, %v1856
  %v1864 = vld [vmem:[%s4] sm:$0xff]
  %v1865 = vld [vmem:[%s4 + $0x8] sm:$0xff]
  %v1866 = vld [vmem:[%s4 + $0x10] sm:$0xff]
  %v1867 = vld [vmem:[%s4 + $0x18] sm:$0xff]
  %v1868 = vld [vmem:[%s4 + $0x20] sm:$0xff]
  %v1869 = vld [vmem:[%s4 + $0x28] sm:$0xff]
  %v1870 = vld [vmem:[%s4 + $0x30] sm:$0xff]
  %v1871 = vld [vmem:[%s4 + $0x38] sm:$0xff]
  %v1880 = vunpack.c.l.b16 %v1864
  %v1881 = vunpack.c.h.b16 %v1864
  %v1882 = vunpack.c.l.b16 %v1865
  %v1883 = vunpack.c.h.b16 %v1865
  %v1884 = vunpack.c.l.b16 %v1866
  %v1885 = vunpack.c.h.b16 %v1866
  %v1886 = vunpack.c.l.b16 %v1867
  %v1887 = vunpack.c.h.b16 %v1867
  %v1888 = vunpack.c.l.b16 %v1868
  %v1889 = vunpack.c.h.b16 %v1868
  %v1890 = vunpack.c.l.b16 %v1869
  %v1891 = vunpack.c.h.b16 %v1869
  %v1892 = vunpack.c.l.b16 %v1870
  %v1893 = vunpack.c.h.b16 %v1870
  %v1894 = vunpack.c.l.b16 %v1871
  %v1895 = vunpack.c.h.b16 %v1871
  %v1896 = vpack.c.b16 %v1882, %v1880
  %v1897 = vpack.c.b16 %v1883, %v1881
  %v1898 = vpack.c.b16 %v1886, %v1884
  %v1899 = vpack.c.b16 %v1887, %v1885
  %v1900 = vpack.c.b16 %v1890, %v1888
  %v1901 = vpack.c.b16 %v1891, %v1889
  %v1902 = vpack.c.b16 %v1894, %v1892
  %v1903 = vpack.c.b16 %v1895, %v1893
  %v1913 = vsel %vm572, %v1863, 0
  %1915 = vmatprep.subr.bf16.mxu0 0
  %1916 = vmatpush1.bf16.msra.mxu0 0
  %1917 = vmatprep.subr.bf16.mxu0 0
  %1918 = vmatpush1.bf16.msra.mxu0 0
  %1919 = vmatprep.subr.bf16.mxu0 0
  %1920 = vmatpush1.bf16.msra.mxu0 0
  %1921 = vmatprep.subr.bf16.mxu0 0
  %1922 = vmatpush1.bf16.msra.mxu0 0
  %1923 = vmatprep.subr.bf16.mxu0 %v1903
  %1924 = vmatpush1.bf16.msra.mxu0 %v1902
  %1925 = vmatprep.subr.bf16.mxu0 %v1901
  %1926 = vmatpush1.bf16.msra.mxu0 %v1900
  %1927 = vmatprep.subr.bf16.mxu0 %v1899
  %1928 = vmatpush1.bf16.msra.mxu0 %v1898
  %1929 = vmatprep.subr.bf16.mxu0 %v1897
  %1930 = vmatpush1.bf16.msra.mxu0 %v1896
  %1931 = vmatprep.subr.bf16.mxu0 0
  %1932 = vmatpush2.bf16.msra.mxu0 0
  %1933 = vmatprep.subr.bf16.mxu0 0
  %1934 = vmatpush2.bf16.msra.mxu0 0
  %1935 = vmatprep.subr.bf16.mxu0 0
  %1936 = vmatpush2.bf16.msra.mxu0 0
  %1937 = vmatprep.subr.bf16.mxu0 0
  %1938 = vmatpush2.bf16.msra.mxu0 0
  %1939 = vmatprep.subr.bf16.mxu0 0
  %1940 = vmatpush2.bf16.msra.mxu0 0
  %1941 = vmatprep.subr.bf16.mxu0 0
  %1942 = vmatpush2.bf16.msra.mxu0 0
  %1943 = vmatprep.subr.bf16.mxu0 0
  %1944 = vmatpush2.bf16.msra.mxu0 0
  %1945 = vmatprep.subr.bf16.mxu0 0
  %1946 = vmatpush2.bf16.msra.mxu0 0
  %1947 = vmatprep.mubr.bf16.mxu0 0
  %1948 = vmatmul.mubr.bf16.gmra.mxu0 %v1913
  %v1949 = vpop.f32.mrf.mxu0
  %v1950 = vadd.f32 0.0, %v1949
  %v1951 = vpop.f32.mrf.mxu0
  %v1952 = vadd.f32 0.0, %v1951
  %v1953 = vpop.f32.mrf.mxu0
  %v1954 = vpop.f32.mrf.mxu0
  %1955 = vdwg.mxu0
  %v1956 = vsel %vm306, %v1859, %v1861
  %v1957 = vsel %vm307, %v1860, %v1862
  %v1958 = vadd.f32 %v1956, %v1950
  %v1959 = vadd.f32 %v1957, %v1952
  %v1960 = vmul.f32 %v1958, %v310
  %v1961 = vmul.f32 %v1959, %v311
  %v1962 = vtanh.pop %v1960
  %v1963 = vtanh.pop %v1961
  %v1964 = vmul.f32 %v1962, 0.5
  %v1965 = vmul.f32 %v1963, 0.5
  %v1966 = vadd.f32 %v1964, 0.5
  %v1967 = vadd.f32 %v1965, 0.5
  %v1968 = vmul.f32 %v1966, %v1850
  %1970 = vrot.lane.b32.xlu0 %v1963, 64
  %v1971 = vpop.permute.xlu0 %1970
  %v1973 = vmul.f32 %v1966, %v1971
  %1975 = vrot.lane.b32.xlu0 %v1973, 64
  %v1976 = vpop.permute.xlu0 %1975
  %v1978 = vadd.f32 %v1968, %v1976
  %v1979 = vtanh.pop %v1978
  %1981 = vrot.lane.b32.xlu0 %v1979, 64
  %v1982 = vpop.permute.xlu0 %1981
  %v1984 = vmul.f32 %v1967, %v1982
  %1985 = vst.msk [vmem:[%s1329] sm:$0xff] %vm646, %v1984
  %1986 = vst.msk [vmem:[%s1327] sm:$0xff] %vm649, %v1984
  %v1987 = vld [vmem:[%s1066] sm:$0xff]
  %v1988 = vld [vmem:[%s1066 + $0x8] sm:$0xff]
  %v1989 = vld [vmem:[%s1061] sm:$0xff]
  %v1990 = vld [vmem:[%s1061 + $0x8] sm:$0xff]
  %v1991 = vpack.c.bf16 %v1984, %v1984
  %v1992 = vld [vmem:[%s4] sm:$0xff]
  %v1993 = vld [vmem:[%s4 + $0x8] sm:$0xff]
  %v1994 = vld [vmem:[%s4 + $0x10] sm:$0xff]
  %v1995 = vld [vmem:[%s4 + $0x18] sm:$0xff]
  %v1996 = vld [vmem:[%s4 + $0x20] sm:$0xff]
  %v1997 = vld [vmem:[%s4 + $0x28] sm:$0xff]
  %v1998 = vld [vmem:[%s4 + $0x30] sm:$0xff]
  %v1999 = vld [vmem:[%s4 + $0x38] sm:$0xff]
  %v2008 = vunpack.c.l.b16 %v1992
  %v2009 = vunpack.c.h.b16 %v1992
  %v2010 = vunpack.c.l.b16 %v1993
  %v2011 = vunpack.c.h.b16 %v1993
  %v2012 = vunpack.c.l.b16 %v1994
  %v2013 = vunpack.c.h.b16 %v1994
  %v2014 = vunpack.c.l.b16 %v1995
  %v2015 = vunpack.c.h.b16 %v1995
  %v2016 = vunpack.c.l.b16 %v1996
  %v2017 = vunpack.c.h.b16 %v1996
  %v2018 = vunpack.c.l.b16 %v1997
  %v2019 = vunpack.c.h.b16 %v1997
  %v2020 = vunpack.c.l.b16 %v1998
  %v2021 = vunpack.c.h.b16 %v1998
  %v2022 = vunpack.c.l.b16 %v1999
  %v2023 = vunpack.c.h.b16 %v1999
  %v2024 = vpack.c.b16 %v2010, %v2008
  %v2025 = vpack.c.b16 %v2011, %v2009
  %v2026 = vpack.c.b16 %v2014, %v2012
  %v2027 = vpack.c.b16 %v2015, %v2013
  %v2028 = vpack.c.b16 %v2018, %v2016
  %v2029 = vpack.c.b16 %v2019, %v2017
  %v2030 = vpack.c.b16 %v2022, %v2020
  %v2031 = vpack.c.b16 %v2023, %v2021
  %v2041 = vsel %vm572, %v1991, 0
  %2043 = vmatprep.subr.bf16.mxu0 0
  %2044 = vmatpush1.bf16.msra.mxu0 0
  %2045 = vmatprep.subr.bf16.mxu0 0
  %2046 = vmatpush1.bf16.msra.mxu0 0
  %2047 = vmatprep.subr.bf16.mxu0 0
  %2048 = vmatpush1.bf16.msra.mxu0 0
  %2049 = vmatprep.subr.bf16.mxu0 0
  %2050 = vmatpush1.bf16.msra.mxu0 0
  %2051 = vmatprep.subr.bf16.mxu0 %v2031
  %2052 = vmatpush1.bf16.msra.mxu0 %v2030
  %2053 = vmatprep.subr.bf16.mxu0 %v2029
  %2054 = vmatpush1.bf16.msra.mxu0 %v2028
  %2055 = vmatprep.subr.bf16.mxu0 %v2027
  %2056 = vmatpush1.bf16.msra.mxu0 %v2026
  %2057 = vmatprep.subr.bf16.mxu0 %v2025
  %2058 = vmatpush1.bf16.msra.mxu0 %v2024
  %2059 = vmatprep.subr.bf16.mxu0 0
  %2060 = vmatpush2.bf16.msra.mxu0 0
  %2061 = vmatprep.subr.bf16.mxu0 0
  %2062 = vmatpush2.bf16.msra.mxu0 0
  %2063 = vmatprep.subr.bf16.mxu0 0
  %2064 = vmatpush2.bf16.msra.mxu0 0
  %2065 = vmatprep.subr.bf16.mxu0 0
  %2066 = vmatpush2.bf16.msra.mxu0 0
  %2067 = vmatprep.subr.bf16.mxu0 0
  %2068 = vmatpush2.bf16.msra.mxu0 0
  %2069 = vmatprep.subr.bf16.mxu0 0
  %2070 = vmatpush2.bf16.msra.mxu0 0
  %2071 = vmatprep.subr.bf16.mxu0 0
  %2072 = vmatpush2.bf16.msra.mxu0 0
  %2073 = vmatprep.subr.bf16.mxu0 0
  %2074 = vmatpush2.bf16.msra.mxu0 0
  %2075 = vmatprep.mubr.bf16.mxu0 0
  %2076 = vmatmul.mubr.bf16.gmra.mxu0 %v2041
  %v2077 = vpop.f32.mrf.mxu0
  %v2078 = vadd.f32 0.0, %v2077
  %v2079 = vpop.f32.mrf.mxu0
  %v2080 = vadd.f32 0.0, %v2079
  %v2081 = vpop.f32.mrf.mxu0
  %v2082 = vpop.f32.mrf.mxu0
  %2083 = vdwg.mxu0
  %v2084 = vsel %vm306, %v1987, %v1989
  %v2085 = vsel %vm307, %v1988, %v1990
  %v2086 = vadd.f32 %v2084, %v2078
  %v2087 = vadd.f32 %v2085, %v2080
  %v2088 = vmul.f32 %v2086, %v310
  %v2089 = vmul.f32 %v2087, %v311
  %v2090 = vtanh.pop %v2088
  %v2091 = vtanh.pop %v2089
  %v2092 = vmul.f32 %v2090, 0.5
  %v2093 = vmul.f32 %v2091, 0.5
  %v2094 = vadd.f32 %v2092, 0.5
  %v2095 = vadd.f32 %v2093, 0.5
  %v2096 = vmul.f32 %v2094, %v1978
  %2098 = vrot.lane.b32.xlu0 %v2091, 64
  %v2099 = vpop.permute.xlu0 %2098
  %v2101 = vmul.f32 %v2094, %v2099
  %2103 = vrot.lane.b32.xlu0 %v2101, 64
  %v2104 = vpop.permute.xlu0 %2103
  %v2106 = vadd.f32 %v2096, %v2104
  %v2107 = vtanh.pop %v2106
  %2109 = vrot.lane.b32.xlu0 %v2107, 64
  %v2110 = vpop.permute.xlu0 %2109
  %v2112 = vmul.f32 %v2095, %v2110
  %2113 = vst.msk [vmem:[%s1193] sm:$0xff] %vm646, %v2112
  %2114 = vst.msk [vmem:[%s1191] sm:$0xff] %vm649, %v2112
  %v2115 = vld [vmem:[%s930] sm:$0xff]
  %v2116 = vld [vmem:[%s930 + $0x8] sm:$0xff]
  %v2117 = vld [vmem:[%s925] sm:$0xff]
  %v2118 = vld [vmem:[%s925 + $0x8] sm:$0xff]
  %v2119 = vpack.c.bf16 %v2112, %v2112
  %v2120 = vld [vmem:[%s4] sm:$0xff]
  %v2121 = vld [vmem:[%s4 + $0x8] sm:$0xff]
  %v2122 = vld [vmem:[%s4 + $0x10] sm:$0xff]
  %v2123 = vld [vmem:[%s4 + $0x18] sm:$0xff]
  %v2124 = vld [vmem:[%s4 + $0x20] sm:$0xff]
  %v2125 = vld [vmem:[%s4 + $0x28] sm:$0xff]
  %v2126 = vld [vmem:[%s4 + $0x30] sm:$0xff]
  %v2127 = vld [vmem:[%s4 + $0x38] sm:$0xff]
  %v2136 = vunpack.c.l.b16 %v2120
  %v2137 = vunpack.c.h.b16 %v2120
  %v2138 = vunpack.c.l.b16 %v2121
  %v2139 = vunpack.c.h.b16 %v2121
  %v2140 = vunpack.c.l.b16 %v2122
  %v2141 = vunpack.c.h.b16 %v2122
  %v2142 = vunpack.c.l.b16 %v2123
  %v2143 = vunpack.c.h.b16 %v2123
  %v2144 = vunpack.c.l.b16 %v2124
  %v2145 = vunpack.c.h.b16 %v2124
  %v2146 = vunpack.c.l.b16 %v2125
  %v2147 = vunpack.c.h.b16 %v2125
  %v2148 = vunpack.c.l.b16 %v2126
  %v2149 = vunpack.c.h.b16 %v2126
  %v2150 = vunpack.c.l.b16 %v2127
  %v2151 = vunpack.c.h.b16 %v2127
  %v2152 = vpack.c.b16 %v2138, %v2136
  %v2153 = vpack.c.b16 %v2139, %v2137
  %v2154 = vpack.c.b16 %v2142, %v2140
  %v2155 = vpack.c.b16 %v2143, %v2141
  %v2156 = vpack.c.b16 %v2146, %v2144
  %v2157 = vpack.c.b16 %v2147, %v2145
  %v2158 = vpack.c.b16 %v2150, %v2148
  %v2159 = vpack.c.b16 %v2151, %v2149
  %v2169 = vsel %vm572, %v2119, 0
  %2171 = vmatprep.subr.bf16.mxu0 0
  %2172 = vmatpush1.bf16.msra.mxu0 0
  %2173 = vmatprep.subr.bf16.mxu0 0
  %2174 = vmatpush1.bf16.msra.mxu0 0
  %2175 = vmatprep.subr.bf16.mxu0 0
  %2176 = vmatpush1.bf16.msra.mxu0 0
  %2177 = vmatprep.subr.bf16.mxu0 0
  %2178 = vmatpush1.bf16.msra.mxu0 0
  %2179 = vmatprep.subr.bf16.mxu0 %v2159
  %2180 = vmatpush1.bf16.msra.mxu0 %v2158
  %2181 = vmatprep.subr.bf16.mxu0 %v2157
  %2182 = vmatpush1.bf16.msra.mxu0 %v2156
  %2183 = vmatprep.subr.bf16.mxu0 %v2155
  %2184 = vmatpush1.bf16.msra.mxu0 %v2154
  %2185 = vmatprep.subr.bf16.mxu0 %v2153
  %2186 = vmatpush1.bf16.msra.mxu0 %v2152
  %2187 = vmatprep.subr.bf16.mxu0 0
  %2188 = vmatpush2.bf16.msra.mxu0 0
  %2189 = vmatprep.subr.bf16.mxu0 0
  %2190 = vmatpush2.bf16.msra.mxu0 0
  %2191 = vmatprep.subr.bf16.mxu0 0
  %2192 = vmatpush2.bf16.msra.mxu0 0
  %2193 = vmatprep.subr.bf16.mxu0 0
  %2194 = vmatpush2.bf16.msra.mxu0 0
  %2195 = vmatprep.subr.bf16.mxu0 0
  %2196 = vmatpush2.bf16.msra.mxu0 0
  %2197 = vmatprep.subr.bf16.mxu0 0
  %2198 = vmatpush2.bf16.msra.mxu0 0
  %2199 = vmatprep.subr.bf16.mxu0 0
  %2200 = vmatpush2.bf16.msra.mxu0 0
  %2201 = vmatprep.subr.bf16.mxu0 0
  %2202 = vmatpush2.bf16.msra.mxu0 0
  %2203 = vmatprep.mubr.bf16.mxu0 0
  %2204 = vmatmul.mubr.bf16.gmra.mxu0 %v2169
  %v2205 = vpop.f32.mrf.mxu0
  %v2206 = vadd.f32 0.0, %v2205
  %v2207 = vpop.f32.mrf.mxu0
  %v2208 = vadd.f32 0.0, %v2207
  %v2209 = vpop.f32.mrf.mxu0
  %v2210 = vpop.f32.mrf.mxu0
  %2211 = vdwg.mxu0
  %v2212 = vsel %vm306, %v2115, %v2117
  %v2213 = vsel %vm307, %v2116, %v2118
  %v2214 = vadd.f32 %v2212, %v2206
  %v2215 = vadd.f32 %v2213, %v2208
  %v2216 = vmul.f32 %v2214, %v310
  %v2217 = vmul.f32 %v2215, %v311
  %v2218 = vtanh.pop %v2216
  %v2219 = vtanh.pop %v2217
  %v2220 = vmul.f32 %v2218, 0.5
  %v2221 = vmul.f32 %v2219, 0.5
  %v2222 = vadd.f32 %v2220, 0.5
  %v2223 = vadd.f32 %v2221, 0.5
  %v2224 = vmul.f32 %v2222, %v2106
  %2226 = vrot.lane.b32.xlu0 %v2219, 64
  %v2227 = vpop.permute.xlu0 %2226
  %v2229 = vmul.f32 %v2222, %v2227
  %2231 = vrot.lane.b32.xlu0 %v2229, 64
  %v2232 = vpop.permute.xlu0 %2231
  %v2234 = vadd.f32 %v2224, %v2232
  %v2235 = vtanh.pop %v2234
  %2237 = vrot.lane.b32.xlu0 %v2235, 64
  %v2238 = vpop.permute.xlu0 %2237
  %v2240 = vmul.f32 %v2223, %v2238
  %2241 = vst.msk [vmem:[%s1057] sm:$0xff] %vm646, %v2240
  %2242 = vst.msk [vmem:[%s1055] sm:$0xff] %vm649, %v2240
  %v2243 = vld [vmem:[%s794] sm:$0xff]
  %v2244 = vld [vmem:[%s794 + $0x8] sm:$0xff]
  %v2245 = vld [vmem:[%s789] sm:$0xff]
  %v2246 = vld [vmem:[%s789 + $0x8] sm:$0xff]
  %v2247 = vpack.c.bf16 %v2240, %v2240
  %v2248 = vld [vmem:[%s4] sm:$0xff]
  %v2249 = vld [vmem:[%s4 + $0x8] sm:$0xff]
  %v2250 = vld [vmem:[%s4 + $0x10] sm:$0xff]
  %v2251 = vld [vmem:[%s4 + $0x18] sm:$0xff]
  %v2252 = vld [vmem:[%s4 + $0x20] sm:$0xff]
  %v2253 = vld [vmem:[%s4 + $0x28] sm:$0xff]
  %v2254 = vld [vmem:[%s4 + $0x30] sm:$0xff]
  %v2255 = vld [vmem:[%s4 + $0x38] sm:$0xff]
  %v2264 = vunpack.c.l.b16 %v2248
  %v2265 = vunpack.c.h.b16 %v2248
  %v2266 = vunpack.c.l.b16 %v2249
  %v2267 = vunpack.c.h.b16 %v2249
  %v2268 = vunpack.c.l.b16 %v2250
  %v2269 = vunpack.c.h.b16 %v2250
  %v2270 = vunpack.c.l.b16 %v2251
  %v2271 = vunpack.c.h.b16 %v2251
  %v2272 = vunpack.c.l.b16 %v2252
  %v2273 = vunpack.c.h.b16 %v2252
  %v2274 = vunpack.c.l.b16 %v2253
  %v2275 = vunpack.c.h.b16 %v2253
  %v2276 = vunpack.c.l.b16 %v2254
  %v2277 = vunpack.c.h.b16 %v2254
  %v2278 = vunpack.c.l.b16 %v2255
  %v2279 = vunpack.c.h.b16 %v2255
  %v2280 = vpack.c.b16 %v2266, %v2264
  %v2281 = vpack.c.b16 %v2267, %v2265
  %v2282 = vpack.c.b16 %v2270, %v2268
  %v2283 = vpack.c.b16 %v2271, %v2269
  %v2284 = vpack.c.b16 %v2274, %v2272
  %v2285 = vpack.c.b16 %v2275, %v2273
  %v2286 = vpack.c.b16 %v2278, %v2276
  %v2287 = vpack.c.b16 %v2279, %v2277
  %v2297 = vsel %vm572, %v2247, 0
  %2299 = vmatprep.subr.bf16.mxu0 0
  %2300 = vmatpush1.bf16.msra.mxu0 0
  %2301 = vmatprep.subr.bf16.mxu0 0
  %2302 = vmatpush1.bf16.msra.mxu0 0
  %2303 = vmatprep.subr.bf16.mxu0 0
  %2304 = vmatpush1.bf16.msra.mxu0 0
  %2305 = vmatprep.subr.bf16.mxu0 0
  %2306 = vmatpush1.bf16.msra.mxu0 0
  %2307 = vmatprep.subr.bf16.mxu0 %v2287
  %2308 = vmatpush1.bf16.msra.mxu0 %v2286
  %2309 = vmatprep.subr.bf16.mxu0 %v2285
  %2310 = vmatpush1.bf16.msra.mxu0 %v2284
  %2311 = vmatprep.subr.bf16.mxu0 %v2283
  %2312 = vmatpush1.bf16.msra.mxu0 %v2282
  %2313 = vmatprep.subr.bf16.mxu0 %v2281
  %2314 = vmatpush1.bf16.msra.mxu0 %v2280
  %2315 = vmatprep.subr.bf16.mxu0 0
  %2316 = vmatpush2.bf16.msra.mxu0 0
  %2317 = vmatprep.subr.bf16.mxu0 0
  %2318 = vmatpush2.bf16.msra.mxu0 0
  %2319 = vmatprep.subr.bf16.mxu0 0
  %2320 = vmatpush2.bf16.msra.mxu0 0
  %2321 = vmatprep.subr.bf16.mxu0 0
  %2322 = vmatpush2.bf16.msra.mxu0 0
  %2323 = vmatprep.subr.bf16.mxu0 0
  %2324 = vmatpush2.bf16.msra.mxu0 0
  %2325 = vmatprep.subr.bf16.mxu0 0
  %2326 = vmatpush2.bf16.msra.mxu0 0
  %2327 = vmatprep.subr.bf16.mxu0 0
  %2328 = vmatpush2.bf16.msra.mxu0 0
  %2329 = vmatprep.subr.bf16.mxu0 0
  %2330 = vmatpush2.bf16.msra.mxu0 0
  %2331 = vmatprep.mubr.bf16.mxu0 0
  %2332 = vmatmul.mubr.bf16.gmra.mxu0 %v2297
  %v2333 = vpop.f32.mrf.mxu0
  %v2334 = vadd.f32 0.0, %v2333
  %v2335 = vpop.f32.mrf.mxu0
  %v2336 = vadd.f32 0.0, %v2335
  %v2337 = vpop.f32.mrf.mxu0
  %v2338 = vpop.f32.mrf.mxu0
  %2339 = vdwg.mxu0
  %v2340 = vsel %vm306, %v2243, %v2245
  %v2341 = vsel %vm307, %v2244, %v2246
  %v2342 = vadd.f32 %v2340, %v2334
  %v2343 = vadd.f32 %v2341, %v2336
  %v2344 = vmul.f32 %v2342, %v310
  %v2345 = vmul.f32 %v2343, %v311
  %v2346 = vtanh.pop %v2344
  %v2347 = vtanh.pop %v2345
  %v2348 = vmul.f32 %v2346, 0.5
  %v2349 = vmul.f32 %v2347, 0.5
  %v2350 = vadd.f32 %v2348, 0.5
  %v2351 = vadd.f32 %v2349, 0.5
  %v2352 = vmul.f32 %v2350, %v2234
  %2354 = vrot.lane.b32.xlu0 %v2347, 64
  %v2355 = vpop.permute.xlu0 %2354
  %v2357 = vmul.f32 %v2350, %v2355
  %2359 = vrot.lane.b32.xlu0 %v2357, 64
  %v2360 = vpop.permute.xlu0 %2359
  %v2362 = vadd.f32 %v2352, %v2360
  %v2363 = vtanh.pop %v2362
  %2365 = vrot.lane.b32.xlu0 %v2363, 64
  %v2366 = vpop.permute.xlu0 %2365
  %v2368 = vmul.f32 %v2351, %v2366
  %2369 = vst.msk [vmem:[%s921] sm:$0xff] %vm646, %v2368
  %2370 = vst.msk [vmem:[%s919] sm:$0xff] %vm649, %v2368
  %v2371 = vld [vmem:[%s658] sm:$0xff]
  %v2372 = vld [vmem:[%s658 + $0x8] sm:$0xff]
  %v2373 = vld [vmem:[%s653] sm:$0xff]
  %v2374 = vld [vmem:[%s653 + $0x8] sm:$0xff]
  %v2375 = vpack.c.bf16 %v2368, %v2368
  %v2376 = vld [vmem:[%s4] sm:$0xff]
  %v2377 = vld [vmem:[%s4 + $0x8] sm:$0xff]
  %v2378 = vld [vmem:[%s4 + $0x10] sm:$0xff]
  %v2379 = vld [vmem:[%s4 + $0x18] sm:$0xff]
  %v2380 = vld [vmem:[%s4 + $0x20] sm:$0xff]
  %v2381 = vld [vmem:[%s4 + $0x28] sm:$0xff]
  %v2382 = vld [vmem:[%s4 + $0x30] sm:$0xff]
  %v2383 = vld [vmem:[%s4 + $0x38] sm:$0xff]
  %v2392 = vunpack.c.l.b16 %v2376
  %v2393 = vunpack.c.h.b16 %v2376
  %v2394 = vunpack.c.l.b16 %v2377
  %v2395 = vunpack.c.h.b16 %v2377
  %v2396 = vunpack.c.l.b16 %v2378
  %v2397 = vunpack.c.h.b16 %v2378
  %v2398 = vunpack.c.l.b16 %v2379
  %v2399 = vunpack.c.h.b16 %v2379
  %v2400 = vunpack.c.l.b16 %v2380
  %v2401 = vunpack.c.h.b16 %v2380
  %v2402 = vunpack.c.l.b16 %v2381
  %v2403 = vunpack.c.h.b16 %v2381
  %v2404 = vunpack.c.l.b16 %v2382
  %v2405 = vunpack.c.h.b16 %v2382
  %v2406 = vunpack.c.l.b16 %v2383
  %v2407 = vunpack.c.h.b16 %v2383
  %v2408 = vpack.c.b16 %v2394, %v2392
  %v2409 = vpack.c.b16 %v2395, %v2393
  %v2410 = vpack.c.b16 %v2398, %v2396
  %v2411 = vpack.c.b16 %v2399, %v2397
  %v2412 = vpack.c.b16 %v2402, %v2400
  %v2413 = vpack.c.b16 %v2403, %v2401
  %v2414 = vpack.c.b16 %v2406, %v2404
  %v2415 = vpack.c.b16 %v2407, %v2405
  %v2425 = vsel %vm572, %v2375, 0
  %2427 = vmatprep.subr.bf16.mxu0 0
  %2428 = vmatpush1.bf16.msra.mxu0 0
  %2429 = vmatprep.subr.bf16.mxu0 0
  %2430 = vmatpush1.bf16.msra.mxu0 0
  %2431 = vmatprep.subr.bf16.mxu0 0
  %2432 = vmatpush1.bf16.msra.mxu0 0
  %2433 = vmatprep.subr.bf16.mxu0 0
  %2434 = vmatpush1.bf16.msra.mxu0 0
  %2435 = vmatprep.subr.bf16.mxu0 %v2415
  %2436 = vmatpush1.bf16.msra.mxu0 %v2414
  %2437 = vmatprep.subr.bf16.mxu0 %v2413
  %2438 = vmatpush1.bf16.msra.mxu0 %v2412
  %2439 = vmatprep.subr.bf16.mxu0 %v2411
  %2440 = vmatpush1.bf16.msra.mxu0 %v2410
  %2441 = vmatprep.subr.bf16.mxu0 %v2409
  %2442 = vmatpush1.bf16.msra.mxu0 %v2408
  %2443 = vmatprep.subr.bf16.mxu0 0
  %2444 = vmatpush2.bf16.msra.mxu0 0
  %2445 = vmatprep.subr.bf16.mxu0 0
  %2446 = vmatpush2.bf16.msra.mxu0 0
  %2447 = vmatprep.subr.bf16.mxu0 0
  %2448 = vmatpush2.bf16.msra.mxu0 0
  %2449 = vmatprep.subr.bf16.mxu0 0
  %2450 = vmatpush2.bf16.msra.mxu0 0
  %2451 = vmatprep.subr.bf16.mxu0 0
  %2452 = vmatpush2.bf16.msra.mxu0 0
  %2453 = vmatprep.subr.bf16.mxu0 0
  %2454 = vmatpush2.bf16.msra.mxu0 0
  %2455 = vmatprep.subr.bf16.mxu0 0
  %2456 = vmatpush2.bf16.msra.mxu0 0
  %2457 = vmatprep.subr.bf16.mxu0 0
  %2458 = vmatpush2.bf16.msra.mxu0 0
  %2459 = vmatprep.mubr.bf16.mxu0 0
  %2460 = vmatmul.mubr.bf16.gmra.mxu0 %v2425
  %v2461 = vpop.f32.mrf.mxu0
  %v2462 = vadd.f32 0.0, %v2461
  %v2463 = vpop.f32.mrf.mxu0
  %v2464 = vadd.f32 0.0, %v2463
  %v2465 = vpop.f32.mrf.mxu0
  %v2466 = vpop.f32.mrf.mxu0
  %2467 = vdwg.mxu0
  %v2468 = vsel %vm306, %v2371, %v2373
  %v2469 = vsel %vm307, %v2372, %v2374
  %v2470 = vadd.f32 %v2468, %v2462
  %v2471 = vadd.f32 %v2469, %v2464
  %v2472 = vmul.f32 %v2470, %v310
  %v2473 = vmul.f32 %v2471, %v311
  %v2474 = vtanh.pop %v2472
  %v2475 = vtanh.pop %v2473
  %v2476 = vmul.f32 %v2474, 0.5
  %v2477 = vmul.f32 %v2475, 0.5
  %v2478 = vadd.f32 %v2476, 0.5
  %v2479 = vadd.f32 %v2477, 0.5
  %v2480 = vmul.f32 %v2478, %v2362
  %2482 = vrot.lane.b32.xlu0 %v2475, 64
  %v2483 = vpop.permute.xlu0 %2482
  %v2485 = vmul.f32 %v2478, %v2483
  %2487 = vrot.lane.b32.xlu0 %v2485, 64
  %v2488 = vpop.permute.xlu0 %2487
  %v2490 = vadd.f32 %v2480, %v2488
  %v2491 = vtanh.pop %v2490
  %2493 = vrot.lane.b32.xlu0 %v2491, 64
  %v2494 = vpop.permute.xlu0 %2493
  %v2496 = vmul.f32 %v2479, %v2494
  %2497 = vst.msk [vmem:[%s785] sm:$0xff] %vm646, %v2496
  %2498 = vst.msk [vmem:[%s783] sm:$0xff] %vm649, %v2496
  %v2499 = vld [vmem:[%s521] sm:$0xff]
  %v2500 = vld [vmem:[%s521 + $0x8] sm:$0xff]
  %v2501 = vld [vmem:[%s516] sm:$0xff]
  %v2502 = vld [vmem:[%s516 + $0x8] sm:$0xff]
  %v2503 = vpack.c.bf16 %v2496, %v2496
  %v2504 = vld [vmem:[%s4] sm:$0xff]
  %v2505 = vld [vmem:[%s4 + $0x8] sm:$0xff]
  %v2506 = vld [vmem:[%s4 + $0x10] sm:$0xff]
  %v2507 = vld [vmem:[%s4 + $0x18] sm:$0xff]
  %v2508 = vld [vmem:[%s4 + $0x20] sm:$0xff]
  %v2509 = vld [vmem:[%s4 + $0x28] sm:$0xff]
  %v2510 = vld [vmem:[%s4 + $0x30] sm:$0xff]
  %v2511 = vld [vmem:[%s4 + $0x38] sm:$0xff]
  %v2520 = vunpack.c.l.b16 %v2504
  %v2521 = vunpack.c.h.b16 %v2504
  %v2522 = vunpack.c.l.b16 %v2505
  %v2523 = vunpack.c.h.b16 %v2505
  %v2524 = vunpack.c.l.b16 %v2506
  %v2525 = vunpack.c.h.b16 %v2506
  %v2526 = vunpack.c.l.b16 %v2507
  %v2527 = vunpack.c.h.b16 %v2507
  %v2528 = vunpack.c.l.b16 %v2508
  %v2529 = vunpack.c.h.b16 %v2508
  %v2530 = vunpack.c.l.b16 %v2509
  %v2531 = vunpack.c.h.b16 %v2509
  %v2532 = vunpack.c.l.b16 %v2510
  %v2533 = vunpack.c.h.b16 %v2510
  %v2534 = vunpack.c.l.b16 %v2511
  %v2535 = vunpack.c.h.b16 %v2511
  %v2536 = vpack.c.b16 %v2522, %v2520
  %v2537 = vpack.c.b16 %v2523, %v2521
  %v2538 = vpack.c.b16 %v2526, %v2524
  %v2539 = vpack.c.b16 %v2527, %v2525
  %v2540 = vpack.c.b16 %v2530, %v2528
  %v2541 = vpack.c.b16 %v2531, %v2529
  %v2542 = vpack.c.b16 %v2534, %v2532
  %v2543 = vpack.c.b16 %v2535, %v2533
  %v2553 = vsel %vm572, %v2503, 0
  %2555 = vmatprep.subr.bf16.mxu0 0
  %2556 = vmatpush1.bf16.msra.mxu0 0
  %2557 = vmatprep.subr.bf16.mxu0 0
  %2558 = vmatpush1.bf16.msra.mxu0 0
  %2559 = vmatprep.subr.bf16.mxu0 0
  %2560 = vmatpush1.bf16.msra.mxu0 0
  %2561 = vmatprep.subr.bf16.mxu0 0
  %2562 = vmatpush1.bf16.msra.mxu0 0
  %2563 = vmatprep.subr.bf16.mxu0 %v2543
  %2564 = vmatpush1.bf16.msra.mxu0 %v2542
  %2565 = vmatprep.subr.bf16.mxu0 %v2541
  %2566 = vmatpush1.bf16.msra.mxu0 %v2540
  %2567 = vmatprep.subr.bf16.mxu0 %v2539
  %2568 = vmatpush1.bf16.msra.mxu0 %v2538
  %2569 = vmatprep.subr.bf16.mxu0 %v2537
  %2570 = vmatpush1.bf16.msra.mxu0 %v2536
  %2571 = vmatprep.subr.bf16.mxu0 0
  %2572 = vmatpush2.bf16.msra.mxu0 0
  %2573 = vmatprep.subr.bf16.mxu0 0
  %2574 = vmatpush2.bf16.msra.mxu0 0
  %2575 = vmatprep.subr.bf16.mxu0 0
  %2576 = vmatpush2.bf16.msra.mxu0 0
  %2577 = vmatprep.subr.bf16.mxu0 0
  %2578 = vmatpush2.bf16.msra.mxu0 0
  %2579 = vmatprep.subr.bf16.mxu0 0
  %2580 = vmatpush2.bf16.msra.mxu0 0
  %2581 = vmatprep.subr.bf16.mxu0 0
  %2582 = vmatpush2.bf16.msra.mxu0 0
  %2583 = vmatprep.subr.bf16.mxu0 0
  %2584 = vmatpush2.bf16.msra.mxu0 0
  %2585 = vmatprep.subr.bf16.mxu0 0
  %2586 = vmatpush2.bf16.msra.mxu0 0
  %2587 = vmatprep.mubr.bf16.mxu0 0
  %2588 = vmatmul.mubr.bf16.gmra.mxu0 %v2553
  %v2589 = vpop.f32.mrf.mxu0
  %v2590 = vadd.f32 0.0, %v2589
  %v2591 = vpop.f32.mrf.mxu0
  %v2592 = vadd.f32 0.0, %v2591
  %v2593 = vpop.f32.mrf.mxu0
  %v2594 = vpop.f32.mrf.mxu0
  %2595 = vdwg.mxu0
  %v2596 = vsel %vm306, %v2499, %v2501
  %v2597 = vsel %vm307, %v2500, %v2502
  %v2598 = vadd.f32 %v2596, %v2590
  %v2599 = vadd.f32 %v2597, %v2592
  %v2600 = vmul.f32 %v2598, %v310
  %v2601 = vmul.f32 %v2599, %v311
  %v2602 = vtanh.pop %v2600
  %v2603 = vtanh.pop %v2601
  %v2604 = vmul.f32 %v2602, 0.5
  %v2605 = vmul.f32 %v2603, 0.5
  %v2606 = vadd.f32 %v2604, 0.5
  %v2607 = vadd.f32 %v2605, 0.5
  %v2608 = vmul.f32 %v2606, %v2490
  %2610 = vrot.lane.b32.xlu0 %v2603, 64
  %v2611 = vpop.permute.xlu0 %2610
  %v2613 = vmul.f32 %v2606, %v2611
  %2615 = vrot.lane.b32.xlu0 %v2613, 64
  %v2616 = vpop.permute.xlu0 %2615
  %v2618 = vadd.f32 %v2608, %v2616
  %v2619 = vtanh.pop %v2618
  %2621 = vrot.lane.b32.xlu0 %v2619, 64
  %v2622 = vpop.permute.xlu0 %2621
  %v2624 = vmul.f32 %v2607, %v2622
  %2625 = vst.msk [vmem:[%s648] sm:$0xff] %vm646, %v2624
  %2626 = vst.msk [vmem:[#allocation3] sm:$0xff] %vm649, %v2624
  %v2627 = vld [vmem:[#allocation3] sm:$0xff]
  %v2628 = vld [vmem:[#allocation3 + $0x8] sm:$0xff]
  %v2629 = vld [vmem:[#allocation3 + $0x10] sm:$0xff]
  %v2630 = vld [vmem:[#allocation3 + $0x18] sm:$0xff]
  %v2631 = vld [vmem:[#allocation3 + $0x20] sm:$0xff]
  %v2632 = vld [vmem:[#allocation3 + $0x28] sm:$0xff]
  %v2633 = vld [vmem:[#allocation3 + $0x30] sm:$0xff]
  %v2634 = vld [vmem:[#allocation3 + $0x38] sm:$0xff]
  %v2635 = vld [vmem:[#allocation3 + $0x40] sm:$0xff]
  %v2636 = vld [vmem:[#allocation3 + $0x48] sm:$0xff]
  %v2637 = vld [vmem:[#allocation3 + $0x50] sm:$0xff]
  %v2638 = vld [vmem:[#allocation3 + $0x58] sm:$0xff]
  %v2639 = vld [vmem:[#allocation3 + $0x60] sm:$0xff]
  %v2640 = vld [vmem:[#allocation3 + $0x68] sm:$0xff]
  %v2641 = vld [vmem:[#allocation3 + $0x70] sm:$0xff]
  %v2642 = vld [vmem:[#allocation3 + $0x78] sm:$0xff]
  %v2643 = vpack.c.bf16 %v2628, %v2627
  %v2644 = vpack.c.bf16 %v2630, %v2629
  %v2645 = vpack.c.bf16 %v2632, %v2631
  %v2646 = vpack.c.bf16 %v2634, %v2633
  %v2647 = vpack.c.bf16 %v2636, %v2635
  %v2648 = vpack.c.bf16 %v2638, %v2637
  %v2649 = vpack.c.bf16 %v2640, %v2639
  %v2650 = vpack.c.bf16 %v2642, %v2641
  %v2651 = vld [vmem:[%s6] sm:$0xff]
  %v2652 = vld [vmem:[%s6 + $0x8] sm:$0xff]
  %v2653 = vld [vmem:[%s6 + $0x10] sm:$0xff]
  %v2654 = vld [vmem:[%s6 + $0x18] sm:$0xff]
  %v2655 = vld [vmem:[%s6 + $0x20] sm:$0xff]
  %v2656 = vld [vmem:[%s6 + $0x28] sm:$0xff]
  %v2657 = vld [vmem:[%s6 + $0x30] sm:$0xff]
  %v2658 = vld [vmem:[%s6 + $0x38] sm:$0xff]
  %v2659 = vld [vmem:[%s8] sm:$0x3]
  %v2661 = vlaneseq
  %v2662 = vshrl.u32 %v2661, 7
  %v2663 = vsub.s32 0, %v2662
  %v2664 = vrot.slane %v2659, %v2663
  %v2665 = vlaneseq
  %v2666 = vshrl.u32 %v2665, 7
  %v2667 = vsub.s32 1, %v2666
  %v2668 = vrot.slane %v2659, %v2667
  %v2679 = vunpack.c.l.b16 %v2651
  %v2680 = vunpack.c.h.b16 %v2651
  %v2681 = vunpack.c.l.b16 %v2652
  %v2682 = vunpack.c.h.b16 %v2652
  %v2683 = vunpack.c.l.b16 %v2653
  %v2684 = vunpack.c.h.b16 %v2653
  %v2685 = vunpack.c.l.b16 %v2654
  %v2686 = vunpack.c.h.b16 %v2654
  %v2687 = vunpack.c.l.b16 %v2655
  %v2688 = vunpack.c.h.b16 %v2655
  %v2689 = vunpack.c.l.b16 %v2656
  %v2690 = vunpack.c.h.b16 %v2656
  %v2691 = vunpack.c.l.b16 %v2657
  %v2692 = vunpack.c.h.b16 %v2657
  %v2693 = vunpack.c.l.b16 %v2658
  %v2694 = vunpack.c.h.b16 %v2658
  %v2695 = vpack.c.b16 %v2681, %v2679
  %v2696 = vpack.c.b16 %v2682, %v2680
  %v2697 = vpack.c.b16 %v2685, %v2683
  %v2698 = vpack.c.b16 %v2686, %v2684
  %v2699 = vpack.c.b16 %v2689, %v2687
  %v2700 = vpack.c.b16 %v2690, %v2688
  %v2701 = vpack.c.b16 %v2693, %v2691
  %v2702 = vpack.c.b16 %v2694, %v2692
  %v2712 = vsel %vm572, %v2643, 0
  %v2715 = vsel %vm572, %v2644, 0
  %v2718 = vsel %vm572, %v2645, 0
  %v2721 = vsel %vm572, %v2646, 0
  %v2724 = vsel %vm572, %v2647, 0
  %v2727 = vsel %vm572, %v2648, 0
  %v2730 = vsel %vm572, %v2649, 0
  %v2733 = vsel %vm572, %v2650, 0
  %2735 = vmatprep.subr.bf16.mxu0 0
  %2736 = vmatpush1.bf16.msra.mxu0 0
  %2737 = vmatprep.subr.bf16.mxu0 0
  %2738 = vmatpush1.bf16.msra.mxu0 0
  %2739 = vmatprep.subr.bf16.mxu0 0
  %2740 = vmatpush1.bf16.msra.mxu0 0
  %2741 = vmatprep.subr.bf16.mxu0 0
  %2742 = vmatpush1.bf16.msra.mxu0 0
  %2743 = vmatprep.subr.bf16.mxu0 %v2702
  %2744 = vmatpush1.bf16.msra.mxu0 %v2701
  %2745 = vmatprep.subr.bf16.mxu0 %v2700
  %2746 = vmatpush1.bf16.msra.mxu0 %v2699
  %2747 = vmatprep.subr.bf16.mxu0 %v2698
  %2748 = vmatpush1.bf16.msra.mxu0 %v2697
  %2749 = vmatprep.subr.bf16.mxu0 %v2696
  %2750 = vmatpush1.bf16.msra.mxu0 %v2695
  %2751 = vmatprep.subr.bf16.mxu0 0
  %2752 = vmatpush2.bf16.msra.mxu0 0
  %2753 = vmatprep.subr.bf16.mxu0 0
  %2754 = vmatpush2.bf16.msra.mxu0 0
  %2755 = vmatprep.subr.bf16.mxu0 0
  %2756 = vmatpush2.bf16.msra.mxu0 0
  %2757 = vmatprep.subr.bf16.mxu0 0
  %2758 = vmatpush2.bf16.msra.mxu0 0
  %2759 = vmatprep.subr.bf16.mxu0 0
  %2760 = vmatpush2.bf16.msra.mxu0 0
  %2761 = vmatprep.subr.bf16.mxu0 0
  %2762 = vmatpush2.bf16.msra.mxu0 0
  %2763 = vmatprep.subr.bf16.mxu0 0
  %2764 = vmatpush2.bf16.msra.mxu0 0
  %2765 = vmatprep.subr.bf16.mxu0 0
  %2766 = vmatpush2.bf16.msra.mxu0 0
  %2767 = vmatprep.mubr.bf16.mxu0 0
  %2768 = vmatmul.mubr.bf16.gmra.mxu0 %v2712
  %v2769 = vpop.f32.mrf.mxu0
  %v2770 = vadd.f32 %v2664, %v2769
  %v2771 = vpop.f32.mrf.mxu0
  %v2772 = vadd.f32 %v2668, %v2771
  %v2773 = vpop.f32.mrf.mxu0
  %v2774 = vadd.f32 %v2664, %v2773
  %v2775 = vpop.f32.mrf.mxu0
  %v2776 = vadd.f32 %v2668, %v2775
  %2777 = vmatprep.mubr.bf16.mxu0 0
  %2778 = vmatmul.mubr.bf16.gmra.mxu0 %v2715
  %v2779 = vpop.f32.mrf.mxu0
  %v2780 = vadd.f32 %v2664, %v2779
  %v2781 = vpop.f32.mrf.mxu0
  %v2782 = vadd.f32 %v2668, %v2781
  %v2783 = vpop.f32.mrf.mxu0
  %v2784 = vadd.f32 %v2664, %v2783
  %v2785 = vpop.f32.mrf.mxu0
  %v2786 = vadd.f32 %v2668, %v2785
  %2787 = vmatprep.mubr.bf16.mxu0 0
  %2788 = vmatmul.mubr.bf16.gmra.mxu0 %v2718
  %v2789 = vpop.f32.mrf.mxu0
  %v2790 = vadd.f32 %v2664, %v2789
  %v2791 = vpop.f32.mrf.mxu0
  %v2792 = vadd.f32 %v2668, %v2791
  %v2793 = vpop.f32.mrf.mxu0
  %v2794 = vadd.f32 %v2664, %v2793
  %v2795 = vpop.f32.mrf.mxu0
  %v2796 = vadd.f32 %v2668, %v2795
  %2797 = vmatprep.mubr.bf16.mxu0 0
  %2798 = vmatmul.mubr.bf16.gmra.mxu0 %v2721
  %v2799 = vpop.f32.mrf.mxu0
  %v2800 = vadd.f32 %v2664, %v2799
  %v2801 = vpop.f32.mrf.mxu0
  %v2802 = vadd.f32 %v2668, %v2801
  %v2803 = vpop.f32.mrf.mxu0
  %v2804 = vadd.f32 %v2664, %v2803
  %v2805 = vpop.f32.mrf.mxu0
  %v2806 = vadd.f32 %v2668, %v2805
  %2807 = vmatprep.mubr.bf16.mxu0 0
  %2808 = vmatmul.mubr.bf16.gmra.mxu0 %v2724
  %v2809 = vpop.f32.mrf.mxu0
  %v2810 = vadd.f32 %v2664, %v2809
  %v2811 = vpop.f32.mrf.mxu0
  %v2812 = vadd.f32 %v2668, %v2811
  %v2813 = vpop.f32.mrf.mxu0
  %v2814 = vadd.f32 %v2664, %v2813
  %v2815 = vpop.f32.mrf.mxu0
  %v2816 = vadd.f32 %v2668, %v2815
  %2817 = vmatprep.mubr.bf16.mxu0 0
  %2818 = vmatmul.mubr.bf16.gmra.mxu0 %v2727
  %v2819 = vpop.f32.mrf.mxu0
  %v2820 = vadd.f32 %v2664, %v2819
  %v2821 = vpop.f32.mrf.mxu0
  %v2822 = vadd.f32 %v2668, %v2821
  %v2823 = vpop.f32.mrf.mxu0
  %v2824 = vadd.f32 %v2664, %v2823
  %v2825 = vpop.f32.mrf.mxu0
  %v2826 = vadd.f32 %v2668, %v2825
  %2827 = vmatprep.mubr.bf16.mxu0 0
  %2828 = vmatmul.mubr.bf16.gmra.mxu0 %v2730
  %v2829 = vpop.f32.mrf.mxu0
  %v2830 = vadd.f32 %v2664, %v2829
  %v2831 = vpop.f32.mrf.mxu0
  %v2832 = vadd.f32 %v2668, %v2831
  %v2833 = vpop.f32.mrf.mxu0
  %v2834 = vadd.f32 %v2664, %v2833
  %v2835 = vpop.f32.mrf.mxu0
  %v2836 = vadd.f32 %v2668, %v2835
  %2837 = vmatprep.mubr.bf16.mxu0 0
  %2838 = vmatmul.mubr.bf16.gmra.mxu0 %v2733
  %v2839 = vpop.f32.mrf.mxu0
  %v2840 = vadd.f32 %v2664, %v2839
  %v2841 = vpop.f32.mrf.mxu0
  %v2842 = vadd.f32 %v2668, %v2841
  %v2843 = vpop.f32.mrf.mxu0
  %v2844 = vadd.f32 %v2664, %v2843
  %v2845 = vpop.f32.mrf.mxu0
  %v2846 = vadd.f32 %v2668, %v2845
  %2847 = vdwg.mxu0
  %2848 = vst [vmem:[#allocation2] sm:$0xff] %v2770
  %2849 = vst [vmem:[#allocation2 + $0x8] sm:$0xff] %v2772
  %2850 = vst [vmem:[#allocation2 + $0x10] sm:$0xff] %v2774
  %2851 = vst [vmem:[#allocation2 + $0x18] sm:$0xff] %v2776
  %2852 = vst [vmem:[#allocation2 + $0x20] sm:$0xff] %v2780
  %2853 = vst [vmem:[#allocation2 + $0x28] sm:$0xff] %v2782
  %2854 = vst [vmem:[#allocation2 + $0x30] sm:$0xff] %v2784
  %2855 = vst [vmem:[#allocation2 + $0x38] sm:$0xff] %v2786
  %2856 = vst [vmem:[#allocation2 + $0x40] sm:$0xff] %v2790
  %2857 = vst [vmem:[#allocation2 + $0x48] sm:$0xff] %v2792
  %2858 = vst [vmem:[#allocation2 + $0x50] sm:$0xff] %v2794
  %2859 = vst [vmem:[#allocation2 + $0x58] sm:$0xff] %v2796
  %2860 = vst [vmem:[#allocation2 + $0x60] sm:$0xff] %v2800
  %2861 = vst [vmem:[#allocation2 + $0x68] sm:$0xff] %v2802
  %2862 = vst [vmem:[#allocation2 + $0x70] sm:$0xff] %v2804
  %2863 = vst [vmem:[#allocation2 + $0x78] sm:$0xff] %v2806
  %2864 = vst [vmem:[#allocation2 + $0x80] sm:$0xff] %v2810
  %2865 = vst [vmem:[#allocation2 + $0x88] sm:$0xff] %v2812
  %2866 = vst [vmem:[#allocation2 + $0x90] sm:$0xff] %v2814
  %2867 = vst [vmem:[#allocation2 + $0x98] sm:$0xff] %v2816
  %2868 = vst [vmem:[#allocation2 + $0xa0] sm:$0xff] %v2820
  %2869 = vst [vmem:[#allocation2 + $0xa8] sm:$0xff] %v2822
  %2870 = vst [vmem:[#allocation2 + $0xb0] sm:$0xff] %v2824
  %2871 = vst [vmem:[#allocation2 + $0xb8] sm:$0xff] %v2826
  %2872 = vst [vmem:[#allocation2 + $0xc0] sm:$0xff] %v2830
  %2873 = vst [vmem:[#allocation2 + $0xc8] sm:$0xff] %v2832
  %2874 = vst [vmem:[#allocation2 + $0xd0] sm:$0xff] %v2834
  %2875 = vst [vmem:[#allocation2 + $0xd8] sm:$0xff] %v2836
  %2876 = vst [vmem:[#allocation2 + $0xe0] sm:$0xff] %v2840
  %2877 = vst [vmem:[#allocation2 + $0xe8] sm:$0xff] %v2842
  %2878 = vst [vmem:[#allocation2 + $0xf0] sm:$0xff] %v2844
  %2879 = vst [vmem:[#allocation2 + $0xf8] sm:$0xff] %v2846
  %v2880 = vld [vmem:[%s516] sm:$0xff]
  %v2881 = vld [vmem:[%s516 + $0x8] sm:$0xff]
  %v2882 = vld [vmem:[%s521] sm:$0xff]
  %v2883 = vld [vmem:[%s521 + $0x8] sm:$0xff]
  %v2884 = vld [vmem:[%s7] sm:$0xff]
  %v2885 = vld [vmem:[%s7 + $0x8] sm:$0xff]
  %v2886 = vld [vmem:[%s7 + $0x10] sm:$0xff]
  %v2887 = vld [vmem:[%s7 + $0x18] sm:$0xff]
  %v2888 = vld [vmem:[%s7 + $0x20] sm:$0xff]
  %v2889 = vld [vmem:[%s7 + $0x28] sm:$0xff]
  %v2890 = vld [vmem:[%s7 + $0x30] sm:$0xff]
  %v2891 = vld [vmem:[%s7 + $0x38] sm:$0xff]
  %v2900 = vunpack.c.l.b16 %v2884
  %v2901 = vunpack.c.h.b16 %v2884
  %v2902 = vunpack.c.l.b16 %v2885
  %v2903 = vunpack.c.h.b16 %v2885
  %v2904 = vunpack.c.l.b16 %v2886
  %v2905 = vunpack.c.h.b16 %v2886
  %v2906 = vunpack.c.l.b16 %v2887
  %v2907 = vunpack.c.h.b16 %v2887
  %v2908 = vunpack.c.l.b16 %v2888
  %v2909 = vunpack.c.h.b16 %v2888
  %v2910 = vunpack.c.l.b16 %v2889
  %v2911 = vunpack.c.h.b16 %v2889
  %v2912 = vunpack.c.l.b16 %v2890
  %v2913 = vunpack.c.h.b16 %v2890
  %v2914 = vunpack.c.l.b16 %v2891
  %v2915 = vunpack.c.h.b16 %v2891
  %v2916 = vpack.c.b16 %v2902, %v2900
  %v2917 = vpack.c.b16 %v2903, %v2901
  %v2918 = vpack.c.b16 %v2906, %v2904
  %v2919 = vpack.c.b16 %v2907, %v2905
  %v2920 = vpack.c.b16 %v2910, %v2908
  %v2921 = vpack.c.b16 %v2911, %v2909
  %v2922 = vpack.c.b16 %v2914, %v2912
  %v2923 = vpack.c.b16 %v2915, %v2913
  %2932 = vmatprep.subr.bf16.mxu0 0
  %2933 = vmatpush1.bf16.msra.mxu0 0
  %2934 = vmatprep.subr.bf16.mxu0 0
  %2935 = vmatpush1.bf16.msra.mxu0 0
  %2936 = vmatprep.subr.bf16.mxu0 0
  %2937 = vmatpush1.bf16.msra.mxu0 0
  %2938 = vmatprep.subr.bf16.mxu0 0
  %2939 = vmatpush1.bf16.msra.mxu0 0
  %2940 = vmatprep.subr.bf16.mxu0 %v2923
  %2941 = vmatpush1.bf16.msra.mxu0 %v2922
  %2942 = vmatprep.subr.bf16.mxu0 %v2921
  %2943 = vmatpush1.bf16.msra.mxu0 %v2920
  %2944 = vmatprep.subr.bf16.mxu0 %v2919
  %2945 = vmatpush1.bf16.msra.mxu0 %v2918
  %2946 = vmatprep.subr.bf16.mxu0 %v2917
  %2947 = vmatpush1.bf16.msra.mxu0 %v2916
  %2948 = vmatprep.subr.bf16.mxu0 0
  %2949 = vmatpush2.bf16.msra.mxu0 0
  %2950 = vmatprep.subr.bf16.mxu0 0
  %2951 = vmatpush2.bf16.msra.mxu0 0
  %2952 = vmatprep.subr.bf16.mxu0 0
  %2953 = vmatpush2.bf16.msra.mxu0 0
  %2954 = vmatprep.subr.bf16.mxu0 0
  %2955 = vmatpush2.bf16.msra.mxu0 0
  %2956 = vmatprep.subr.bf16.mxu0 0
  %2957 = vmatpush2.bf16.msra.mxu0 0
  %2958 = vmatprep.subr.bf16.mxu0 0
  %2959 = vmatpush2.bf16.msra.mxu0 0
  %2960 = vmatprep.subr.bf16.mxu0 0
  %2961 = vmatpush2.bf16.msra.mxu0 0
  %2962 = vmatprep.subr.bf16.mxu0 0
  %2963 = vmatpush2.bf16.msra.mxu0 0
  %2964 = vmatprep.mubr.bf16.mxu0 0
  %2965 = vmatmul.mubr.bf16.gmra.mxu0 %v574
  %v2966 = vpop.f32.mrf.mxu0
  %v2967 = vadd.f32 0.0, %v2966
  %v2968 = vpop.f32.mrf.mxu0
  %v2969 = vadd.f32 0.0, %v2968
  %v2970 = vpop.f32.mrf.mxu0
  %v2971 = vpop.f32.mrf.mxu0
  %2972 = vdwg.mxu0
  %v2973 = vsel %vm306, %v2880, %v2882
  %v2974 = vsel %vm307, %v2881, %v2883
  %v2975 = vadd.f32 %v2973, %v2967
  %v2976 = vadd.f32 %v2974, %v2969
  %v2977 = vmul.f32 %v2975, %v310
  %v2978 = vmul.f32 %v2976, %v311
  %v2979 = vtanh.pop %v2977
  %v2980 = vtanh.pop %v2978
  %v2981 = vmul.f32 %v2979, 0.5
  %v2982 = vmul.f32 %v2980, 0.5
  %v2983 = vadd.f32 %v2981, 0.5
  %v2984 = vadd.f32 %v2982, 0.5
  %v2985 = vmul.f32 %v2983, 0.0
  %2987 = vrot.lane.b32.xlu0 %v2980, 64
  %v2988 = vpop.permute.xlu0 %2987
  %v2990 = vmul.f32 %v2983, %v2988
  %2992 = vrot.lane.b32.xlu0 %v2990, 64
  %v2993 = vpop.permute.xlu0 %2992
  %v2995 = vadd.f32 %v2985, %v2993
  %v2996 = vtanh.pop %v2995
  %2998 = vrot.lane.b32.xlu0 %v2996, 64
  %v2999 = vpop.permute.xlu0 %2998
  %v3001 = vmul.f32 %v2984, %v2999
  %3002 = vst.msk [vmem:[#allocation3] sm:$0xff] %vm646, %v3001
  %3003 = vst.msk [vmem:[%s648] sm:$0xff] %vm649, %v3001
  %v3004 = vld [vmem:[%s653] sm:$0xff]
  %v3005 = vld [vmem:[%s653 + $0x8] sm:$0xff]
  %v3006 = vld [vmem:[%s658] sm:$0xff]
  %v3007 = vld [vmem:[%s658 + $0x8] sm:$0xff]
  %v3008 = vpack.c.bf16 %v3001, %v3001
  %v3009 = vld [vmem:[%s7] sm:$0xff]
  %v3010 = vld [vmem:[%s7 + $0x8] sm:$0xff]
  %v3011 = vld [vmem:[%s7 + $0x10] sm:$0xff]
  %v3012 = vld [vmem:[%s7 + $0x18] sm:$0xff]
  %v3013 = vld [vmem:[%s7 + $0x20] sm:$0xff]
  %v3014 = vld [vmem:[%s7 + $0x28] sm:$0xff]
  %v3015 = vld [vmem:[%s7 + $0x30] sm:$0xff]
  %v3016 = vld [vmem:[%s7 + $0x38] sm:$0xff]
  %v3025 = vunpack.c.l.b16 %v3009
  %v3026 = vunpack.c.h.b16 %v3009
  %v3027 = vunpack.c.l.b16 %v3010
  %v3028 = vunpack.c.h.b16 %v3010
  %v3029 = vunpack.c.l.b16 %v3011
  %v3030 = vunpack.c.h.b16 %v3011
  %v3031 = vunpack.c.l.b16 %v3012
  %v3032 = vunpack.c.h.b16 %v3012
  %v3033 = vunpack.c.l.b16 %v3013
  %v3034 = vunpack.c.h.b16 %v3013
  %v3035 = vunpack.c.l.b16 %v3014
  %v3036 = vunpack.c.h.b16 %v3014
  %v3037 = vunpack.c.l.b16 %v3015
  %v3038 = vunpack.c.h.b16 %v3015
  %v3039 = vunpack.c.l.b16 %v3016
  %v3040 = vunpack.c.h.b16 %v3016
  %v3041 = vpack.c.b16 %v3027, %v3025
  %v3042 = vpack.c.b16 %v3028, %v3026
  %v3043 = vpack.c.b16 %v3031, %v3029
  %v3044 = vpack.c.b16 %v3032, %v3030
  %v3045 = vpack.c.b16 %v3035, %v3033
  %v3046 = vpack.c.b16 %v3036, %v3034
  %v3047 = vpack.c.b16 %v3039, %v3037
  %v3048 = vpack.c.b16 %v3040, %v3038
  %v3058 = vsel %vm572, %v3008, 0
  %3060 = vmatprep.subr.bf16.mxu0 0
  %3061 = vmatpush1.bf16.msra.mxu0 0
  %3062 = vmatprep.subr.bf16.mxu0 0
  %3063 = vmatpush1.bf16.msra.mxu0 0
  %3064 = vmatprep.subr.bf16.mxu0 0
  %3065 = vmatpush1.bf16.msra.mxu0 0
  %3066 = vmatprep.subr.bf16.mxu0 0
  %3067 = vmatpush1.bf16.msra.mxu0 0
  %3068 = vmatprep.subr.bf16.mxu0 %v3048
  %3069 = vmatpush1.bf16.msra.mxu0 %v3047
  %3070 = vmatprep.subr.bf16.mxu0 %v3046
  %3071 = vmatpush1.bf16.msra.mxu0 %v3045
  %3072 = vmatprep.subr.bf16.mxu0 %v3044
  %3073 = vmatpush1.bf16.msra.mxu0 %v3043
  %3074 = vmatprep.subr.bf16.mxu0 %v3042
  %3075 = vmatpush1.bf16.msra.mxu0 %v3041
  %3076 = vmatprep.subr.bf16.mxu0 0
  %3077 = vmatpush2.bf16.msra.mxu0 0
  %3078 = vmatprep.subr.bf16.mxu0 0
  %3079 = vmatpush2.bf16.msra.mxu0 0
  %3080 = vmatprep.subr.bf16.mxu0 0
  %3081 = vmatpush2.bf16.msra.mxu0 0
  %3082 = vmatprep.subr.bf16.mxu0 0
  %3083 = vmatpush2.bf16.msra.mxu0 0
  %3084 = vmatprep.subr.bf16.mxu0 0
  %3085 = vmatpush2.bf16.msra.mxu0 0
  %3086 = vmatprep.subr.bf16.mxu0 0
  %3087 = vmatpush2.bf16.msra.mxu0 0
  %3088 = vmatprep.subr.bf16.mxu0 0
  %3089 = vmatpush2.bf16.msra.mxu0 0
  %3090 = vmatprep.subr.bf16.mxu0 0
  %3091 = vmatpush2.bf16.msra.mxu0 0
  %3092 = vmatprep.mubr.bf16.mxu0 0
  %3093 = vmatmul.mubr.bf16.gmra.mxu0 %v3058
  %v3094 = vpop.f32.mrf.mxu0
  %v3095 = vadd.f32 0.0, %v3094
  %v3096 = vpop.f32.mrf.mxu0
  %v3097 = vadd.f32 0.0, %v3096
  %v3098 = vpop.f32.mrf.mxu0
  %v3099 = vpop.f32.mrf.mxu0
  %3100 = vdwg.mxu0
  %v3101 = vsel %vm306, %v3004, %v3006
  %v3102 = vsel %vm307, %v3005, %v3007
  %v3103 = vadd.f32 %v3101, %v3095
  %v3104 = vadd.f32 %v3102, %v3097
  %v3105 = vmul.f32 %v3103, %v310
  %v3106 = vmul.f32 %v3104, %v311
  %v3107 = vtanh.pop %v3105
  %v3108 = vtanh.pop %v3106
  %v3109 = vmul.f32 %v3107, 0.5
  %v3110 = vmul.f32 %v3108, 0.5
  %v3111 = vadd.f32 %v3109, 0.5
  %v3112 = vadd.f32 %v3110, 0.5
  %v3113 = vmul.f32 %v3111, %v2995
  %3115 = vrot.lane.b32.xlu0 %v3108, 64
  %v3116 = vpop.permute.xlu0 %3115
  %v3118 = vmul.f32 %v3111, %v3116
  %3120 = vrot.lane.b32.xlu0 %v3118, 64
  %v3121 = vpop.permute.xlu0 %3120
  %v3123 = vadd.f32 %v3113, %v3121
  %v3124 = vtanh.pop %v3123
  %3126 = vrot.lane.b32.xlu0 %v3124, 64
  %v3127 = vpop.permute.xlu0 %3126
  %v3129 = vmul.f32 %v3112, %v3127
  %3130 = vst.msk [vmem:[%s783] sm:$0xff] %vm646, %v3129
  %3131 = vst.msk [vmem:[%s785] sm:$0xff] %vm649, %v3129
  %v3132 = vld [vmem:[%s789] sm:$0xff]
  %v3133 = vld [vmem:[%s789 + $0x8] sm:$0xff]
  %v3134 = vld [vmem:[%s794] sm:$0xff]
  %v3135 = vld [vmem:[%s794 + $0x8] sm:$0xff]
  %v3136 = vpack.c.bf16 %v3129, %v3129
  %v3137 = vld [vmem:[%s7] sm:$0xff]
  %v3138 = vld [vmem:[%s7 + $0x8] sm:$0xff]
  %v3139 = vld [vmem:[%s7 + $0x10] sm:$0xff]
  %v3140 = vld [vmem:[%s7 + $0x18] sm:$0xff]
  %v3141 = vld [vmem:[%s7 + $0x20] sm:$0xff]
  %v3142 = vld [vmem:[%s7 + $0x28] sm:$0xff]
  %v3143 = vld [vmem:[%s7 + $0x30] sm:$0xff]
  %v3144 = vld [vmem:[%s7 + $0x38] sm:$0xff]
  %v3153 = vunpack.c.l.b16 %v3137
  %v3154 = vunpack.c.h.b16 %v3137
  %v3155 = vunpack.c.l.b16 %v3138
  %v3156 = vunpack.c.h.b16 %v3138
  %v3157 = vunpack.c.l.b16 %v3139
  %v3158 = vunpack.c.h.b16 %v3139
  %v3159 = vunpack.c.l.b16 %v3140
  %v3160 = vunpack.c.h.b16 %v3140
  %v3161 = vunpack.c.l.b16 %v3141
  %v3162 = vunpack.c.h.b16 %v3141
  %v3163 = vunpack.c.l.b16 %v3142
  %v3164 = vunpack.c.h.b16 %v3142
  %v3165 = vunpack.c.l.b16 %v3143
  %v3166 = vunpack.c.h.b16 %v3143
  %v3167 = vunpack.c.l.b16 %v3144
  %v3168 = vunpack.c.h.b16 %v3144
  %v3169 = vpack.c.b16 %v3155, %v3153
  %v3170 = vpack.c.b16 %v3156, %v3154
  %v3171 = vpack.c.b16 %v3159, %v3157
  %v3172 = vpack.c.b16 %v3160, %v3158
  %v3173 = vpack.c.b16 %v3163, %v3161
  %v3174 = vpack.c.b16 %v3164, %v3162
  %v3175 = vpack.c.b16 %v3167, %v3165
  %v3176 = vpack.c.b16 %v3168, %v3166
  %v3186 = vsel %vm572, %v3136, 0
  %3188 = vmatprep.subr.bf16.mxu0 0
  %3189 = vmatpush1.bf16.msra.mxu0 0
  %3190 = vmatprep.subr.bf16.mxu0 0
  %3191 = vmatpush1.bf16.msra.mxu0 0
  %3192 = vmatprep.subr.bf16.mxu0 0
  %3193 = vmatpush1.bf16.msra.mxu0 0
  %3194 = vmatprep.subr.bf16.mxu0 0
  %3195 = vmatpush1.bf16.msra.mxu0 0
  %3196 = vmatprep.subr.bf16.mxu0 %v3176
  %3197 = vmatpush1.bf16.msra.mxu0 %v3175
  %3198 = vmatprep.subr.bf16.mxu0 %v3174
  %3199 = vmatpush1.bf16.msra.mxu0 %v3173
  %3200 = vmatprep.subr.bf16.mxu0 %v3172
  %3201 = vmatpush1.bf16.msra.mxu0 %v3171
  %3202 = vmatprep.subr.bf16.mxu0 %v3170
  %3203 = vmatpush1.bf16.msra.mxu0 %v3169
  %3204 = vmatprep.subr.bf16.mxu0 0
  %3205 = vmatpush2.bf16.msra.mxu0 0
  %3206 = vmatprep.subr.bf16.mxu0 0
  %3207 = vmatpush2.bf16.msra.mxu0 0
  %3208 = vmatprep.subr.bf16.mxu0 0
  %3209 = vmatpush2.bf16.msra.mxu0 0
  %3210 = vmatprep.subr.bf16.mxu0 0
  %3211 = vmatpush2.bf16.msra.mxu0 0
  %3212 = vmatprep.subr.bf16.mxu0 0
  %3213 = vmatpush2.bf16.msra.mxu0 0
  %3214 = vmatprep.subr.bf16.mxu0 0
  %3215 = vmatpush2.bf16.msra.mxu0 0
  %3216 = vmatprep.subr.bf16.mxu0 0
  %3217 = vmatpush2.bf16.msra.mxu0 0
  %3218 = vmatprep.subr.bf16.mxu0 0
  %3219 = vmatpush2.bf16.msra.mxu0 0
  %3220 = vmatprep.mubr.bf16.mxu0 0
  %3221 = vmatmul.mubr.bf16.gmra.mxu0 %v3186
  %v3222 = vpop.f32.mrf.mxu0
  %v3223 = vadd.f32 0.0, %v3222
  %v3224 = vpop.f32.mrf.mxu0
  %v3225 = vadd.f32 0.0, %v3224
  %v3226 = vpop.f32.mrf.mxu0
  %v3227 = vpop.f32.mrf.mxu0
  %3228 = vdwg.mxu0
  %v3229 = vsel %vm306, %v3132, %v3134
  %v3230 = vsel %vm307, %v3133, %v3135
  %v3231 = vadd.f32 %v3229, %v3223
  %v3232 = vadd.f32 %v3230, %v3225
  %v3233 = vmul.f32 %v3231, %v310
  %v3234 = vmul.f32 %v3232, %v311
  %v3235 = vtanh.pop %v3233
  %v3236 = vtanh.pop %v3234
  %v3237 = vmul.f32 %v3235, 0.5
  %v3238 = vmul.f32 %v3236, 0.5
  %v3239 = vadd.f32 %v3237, 0.5
  %v3240 = vadd.f32 %v3238, 0.5
  %v3241 = vmul.f32 %v3239, %v3123
  %3243 = vrot.lane.b32.xlu0 %v3236, 64
  %v3244 = vpop.permute.xlu0 %3243
  %v3246 = vmul.f32 %v3239, %v3244
  %3248 = vrot.lane.b32.xlu0 %v3246, 64
  %v3249 = vpop.permute.xlu0 %3248
  %v3251 = vadd.f32 %v3241, %v3249
  %v3252 = vtanh.pop %v3251
  %3254 = vrot.lane.b32.xlu0 %v3252, 64
  %v3255 = vpop.permute.xlu0 %3254
  %v3257 = vmul.f32 %v3240, %v3255
  %3258 = vst.msk [vmem:[%s919] sm:$0xff] %vm646, %v3257
  %3259 = vst.msk [vmem:[%s921] sm:$0xff] %vm649, %v3257
  %v3260 = vld [vmem:[%s925] sm:$0xff]
  %v3261 = vld [vmem:[%s925 + $0x8] sm:$0xff]
  %v3262 = vld [vmem:[%s930] sm:$0xff]
  %v3263 = vld [vmem:[%s930 + $0x8] sm:$0xff]
  %v3264 = vpack.c.bf16 %v3257, %v3257
  %v3265 = vld [vmem:[%s7] sm:$0xff]
  %v3266 = vld [vmem:[%s7 + $0x8] sm:$0xff]
  %v3267 = vld [vmem:[%s7 + $0x10] sm:$0xff]
  %v3268 = vld [vmem:[%s7 + $0x18] sm:$0xff]
  %v3269 = vld [vmem:[%s7 + $0x20] sm:$0xff]
  %v3270 = vld [vmem:[%s7 + $0x28] sm:$0xff]
  %v3271 = vld [vmem:[%s7 + $0x30] sm:$0xff]
  %v3272 = vld [vmem:[%s7 + $0x38] sm:$0xff]
  %v3281 = vunpack.c.l.b16 %v3265
  %v3282 = vunpack.c.h.b16 %v3265
  %v3283 = vunpack.c.l.b16 %v3266
  %v3284 = vunpack.c.h.b16 %v3266
  %v3285 = vunpack.c.l.b16 %v3267
  %v3286 = vunpack.c.h.b16 %v3267
  %v3287 = vunpack.c.l.b16 %v3268
  %v3288 = vunpack.c.h.b16 %v3268
  %v3289 = vunpack.c.l.b16 %v3269
  %v3290 = vunpack.c.h.b16 %v3269
  %v3291 = vunpack.c.l.b16 %v3270
  %v3292 = vunpack.c.h.b16 %v3270
  %v3293 = vunpack.c.l.b16 %v3271
  %v3294 = vunpack.c.h.b16 %v3271
  %v3295 = vunpack.c.l.b16 %v3272
  %v3296 = vunpack.c.h.b16 %v3272
  %v3297 = vpack.c.b16 %v3283, %v3281
  %v3298 = vpack.c.b16 %v3284, %v3282
  %v3299 = vpack.c.b16 %v3287, %v3285
  %v3300 = vpack.c.b16 %v3288, %v3286
  %v3301 = vpack.c.b16 %v3291, %v3289
  %v3302 = vpack.c.b16 %v3292, %v3290
  %v3303 = vpack.c.b16 %v3295, %v3293
  %v3304 = vpack.c.b16 %v3296, %v3294
  %v3314 = vsel %vm572, %v3264, 0
  %3316 = vmatprep.subr.bf16.mxu0 0
  %3317 = vmatpush1.bf16.msra.mxu0 0
  %3318 = vmatprep.subr.bf16.mxu0 0
  %3319 = vmatpush1.bf16.msra.mxu0 0
  %3320 = vmatprep.subr.bf16.mxu0 0
  %3321 = vmatpush1.bf16.msra.mxu0 0
  %3322 = vmatprep.subr.bf16.mxu0 0
  %3323 = vmatpush1.bf16.msra.mxu0 0
  %3324 = vmatprep.subr.bf16.mxu0 %v3304
  %3325 = vmatpush1.bf16.msra.mxu0 %v3303
  %3326 = vmatprep.subr.bf16.mxu0 %v3302
  %3327 = vmatpush1.bf16.msra.mxu0 %v3301
  %3328 = vmatprep.subr.bf16.mxu0 %v3300
  %3329 = vmatpush1.bf16.msra.mxu0 %v3299
  %3330 = vmatprep.subr.bf16.mxu0 %v3298
  %3331 = vmatpush1.bf16.msra.mxu0 %v3297
  %3332 = vmatprep.subr.bf16.mxu0 0
  %3333 = vmatpush2.bf16.msra.mxu0 0
  %3334 = vmatprep.subr.bf16.mxu0 0
  %3335 = vmatpush2.bf16.msra.mxu0 0
  %3336 = vmatprep.subr.bf16.mxu0 0
  %3337 = vmatpush2.bf16.msra.mxu0 0
  %3338 = vmatprep.subr.bf16.mxu0 0
  %3339 = vmatpush2.bf16.msra.mxu0 0
  %3340 = vmatprep.subr.bf16.mxu0 0
  %3341 = vmatpush2.bf16.msra.mxu0 0
  %3342 = vmatprep.subr.bf16.mxu0 0
  %3343 = vmatpush2.bf16.msra.mxu0 0
  %3344 = vmatprep.subr.bf16.mxu0 0
  %3345 = vmatpush2.bf16.msra.mxu0 0
  %3346 = vmatprep.subr.bf16.mxu0 0
  %3347 = vmatpush2.bf16.msra.mxu0 0
  %3348 = vmatprep.mubr.bf16.mxu0 0
  %3349 = vmatmul.mubr.bf16.gmra.mxu0 %v3314
  %v3350 = vpop.f32.mrf.mxu0
  %v3351 = vadd.f32 0.0, %v3350
  %v3352 = vpop.f32.mrf.mxu0
  %v3353 = vadd.f32 0.0, %v3352
  %v3354 = vpop.f32.mrf.mxu0
  %v3355 = vpop.f32.mrf.mxu0
  %3356 = vdwg.mxu0
  %v3357 = vsel %vm306, %v3260, %v3262
  %v3358 = vsel %vm307, %v3261, %v3263
  %v3359 = vadd.f32 %v3357, %v3351
  %v3360 = vadd.f32 %v3358, %v3353
  %v3361 = vmul.f32 %v3359, %v310
  %v3362 = vmul.f32 %v3360, %v311
  %v3363 = vtanh.pop %v3361
  %v3364 = vtanh.pop %v3362
  %v3365 = vmul.f32 %v3363, 0.5
  %v3366 = vmul.f32 %v3364, 0.5
  %v3367 = vadd.f32 %v3365, 0.5
  %v3368 = vadd.f32 %v3366, 0.5
  %v3369 = vmul.f32 %v3367, %v3251
  %3371 = vrot.lane.b32.xlu0 %v3364, 64
  %v3372 = vpop.permute.xlu0 %3371
  %v3374 = vmul.f32 %v3367, %v3372
  %3376 = vrot.lane.b32.xlu0 %v3374, 64
  %v3377 = vpop.permute.xlu0 %3376
  %v3379 = vadd.f32 %v3369, %v3377
  %v3380 = vtanh.pop %v3379
  %3382 = vrot.lane.b32.xlu0 %v3380, 64
  %v3383 = vpop.permute.xlu0 %3382
  %v3385 = vmul.f32 %v3368, %v3383
  %3386 = vst.msk [vmem:[%s1055] sm:$0xff] %vm646, %v3385
  %3387 = vst.msk [vmem:[%s1057] sm:$0xff] %vm649, %v3385
  %v3388 = vld [vmem:[%s1061] sm:$0xff]
  %v3389 = vld [vmem:[%s1061 + $0x8] sm:$0xff]
  %v3390 = vld [vmem:[%s1066] sm:$0xff]
  %v3391 = vld [vmem:[%s1066 + $0x8] sm:$0xff]
  %v3392 = vpack.c.bf16 %v3385, %v3385
  %v3393 = vld [vmem:[%s7] sm:$0xff]
  %v3394 = vld [vmem:[%s7 + $0x8] sm:$0xff]
  %v3395 = vld [vmem:[%s7 + $0x10] sm:$0xff]
  %v3396 = vld [vmem:[%s7 + $0x18] sm:$0xff]
  %v3397 = vld [vmem:[%s7 + $0x20] sm:$0xff]
  %v3398 = vld [vmem:[%s7 + $0x28] sm:$0xff]
  %v3399 = vld [vmem:[%s7 + $0x30] sm:$0xff]
  %v3400 = vld [vmem:[%s7 + $0x38] sm:$0xff]
  %v3409 = vunpack.c.l.b16 %v3393
  %v3410 = vunpack.c.h.b16 %v3393
  %v3411 = vunpack.c.l.b16 %v3394
  %v3412 = vunpack.c.h.b16 %v3394
  %v3413 = vunpack.c.l.b16 %v3395
  %v3414 = vunpack.c.h.b16 %v3395
  %v3415 = vunpack.c.l.b16 %v3396
  %v3416 = vunpack.c.h.b16 %v3396
  %v3417 = vunpack.c.l.b16 %v3397
  %v3418 = vunpack.c.h.b16 %v3397
  %v3419 = vunpack.c.l.b16 %v3398
  %v3420 = vunpack.c.h.b16 %v3398
  %v3421 = vunpack.c.l.b16 %v3399
  %v3422 = vunpack.c.h.b16 %v3399
  %v3423 = vunpack.c.l.b16 %v3400
  %v3424 = vunpack.c.h.b16 %v3400
  %v3425 = vpack.c.b16 %v3411, %v3409
  %v3426 = vpack.c.b16 %v3412, %v3410
  %v3427 = vpack.c.b16 %v3415, %v3413
  %v3428 = vpack.c.b16 %v3416, %v3414
  %v3429 = vpack.c.b16 %v3419, %v3417
  %v3430 = vpack.c.b16 %v3420, %v3418
  %v3431 = vpack.c.b16 %v3423, %v3421
  %v3432 = vpack.c.b16 %v3424, %v3422
  %v3442 = vsel %vm572, %v3392, 0
  %3444 = vmatprep.subr.bf16.mxu0 0
  %3445 = vmatpush1.bf16.msra.mxu0 0
  %3446 = vmatprep.subr.bf16.mxu0 0
  %3447 = vmatpush1.bf16.msra.mxu0 0
  %3448 = vmatprep.subr.bf16.mxu0 0
  %3449 = vmatpush1.bf16.msra.mxu0 0
  %3450 = vmatprep.subr.bf16.mxu0 0
  %3451 = vmatpush1.bf16.msra.mxu0 0
  %3452 = vmatprep.subr.bf16.mxu0 %v3432
  %3453 = vmatpush1.bf16.msra.mxu0 %v3431
  %3454 = vmatprep.subr.bf16.mxu0 %v3430
  %3455 = vmatpush1.bf16.msra.mxu0 %v3429
  %3456 = vmatprep.subr.bf16.mxu0 %v3428
  %3457 = vmatpush1.bf16.msra.mxu0 %v3427
  %3458 = vmatprep.subr.bf16.mxu0 %v3426
  %3459 = vmatpush1.bf16.msra.mxu0 %v3425
  %3460 = vmatprep.subr.bf16.mxu0 0
  %3461 = vmatpush2.bf16.msra.mxu0 0
  %3462 = vmatprep.subr.bf16.mxu0 0
  %3463 = vmatpush2.bf16.msra.mxu0 0
  %3464 = vmatprep.subr.bf16.mxu0 0
  %3465 = vmatpush2.bf16.msra.mxu0 0
  %3466 = vmatprep.subr.bf16.mxu0 0
  %3467 = vmatpush2.bf16.msra.mxu0 0
  %3468 = vmatprep.subr.bf16.mxu0 0
  %3469 = vmatpush2.bf16.msra.mxu0 0
  %3470 = vmatprep.subr.bf16.mxu0 0
  %3471 = vmatpush2.bf16.msra.mxu0 0
  %3472 = vmatprep.subr.bf16.mxu0 0
  %3473 = vmatpush2.bf16.msra.mxu0 0
  %3474 = vmatprep.subr.bf16.mxu0 0
  %3475 = vmatpush2.bf16.msra.mxu0 0
  %3476 = vmatprep.mubr.bf16.mxu0 0
  %3477 = vmatmul.mubr.bf16.gmra.mxu0 %v3442
  %v3478 = vpop.f32.mrf.mxu0
  %v3479 = vadd.f32 0.0, %v3478
  %v3480 = vpop.f32.mrf.mxu0
  %v3481 = vadd.f32 0.0, %v3480
  %v3482 = vpop.f32.mrf.mxu0
  %v3483 = vpop.f32.mrf.mxu0
  %3484 = vdwg.mxu0
  %v3485 = vsel %vm306, %v3388, %v3390
  %v3486 = vsel %vm307, %v3389, %v3391
  %v3487 = vadd.f32 %v3485, %v3479
  %v3488 = vadd.f32 %v3486, %v3481
  %v3489 = vmul.f32 %v3487, %v310
  %v3490 = vmul.f32 %v3488, %v311
  %v3491 = vtanh.pop %v3489
  %v3492 = vtanh.pop %v3490
  %v3493 = vmul.f32 %v3491, 0.5
  %v3494 = vmul.f32 %v3492, 0.5
  %v3495 = vadd.f32 %v3493, 0.5
  %v3496 = vadd.f32 %v3494, 0.5
  %v3497 = vmul.f32 %v3495, %v3379
  %3499 = vrot.lane.b32.xlu0 %v3492, 64
  %v3500 = vpop.permute.xlu0 %3499
  %v3502 = vmul.f32 %v3495, %v3500
  %3504 = vrot.lane.b32.xlu0 %v3502, 64
  %v3505 = vpop.permute.xlu0 %3504
  %v3507 = vadd.f32 %v3497, %v3505
  %v3508 = vtanh.pop %v3507
  %3510 = vrot.lane.b32.xlu0 %v3508, 64
  %v3511 = vpop.permute.xlu0 %3510
  %v3513 = vmul.f32 %v3496, %v3511
  %3514 = vst.msk [vmem:[%s1191] sm:$0xff] %vm646, %v3513
  %3515 = vst.msk [vmem:[%s1193] sm:$0xff] %vm649, %v3513
  %v3516 = vld [vmem:[%s1197] sm:$0xff]
  %v3517 = vld [vmem:[%s1197 + $0x8] sm:$0xff]
  %v3518 = vld [vmem:[%s1202] sm:$0xff]
  %v3519 = vld [vmem:[%s1202 + $0x8] sm:$0xff]
  %v3520 = vpack.c.bf16 %v3513, %v3513
  %v3521 = vld [vmem:[%s7] sm:$0xff]
  %v3522 = vld [vmem:[%s7 + $0x8] sm:$0xff]
  %v3523 = vld [vmem:[%s7 + $0x10] sm:$0xff]
  %v3524 = vld [vmem:[%s7 + $0x18] sm:$0xff]
  %v3525 = vld [vmem:[%s7 + $0x20] sm:$0xff]
  %v3526 = vld [vmem:[%s7 + $0x28] sm:$0xff]
  %v3527 = vld [vmem:[%s7 + $0x30] sm:$0xff]
  %v3528 = vld [vmem:[%s7 + $0x38] sm:$0xff]
  %v3537 = vunpack.c.l.b16 %v3521
  %v3538 = vunpack.c.h.b16 %v3521
  %v3539 = vunpack.c.l.b16 %v3522
  %v3540 = vunpack.c.h.b16 %v3522
  %v3541 = vunpack.c.l.b16 %v3523
  %v3542 = vunpack.c.h.b16 %v3523
  %v3543 = vunpack.c.l.b16 %v3524
  %v3544 = vunpack.c.h.b16 %v3524
  %v3545 = vunpack.c.l.b16 %v3525
  %v3546 = vunpack.c.h.b16 %v3525
  %v3547 = vunpack.c.l.b16 %v3526
  %v3548 = vunpack.c.h.b16 %v3526
  %v3549 = vunpack.c.l.b16 %v3527
  %v3550 = vunpack.c.h.b16 %v3527
  %v3551 = vunpack.c.l.b16 %v3528
  %v3552 = vunpack.c.h.b16 %v3528
  %v3553 = vpack.c.b16 %v3539, %v3537
  %v3554 = vpack.c.b16 %v3540, %v3538
  %v3555 = vpack.c.b16 %v3543, %v3541
  %v3556 = vpack.c.b16 %v3544, %v3542
  %v3557 = vpack.c.b16 %v3547, %v3545
  %v3558 = vpack.c.b16 %v3548, %v3546
  %v3559 = vpack.c.b16 %v3551, %v3549
  %v3560 = vpack.c.b16 %v3552, %v3550
  %v3570 = vsel %vm572, %v3520, 0
  %3572 = vmatprep.subr.bf16.mxu0 0
  %3573 = vmatpush1.bf16.msra.mxu0 0
  %3574 = vmatprep.subr.bf16.mxu0 0
  %3575 = vmatpush1.bf16.msra.mxu0 0
  %3576 = vmatprep.subr.bf16.mxu0 0
  %3577 = vmatpush1.bf16.msra.mxu0 0
  %3578 = vmatprep.subr.bf16.mxu0 0
  %3579 = vmatpush1.bf16.msra.mxu0 0
  %3580 = vmatprep.subr.bf16.mxu0 %v3560
  %3581 = vmatpush1.bf16.msra.mxu0 %v3559
  %3582 = vmatprep.subr.bf16.mxu0 %v3558
  %3583 = vmatpush1.bf16.msra.mxu0 %v3557
  %3584 = vmatprep.subr.bf16.mxu0 %v3556
  %3585 = vmatpush1.bf16.msra.mxu0 %v3555
  %3586 = vmatprep.subr.bf16.mxu0 %v3554
  %3587 = vmatpush1.bf16.msra.mxu0 %v3553
  %3588 = vmatprep.subr.bf16.mxu0 0
  %3589 = vmatpush2.bf16.msra.mxu0 0
  %3590 = vmatprep.subr.bf16.mxu0 0
  %3591 = vmatpush2.bf16.msra.mxu0 0
  %3592 = vmatprep.subr.bf16.mxu0 0
  %3593 = vmatpush2.bf16.msra.mxu0 0
  %3594 = vmatprep.subr.bf16.mxu0 0
  %3595 = vmatpush2.bf16.msra.mxu0 0
  %3596 = vmatprep.subr.bf16.mxu0 0
  %3597 = vmatpush2.bf16.msra.mxu0 0
  %3598 = vmatprep.subr.bf16.mxu0 0
  %3599 = vmatpush2.bf16.msra.mxu0 0
  %3600 = vmatprep.subr.bf16.mxu0 0
  %3601 = vmatpush2.bf16.msra.mxu0 0
  %3602 = vmatprep.subr.bf16.mxu0 0
  %3603 = vmatpush2.bf16.msra.mxu0 0
  %3604 = vmatprep.mubr.bf16.mxu0 0
  %3605 = vmatmul.mubr.bf16.gmra.mxu0 %v3570
  %v3606 = vpop.f32.mrf.mxu0
  %v3607 = vadd.f32 0.0, %v3606
  %v3608 = vpop.f32.mrf.mxu0
  %v3609 = vadd.f32 0.0, %v3608
  %v3610 = vpop.f32.mrf.mxu0
  %v3611 = vpop.f32.mrf.mxu0
  %3612 = vdwg.mxu0
  %v3613 = vsel %vm306, %v3516, %v3518
  %v3614 = vsel %vm307, %v3517, %v3519
  %v3615 = vadd.f32 %v3613, %v3607
  %v3616 = vadd.f32 %v3614, %v3609
  %v3617 = vmul.f32 %v3615, %v310
  %v3618 = vmul.f32 %v3616, %v311
  %v3619 = vtanh.pop %v3617
  %v3620 = vtanh.pop %v3618
  %v3621 = vmul.f32 %v3619, 0.5
  %v3622 = vmul.f32 %v3620, 0.5
  %v3623 = vadd.f32 %v3621, 0.5
  %v3624 = vadd.f32 %v3622, 0.5
  %v3625 = vmul.f32 %v3623, %v3507
  %3627 = vrot.lane.b32.xlu0 %v3620, 64
  %v3628 = vpop.permute.xlu0 %3627
  %v3630 = vmul.f32 %v3623, %v3628
  %3632 = vrot.lane.b32.xlu0 %v3630, 64
  %v3633 = vpop.permute.xlu0 %3632
  %v3635 = vadd.f32 %v3625, %v3633
  %v3636 = vtanh.pop %v3635
  %3638 = vrot.lane.b32.xlu0 %v3636, 64
  %v3639 = vpop.permute.xlu0 %3638
  %v3641 = vmul.f32 %v3624, %v3639
  %3642 = vst.msk [vmem:[%s1327] sm:$0xff] %vm646, %v3641
  %3643 = vst.msk [vmem:[%s1329] sm:$0xff] %vm649, %v3641
  %v3644 = vld [vmem:[%s1333] sm:$0xff]
  %v3645 = vld [vmem:[%s1333 + $0x8] sm:$0xff]
  %v3646 = vld [vmem:[%s1338] sm:$0xff]
  %v3647 = vld [vmem:[%s1338 + $0x8] sm:$0xff]
  %v3648 = vpack.c.bf16 %v3641, %v3641
  %v3649 = vld [vmem:[%s7] sm:$0xff]
  %v3650 = vld [vmem:[%s7 + $0x8] sm:$0xff]
  %v3651 = vld [vmem:[%s7 + $0x10] sm:$0xff]
  %v3652 = vld [vmem:[%s7 + $0x18] sm:$0xff]
  %v3653 = vld [vmem:[%s7 + $0x20] sm:$0xff]
  %v3654 = vld [vmem:[%s7 + $0x28] sm:$0xff]
  %v3655 = vld [vmem:[%s7 + $0x30] sm:$0xff]
  %v3656 = vld [vmem:[%s7 + $0x38] sm:$0xff]
  %v3665 = vunpack.c.l.b16 %v3649
  %v3666 = vunpack.c.h.b16 %v3649
  %v3667 = vunpack.c.l.b16 %v3650
  %v3668 = vunpack.c.h.b16 %v3650
  %v3669 = vunpack.c.l.b16 %v3651
  %v3670 = vunpack.c.h.b16 %v3651
  %v3671 = vunpack.c.l.b16 %v3652
  %v3672 = vunpack.c.h.b16 %v3652
  %v3673 = vunpack.c.l.b16 %v3653
  %v3674 = vunpack.c.h.b16 %v3653
  %v3675 = vunpack.c.l.b16 %v3654
  %v3676 = vunpack.c.h.b16 %v3654
  %v3677 = vunpack.c.l.b16 %v3655
  %v3678 = vunpack.c.h.b16 %v3655
  %v3679 = vunpack.c.l.b16 %v3656
  %v3680 = vunpack.c.h.b16 %v3656
  %v3681 = vpack.c.b16 %v3667, %v3665
  %v3682 = vpack.c.b16 %v3668, %v3666
  %v3683 = vpack.c.b16 %v3671, %v3669
  %v3684 = vpack.c.b16 %v3672, %v3670
  %v3685 = vpack.c.b16 %v3675, %v3673
  %v3686 = vpack.c.b16 %v3676, %v3674
  %v3687 = vpack.c.b16 %v3679, %v3677
  %v3688 = vpack.c.b16 %v3680, %v3678
  %v3698 = vsel %vm572, %v3648, 0
  %3700 = vmatprep.subr.bf16.mxu0 0
  %3701 = vmatpush1.bf16.msra.mxu0 0
  %3702 = vmatprep.subr.bf16.mxu0 0
  %3703 = vmatpush1.bf16.msra.mxu0 0
  %3704 = vmatprep.subr.bf16.mxu0 0
  %3705 = vmatpush1.bf16.msra.mxu0 0
  %3706 = vmatprep.subr.bf16.mxu0 0
  %3707 = vmatpush1.bf16.msra.mxu0 0
  %3708 = vmatprep.subr.bf16.mxu0 %v3688
  %3709 = vmatpush1.bf16.msra.mxu0 %v3687
  %3710 = vmatprep.subr.bf16.mxu0 %v3686
  %3711 = vmatpush1.bf16.msra.mxu0 %v3685
  %3712 = vmatprep.subr.bf16.mxu0 %v3684
  %3713 = vmatpush1.bf16.msra.mxu0 %v3683
  %3714 = vmatprep.subr.bf16.mxu0 %v3682
  %3715 = vmatpush1.bf16.msra.mxu0 %v3681
  %3716 = vmatprep.subr.bf16.mxu0 0
  %3717 = vmatpush2.bf16.msra.mxu0 0
  %3718 = vmatprep.subr.bf16.mxu0 0
  %3719 = vmatpush2.bf16.msra.mxu0 0
  %3720 = vmatprep.subr.bf16.mxu0 0
  %3721 = vmatpush2.bf16.msra.mxu0 0
  %3722 = vmatprep.subr.bf16.mxu0 0
  %3723 = vmatpush2.bf16.msra.mxu0 0
  %3724 = vmatprep.subr.bf16.mxu0 0
  %3725 = vmatpush2.bf16.msra.mxu0 0
  %3726 = vmatprep.subr.bf16.mxu0 0
  %3727 = vmatpush2.bf16.msra.mxu0 0
  %3728 = vmatprep.subr.bf16.mxu0 0
  %3729 = vmatpush2.bf16.msra.mxu0 0
  %3730 = vmatprep.subr.bf16.mxu0 0
  %3731 = vmatpush2.bf16.msra.mxu0 0
  %3732 = vmatprep.mubr.bf16.mxu0 0
  %3733 = vmatmul.mubr.bf16.gmra.mxu0 %v3698
  %v3734 = vpop.f32.mrf.mxu0
  %v3735 = vadd.f32 0.0, %v3734
  %v3736 = vpop.f32.mrf.mxu0
  %v3737 = vadd.f32 0.0, %v3736
  %v3738 = vpop.f32.mrf.mxu0
  %v3739 = vpop.f32.mrf.mxu0
  %3740 = vdwg.mxu0
  %v3741 = vsel %vm306, %v3644, %v3646
  %v3742 = vsel %vm307, %v3645, %v3647
  %v3743 = vadd.f32 %v3741, %v3735
  %v3744 = vadd.f32 %v3742, %v3737
  %v3745 = vmul.f32 %v3743, %v310
  %v3746 = vmul.f32 %v3744, %v311
  %v3747 = vtanh.pop %v3745
  %v3748 = vtanh.pop %v3746
  %v3749 = vmul.f32 %v3747, 0.5
  %v3750 = vmul.f32 %v3748, 0.5
  %v3751 = vadd.f32 %v3749, 0.5
  %v3752 = vadd.f32 %v3750, 0.5
  %v3753 = vmul.f32 %v3751, %v3635
  %3755 = vrot.lane.b32.xlu0 %v3748, 64
  %v3756 = vpop.permute.xlu0 %3755
  %v3758 = vmul.f32 %v3751, %v3756
  %3760 = vrot.lane.b32.xlu0 %v3758, 64
  %v3761 = vpop.permute.xlu0 %3760
  %v3763 = vadd.f32 %v3753, %v3761
  %v3764 = vtanh.pop %v3763
  %3766 = vrot.lane.b32.xlu0 %v3764, 64
  %v3767 = vpop.permute.xlu0 %3766
  %v3769 = vmul.f32 %v3752, %v3767
  %3770 = vst.msk [vmem:[%s1463] sm:$0xff] %vm646, %v3769
  %3771 = vst.msk [vmem:[%s1465] sm:$0xff] %vm649, %v3769
  %v3772 = vld [vmem:[%s1469] sm:$0xff]
  %v3773 = vld [vmem:[%s1469 + $0x8] sm:$0xff]
  %v3774 = vld [vmem:[%s1474] sm:$0xff]
  %v3775 = vld [vmem:[%s1474 + $0x8] sm:$0xff]
  %v3776 = vpack.c.bf16 %v3769, %v3769
  %v3777 = vld [vmem:[%s7] sm:$0xff]
  %v3778 = vld [vmem:[%s7 + $0x8] sm:$0xff]
  %v3779 = vld [vmem:[%s7 + $0x10] sm:$0xff]
  %v3780 = vld [vmem:[%s7 + $0x18] sm:$0xff]
  %v3781 = vld [vmem:[%s7 + $0x20] sm:$0xff]
  %v3782 = vld [vmem:[%s7 + $0x28] sm:$0xff]
  %v3783 = vld [vmem:[%s7 + $0x30] sm:$0xff]
  %v3784 = vld [vmem:[%s7 + $0x38] sm:$0xff]
  %v3793 = vunpack.c.l.b16 %v3777
  %v3794 = vunpack.c.h.b16 %v3777
  %v3795 = vunpack.c.l.b16 %v3778
  %v3796 = vunpack.c.h.b16 %v3778
  %v3797 = vunpack.c.l.b16 %v3779
  %v3798 = vunpack.c.h.b16 %v3779
  %v3799 = vunpack.c.l.b16 %v3780
  %v3800 = vunpack.c.h.b16 %v3780
  %v3801 = vunpack.c.l.b16 %v3781
  %v3802 = vunpack.c.h.b16 %v3781
  %v3803 = vunpack.c.l.b16 %v3782
  %v3804 = vunpack.c.h.b16 %v3782
  %v3805 = vunpack.c.l.b16 %v3783
  %v3806 = vunpack.c.h.b16 %v3783
  %v3807 = vunpack.c.l.b16 %v3784
  %v3808 = vunpack.c.h.b16 %v3784
  %v3809 = vpack.c.b16 %v3795, %v3793
  %v3810 = vpack.c.b16 %v3796, %v3794
  %v3811 = vpack.c.b16 %v3799, %v3797
  %v3812 = vpack.c.b16 %v3800, %v3798
  %v3813 = vpack.c.b16 %v3803, %v3801
  %v3814 = vpack.c.b16 %v3804, %v3802
  %v3815 = vpack.c.b16 %v3807, %v3805
  %v3816 = vpack.c.b16 %v3808, %v3806
  %v3826 = vsel %vm572, %v3776, 0
  %3828 = vmatprep.subr.bf16.mxu0 0
  %3829 = vmatpush1.bf16.msra.mxu0 0
  %3830 = vmatprep.subr.bf16.mxu0 0
  %3831 = vmatpush1.bf16.msra.mxu0 0
  %3832 = vmatprep.subr.bf16.mxu0 0
  %3833 = vmatpush1.bf16.msra.mxu0 0
  %3834 = vmatprep.subr.bf16.mxu0 0
  %3835 = vmatpush1.bf16.msra.mxu0 0
  %3836 = vmatprep.subr.bf16.mxu0 %v3816
  %3837 = vmatpush1.bf16.msra.mxu0 %v3815
  %3838 = vmatprep.subr.bf16.mxu0 %v3814
  %3839 = vmatpush1.bf16.msra.mxu0 %v3813
  %3840 = vmatprep.subr.bf16.mxu0 %v3812
  %3841 = vmatpush1.bf16.msra.mxu0 %v3811
  %3842 = vmatprep.subr.bf16.mxu0 %v3810
  %3843 = vmatpush1.bf16.msra.mxu0 %v3809
  %3844 = vmatprep.subr.bf16.mxu0 0
  %3845 = vmatpush2.bf16.msra.mxu0 0
  %3846 = vmatprep.subr.bf16.mxu0 0
  %3847 = vmatpush2.bf16.msra.mxu0 0
  %3848 = vmatprep.subr.bf16.mxu0 0
  %3849 = vmatpush2.bf16.msra.mxu0 0
  %3850 = vmatprep.subr.bf16.mxu0 0
  %3851 = vmatpush2.bf16.msra.mxu0 0
  %3852 = vmatprep.subr.bf16.mxu0 0
  %3853 = vmatpush2.bf16.msra.mxu0 0
  %3854 = vmatprep.subr.bf16.mxu0 0
  %3855 = vmatpush2.bf16.msra.mxu0 0
  %3856 = vmatprep.subr.bf16.mxu0 0
  %3857 = vmatpush2.bf16.msra.mxu0 0
  %3858 = vmatprep.subr.bf16.mxu0 0
  %3859 = vmatpush2.bf16.msra.mxu0 0
  %3860 = vmatprep.mubr.bf16.mxu0 0
  %3861 = vmatmul.mubr.bf16.gmra.mxu0 %v3826
  %v3862 = vpop.f32.mrf.mxu0
  %v3863 = vadd.f32 0.0, %v3862
  %v3864 = vpop.f32.mrf.mxu0
  %v3865 = vadd.f32 0.0, %v3864
  %v3866 = vpop.f32.mrf.mxu0
  %v3867 = vpop.f32.mrf.mxu0
  %3868 = vdwg.mxu0
  %v3869 = vsel %vm306, %v3772, %v3774
  %v3870 = vsel %vm307, %v3773, %v3775
  %v3871 = vadd.f32 %v3869, %v3863
  %v3872 = vadd.f32 %v3870, %v3865
  %v3873 = vmul.f32 %v3871, %v310
  %v3874 = vmul.f32 %v3872, %v311
  %v3875 = vtanh.pop %v3873
  %v3876 = vtanh.pop %v3874
  %v3877 = vmul.f32 %v3875, 0.5
  %v3878 = vmul.f32 %v3876, 0.5
  %v3879 = vadd.f32 %v3877, 0.5
  %v3880 = vadd.f32 %v3878, 0.5
  %v3881 = vmul.f32 %v3879, %v3763
  %3883 = vrot.lane.b32.xlu0 %v3876, 64
  %v3884 = vpop.permute.xlu0 %3883
  %v3886 = vmul.f32 %v3879, %v3884
  %3888 = vrot.lane.b32.xlu0 %v3886, 64
  %v3889 = vpop.permute.xlu0 %3888
  %v3891 = vadd.f32 %v3881, %v3889
  %v3892 = vtanh.pop %v3891
  %3894 = vrot.lane.b32.xlu0 %v3892, 64
  %v3895 = vpop.permute.xlu0 %3894
  %v3897 = vmul.f32 %v3880, %v3895
  %3898 = vst.msk [vmem:[%s1599] sm:$0xff] %vm646, %v3897
  %3899 = vst.msk [vmem:[%s1601] sm:$0xff] %vm649, %v3897
  %v3900 = vld [vmem:[%s1474] sm:$0xff]
  %v3901 = vld [vmem:[%s1474 + $0x8] sm:$0xff]
  %v3902 = vld [vmem:[%s1469] sm:$0xff]
  %v3903 = vld [vmem:[%s1469 + $0x8] sm:$0xff]
  %v3904 = vpack.c.bf16 %v3897, %v3897
  %v3905 = vld [vmem:[%s7] sm:$0xff]
  %v3906 = vld [vmem:[%s7 + $0x8] sm:$0xff]
  %v3907 = vld [vmem:[%s7 + $0x10] sm:$0xff]
  %v3908 = vld [vmem:[%s7 + $0x18] sm:$0xff]
  %v3909 = vld [vmem:[%s7 + $0x20] sm:$0xff]
  %v3910 = vld [vmem:[%s7 + $0x28] sm:$0xff]
  %v3911 = vld [vmem:[%s7 + $0x30] sm:$0xff]
  %v3912 = vld [vmem:[%s7 + $0x38] sm:$0xff]
  %v3921 = vunpack.c.l.b16 %v3905
  %v3922 = vunpack.c.h.b16 %v3905
  %v3923 = vunpack.c.l.b16 %v3906
  %v3924 = vunpack.c.h.b16 %v3906
  %v3925 = vunpack.c.l.b16 %v3907
  %v3926 = vunpack.c.h.b16 %v3907
  %v3927 = vunpack.c.l.b16 %v3908
  %v3928 = vunpack.c.h.b16 %v3908
  %v3929 = vunpack.c.l.b16 %v3909
  %v3930 = vunpack.c.h.b16 %v3909
  %v3931 = vunpack.c.l.b16 %v3910
  %v3932 = vunpack.c.h.b16 %v3910
  %v3933 = vunpack.c.l.b16 %v3911
  %v3934 = vunpack.c.h.b16 %v3911
  %v3935 = vunpack.c.l.b16 %v3912
  %v3936 = vunpack.c.h.b16 %v3912
  %v3937 = vpack.c.b16 %v3923, %v3921
  %v3938 = vpack.c.b16 %v3924, %v3922
  %v3939 = vpack.c.b16 %v3927, %v3925
  %v3940 = vpack.c.b16 %v3928, %v3926
  %v3941 = vpack.c.b16 %v3931, %v3929
  %v3942 = vpack.c.b16 %v3932, %v3930
  %v3943 = vpack.c.b16 %v3935, %v3933
  %v3944 = vpack.c.b16 %v3936, %v3934
  %v3954 = vsel %vm572, %v3904, 0
  %3956 = vmatprep.subr.bf16.mxu0 0
  %3957 = vmatpush1.bf16.msra.mxu0 0
  %3958 = vmatprep.subr.bf16.mxu0 0
  %3959 = vmatpush1.bf16.msra.mxu0 0
  %3960 = vmatprep.subr.bf16.mxu0 0
  %3961 = vmatpush1.bf16.msra.mxu0 0
  %3962 = vmatprep.subr.bf16.mxu0 0
  %3963 = vmatpush1.bf16.msra.mxu0 0
  %3964 = vmatprep.subr.bf16.mxu0 %v3944
  %3965 = vmatpush1.bf16.msra.mxu0 %v3943
  %3966 = vmatprep.subr.bf16.mxu0 %v3942
  %3967 = vmatpush1.bf16.msra.mxu0 %v3941
  %3968 = vmatprep.subr.bf16.mxu0 %v3940
  %3969 = vmatpush1.bf16.msra.mxu0 %v3939
  %3970 = vmatprep.subr.bf16.mxu0 %v3938
  %3971 = vmatpush1.bf16.msra.mxu0 %v3937
  %3972 = vmatprep.subr.bf16.mxu0 0
  %3973 = vmatpush2.bf16.msra.mxu0 0
  %3974 = vmatprep.subr.bf16.mxu0 0
  %3975 = vmatpush2.bf16.msra.mxu0 0
  %3976 = vmatprep.subr.bf16.mxu0 0
  %3977 = vmatpush2.bf16.msra.mxu0 0
  %3978 = vmatprep.subr.bf16.mxu0 0
  %3979 = vmatpush2.bf16.msra.mxu0 0
  %3980 = vmatprep.subr.bf16.mxu0 0
  %3981 = vmatpush2.bf16.msra.mxu0 0
  %3982 = vmatprep.subr.bf16.mxu0 0
  %3983 = vmatpush2.bf16.msra.mxu0 0
  %3984 = vmatprep.subr.bf16.mxu0 0
  %3985 = vmatpush2.bf16.msra.mxu0 0
  %3986 = vmatprep.subr.bf16.mxu0 0
  %3987 = vmatpush2.bf16.msra.mxu0 0
  %3988 = vmatprep.mubr.bf16.mxu0 0
  %3989 = vmatmul.mubr.bf16.gmra.mxu0 %v3954
  %v3990 = vpop.f32.mrf.mxu0
  %v3991 = vadd.f32 0.0, %v3990
  %v3992 = vpop.f32.mrf.mxu0
  %v3993 = vadd.f32 0.0, %v3992
  %v3994 = vpop.f32.mrf.mxu0
  %v3995 = vpop.f32.mrf.mxu0
  %3996 = vdwg.mxu0
  %v3997 = vsel %vm306, %v3900, %v3902
  %v3998 = vsel %vm307, %v3901, %v3903
  %v3999 = vadd.f32 %v3997, %v3991
  %v4000 = vadd.f32 %v3998, %v3993
  %v4001 = vmul.f32 %v3999, %v310
  %v4002 = vmul.f32 %v4000, %v311
  %v4003 = vtanh.pop %v4001
  %v4004 = vtanh.pop %v4002
  %v4005 = vmul.f32 %v4003, 0.5
  %v4006 = vmul.f32 %v4004, 0.5
  %v4007 = vadd.f32 %v4005, 0.5
  %v4008 = vadd.f32 %v4006, 0.5
  %v4009 = vmul.f32 %v4007, %v3891
  %4011 = vrot.lane.b32.xlu0 %v4004, 64
  %v4012 = vpop.permute.xlu0 %4011
  %v4014 = vmul.f32 %v4007, %v4012
  %4016 = vrot.lane.b32.xlu0 %v4014, 64
  %v4017 = vpop.permute.xlu0 %4016
  %v4019 = vadd.f32 %v4009, %v4017
  %v4020 = vtanh.pop %v4019
  %4022 = vrot.lane.b32.xlu0 %v4020, 64
  %v4023 = vpop.permute.xlu0 %4022
  %v4025 = vmul.f32 %v4008, %v4023
  %4026 = vst.msk [vmem:[%s1601] sm:$0xff] %vm646, %v4025
  %4027 = vst.msk [vmem:[%s1599] sm:$0xff] %vm649, %v4025
  %v4028 = vld [vmem:[%s1338] sm:$0xff]
  %v4029 = vld [vmem:[%s1338 + $0x8] sm:$0xff]
  %v4030 = vld [vmem:[%s1333] sm:$0xff]
  %v4031 = vld [vmem:[%s1333 + $0x8] sm:$0xff]
  %v4032 = vpack.c.bf16 %v4025, %v4025
  %v4033 = vld [vmem:[%s7] sm:$0xff]
  %v4034 = vld [vmem:[%s7 + $0x8] sm:$0xff]
  %v4035 = vld [vmem:[%s7 + $0x10] sm:$0xff]
  %v4036 = vld [vmem:[%s7 + $0x18] sm:$0xff]
  %v4037 = vld [vmem:[%s7 + $0x20] sm:$0xff]
  %v4038 = vld [vmem:[%s7 + $0x28] sm:$0xff]
  %v4039 = vld [vmem:[%s7 + $0x30] sm:$0xff]
  %v4040 = vld [vmem:[%s7 + $0x38] sm:$0xff]
  %v4049 = vunpack.c.l.b16 %v4033
  %v4050 = vunpack.c.h.b16 %v4033
  %v4051 = vunpack.c.l.b16 %v4034
  %v4052 = vunpack.c.h.b16 %v4034
  %v4053 = vunpack.c.l.b16 %v4035
  %v4054 = vunpack.c.h.b16 %v4035
  %v4055 = vunpack.c.l.b16 %v4036
  %v4056 = vunpack.c.h.b16 %v4036
  %v4057 = vunpack.c.l.b16 %v4037
  %v4058 = vunpack.c.h.b16 %v4037
  %v4059 = vunpack.c.l.b16 %v4038
  %v4060 = vunpack.c.h.b16 %v4038
  %v4061 = vunpack.c.l.b16 %v4039
  %v4062 = vunpack.c.h.b16 %v4039
  %v4063 = vunpack.c.l.b16 %v4040
  %v4064 = vunpack.c.h.b16 %v4040
  %v4065 = vpack.c.b16 %v4051, %v4049
  %v4066 = vpack.c.b16 %v4052, %v4050
  %v4067 = vpack.c.b16 %v4055, %v4053
  %v4068 = vpack.c.b16 %v4056, %v4054
  %v4069 = vpack.c.b16 %v4059, %v4057
  %v4070 = vpack.c.b16 %v4060, %v4058
  %v4071 = vpack.c.b16 %v4063, %v4061
  %v4072 = vpack.c.b16 %v4064, %v4062
  %v4082 = vsel %vm572, %v4032, 0
  %4084 = vmatprep.subr.bf16.mxu0 0
  %4085 = vmatpush1.bf16.msra.mxu0 0
  %4086 = vmatprep.subr.bf16.mxu0 0
  %4087 = vmatpush1.bf16.msra.mxu0 0
  %4088 = vmatprep.subr.bf16.mxu0 0
  %4089 = vmatpush1.bf16.msra.mxu0 0
  %4090 = vmatprep.subr.bf16.mxu0 0
  %4091 = vmatpush1.bf16.msra.mxu0 0
  %4092 = vmatprep.subr.bf16.mxu0 %v4072
  %4093 = vmatpush1.bf16.msra.mxu0 %v4071
  %4094 = vmatprep.subr.bf16.mxu0 %v4070
  %4095 = vmatpush1.bf16.msra.mxu0 %v4069
  %4096 = vmatprep.subr.bf16.mxu0 %v4068
  %4097 = vmatpush1.bf16.msra.mxu0 %v4067
  %4098 = vmatprep.subr.bf16.mxu0 %v4066
  %4099 = vmatpush1.bf16.msra.mxu0 %v4065
  %4100 = vmatprep.subr.bf16.mxu0 0
  %4101 = vmatpush2.bf16.msra.mxu0 0
  %4102 = vmatprep.subr.bf16.mxu0 0
  %4103 = vmatpush2.bf16.msra.mxu0 0
  %4104 = vmatprep.subr.bf16.mxu0 0
  %4105 = vmatpush2.bf16.msra.mxu0 0
  %4106 = vmatprep.subr.bf16.mxu0 0
  %4107 = vmatpush2.bf16.msra.mxu0 0
  %4108 = vmatprep.subr.bf16.mxu0 0
  %4109 = vmatpush2.bf16.msra.mxu0 0
  %4110 = vmatprep.subr.bf16.mxu0 0
  %4111 = vmatpush2.bf16.msra.mxu0 0
  %4112 = vmatprep.subr.bf16.mxu0 0
  %4113 = vmatpush2.bf16.msra.mxu0 0
  %4114 = vmatprep.subr.bf16.mxu0 0
  %4115 = vmatpush2.bf16.msra.mxu0 0
  %4116 = vmatprep.mubr.bf16.mxu0 0
  %4117 = vmatmul.mubr.bf16.gmra.mxu0 %v4082
  %v4118 = vpop.f32.mrf.mxu0
  %v4119 = vadd.f32 0.0, %v4118
  %v4120 = vpop.f32.mrf.mxu0
  %v4121 = vadd.f32 0.0, %v4120
  %v4122 = vpop.f32.mrf.mxu0
  %v4123 = vpop.f32.mrf.mxu0
  %4124 = vdwg.mxu0
  %v4125 = vsel %vm306, %v4028, %v4030
  %v4126 = vsel %vm307, %v4029, %v4031
  %v4127 = vadd.f32 %v4125, %v4119
  %v4128 = vadd.f32 %v4126, %v4121
  %v4129 = vmul.f32 %v4127, %v310
  %v4130 = vmul.f32 %v4128, %v311
  %v4131 = vtanh.pop %v4129
  %v4132 = vtanh.pop %v4130
  %v4133 = vmul.f32 %v4131, 0.5
  %v4134 = vmul.f32 %v4132, 0.5
  %v4135 = vadd.f32 %v4133, 0.5
  %v4136 = vadd.f32 %v4134, 0.5
  %v4137 = vmul.f32 %v4135, %v4019
  %4139 = vrot.lane.b32.xlu0 %v4132, 64
  %v4140 = vpop.permute.xlu0 %4139
  %v4142 = vmul.f32 %v4135, %v4140
  %4144 = vrot.lane.b32.xlu0 %v4142, 64
  %v4145 = vpop.permute.xlu0 %4144
  %v4147 = vadd.f32 %v4137, %v4145
  %v4148 = vtanh.pop %v4147
  %4150 = vrot.lane.b32.xlu0 %v4148, 64
  %v4151 = vpop.permute.xlu0 %4150
  %v4153 = vmul.f32 %v4136, %v4151
  %4154 = vst.msk [vmem:[%s1465] sm:$0xff] %vm646, %v4153
  %4155 = vst.msk [vmem:[%s1463] sm:$0xff] %vm649, %v4153
  %v4156 = vld [vmem:[%s1202] sm:$0xff]
  %v4157 = vld [vmem:[%s1202 + $0x8] sm:$0xff]
  %v4158 = vld [vmem:[%s1197] sm:$0xff]
  %v4159 = vld [vmem:[%s1197 + $0x8] sm:$0xff]
  %v4160 = vpack.c.bf16 %v4153, %v4153
  %v4161 = vld [vmem:[%s7] sm:$0xff]
  %v4162 = vld [vmem:[%s7 + $0x8] sm:$0xff]
  %v4163 = vld [vmem:[%s7 + $0x10] sm:$0xff]
  %v4164 = vld [vmem:[%s7 + $0x18] sm:$0xff]
  %v4165 = vld [vmem:[%s7 + $0x20] sm:$0xff]
  %v4166 = vld [vmem:[%s7 + $0x28] sm:$0xff]
  %v4167 = vld [vmem:[%s7 + $0x30] sm:$0xff]
  %v4168 = vld [vmem:[%s7 + $0x38] sm:$0xff]
  %v4177 = vunpack.c.l.b16 %v4161
  %v4178 = vunpack.c.h.b16 %v4161
  %v4179 = vunpack.c.l.b16 %v4162
  %v4180 = vunpack.c.h.b16 %v4162
  %v4181 = vunpack.c.l.b16 %v4163
  %v4182 = vunpack.c.h.b16 %v4163
  %v4183 = vunpack.c.l.b16 %v4164
  %v4184 = vunpack.c.h.b16 %v4164
  %v4185 = vunpack.c.l.b16 %v4165
  %v4186 = vunpack.c.h.b16 %v4165
  %v4187 = vunpack.c.l.b16 %v4166
  %v4188 = vunpack.c.h.b16 %v4166
  %v4189 = vunpack.c.l.b16 %v4167
  %v4190 = vunpack.c.h.b16 %v4167
  %v4191 = vunpack.c.l.b16 %v4168
  %v4192 = vunpack.c.h.b16 %v4168
  %v4193 = vpack.c.b16 %v4179, %v4177
  %v4194 = vpack.c.b16 %v4180, %v4178
  %v4195 = vpack.c.b16 %v4183, %v4181
  %v4196 = vpack.c.b16 %v4184, %v4182
  %v4197 = vpack.c.b16 %v4187, %v4185
  %v4198 = vpack.c.b16 %v4188, %v4186
  %v4199 = vpack.c.b16 %v4191, %v4189
  %v4200 = vpack.c.b16 %v4192, %v4190
  %v4210 = vsel %vm572, %v4160, 0
  %4212 = vmatprep.subr.bf16.mxu0 0
  %4213 = vmatpush1.bf16.msra.mxu0 0
  %4214 = vmatprep.subr.bf16.mxu0 0
  %4215 = vmatpush1.bf16.msra.mxu0 0
  %4216 = vmatprep.subr.bf16.mxu0 0
  %4217 = vmatpush1.bf16.msra.mxu0 0
  %4218 = vmatprep.subr.bf16.mxu0 0
  %4219 = vmatpush1.bf16.msra.mxu0 0
  %4220 = vmatprep.subr.bf16.mxu0 %v4200
  %4221 = vmatpush1.bf16.msra.mxu0 %v4199
  %4222 = vmatprep.subr.bf16.mxu0 %v4198
  %4223 = vmatpush1.bf16.msra.mxu0 %v4197
  %4224 = vmatprep.subr.bf16.mxu0 %v4196
  %4225 = vmatpush1.bf16.msra.mxu0 %v4195
  %4226 = vmatprep.subr.bf16.mxu0 %v4194
  %4227 = vmatpush1.bf16.msra.mxu0 %v4193
  %4228 = vmatprep.subr.bf16.mxu0 0
  %4229 = vmatpush2.bf16.msra.mxu0 0
  %4230 = vmatprep.subr.bf16.mxu0 0
  %4231 = vmatpush2.bf16.msra.mxu0 0
  %4232 = vmatprep.subr.bf16.mxu0 0
  %4233 = vmatpush2.bf16.msra.mxu0 0
  %4234 = vmatprep.subr.bf16.mxu0 0
  %4235 = vmatpush2.bf16.msra.mxu0 0
  %4236 = vmatprep.subr.bf16.mxu0 0
  %4237 = vmatpush2.bf16.msra.mxu0 0
  %4238 = vmatprep.subr.bf16.mxu0 0
  %4239 = vmatpush2.bf16.msra.mxu0 0
  %4240 = vmatprep.subr.bf16.mxu0 0
  %4241 = vmatpush2.bf16.msra.mxu0 0
  %4242 = vmatprep.subr.bf16.mxu0 0
  %4243 = vmatpush2.bf16.msra.mxu0 0
  %4244 = vmatprep.mubr.bf16.mxu0 0
  %4245 = vmatmul.mubr.bf16.gmra.mxu0 %v4210
  %v4246 = vpop.f32.mrf.mxu0
  %v4247 = vadd.f32 0.0, %v4246
  %v4248 = vpop.f32.mrf.mxu0
  %v4249 = vadd.f32 0.0, %v4248
  %v4250 = vpop.f32.mrf.mxu0
  %v4251 = vpop.f32.mrf.mxu0
  %4252 = vdwg.mxu0
  %v4253 = vsel %vm306, %v4156, %v4158
  %v4254 = vsel %vm307, %v4157, %v4159
  %v4255 = vadd.f32 %v4253, %v4247
  %v4256 = vadd.f32 %v4254, %v4249
  %v4257 = vmul.f32 %v4255, %v310
  %v4258 = vmul.f32 %v4256, %v311
  %v4259 = vtanh.pop %v4257
  %v4260 = vtanh.pop %v4258
  %v4261 = vmul.f32 %v4259, 0.5
  %v4262 = vmul.f32 %v4260, 0.5
  %v4263 = vadd.f32 %v4261, 0.5
  %v4264 = vadd.f32 %v4262, 0.5
  %v4265 = vmul.f32 %v4263, %v4147
  %4267 = vrot.lane.b32.xlu0 %v4260, 64
  %v4268 = vpop.permute.xlu0 %4267
  %v4270 = vmul.f32 %v4263, %v4268
  %4272 = vrot.lane.b32.xlu0 %v4270, 64
  %v4273 = vpop.permute.xlu0 %4272
  %v4275 = vadd.f32 %v4265, %v4273
  %v4276 = vtanh.pop %v4275
  %4278 = vrot.lane.b32.xlu0 %v4276, 64
  %v4279 = vpop.permute.xlu0 %4278
  %v4281 = vmul.f32 %v4264, %v4279
  %4282 = vst.msk [vmem:[%s1329] sm:$0xff] %vm646, %v4281
  %4283 = vst.msk [vmem:[%s1327] sm:$0xff] %vm649, %v4281
  %v4284 = vld [vmem:[%s1066] sm:$0xff]
  %v4285 = vld [vmem:[%s1066 + $0x8] sm:$0xff]
  %v4286 = vld [vmem:[%s1061] sm:$0xff]
  %v4287 = vld [vmem:[%s1061 + $0x8] sm:$0xff]
  %v4288 = vpack.c.bf16 %v4281, %v4281
  %v4289 = vld [vmem:[%s7] sm:$0xff]
  %v4290 = vld [vmem:[%s7 + $0x8] sm:$0xff]
  %v4291 = vld [vmem:[%s7 + $0x10] sm:$0xff]
  %v4292 = vld [vmem:[%s7 + $0x18] sm:$0xff]
  %v4293 = vld [vmem:[%s7 + $0x20] sm:$0xff]
  %v4294 = vld [vmem:[%s7 + $0x28] sm:$0xff]
  %v4295 = vld [vmem:[%s7 + $0x30] sm:$0xff]
  %v4296 = vld [vmem:[%s7 + $0x38] sm:$0xff]
  %v4305 = vunpack.c.l.b16 %v4289
  %v4306 = vunpack.c.h.b16 %v4289
  %v4307 = vunpack.c.l.b16 %v4290
  %v4308 = vunpack.c.h.b16 %v4290
  %v4309 = vunpack.c.l.b16 %v4291
  %v4310 = vunpack.c.h.b16 %v4291
  %v4311 = vunpack.c.l.b16 %v4292
  %v4312 = vunpack.c.h.b16 %v4292
  %v4313 = vunpack.c.l.b16 %v4293
  %v4314 = vunpack.c.h.b16 %v4293
  %v4315 = vunpack.c.l.b16 %v4294
  %v4316 = vunpack.c.h.b16 %v4294
  %v4317 = vunpack.c.l.b16 %v4295
  %v4318 = vunpack.c.h.b16 %v4295
  %v4319 = vunpack.c.l.b16 %v4296
  %v4320 = vunpack.c.h.b16 %v4296
  %v4321 = vpack.c.b16 %v4307, %v4305
  %v4322 = vpack.c.b16 %v4308, %v4306
  %v4323 = vpack.c.b16 %v4311, %v4309
  %v4324 = vpack.c.b16 %v4312, %v4310
  %v4325 = vpack.c.b16 %v4315, %v4313
  %v4326 = vpack.c.b16 %v4316, %v4314
  %v4327 = vpack.c.b16 %v4319, %v4317
  %v4328 = vpack.c.b16 %v4320, %v4318
  %v4338 = vsel %vm572, %v4288, 0
  %4340 = vmatprep.subr.bf16.mxu0 0
  %4341 = vmatpush1.bf16.msra.mxu0 0
  %4342 = vmatprep.subr.bf16.mxu0 0
  %4343 = vmatpush1.bf16.msra.mxu0 0
  %4344 = vmatprep.subr.bf16.mxu0 0
  %4345 = vmatpush1.bf16.msra.mxu0 0
  %4346 = vmatprep.subr.bf16.mxu0 0
  %4347 = vmatpush1.bf16.msra.mxu0 0
  %4348 = vmatprep.subr.bf16.mxu0 %v4328
  %4349 = vmatpush1.bf16.msra.mxu0 %v4327
  %4350 = vmatprep.subr.bf16.mxu0 %v4326
  %4351 = vmatpush1.bf16.msra.mxu0 %v4325
  %4352 = vmatprep.subr.bf16.mxu0 %v4324
  %4353 = vmatpush1.bf16.msra.mxu0 %v4323
  %4354 = vmatprep.subr.bf16.mxu0 %v4322
  %4355 = vmatpush1.bf16.msra.mxu0 %v4321
  %4356 = vmatprep.subr.bf16.mxu0 0
  %4357 = vmatpush2.bf16.msra.mxu0 0
  %4358 = vmatprep.subr.bf16.mxu0 0
  %4359 = vmatpush2.bf16.msra.mxu0 0
  %4360 = vmatprep.subr.bf16.mxu0 0
  %4361 = vmatpush2.bf16.msra.mxu0 0
  %4362 = vmatprep.subr.bf16.mxu0 0
  %4363 = vmatpush2.bf16.msra.mxu0 0
  %4364 = vmatprep.subr.bf16.mxu0 0
  %4365 = vmatpush2.bf16.msra.mxu0 0
  %4366 = vmatprep.subr.bf16.mxu0 0
  %4367 = vmatpush2.bf16.msra.mxu0 0
  %4368 = vmatprep.subr.bf16.mxu0 0
  %4369 = vmatpush2.bf16.msra.mxu0 0
  %4370 = vmatprep.subr.bf16.mxu0 0
  %4371 = vmatpush2.bf16.msra.mxu0 0
  %4372 = vmatprep.mubr.bf16.mxu0 0
  %4373 = vmatmul.mubr.bf16.gmra.mxu0 %v4338
  %v4374 = vpop.f32.mrf.mxu0
  %v4375 = vadd.f32 0.0, %v4374
  %v4376 = vpop.f32.mrf.mxu0
  %v4377 = vadd.f32 0.0, %v4376
  %v4378 = vpop.f32.mrf.mxu0
  %v4379 = vpop.f32.mrf.mxu0
  %4380 = vdwg.mxu0
  %v4381 = vsel %vm306, %v4284, %v4286
  %v4382 = vsel %vm307, %v4285, %v4287
  %v4383 = vadd.f32 %v4381, %v4375
  %v4384 = vadd.f32 %v4382, %v4377
  %v4385 = vmul.f32 %v4383, %v310
  %v4386 = vmul.f32 %v4384, %v311
  %v4387 = vtanh.pop %v4385
  %v4388 = vtanh.pop %v4386
  %v4389 = vmul.f32 %v4387, 0.5
  %v4390 = vmul.f32 %v4388, 0.5
  %v4391 = vadd.f32 %v4389, 0.5
  %v4392 = vadd.f32 %v4390, 0.5
  %v4393 = vmul.f32 %v4391, %v4275
  %4395 = vrot.lane.b32.xlu0 %v4388, 64
  %v4396 = vpop.permute.xlu0 %4395
  %v4398 = vmul.f32 %v4391, %v4396
  %4400 = vrot.lane.b32.xlu0 %v4398, 64
  %v4401 = vpop.permute.xlu0 %4400
  %v4403 = vadd.f32 %v4393, %v4401
  %v4404 = vtanh.pop %v4403
  %4406 = vrot.lane.b32.xlu0 %v4404, 64
  %v4407 = vpop.permute.xlu0 %4406
  %v4409 = vmul.f32 %v4392, %v4407
  %4410 = vst.msk [vmem:[%s1193] sm:$0xff] %vm646, %v4409
  %4411 = vst.msk [vmem:[%s1191] sm:$0xff] %vm649, %v4409
  %v4412 = vld [vmem:[%s930] sm:$0xff]
  %v4413 = vld [vmem:[%s930 + $0x8] sm:$0xff]
  %v4414 = vld [vmem:[%s925] sm:$0xff]
  %v4415 = vld [vmem:[%s925 + $0x8] sm:$0xff]
  %v4416 = vpack.c.bf16 %v4409, %v4409
  %v4417 = vld [vmem:[%s7] sm:$0xff]
  %v4418 = vld [vmem:[%s7 + $0x8] sm:$0xff]
  %v4419 = vld [vmem:[%s7 + $0x10] sm:$0xff]
  %v4420 = vld [vmem:[%s7 + $0x18] sm:$0xff]
  %v4421 = vld [vmem:[%s7 + $0x20] sm:$0xff]
  %v4422 = vld [vmem:[%s7 + $0x28] sm:$0xff]
  %v4423 = vld [vmem:[%s7 + $0x30] sm:$0xff]
  %v4424 = vld [vmem:[%s7 + $0x38] sm:$0xff]
  %v4433 = vunpack.c.l.b16 %v4417
  %v4434 = vunpack.c.h.b16 %v4417
  %v4435 = vunpack.c.l.b16 %v4418
  %v4436 = vunpack.c.h.b16 %v4418
  %v4437 = vunpack.c.l.b16 %v4419
  %v4438 = vunpack.c.h.b16 %v4419
  %v4439 = vunpack.c.l.b16 %v4420
  %v4440 = vunpack.c.h.b16 %v4420
  %v4441 = vunpack.c.l.b16 %v4421
  %v4442 = vunpack.c.h.b16 %v4421
  %v4443 = vunpack.c.l.b16 %v4422
  %v4444 = vunpack.c.h.b16 %v4422
  %v4445 = vunpack.c.l.b16 %v4423
  %v4446 = vunpack.c.h.b16 %v4423
  %v4447 = vunpack.c.l.b16 %v4424
  %v4448 = vunpack.c.h.b16 %v4424
  %v4449 = vpack.c.b16 %v4435, %v4433
  %v4450 = vpack.c.b16 %v4436, %v4434
  %v4451 = vpack.c.b16 %v4439, %v4437
  %v4452 = vpack.c.b16 %v4440, %v4438
  %v4453 = vpack.c.b16 %v4443, %v4441
  %v4454 = vpack.c.b16 %v4444, %v4442
  %v4455 = vpack.c.b16 %v4447, %v4445
  %v4456 = vpack.c.b16 %v4448, %v4446
  %v4466 = vsel %vm572, %v4416, 0
  %4468 = vmatprep.subr.bf16.mxu0 0
  %4469 = vmatpush1.bf16.msra.mxu0 0
  %4470 = vmatprep.subr.bf16.mxu0 0
  %4471 = vmatpush1.bf16.msra.mxu0 0
  %4472 = vmatprep.subr.bf16.mxu0 0
  %4473 = vmatpush1.bf16.msra.mxu0 0
  %4474 = vmatprep.subr.bf16.mxu0 0
  %4475 = vmatpush1.bf16.msra.mxu0 0
  %4476 = vmatprep.subr.bf16.mxu0 %v4456
  %4477 = vmatpush1.bf16.msra.mxu0 %v4455
  %4478 = vmatprep.subr.bf16.mxu0 %v4454
  %4479 = vmatpush1.bf16.msra.mxu0 %v4453
  %4480 = vmatprep.subr.bf16.mxu0 %v4452
  %4481 = vmatpush1.bf16.msra.mxu0 %v4451
  %4482 = vmatprep.subr.bf16.mxu0 %v4450
  %4483 = vmatpush1.bf16.msra.mxu0 %v4449
  %4484 = vmatprep.subr.bf16.mxu0 0
  %4485 = vmatpush2.bf16.msra.mxu0 0
  %4486 = vmatprep.subr.bf16.mxu0 0
  %4487 = vmatpush2.bf16.msra.mxu0 0
  %4488 = vmatprep.subr.bf16.mxu0 0
  %4489 = vmatpush2.bf16.msra.mxu0 0
  %4490 = vmatprep.subr.bf16.mxu0 0
  %4491 = vmatpush2.bf16.msra.mxu0 0
  %4492 = vmatprep.subr.bf16.mxu0 0
  %4493 = vmatpush2.bf16.msra.mxu0 0
  %4494 = vmatprep.subr.bf16.mxu0 0
  %4495 = vmatpush2.bf16.msra.mxu0 0
  %4496 = vmatprep.subr.bf16.mxu0 0
  %4497 = vmatpush2.bf16.msra.mxu0 0
  %4498 = vmatprep.subr.bf16.mxu0 0
  %4499 = vmatpush2.bf16.msra.mxu0 0
  %4500 = vmatprep.mubr.bf16.mxu0 0
  %4501 = vmatmul.mubr.bf16.gmra.mxu0 %v4466
  %v4502 = vpop.f32.mrf.mxu0
  %v4503 = vadd.f32 0.0, %v4502
  %v4504 = vpop.f32.mrf.mxu0
  %v4505 = vadd.f32 0.0, %v4504
  %v4506 = vpop.f32.mrf.mxu0
  %v4507 = vpop.f32.mrf.mxu0
  %4508 = vdwg.mxu0
  %v4509 = vsel %vm306, %v4412, %v4414
  %v4510 = vsel %vm307, %v4413, %v4415
  %v4511 = vadd.f32 %v4509, %v4503
  %v4512 = vadd.f32 %v4510, %v4505
  %v4513 = vmul.f32 %v4511, %v310
  %v4514 = vmul.f32 %v4512, %v311
  %v4515 = vtanh.pop %v4513
  %v4516 = vtanh.pop %v4514
  %v4517 = vmul.f32 %v4515, 0.5
  %v4518 = vmul.f32 %v4516, 0.5
  %v4519 = vadd.f32 %v4517, 0.5
  %v4520 = vadd.f32 %v4518, 0.5
  %v4521 = vmul.f32 %v4519, %v4403
  %4523 = vrot.lane.b32.xlu0 %v4516, 64
  %v4524 = vpop.permute.xlu0 %4523
  %v4526 = vmul.f32 %v4519, %v4524
  %4528 = vrot.lane.b32.xlu0 %v4526, 64
  %v4529 = vpop.permute.xlu0 %4528
  %v4531 = vadd.f32 %v4521, %v4529
  %v4532 = vtanh.pop %v4531
  %4534 = vrot.lane.b32.xlu0 %v4532, 64
  %v4535 = vpop.permute.xlu0 %4534
  %v4537 = vmul.f32 %v4520, %v4535
  %4538 = vst.msk [vmem:[%s1057] sm:$0xff] %vm646, %v4537
  %4539 = vst.msk [vmem:[%s1055] sm:$0xff] %vm649, %v4537
  %v4540 = vld [vmem:[%s794] sm:$0xff]
  %v4541 = vld [vmem:[%s794 + $0x8] sm:$0xff]
  %v4542 = vld [vmem:[%s789] sm:$0xff]
  %v4543 = vld [vmem:[%s789 + $0x8] sm:$0xff]
  %v4544 = vpack.c.bf16 %v4537, %v4537
  %v4545 = vld [vmem:[%s7] sm:$0xff]
  %v4546 = vld [vmem:[%s7 + $0x8] sm:$0xff]
  %v4547 = vld [vmem:[%s7 + $0x10] sm:$0xff]
  %v4548 = vld [vmem:[%s7 + $0x18] sm:$0xff]
  %v4549 = vld [vmem:[%s7 + $0x20] sm:$0xff]
  %v4550 = vld [vmem:[%s7 + $0x28] sm:$0xff]
  %v4551 = vld [vmem:[%s7 + $0x30] sm:$0xff]
  %v4552 = vld [vmem:[%s7 + $0x38] sm:$0xff]
  %v4561 = vunpack.c.l.b16 %v4545
  %v4562 = vunpack.c.h.b16 %v4545
  %v4563 = vunpack.c.l.b16 %v4546
  %v4564 = vunpack.c.h.b16 %v4546
  %v4565 = vunpack.c.l.b16 %v4547
  %v4566 = vunpack.c.h.b16 %v4547
  %v4567 = vunpack.c.l.b16 %v4548
  %v4568 = vunpack.c.h.b16 %v4548
  %v4569 = vunpack.c.l.b16 %v4549
  %v4570 = vunpack.c.h.b16 %v4549
  %v4571 = vunpack.c.l.b16 %v4550
  %v4572 = vunpack.c.h.b16 %v4550
  %v4573 = vunpack.c.l.b16 %v4551
  %v4574 = vunpack.c.h.b16 %v4551
  %v4575 = vunpack.c.l.b16 %v4552
  %v4576 = vunpack.c.h.b16 %v4552
  %v4577 = vpack.c.b16 %v4563, %v4561
  %v4578 = vpack.c.b16 %v4564, %v4562
  %v4579 = vpack.c.b16 %v4567, %v4565
  %v4580 = vpack.c.b16 %v4568, %v4566
  %v4581 = vpack.c.b16 %v4571, %v4569
  %v4582 = vpack.c.b16 %v4572, %v4570
  %v4583 = vpack.c.b16 %v4575, %v4573
  %v4584 = vpack.c.b16 %v4576, %v4574
  %v4594 = vsel %vm572, %v4544, 0
  %4596 = vmatprep.subr.bf16.mxu0 0
  %4597 = vmatpush1.bf16.msra.mxu0 0
  %4598 = vmatprep.subr.bf16.mxu0 0
  %4599 = vmatpush1.bf16.msra.mxu0 0
  %4600 = vmatprep.subr.bf16.mxu0 0
  %4601 = vmatpush1.bf16.msra.mxu0 0
  %4602 = vmatprep.subr.bf16.mxu0 0
  %4603 = vmatpush1.bf16.msra.mxu0 0
  %4604 = vmatprep.subr.bf16.mxu0 %v4584
  %4605 = vmatpush1.bf16.msra.mxu0 %v4583
  %4606 = vmatprep.subr.bf16.mxu0 %v4582
  %4607 = vmatpush1.bf16.msra.mxu0 %v4581
  %4608 = vmatprep.subr.bf16.mxu0 %v4580
  %4609 = vmatpush1.bf16.msra.mxu0 %v4579
  %4610 = vmatprep.subr.bf16.mxu0 %v4578
  %4611 = vmatpush1.bf16.msra.mxu0 %v4577
  %4612 = vmatprep.subr.bf16.mxu0 0
  %4613 = vmatpush2.bf16.msra.mxu0 0
  %4614 = vmatprep.subr.bf16.mxu0 0
  %4615 = vmatpush2.bf16.msra.mxu0 0
  %4616 = vmatprep.subr.bf16.mxu0 0
  %4617 = vmatpush2.bf16.msra.mxu0 0
  %4618 = vmatprep.subr.bf16.mxu0 0
  %4619 = vmatpush2.bf16.msra.mxu0 0
  %4620 = vmatprep.subr.bf16.mxu0 0
  %4621 = vmatpush2.bf16.msra.mxu0 0
  %4622 = vmatprep.subr.bf16.mxu0 0
  %4623 = vmatpush2.bf16.msra.mxu0 0
  %4624 = vmatprep.subr.bf16.mxu0 0
  %4625 = vmatpush2.bf16.msra.mxu0 0
  %4626 = vmatprep.subr.bf16.mxu0 0
  %4627 = vmatpush2.bf16.msra.mxu0 0
  %4628 = vmatprep.mubr.bf16.mxu0 0
  %4629 = vmatmul.mubr.bf16.gmra.mxu0 %v4594
  %v4630 = vpop.f32.mrf.mxu0
  %v4631 = vadd.f32 0.0, %v4630
  %v4632 = vpop.f32.mrf.mxu0
  %v4633 = vadd.f32 0.0, %v4632
  %v4634 = vpop.f32.mrf.mxu0
  %v4635 = vpop.f32.mrf.mxu0
  %4636 = vdwg.mxu0
  %v4637 = vsel %vm306, %v4540, %v4542
  %v4638 = vsel %vm307, %v4541, %v4543
  %v4639 = vadd.f32 %v4637, %v4631
  %v4640 = vadd.f32 %v4638, %v4633
  %v4641 = vmul.f32 %v4639, %v310
  %v4642 = vmul.f32 %v4640, %v311
  %v4643 = vtanh.pop %v4641
  %v4644 = vtanh.pop %v4642
  %v4645 = vmul.f32 %v4643, 0.5
  %v4646 = vmul.f32 %v4644, 0.5
  %v4647 = vadd.f32 %v4645, 0.5
  %v4648 = vadd.f32 %v4646, 0.5
  %v4649 = vmul.f32 %v4647, %v4531
  %4651 = vrot.lane.b32.xlu0 %v4644, 64
  %v4652 = vpop.permute.xlu0 %4651
  %v4654 = vmul.f32 %v4647, %v4652
  %4656 = vrot.lane.b32.xlu0 %v4654, 64
  %v4657 = vpop.permute.xlu0 %4656
  %v4659 = vadd.f32 %v4649, %v4657
  %v4660 = vtanh.pop %v4659
  %4662 = vrot.lane.b32.xlu0 %v4660, 64
  %v4663 = vpop.permute.xlu0 %4662
  %v4665 = vmul.f32 %v4648, %v4663
  %4666 = vst.msk [vmem:[%s921] sm:$0xff] %vm646, %v4665
  %4667 = vst.msk [vmem:[%s919] sm:$0xff] %vm649, %v4665
  %v4668 = vld [vmem:[%s658] sm:$0xff]
  %v4669 = vld [vmem:[%s658 + $0x8] sm:$0xff]
  %v4670 = vld [vmem:[%s653] sm:$0xff]
  %v4671 = vld [vmem:[%s653 + $0x8] sm:$0xff]
  %v4672 = vpack.c.bf16 %v4665, %v4665
  %v4673 = vld [vmem:[%s7] sm:$0xff]
  %v4674 = vld [vmem:[%s7 + $0x8] sm:$0xff]
  %v4675 = vld [vmem:[%s7 + $0x10] sm:$0xff]
  %v4676 = vld [vmem:[%s7 + $0x18] sm:$0xff]
  %v4677 = vld [vmem:[%s7 + $0x20] sm:$0xff]
  %v4678 = vld [vmem:[%s7 + $0x28] sm:$0xff]
  %v4679 = vld [vmem:[%s7 + $0x30] sm:$0xff]
  %v4680 = vld [vmem:[%s7 + $0x38] sm:$0xff]
  %v4689 = vunpack.c.l.b16 %v4673
  %v4690 = vunpack.c.h.b16 %v4673
  %v4691 = vunpack.c.l.b16 %v4674
  %v4692 = vunpack.c.h.b16 %v4674
  %v4693 = vunpack.c.l.b16 %v4675
  %v4694 = vunpack.c.h.b16 %v4675
  %v4695 = vunpack.c.l.b16 %v4676
  %v4696 = vunpack.c.h.b16 %v4676
  %v4697 = vunpack.c.l.b16 %v4677
  %v4698 = vunpack.c.h.b16 %v4677
  %v4699 = vunpack.c.l.b16 %v4678
  %v4700 = vunpack.c.h.b16 %v4678
  %v4701 = vunpack.c.l.b16 %v4679
  %v4702 = vunpack.c.h.b16 %v4679
  %v4703 = vunpack.c.l.b16 %v4680
  %v4704 = vunpack.c.h.b16 %v4680
  %v4705 = vpack.c.b16 %v4691, %v4689
  %v4706 = vpack.c.b16 %v4692, %v4690
  %v4707 = vpack.c.b16 %v4695, %v4693
  %v4708 = vpack.c.b16 %v4696, %v4694
  %v4709 = vpack.c.b16 %v4699, %v4697
  %v4710 = vpack.c.b16 %v4700, %v4698
  %v4711 = vpack.c.b16 %v4703, %v4701
  %v4712 = vpack.c.b16 %v4704, %v4702
  %v4722 = vsel %vm572, %v4672, 0
  %4724 = vmatprep.subr.bf16.mxu0 0
  %4725 = vmatpush1.bf16.msra.mxu0 0
  %4726 = vmatprep.subr.bf16.mxu0 0
  %4727 = vmatpush1.bf16.msra.mxu0 0
  %4728 = vmatprep.subr.bf16.mxu0 0
  %4729 = vmatpush1.bf16.msra.mxu0 0
  %4730 = vmatprep.subr.bf16.mxu0 0
  %4731 = vmatpush1.bf16.msra.mxu0 0
  %4732 = vmatprep.subr.bf16.mxu0 %v4712
  %4733 = vmatpush1.bf16.msra.mxu0 %v4711
  %4734 = vmatprep.subr.bf16.mxu0 %v4710
  %4735 = vmatpush1.bf16.msra.mxu0 %v4709
  %4736 = vmatprep.subr.bf16.mxu0 %v4708
  %4737 = vmatpush1.bf16.msra.mxu0 %v4707
  %4738 = vmatprep.subr.bf16.mxu0 %v4706
  %4739 = vmatpush1.bf16.msra.mxu0 %v4705
  %4740 = vmatprep.subr.bf16.mxu0 0
  %4741 = vmatpush2.bf16.msra.mxu0 0
  %4742 = vmatprep.subr.bf16.mxu0 0
  %4743 = vmatpush2.bf16.msra.mxu0 0
  %4744 = vmatprep.subr.bf16.mxu0 0
  %4745 = vmatpush2.bf16.msra.mxu0 0
  %4746 = vmatprep.subr.bf16.mxu0 0
  %4747 = vmatpush2.bf16.msra.mxu0 0
  %4748 = vmatprep.subr.bf16.mxu0 0
  %4749 = vmatpush2.bf16.msra.mxu0 0
  %4750 = vmatprep.subr.bf16.mxu0 0
  %4751 = vmatpush2.bf16.msra.mxu0 0
  %4752 = vmatprep.subr.bf16.mxu0 0
  %4753 = vmatpush2.bf16.msra.mxu0 0
  %4754 = vmatprep.subr.bf16.mxu0 0
  %4755 = vmatpush2.bf16.msra.mxu0 0
  %4756 = vmatprep.mubr.bf16.mxu0 0
  %4757 = vmatmul.mubr.bf16.gmra.mxu0 %v4722
  %v4758 = vpop.f32.mrf.mxu0
  %v4759 = vadd.f32 0.0, %v4758
  %v4760 = vpop.f32.mrf.mxu0
  %v4761 = vadd.f32 0.0, %v4760
  %v4762 = vpop.f32.mrf.mxu0
  %v4763 = vpop.f32.mrf.mxu0
  %4764 = vdwg.mxu0
  %v4765 = vsel %vm306, %v4668, %v4670
  %v4766 = vsel %vm307, %v4669, %v4671
  %v4767 = vadd.f32 %v4765, %v4759
  %v4768 = vadd.f32 %v4766, %v4761
  %v4769 = vmul.f32 %v4767, %v310
  %v4770 = vmul.f32 %v4768, %v311
  %v4771 = vtanh.pop %v4769
  %v4772 = vtanh.pop %v4770
  %v4773 = vmul.f32 %v4771, 0.5
  %v4774 = vmul.f32 %v4772, 0.5
  %v4775 = vadd.f32 %v4773, 0.5
  %v4776 = vadd.f32 %v4774, 0.5
  %v4777 = vmul.f32 %v4775, %v4659
  %4779 = vrot.lane.b32.xlu0 %v4772, 64
  %v4780 = vpop.permute.xlu0 %4779
  %v4782 = vmul.f32 %v4775, %v4780
  %4784 = vrot.lane.b32.xlu0 %v4782, 64
  %v4785 = vpop.permute.xlu0 %4784
  %v4787 = vadd.f32 %v4777, %v4785
  %v4788 = vtanh.pop %v4787
  %4790 = vrot.lane.b32.xlu0 %v4788, 64
  %v4791 = vpop.permute.xlu0 %4790
  %v4793 = vmul.f32 %v4776, %v4791
  %4794 = vst.msk [vmem:[%s785] sm:$0xff] %vm646, %v4793
  %4795 = vst.msk [vmem:[%s783] sm:$0xff] %vm649, %v4793
  %v4796 = vld [vmem:[%s521] sm:$0xff]
  %v4797 = vld [vmem:[%s521 + $0x8] sm:$0xff]
  %v4798 = vld [vmem:[%s516] sm:$0xff]
  %v4799 = vld [vmem:[%s516 + $0x8] sm:$0xff]
  %v4800 = vpack.c.bf16 %v4793, %v4793
  %v4801 = vld [vmem:[%s7] sm:$0xff]
  %v4802 = vld [vmem:[%s7 + $0x8] sm:$0xff]
  %v4803 = vld [vmem:[%s7 + $0x10] sm:$0xff]
  %v4804 = vld [vmem:[%s7 + $0x18] sm:$0xff]
  %v4805 = vld [vmem:[%s7 + $0x20] sm:$0xff]
  %v4806 = vld [vmem:[%s7 + $0x28] sm:$0xff]
  %v4807 = vld [vmem:[%s7 + $0x30] sm:$0xff]
  %v4808 = vld [vmem:[%s7 + $0x38] sm:$0xff]
  %v4817 = vunpack.c.l.b16 %v4801
  %v4818 = vunpack.c.h.b16 %v4801
  %v4819 = vunpack.c.l.b16 %v4802
  %v4820 = vunpack.c.h.b16 %v4802
  %v4821 = vunpack.c.l.b16 %v4803
  %v4822 = vunpack.c.h.b16 %v4803
  %v4823 = vunpack.c.l.b16 %v4804
  %v4824 = vunpack.c.h.b16 %v4804
  %v4825 = vunpack.c.l.b16 %v4805
  %v4826 = vunpack.c.h.b16 %v4805
  %v4827 = vunpack.c.l.b16 %v4806
  %v4828 = vunpack.c.h.b16 %v4806
  %v4829 = vunpack.c.l.b16 %v4807
  %v4830 = vunpack.c.h.b16 %v4807
  %v4831 = vunpack.c.l.b16 %v4808
  %v4832 = vunpack.c.h.b16 %v4808
  %v4833 = vpack.c.b16 %v4819, %v4817
  %v4834 = vpack.c.b16 %v4820, %v4818
  %v4835 = vpack.c.b16 %v4823, %v4821
  %v4836 = vpack.c.b16 %v4824, %v4822
  %v4837 = vpack.c.b16 %v4827, %v4825
  %v4838 = vpack.c.b16 %v4828, %v4826
  %v4839 = vpack.c.b16 %v4831, %v4829
  %v4840 = vpack.c.b16 %v4832, %v4830
  %v4850 = vsel %vm572, %v4800, 0
  %4852 = vmatprep.subr.bf16.mxu0 0
  %4853 = vmatpush1.bf16.msra.mxu0 0
  %4854 = vmatprep.subr.bf16.mxu0 0
  %4855 = vmatpush1.bf16.msra.mxu0 0
  %4856 = vmatprep.subr.bf16.mxu0 0
  %4857 = vmatpush1.bf16.msra.mxu0 0
  %4858 = vmatprep.subr.bf16.mxu0 0
  %4859 = vmatpush1.bf16.msra.mxu0 0
  %4860 = vmatprep.subr.bf16.mxu0 %v4840
  %4861 = vmatpush1.bf16.msra.mxu0 %v4839
  %4862 = vmatprep.subr.bf16.mxu0 %v4838
  %4863 = vmatpush1.bf16.msra.mxu0 %v4837
  %4864 = vmatprep.subr.bf16.mxu0 %v4836
  %4865 = vmatpush1.bf16.msra.mxu0 %v4835
  %4866 = vmatprep.subr.bf16.mxu0 %v4834
  %4867 = vmatpush1.bf16.msra.mxu0 %v4833
  %4868 = vmatprep.subr.bf16.mxu0 0
  %4869 = vmatpush2.bf16.msra.mxu0 0
  %4870 = vmatprep.subr.bf16.mxu0 0
  %4871 = vmatpush2.bf16.msra.mxu0 0
  %4872 = vmatprep.subr.bf16.mxu0 0
  %4873 = vmatpush2.bf16.msra.mxu0 0
  %4874 = vmatprep.subr.bf16.mxu0 0
  %4875 = vmatpush2.bf16.msra.mxu0 0
  %4876 = vmatprep.subr.bf16.mxu0 0
  %4877 = vmatpush2.bf16.msra.mxu0 0
  %4878 = vmatprep.subr.bf16.mxu0 0
  %4879 = vmatpush2.bf16.msra.mxu0 0
  %4880 = vmatprep.subr.bf16.mxu0 0
  %4881 = vmatpush2.bf16.msra.mxu0 0
  %4882 = vmatprep.subr.bf16.mxu0 0
  %4883 = vmatpush2.bf16.msra.mxu0 0
  %4884 = vmatprep.mubr.bf16.mxu0 0
  %4885 = vmatmul.mubr.bf16.gmra.mxu0 %v4850
  %v4886 = vpop.f32.mrf.mxu0
  %v4887 = vadd.f32 0.0, %v4886
  %v4888 = vpop.f32.mrf.mxu0
  %v4889 = vadd.f32 0.0, %v4888
  %v4890 = vpop.f32.mrf.mxu0
  %v4891 = vpop.f32.mrf.mxu0
  %4892 = vdwg.mxu0
  %v4893 = vsel %vm306, %v4796, %v4798
  %v4894 = vsel %vm307, %v4797, %v4799
  %v4895 = vadd.f32 %v4893, %v4887
  %v4896 = vadd.f32 %v4894, %v4889
  %v4897 = vmul.f32 %v4895, %v310
  %v4898 = vmul.f32 %v4896, %v311
  %v4899 = vtanh.pop %v4897
  %v4900 = vtanh.pop %v4898
  %v4901 = vmul.f32 %v4899, 0.5
  %v4902 = vmul.f32 %v4900, 0.5
  %v4903 = vadd.f32 %v4901, 0.5
  %v4904 = vadd.f32 %v4902, 0.5
  %v4905 = vmul.f32 %v4903, %v4787
  %4907 = vrot.lane.b32.xlu0 %v4900, 64
  %v4908 = vpop.permute.xlu0 %4907
  %v4910 = vmul.f32 %v4903, %v4908
  %4912 = vrot.lane.b32.xlu0 %v4910, 64
  %v4913 = vpop.permute.xlu0 %4912
  %v4915 = vadd.f32 %v4905, %v4913
  %v4916 = vtanh.pop %v4915
  %4918 = vrot.lane.b32.xlu0 %v4916, 64
  %v4919 = vpop.permute.xlu0 %4918
  %v4921 = vmul.f32 %v4904, %v4919
  %4922 = vst.msk [vmem:[%s648] sm:$0xff] %vm646, %v4921
  %4923 = vst.msk [vmem:[#allocation3] sm:$0xff] %vm649, %v4921
  %v4924 = vld [vmem:[#allocation3 + $0x78] sm:$0xff]
  %v4925 = vld [vmem:[%s9] sm:$0xff]
  %v4926 = vld [vmem:[%s9 + $0x8] sm:$0xff]
  %v4927 = vld [vmem:[%s9 + $0x10] sm:$0xff]
  %v4928 = vld [vmem:[%s9 + $0x18] sm:$0xff]
  %v4929 = vld [vmem:[%s9 + $0x20] sm:$0xff]
  %v4930 = vld [vmem:[%s9 + $0x28] sm:$0xff]
  %v4931 = vld [vmem:[%s9 + $0x30] sm:$0xff]
  %v4932 = vld [vmem:[%s9 + $0x38] sm:$0xff]
  %v4933 = vld [vmem:[%s10] sm:$0x1]
  %v4935 = vlaneseq
  %v4936 = vshrl.u32 %v4935, 7
  %v4937 = vsub.s32 0, %v4936
  %v4938 = vrot.slane %v4933, %v4937
  %v4941 = vsel %vm572, %v4924, 0
  %4943 = vmatprep.subr.mxu0 0.0
  %4944 = vmatpush1.msra.mxu0 0.0
  %4945 = vmatprep.subr.mxu0 0.0
  %4946 = vmatpush1.msra.mxu0 0.0
  %4947 = vmatprep.subr.mxu0 0.0
  %4948 = vmatpush1.msra.mxu0 0.0
  %4949 = vmatprep.subr.mxu0 0.0
  %4950 = vmatpush1.msra.mxu0 0.0
  %4951 = vmatprep.subr.mxu0 0.0
  %4952 = vmatpush1.msra.mxu0 0.0
  %4953 = vmatprep.subr.mxu0 0.0
  %4954 = vmatpush1.msra.mxu0 0.0
  %4955 = vmatprep.subr.mxu0 0.0
  %4956 = vmatpush1.msra.mxu0 0.0
  %4957 = vmatprep.subr.mxu0 0.0
  %4958 = vmatpush1.msra.mxu0 0.0
  %4959 = vmatprep.subr.mxu0 0.0
  %4960 = vmatpush1.msra.mxu0 %v4932
  %4961 = vmatprep.subr.mxu0 0.0
  %4962 = vmatpush1.msra.mxu0 %v4931
  %4963 = vmatprep.subr.mxu0 0.0
  %4964 = vmatpush1.msra.mxu0 %v4930
  %4965 = vmatprep.subr.mxu0 0.0
  %4966 = vmatpush1.msra.mxu0 %v4929
  %4967 = vmatprep.subr.mxu0 0.0
  %4968 = vmatpush1.msra.mxu0 %v4928
  %4969 = vmatprep.subr.mxu0 0.0
  %4970 = vmatpush1.msra.mxu0 %v4927
  %4971 = vmatprep.subr.mxu0 0.0
  %4972 = vmatpush1.msra.mxu0 %v4926
  %4973 = vmatprep.subr.mxu0 0.0
  %4974 = vmatpush1.msra.mxu0 %v4925
  %4975 = vmatprep.subr.mxu0 0.0
  %4976 = vmatpush2.msra.mxu0 0.0
  %4977 = vmatprep.subr.mxu0 0.0
  %4978 = vmatpush2.msra.mxu0 0.0
  %4979 = vmatprep.subr.mxu0 0.0
  %4980 = vmatpush2.msra.mxu0 0.0
  %4981 = vmatprep.subr.mxu0 0.0
  %4982 = vmatpush2.msra.mxu0 0.0
  %4983 = vmatprep.subr.mxu0 0.0
  %4984 = vmatpush2.msra.mxu0 0.0
  %4985 = vmatprep.subr.mxu0 0.0
  %4986 = vmatpush2.msra.mxu0 0.0
  %4987 = vmatprep.subr.mxu0 0.0
  %4988 = vmatpush2.msra.mxu0 0.0
  %4989 = vmatprep.subr.mxu0 0.0
  %4990 = vmatpush2.msra.mxu0 0.0
  %4991 = vmatprep.subr.mxu0 0.0
  %4992 = vmatpush2.msra.mxu0 0.0
  %4993 = vmatprep.subr.mxu0 0.0
  %4994 = vmatpush2.msra.mxu0 0.0
  %4995 = vmatprep.subr.mxu0 0.0
  %4996 = vmatpush2.msra.mxu0 0.0
  %4997 = vmatprep.subr.mxu0 0.0
  %4998 = vmatpush2.msra.mxu0 0.0
  %4999 = vmatprep.subr.mxu0 0.0
  %5000 = vmatpush2.msra.mxu0 0.0
  %5001 = vmatprep.subr.mxu0 0.0
  %5002 = vmatpush2.msra.mxu0 0.0
  %5003 = vmatprep.subr.mxu0 0.0
  %5004 = vmatpush2.msra.mxu0 0.0
  %5005 = vmatprep.subr.mxu0 0.0
  %5006 = vmatpush2.msra.mxu0 0.0
  %5007 = vmatprep.mubr.f32.mxu0 0.0
  %5008 = vmatmul.mubr.f32.gmra.mxu0 %v4941
  %v5009 = vpop.f32.mrf.mxu0
  %v5010 = vadd.f32 %v4938, %v5009
  %v5011 = vpop.f32.mrf.mxu0
  %5012 = vdwg.mxu0
  %vm5013 = vcmask 64512
  %5014 = vst.msk [vmem:[%s11] sm:$0xff] %vm5013, %v5010
  // Predicated region
  $region46: #{bilstm_forward.1} parent=0 // pred_check
    _
  $region47: #{bilstm_forward.1} parent=0 // pred_check_branch
    %5016 = sbr.rel (0) target = $region49
  $region48: #{bilstm_forward.1} parent=0 // pred_region
    _
  $region49: #{bilstm_forward.1} parent=0 // pred_fallthru
    _
  // Predicated region
  $region50: #{bilstm_forward.1} parent=0 // pred_check
    _
  $region51: #{bilstm_forward.1} parent=0 // pred_check_branch
    %5018 = sbr.rel (0) target = $region53
  $region52: #{bilstm_forward.1} parent=0 // pred_region
    _
  $region53: #{bilstm_forward.1} parent=0 // pred_fallthru
    _

</llo_original>
